<compile_context>
chip_gen: v6e
topology: v6e:2x2x1
jax: 0.10.0
libtpu: 0.0.40
codegen_flags: <defaults>
</compile_context>

<pallas_src>
import functools
import math

import jax
import jax.numpy as jnp
from jax import lax
from jax.experimental import pallas as pl
from jax.experimental.pallas import tpu as pltpu

NEG_SLOPE = 0.01      # torch.nn.LeakyReLU default
GEN_EPS = 1e-7        # GENConv message eps
LN_EPS = 1e-5         # torch_geometric.nn.LayerNorm eps
SOFTMAX_EPS = 1e-16   # torch_geometric.utils.softmax eps
NEG_INF = -1e30
HEAD_PAD = 128        # lane-dense output width of the GFN head slabs


# ----------------------------------------------------------------------------
# in-kernel helpers
# ----------------------------------------------------------------------------
def _leaky(x):
    return jnp.where(x > 0.0, x, NEG_SLOPE * x)


def _wmat(a, w_bf16):
    """activation (f32) @ weight (pre-cast bf16) with f32 accumulation."""
    return jnp.dot(a.astype(jnp.bfloat16), w_bf16,
                   preferred_element_type=jnp.float32)


def _gmat(a, b, dims=((1,), (0,))):
    """f32 structural contraction (one-hot gather / scatter / pool / LN stats)."""
    return lax.dot_general(a, b, dimension_numbers=(dims, ((), ())),
                           preferred_element_type=jnp.float32)


def _mlp3(v, w1, b1, w2, b2, w3, b3):
    h = _leaky(_wmat(v, w1) + b1)
    h = _leaky(_wmat(h, w2) + b2)
    return _wmat(h, w3) + b3


def _graph_layernorm(h, bg, inv_norm):
    """torch_geometric.nn.LayerNorm(mode='graph', affine=False); f32 stats."""
    s = _gmat(bg, h, ((0,), (0,)))                           # (G, D) per-graph sums
    mean = jnp.sum(s, axis=-1, keepdims=True) * inv_norm     # (G, 1)
    xc = h - _gmat(bg, mean)                                 # broadcast mean to nodes
    s2 = _gmat(bg, xc * xc, ((0,), (0,)))                    # (G, D)
    var = jnp.sum(s2, axis=-1, keepdims=True) * inv_norm     # (G, 1)
    rstd = lax.rsqrt(var + LN_EPS)
    return xc * _gmat(bg, rstd)


# ----------------------------------------------------------------------------
# The single fused forward kernel
# ----------------------------------------------------------------------------
def _gfn_forward_kernel(
    # graph features
    x_ref, ea_ref, cond_ref,
    # graph structure (f32 one-hot / constant matrices, built once on host)
    src_ref, dst_ref, maskb_ref, bg_ref, invn_ref,
    me_ref, ce_ref, sn_ref, sg_ref, breal_ref, invcnt_ref, selt_ref,
    ne_ref, se_ref,
    # input embedder MLP weights (bf16) / biases (f32)
    wx1, bx1, wx2, bx2, wx3, bx3,
    we1, be1, we2, be2, we3, be3,
    wc1, bc1, wc2, bc2, wc3, bc3,
    # per-layer weights, stacked on a leading layer axis (bf16 / f32 biases)
    wtop_ref, wagg_ref, bq_ref, wedge_ref,
    wlin_ref, blin_ref, wff1_ref, bff1_ref, wff2_ref, bff2_ref,
    # GFN head weights (columns zero-padded to HEAD_PAD lanes)
    wno_ref, wnc_ref, bnd_ref, bedge_ref,
    wg1_ref, wg2_ref, wg3_ref, bglob_ref,
    # outputs (lane-dense HEAD_PAD-wide slabs)
    node_out_ref, ne_out_ref, se_out_ref, graph_out_ref,
    *, num_layers, heads, ch,
):
    hc = heads * ch
    inv_sqrt_c = 1.0 / math.sqrt(ch)

    # structural matrices, loaded once and reused across all layers
    src_f = src_ref[...]            # (E, Na) one-hot of edge source
    dst_f = dst_ref[...]            # (E, Na) one-hot of edge destination
    mask_bias = maskb_ref[...]      # (E, Na): 0 where dst matches, else -1e30
    bg = bg_ref[...]                # (Na, G) graph one-hot (augmented nodes)
    inv_norm = invn_ref[...]        # (G, 1) 1/(nodes_per_graph * emb)
    selt = selt_ref[...]            # (H, hc) per-head channel-block selector

    # ---- input embedders (x2h / e2h / c2h): fused 3-layer MLPs ------------
    o_x = _mlp3(x_ref[...], wx1[...], bx1[...], wx2[...], bx2[...], wx3[...], bx3[...])
    e0 = _mlp3(ea_ref[...], we1[...], be1[...], we2[...], be2[...], we3[...], be3[...])
    c = _mlp3(cond_ref[...], wc1[...], bc1[...], wc2[...], bc2[...], wc3[...], bc3[...])

    # ---- assemble augmented node / edge features (concat-free) ------------
    o = _gmat(sn_ref[...], o_x) + _gmat(sg_ref[...], c)       # (Na, emb)
    # add_self_loops(fill='mean') folded into a constant matrix:  Me @ e + C
    aug_e = _gmat(me_ref[...], e0) + ce_ref[...]               # (E, emb)

    # ---- transformer layers (statically unrolled, all state in VMEM) ------
    for l in range(num_layers):
        # GENConv message + sum aggregation; its Linear is pre-folded into wagg.
        o_src = _gmat(src_f, o)                                # (E, emb) gather
        msg = jnp.maximum(o_src + aug_e, 0.0) + GEN_EPS
        aggsum = _gmat(dst_f, msg, ((0,), (0,)))               # (Na, emb) scatter-add
        # fused q|k|v|skip projection: o @ W_top + (o + aggsum) @ W_agg + b
        qkvs = _wmat(o, wtop_ref[l]) + _wmat(o + aggsum, wagg_ref[l]) + bq_ref[l]
        ep = _wmat(aug_e, wedge_ref[l])                        # lin_edge (no bias)

        q = qkvs[:, :hc]
        k = qkvs[:, hc:2 * hc]
        v = qkvs[:, 2 * hc:3 * hc]
        skip = qkvs[:, 3 * hc:]

        q_dst = _gmat(dst_f, q)                                # (E, hc) gathers
        k_e = _gmat(src_f, k) + ep
        v_e = _gmat(src_f, v) + ep
        qk = q_dst * k_e                                       # (E, hc)

        # per-destination multi-head softmax (torch_geometric.utils.softmax).
        # TODO(synk): at production scale, move these per-head gathers to
        #             one-hot MXU contractions and tile the edge axis.
        w_full = None
        for h in range(heads):
            sel_h = selt[h:h + 1, :]                                       # (1, hc)
            a_h = jnp.sum(qk * sel_h, axis=1, keepdims=True) * inv_sqrt_c  # (E, 1)
            m_row = jnp.max(a_h + mask_bias, axis=0, keepdims=True)        # (1, Na)
            m_e = jnp.sum(dst_f * m_row, axis=1, keepdims=True)            # (E, 1)
            p_h = jnp.exp(a_h - m_e)
            den = jnp.sum(dst_f * p_h, axis=0, keepdims=True) + SOFTMAX_EPS  # (1, Na)
            den_e = jnp.sum(dst_f * den, axis=1, keepdims=True)            # (E, 1)
            part = (p_h / den_e) * sel_h                                    # (E, hc)
            w_full = part if w_full is None else w_full + part

        attn = _gmat(dst_f, v_e * w_full, ((0,), (0,)))        # (Na, hc) aggregate
        trans_out = attn + skip                                # + lin_skip(x_dst)
        lin_out = _wmat(trans_out, wlin_ref[l]) + blin_ref[l]
        o = _graph_layernorm(o + lin_out, bg, inv_norm)
        ff = _leaky(_wmat(o, wff1_ref[l]) + bff1_ref[l])
        ff = _wmat(ff, wff2_ref[l]) + bff2_ref[l]
        o = _graph_layernorm(o + ff, bg, inv_norm)

    # ---- GFN heads (only the final logits leave VMEM) ---------------------
    o_real = _gmat(sn_ref[...], o, ((0,), (0,)))               # (N, emb)
    o_virt = _gmat(sg_ref[...], o, ((0,), (0,)))               # (G, emb)
    c_b = _gmat(breal_ref[...], c)                             # (N, emb) = c[batch]

    node_out = _wmat(o_real, wno_ref[...]) + _wmat(c_b, wnc_ref[...]) + bnd_ref[...]
    node_out_ref[...] = node_out                               # (N, 128)
    ne_out_ref[...] = _gmat(ne_ref[...], node_out) + bedge_ref[...]   # (NE, 128)
    se_out_ref[...] = _gmat(se_ref[...], node_out) + bedge_ref[...]   # (SE, 128)

    pooled = _gmat(breal_ref[...], o_real, ((0,), (0,))) * invcnt_ref[...]
    graph_out_ref[...] = (_wmat(pooled, wg1_ref[...]) + _wmat(o_virt, wg2_ref[...])
                          + _wmat(c, wg3_ref[...]) + bglob_ref[...])  # (G, 128)


# ----------------------------------------------------------------------------
# pallas_call wrapper: single full-array block per operand, grid=(1,)
# ----------------------------------------------------------------------------
def _fs(shape):
    return pl.BlockSpec(shape, lambda i: (0,) * len(shape))


def _run_kernel(kernel, inputs, out_shapes):
    return pl.pallas_call(
        kernel,
        grid=(1,),
        in_specs=[_fs(a.shape) for a in inputs],
        out_specs=tuple(_fs(s) for s in out_shapes),
        out_shape=tuple(jax.ShapeDtypeStruct(s, jnp.float32) for s in out_shapes),
        compiler_params=pltpu.CompilerParams(
            dimension_semantics=("arbitrary",),
            vmem_limit_bytes=32 * 1024 * 1024,   # v7x-safe; demo data << limit
        ),
    )(*inputs)


# ----------------------------------------------------------------------------
# Parameter init (mimics torch Linear default init shapes / bounds)
# ----------------------------------------------------------------------------
def init_linear(key, din, dout, bias=True):
    k1, k2 = jax.random.split(key)
    bound = 1.0 / math.sqrt(din)
    w = jax.random.uniform(k1, (din, dout), jnp.float32, -bound, bound)
    b = (jax.random.uniform(k2, (1, dout), jnp.float32, -bound, bound)
         if bias else jnp.zeros((1, dout), jnp.float32))
    return w, b


def init_mlp3(key, dims):
    keys = jax.random.split(key, 3)
    return [init_linear(keys[i], dims[i], dims[i + 1]) for i in range(3)]


def init_gt_layer(key, emb, heads):
    ks = jax.random.split(key, 7)
    hc = heads * emb
    return dict(
        gen=init_linear(ks[0], emb, emb),                      # GENConv internal Linear
        qkvs=init_linear(ks[1], 2 * emb, 4 * hc),              # fused q|k|v|skip
        edge=init_linear(ks[2], emb, hc, bias=False)[0],       # lin_edge (no bias)
        lin=init_linear(ks[3], hc, emb),                       # post-attention Linear
        ff=(init_linear(ks[4], emb, 4 * emb),
            init_linear(ks[5], 4 * emb, emb)),                 # mlp(emb, 4*emb, emb, 1)
    )


def init_params(key, x_dim, e_dim, g_dim, emb, num_layers, heads,
                n_new_node, n_node_attr, n_edge_attr):
    ks = jax.random.split(key, 6 + num_layers)
    n_head_cols = n_new_node + n_node_attr + 1 + n_edge_attr
    return dict(
        x2h=init_mlp3(ks[0], [x_dim, emb, emb, emb]),
        e2h=init_mlp3(ks[1], [e_dim, emb, emb, emb]),
        c2h=init_mlp3(ks[2], [g_dim, emb, emb, emb]),
        layers=[init_gt_layer(ks[3 + i], emb, heads) for i in range(num_layers)],
        node_heads=init_linear(ks[3 + num_layers], 2 * emb, n_head_cols),
        graph_heads=init_linear(ks[4 + num_layers], 3 * emb, 2),   # [stop | reward]
    )


def prepare_params(params, *, emb, heads, head_dims):
    """One-time weight prep: fold GENConv Linear into the qkvs projection,
    pad head weight columns to HEAD_PAD lanes, stack per-layer weights on a
    leading layer axis and pre-cast all matmul weights to bf16."""
    bfd = jnp.bfloat16

    def prep_mlp(layers):
        flat = []
        for (w, b) in layers:
            flat += [w.astype(bfd), b]
        return flat

    stacks = {k: [] for k in ("wtop", "wagg", "bq", "wedge", "wlin", "blin",
                              "wff1", "bff1", "wff2", "bff2")}
    for lp in params["layers"]:
        w_gen, b_gen = lp["gen"]
        w_qkvs, b_qkvs = lp["qkvs"]
        w_top, w_bot = w_qkvs[:emb], w_qkvs[emb:]
        w_agg = w_gen @ w_bot                       # exact fold of GENConv Linear
        b_fold = b_qkvs + b_gen @ w_bot
        w_lin, b_lin = lp["lin"]
        (wf1, bf1), (wf2, bf2) = lp["ff"]
        stacks["wtop"].append(w_top.astype(bfd))
        stacks["wagg"].append(w_agg.astype(bfd))
        stacks["bq"].append(b_fold)
        stacks["wedge"].append(lp["edge"].astype(bfd))
        stacks["wlin"].append(w_lin.astype(bfd))
        stacks["blin"].append(b_lin)
        stacks["wff1"].append(wf1.astype(bfd))
        stacks["bff1"].append(bf1)
        stacks["wff2"].append(wf2.astype(bfd))
        stacks["bff2"].append(bf2)
    stacked = {k: jnp.stack(v) for k, v in stacks.items()}

    n_new_node, n_node_attr, n_edge_attr = head_dims
    n_cols = n_new_node + n_node_attr + 1 + n_edge_attr
    i_sn = n_new_node + n_node_attr                 # first edge-head column
    pad_c = HEAD_PAD - n_cols

    def padc(a):
        return jnp.pad(a, ((0, 0), (0, pad_c)))

    w_node, b_node = params["node_heads"]           # (2*emb, n_cols), (1, n_cols)
    w_glob, b_glob = params["graph_heads"]          # (3*emb, 2), (1, 2)
    pad_g = HEAD_PAD - 2

    return dict(
        x2h=prep_mlp(params["x2h"]),
        e2h=prep_mlp(params["e2h"]),
        c2h=prep_mlp(params["c2h"]),
        layers=stacked,
        wno=padc(w_node[:emb]).astype(bfd),
        wnc=padc(w_node[emb:]).astype(bfd),
        b_direct=padc(b_node.at[:, i_sn:].set(0.0)),            # node-head biases
        b_edge=padc(b_node.at[:, :i_sn].set(0.0)),               # edge-head biases (once)
        wg1=jnp.pad(w_glob[:emb], ((0, 0), (0, pad_g))).astype(bfd),
        wg2=jnp.pad(w_glob[emb:2 * emb], ((0, 0), (0, pad_g))).astype(bfd),
        wg3=jnp.pad(w_glob[2 * emb:], ((0, 0), (0, pad_g))).astype(bfd),
        b_glob=jnp.pad(b_glob, ((0, 0), (0, pad_g))),
    )


# ----------------------------------------------------------------------------
# GraphTransformerGFN forward (host side: index math only, one pallas_call)
# ----------------------------------------------------------------------------
def graph_transformer_gfn_forward(prep, g, cond, *, emb, heads, head_dims):
    x, edge_index, edge_attr = g["x"], g["edge_index"], g["edge_attr"]
    batch, non_edge_index = g["batch"], g["non_edge_index"]
    f32 = jnp.float32
    n = x.shape[0]
    gcnt = cond.shape[0]
    e_cnt0 = edge_attr.shape[0]
    n_aug = n + gcnt
    hc = heads * emb

    # ---- augmented graph connectivity --------------------------------------
    u = jnp.arange(n, dtype=jnp.int32)
    v = batch + n
    src0 = jnp.concatenate([edge_index[0], u, v])
    dst0 = jnp.concatenate([edge_index[1], v, u])
    loops = jnp.arange(n_aug, dtype=jnp.int32)
    src = jnp.concatenate([src0, loops])
    dst = jnp.concatenate([dst0, loops])

    src_oh = jax.nn.one_hot(src, n_aug, dtype=f32)               # (E, Na)
    dst_oh = jax.nn.one_hot(dst, n_aug, dtype=f32)
    mask_bias = jnp.where(dst_oh > 0.5, 0.0, NEG_INF).astype(f32)

    # add_self_loops(fill_value='mean') as a constant affine map on e:
    #   aug_e = Me @ e + C_const
    dst0_oh = jax.nn.one_hot(dst0, n_aug, dtype=f32)             # (E0+2N, Na)
    inv0 = (1.0 / jnp.maximum(jnp.sum(dst0_oh, axis=0), 1.0))[:, None]
    e_p = jnp.zeros((2 * n, emb), f32).at[:, 0].set(1.0)
    me_mat = jnp.concatenate([
        jnp.eye(e_cnt0, dtype=f32),
        jnp.zeros((2 * n, e_cnt0), f32),
        inv0 * dst0_oh[:e_cnt0].T,
    ], axis=0)                                                   # (E, E0)
    c_const = jnp.concatenate([
        jnp.zeros((e_cnt0, emb), f32),
        e_p,
        inv0 * (dst0_oh[e_cnt0:].T @ e_p),
    ], axis=0)                                                   # (E, emb)

    # batching / selection matrices
    aug_batch = jnp.concatenate([batch, jnp.arange(gcnt, dtype=jnp.int32)])
    bg = jax.nn.one_hot(aug_batch, gcnt, dtype=f32)              # (Na, G)
    inv_norm = (1.0 / (jnp.sum(bg, axis=0) * emb))[:, None]      # (G, 1)
    s_n = jnp.concatenate([jnp.eye(n, dtype=f32), jnp.zeros((gcnt, n), f32)], 0)
    s_g = jnp.concatenate([jnp.zeros((n, gcnt), f32), jnp.eye(gcnt, dtype=f32)], 0)
    b_real = jax.nn.one_hot(batch, gcnt, dtype=f32)              # (N, G)
    inv_cnt = (1.0 / jnp.maximum(jnp.sum(b_real, axis=0), 1.0))[:, None]

    # per-head channel-block selector and edge-logit gather matrices
    selt = (jnp.arange(hc) // emb == jnp.arange(heads)[:, None]).astype(f32)
    ne_row, ne_col = non_edge_index[0], non_edge_index[1]
    e_row, e_col = edge_index[0, ::2], edge_index[1, ::2]
    ne_sum = jax.nn.one_hot(ne_row, n, dtype=f32) + jax.nn.one_hot(ne_col, n, dtype=f32)
    se_sum = jax.nn.one_hot(e_row, n, dtype=f32) + jax.nn.one_hot(e_col, n, dtype=f32)

    ls = prep["layers"]
    num_layers = ls["wtop"].shape[0]
    inputs = (
        x, edge_attr, cond,
        src_oh, dst_oh, mask_bias, bg, inv_norm,
        me_mat, c_const, s_n, s_g, b_real, inv_cnt, selt,
        ne_sum, se_sum,
        *prep["x2h"], *prep["e2h"], *prep["c2h"],
        ls["wtop"], ls["wagg"], ls["bq"], ls["wedge"],
        ls["wlin"], ls["blin"], ls["wff1"], ls["bff1"], ls["wff2"], ls["bff2"],
        prep["wno"], prep["wnc"], prep["b_direct"], prep["b_edge"],
        prep["wg1"], prep["wg2"], prep["wg3"], prep["b_glob"],
    )
    out_shapes = ((n, HEAD_PAD), (ne_sum.shape[0], HEAD_PAD),
                  (se_sum.shape[0], HEAD_PAD), (gcnt, HEAD_PAD))

    kernel = functools.partial(_gfn_forward_kernel,
                               num_layers=num_layers, heads=heads, ch=emb)
    node_out, ne_out, se_out, graph_out = _run_kernel(kernel, inputs, out_shapes)

    n_new_node, n_node_attr, n_edge_attr = head_dims
    i_sn = n_new_node + n_node_attr
    i_ae = i_sn + 1
    logits = {
        "add_node": node_out[:, :n_new_node],
        "set_node_attr": node_out[:, n_new_node:i_sn],
        "add_edge": ne_out[:, i_sn:i_ae],
        "set_edge_attr": se_out[:, i_ae:i_ae + n_edge_attr],
        "stop": graph_out[:, 0:1],
    }
    reward = graph_out[:, 1:2]
    return logits, reward


# ----------------------------------------------------------------------------
# Example
# ----------------------------------------------------------------------------
if __name__ == "__main__":
    X_DIM, E_DIM, G_DIM = 8, 4, 16
    N_NEW_NODE, N_NODE_ATTR, N_EDGE_ATTR = 5, 6, 3
    EMB, NUM_LAYERS, HEADS = 32, 3, 2

    key = jax.random.PRNGKey(0)
    kp, kx, ke, kc = jax.random.split(key, 4)
    params = init_params(kp, X_DIM, E_DIM, G_DIM, EMB, NUM_LAYERS, HEADS,
                         N_NEW_NODE, N_NODE_ATTR, N_EDGE_ATTR)
    prep = prepare_params(params, emb=EMB, heads=HEADS,
                          head_dims=(N_NEW_NODE, N_NODE_ATTR, N_EDGE_ATTR))

    # batch of 2 graphs: graph0 = path 0-1-2-3, graph1 = path 4-5-6
    g = {
        "x": jax.random.normal(kx, (7, X_DIM), jnp.float32),
        "edge_index": jnp.array([[0, 1, 1, 2, 2, 3, 4, 5, 5, 6],
                                 [1, 0, 2, 1, 3, 2, 5, 4, 6, 5]], dtype=jnp.int32),
        "edge_attr": jax.random.normal(ke, (10, E_DIM), jnp.float32),
        "batch": jnp.array([0, 0, 0, 0, 1, 1, 1], dtype=jnp.int32),
        "non_edge_index": jnp.array([[0, 0, 4],
                                     [2, 3, 6]], dtype=jnp.int32),
    }
    cond = jax.random.normal(kc, (2, G_DIM), jnp.float32)

    fwd = jax.jit(functools.partial(
        graph_transformer_gfn_forward,
        emb=EMB, heads=HEADS,
        head_dims=(N_NEW_NODE, N_NODE_ATTR, N_EDGE_ATTR)))

    logits, reward = fwd(prep, g, cond)

    jax.block_until_ready(reward)
    for val in logits.values():
        jax.block_until_ready(val)

    assert logits["stop"].shape == (2, 1)
    assert logits["add_node"].shape == (7, N_NEW_NODE)
    assert logits["set_node_attr"].shape == (7, N_NODE_ATTR)
    assert logits["add_edge"].shape == (3, 1)
    assert logits["set_edge_attr"].shape == (5, N_EDGE_ATTR)
    assert reward.shape == (2, 1)
    for val in list(logits.values()) + [reward]:
        assert bool(jnp.all(jnp.isfinite(val)))
    print("KERNEL_OK")
</pallas_src>

<mosaic_0001>
module attributes {stable_mosaic.version = 11 : i64} {
  func.func @_gfn_forward_kernel(%arg0: i32, %arg1: memref<7x8xf32, #tpu.memory_space<vmem>>, %arg2: memref<10x4xf32, #tpu.memory_space<vmem>>, %arg3: memref<2x16xf32, #tpu.memory_space<vmem>>, %arg4: memref<33x9xf32, #tpu.memory_space<vmem>>, %arg5: memref<33x9xf32, #tpu.memory_space<vmem>>, %arg6: memref<33x9xf32, #tpu.memory_space<vmem>>, %arg7: memref<9x2xf32, #tpu.memory_space<vmem>>, %arg8: memref<2x1xf32, #tpu.memory_space<vmem>>, %arg9: memref<33x10xf32, #tpu.memory_space<vmem>>, %arg10: memref<33x32xf32, #tpu.memory_space<vmem>>, %arg11: memref<9x7xf32, #tpu.memory_space<vmem>>, %arg12: memref<9x2xf32, #tpu.memory_space<vmem>>, %arg13: memref<7x2xf32, #tpu.memory_space<vmem>>, %arg14: memref<2x1xf32, #tpu.memory_space<vmem>>, %arg15: memref<2x64xf32, #tpu.memory_space<vmem>>, %arg16: memref<3x7xf32, #tpu.memory_space<vmem>>, %arg17: memref<5x7xf32, #tpu.memory_space<vmem>>, %arg18: memref<8x32xbf16, #tpu.memory_space<vmem>>, %arg19: memref<1x32xf32, #tpu.memory_space<vmem>>, %arg20: memref<32x32xbf16, #tpu.memory_space<vmem>>, %arg21: memref<1x32xf32, #tpu.memory_space<vmem>>, %arg22: memref<32x32xbf16, #tpu.memory_space<vmem>>, %arg23: memref<1x32xf32, #tpu.memory_space<vmem>>, %arg24: memref<4x32xbf16, #tpu.memory_space<vmem>>, %arg25: memref<1x32xf32, #tpu.memory_space<vmem>>, %arg26: memref<32x32xbf16, #tpu.memory_space<vmem>>, %arg27: memref<1x32xf32, #tpu.memory_space<vmem>>, %arg28: memref<32x32xbf16, #tpu.memory_space<vmem>>, %arg29: memref<1x32xf32, #tpu.memory_space<vmem>>, %arg30: memref<16x32xbf16, #tpu.memory_space<vmem>>, %arg31: memref<1x32xf32, #tpu.memory_space<vmem>>, %arg32: memref<32x32xbf16, #tpu.memory_space<vmem>>, %arg33: memref<1x32xf32, #tpu.memory_space<vmem>>, %arg34: memref<32x32xbf16, #tpu.memory_space<vmem>>, %arg35: memref<1x32xf32, #tpu.memory_space<vmem>>, %arg36: memref<3x32x256xbf16, #tpu.memory_space<vmem>>, %arg37: memref<3x32x256xbf16, #tpu.memory_space<vmem>>, %arg38: memref<3x1x256xf32, #tpu.memory_space<vmem>>, %arg39: memref<3x32x64xbf16, #tpu.memory_space<vmem>>, %arg40: memref<3x64x32xbf16, #tpu.memory_space<vmem>>, %arg41: memref<3x1x32xf32, #tpu.memory_space<vmem>>, %arg42: memref<3x32x128xbf16, #tpu.memory_space<vmem>>, %arg43: memref<3x1x128xf32, #tpu.memory_space<vmem>>, %arg44: memref<3x128x32xbf16, #tpu.memory_space<vmem>>, %arg45: memref<3x1x32xf32, #tpu.memory_space<vmem>>, %arg46: memref<32x128xbf16, #tpu.memory_space<vmem>>, %arg47: memref<32x128xbf16, #tpu.memory_space<vmem>>, %arg48: memref<1x128xf32, #tpu.memory_space<vmem>>, %arg49: memref<1x128xf32, #tpu.memory_space<vmem>>, %arg50: memref<32x128xbf16, #tpu.memory_space<vmem>>, %arg51: memref<32x128xbf16, #tpu.memory_space<vmem>>, %arg52: memref<32x128xbf16, #tpu.memory_space<vmem>>, %arg53: memref<1x128xf32, #tpu.memory_space<vmem>>, %arg54: memref<7x128xf32, #tpu.memory_space<vmem>>, %arg55: memref<3x128xf32, #tpu.memory_space<vmem>>, %arg56: memref<5x128xf32, #tpu.memory_space<vmem>>, %arg57: memref<2x128xf32, #tpu.memory_space<vmem>>) attributes {dimension_semantics = [#tpu.dimension_semantics<arbitrary>], iteration_bounds = array<i64: 1>, scalar_prefetch = 0 : i64, scratch_operands = 0 : i64, tpu.core_type = #tpu.core_type<tc>, window_params = [{pipeline_mode = #tpu.pipeline_mode<synchronous>, transform_indices = @transform_0, window_bounds = array<i64: 7, 8>}, {pipeline_mode = #tpu.pipeline_mode<synchronous>, transform_indices = @transform_1, window_bounds = array<i64: 10, 4>}, {pipeline_mode = #tpu.pipeline_mode<synchronous>, transform_indices = @transform_2, window_bounds = array<i64: 2, 16>}, {pipeline_mode = #tpu.pipeline_mode<synchronous>, transform_indices = @transform_3, window_bounds = array<i64: 33, 9>}, {pipeline_mode = #tpu.pipeline_mode<synchronous>, transform_indices = @transform_4, window_bounds = array<i64: 33, 9>}, {pipeline_mode = #tpu.pipeline_mode<synchronous>, transform_indices = @transform_5, window_bounds = array<i64: 33, 9>}, {pipeline_mode = #tpu.pipeline_mode<synchronous>, transform_indices = @transform_6, window_bounds = array<i64: 9, 2>}, {pipeline_mode = #tpu.pipeline_mode<synchronous>, transform_indices = @transform_7, window_bounds = array<i64: 2, 1>}, {pipeline_mode = #tpu.pipeline_mode<synchronous>, transform_indices = @transform_8, window_bounds = array<i64: 33, 10>}, {pipeline_mode = #tpu.pipeline_mode<synchronous>, transform_indices = @transform_9, window_bounds = array<i64: 33, 32>}, {pipeline_mode = #tpu.pipeline_mode<synchronous>, transform_indices = @transform_10, window_bounds = array<i64: 9, 7>}, {pipeline_mode = #tpu.pipeline_mode<synchronous>, transform_indices = @transform_11, window_bounds = array<i64: 9, 2>}, {pipeline_mode = #tpu.pipeline_mode<synchronous>, transform_indices = @transform_12, window_bounds = array<i64: 7, 2>}, {pipeline_mode = #tpu.pipeline_mode<synchronous>, transform_indices = @transform_13, window_bounds = array<i64: 2, 1>}, {pipeline_mode = #tpu.pipeline_mode<synchronous>, transform_indices = @transform_14, window_bounds = array<i64: 2, 64>}, {pipeline_mode = #tpu.pipeline_mode<synchronous>, transform_indices = @transform_15, window_bounds = array<i64: 3, 7>}, {pipeline_mode = #tpu.pipeline_mode<synchronous>, transform_indices = @transform_16, window_bounds = array<i64: 5, 7>}, {pipeline_mode = #tpu.pipeline_mode<synchronous>, transform_indices = @transform_17, window_bounds = array<i64: 8, 32>}, {pipeline_mode = #tpu.pipeline_mode<synchronous>, transform_indices = @transform_18, window_bounds = array<i64: 1, 32>}, {pipeline_mode = #tpu.pipeline_mode<synchronous>, transform_indices = @transform_19, window_bounds = array<i64: 32, 32>}, {pipeline_mode = #tpu.pipeline_mode<synchronous>, transform_indices = @transform_20, window_bounds = array<i64: 1, 32>}, {pipeline_mode = #tpu.pipeline_mode<synchronous>, transform_indices = @transform_21, window_bounds = array<i64: 32, 32>}, {pipeline_mode = #tpu.pipeline_mode<synchronous>, transform_indices = @transform_22, window_bounds = array<i64: 1, 32>}, {pipeline_mode = #tpu.pipeline_mode<synchronous>, transform_indices = @transform_23, window_bounds = array<i64: 4, 32>}, {pipeline_mode = #tpu.pipeline_mode<synchronous>, transform_indices = @transform_24, window_bounds = array<i64: 1, 32>}, {pipeline_mode = #tpu.pipeline_mode<synchronous>, transform_indices = @transform_25, window_bounds = array<i64: 32, 32>}, {pipeline_mode = #tpu.pipeline_mode<synchronous>, transform_indices = @transform_26, window_bounds = array<i64: 1, 32>}, {pipeline_mode = #tpu.pipeline_mode<synchronous>, transform_indices = @transform_27, window_bounds = array<i64: 32, 32>}, {pipeline_mode = #tpu.pipeline_mode<synchronous>, transform_indices = @transform_28, window_bounds = array<i64: 1, 32>}, {pipeline_mode = #tpu.pipeline_mode<synchronous>, transform_indices = @transform_29, window_bounds = array<i64: 16, 32>}, {pipeline_mode = #tpu.pipeline_mode<synchronous>, transform_indices = @transform_30, window_bounds = array<i64: 1, 32>}, {pipeline_mode = #tpu.pipeline_mode<synchronous>, transform_indices = @transform_31, window_bounds = array<i64: 32, 32>}, {pipeline_mode = #tpu.pipeline_mode<synchronous>, transform_indices = @transform_32, window_bounds = array<i64: 1, 32>}, {pipeline_mode = #tpu.pipeline_mode<synchronous>, transform_indices = @transform_33, window_bounds = array<i64: 32, 32>}, {pipeline_mode = #tpu.pipeline_mode<synchronous>, transform_indices = @transform_34, window_bounds = array<i64: 1, 32>}, {pipeline_mode = #tpu.pipeline_mode<synchronous>, transform_indices = @transform_35, window_bounds = array<i64: 3, 32, 256>}, {pipeline_mode = #tpu.pipeline_mode<synchronous>, transform_indices = @transform_36, window_bounds = array<i64: 3, 32, 256>}, {pipeline_mode = #tpu.pipeline_mode<synchronous>, transform_indices = @transform_37, window_bounds = array<i64: 3, 1, 256>}, {pipeline_mode = #tpu.pipeline_mode<synchronous>, transform_indices = @transform_38, window_bounds = array<i64: 3, 32, 64>}, {pipeline_mode = #tpu.pipeline_mode<synchronous>, transform_indices = @transform_39, window_bounds = array<i64: 3, 64, 32>}, {pipeline_mode = #tpu.pipeline_mode<synchronous>, transform_indices = @transform_40, window_bounds = array<i64: 3, 1, 32>}, {pipeline_mode = #tpu.pipeline_mode<synchronous>, transform_indices = @transform_41, window_bounds = array<i64: 3, 32, 128>}, {pipeline_mode = #tpu.pipeline_mode<synchronous>, transform_indices = @transform_42, window_bounds = array<i64: 3, 1, 128>}, {pipeline_mode = #tpu.pipeline_mode<synchronous>, transform_indices = @transform_43, window_bounds = array<i64: 3, 128, 32>}, {pipeline_mode = #tpu.pipeline_mode<synchronous>, transform_indices = @transform_44, window_bounds = array<i64: 3, 1, 32>}, {pipeline_mode = #tpu.pipeline_mode<synchronous>, transform_indices = @transform_45, window_bounds = array<i64: 32, 128>}, {pipeline_mode = #tpu.pipeline_mode<synchronous>, transform_indices = @transform_46, window_bounds = array<i64: 32, 128>}, {pipeline_mode = #tpu.pipeline_mode<synchronous>, transform_indices = @transform_47, window_bounds = array<i64: 1, 128>}, {pipeline_mode = #tpu.pipeline_mode<synchronous>, transform_indices = @transform_48, window_bounds = array<i64: 1, 128>}, {pipeline_mode = #tpu.pipeline_mode<synchronous>, transform_indices = @transform_49, window_bounds = array<i64: 32, 128>}, {pipeline_mode = #tpu.pipeline_mode<synchronous>, transform_indices = @transform_50, window_bounds = array<i64: 32, 128>}, {pipeline_mode = #tpu.pipeline_mode<synchronous>, transform_indices = @transform_51, window_bounds = array<i64: 32, 128>}, {pipeline_mode = #tpu.pipeline_mode<synchronous>, transform_indices = @transform_52, window_bounds = array<i64: 1, 128>}, {pipeline_mode = #tpu.pipeline_mode<synchronous>, transform_indices = @transform_53, window_bounds = array<i64: 7, 128>}, {pipeline_mode = #tpu.pipeline_mode<synchronous>, transform_indices = @transform_54, window_bounds = array<i64: 3, 128>}, {pipeline_mode = #tpu.pipeline_mode<synchronous>, transform_indices = @transform_55, window_bounds = array<i64: 5, 128>}, {pipeline_mode = #tpu.pipeline_mode<synchronous>, transform_indices = @transform_56, window_bounds = array<i64: 2, 128>}]} {
    %c0 = arith.constant 0 : index
    %c0_0 = arith.constant 0 : index
    %0 = vector.load %arg4[%c0, %c0_0] : memref<33x9xf32, #tpu.memory_space<vmem>>, vector<33x9xf32>
    %c0_1 = arith.constant 0 : index
    %c0_2 = arith.constant 0 : index
    %1 = vector.load %arg5[%c0_1, %c0_2] : memref<33x9xf32, #tpu.memory_space<vmem>>, vector<33x9xf32>
    %c0_3 = arith.constant 0 : index
    %c0_4 = arith.constant 0 : index
    %2 = vector.load %arg6[%c0_3, %c0_4] : memref<33x9xf32, #tpu.memory_space<vmem>>, vector<33x9xf32>
    %c0_5 = arith.constant 0 : index
    %c0_6 = arith.constant 0 : index
    %3 = vector.load %arg7[%c0_5, %c0_6] : memref<9x2xf32, #tpu.memory_space<vmem>>, vector<9x2xf32>
    %c0_7 = arith.constant 0 : index
    %c0_8 = arith.constant 0 : index
    %4 = vector.load %arg8[%c0_7, %c0_8] : memref<2x1xf32, #tpu.memory_space<vmem>>, vector<2x1xf32>
    %c0_9 = arith.constant 0 : index
    %c0_10 = arith.constant 0 : index
    %5 = vector.load %arg15[%c0_9, %c0_10] : memref<2x64xf32, #tpu.memory_space<vmem>>, vector<2x64xf32>
    %c0_11 = arith.constant 0 : index
    %c0_12 = arith.constant 0 : index
    %6 = vector.load %arg1[%c0_11, %c0_12] : memref<7x8xf32, #tpu.memory_space<vmem>>, vector<7x8xf32>
    %c0_13 = arith.constant 0 : index
    %c0_14 = arith.constant 0 : index
    %7 = vector.load %arg18[%c0_13, %c0_14] : memref<8x32xbf16, #tpu.memory_space<vmem>>, vector<8x32xbf16>
    %c0_15 = arith.constant 0 : index
    %c0_16 = arith.constant 0 : index
    %8 = vector.load %arg19[%c0_15, %c0_16] : memref<1x32xf32, #tpu.memory_space<vmem>>, vector<1x32xf32>
    %c0_17 = arith.constant 0 : index
    %c0_18 = arith.constant 0 : index
    %9 = vector.load %arg20[%c0_17, %c0_18] : memref<32x32xbf16, #tpu.memory_space<vmem>>, vector<32x32xbf16>
    %c0_19 = arith.constant 0 : index
    %c0_20 = arith.constant 0 : index
    %10 = vector.load %arg21[%c0_19, %c0_20] : memref<1x32xf32, #tpu.memory_space<vmem>>, vector<1x32xf32>
    %c0_21 = arith.constant 0 : index
    %c0_22 = arith.constant 0 : index
    %11 = vector.load %arg22[%c0_21, %c0_22] : memref<32x32xbf16, #tpu.memory_space<vmem>>, vector<32x32xbf16>
    %c0_23 = arith.constant 0 : index
    %c0_24 = arith.constant 0 : index
    %12 = vector.load %arg23[%c0_23, %c0_24] : memref<1x32xf32, #tpu.memory_space<vmem>>, vector<1x32xf32>
    %13 = arith.truncf %6 : vector<7x8xf32> to vector<7x8xbf16>
    %cst = arith.constant dense<0.000000e+00> : vector<7x32xf32>
    %14 = tpu.matmul %13, %7, %cst {dimension_numbers = #tpu.dot_dimension_numbers<[1], [0], [0], [1], [0, 0, 1, 1], [], []>} : vector<7x8xbf16>, vector<8x32xbf16>, vector<7x32xf32> -> vector<7x32xf32>
    %15 = vector.broadcast %8 : vector<1x32xf32> to vector<7x32xf32>
    %16 = arith.addf %14, %15 : vector<7x32xf32>
    %cst_25 = arith.constant 0.000000e+00 : f32
    %17 = vector.broadcast %cst_25 : f32 to vector<7x32xf32>
    %18 = arith.cmpf ogt, %16, %17 : vector<7x32xf32>
    %cst_26 = arith.constant 0.00999999977 : f32
    %19 = vector.broadcast %cst_26 : f32 to vector<7x32xf32>
    %20 = arith.mulf %19, %16 : vector<7x32xf32>
    %21 = arith.select %18, %16, %20 : vector<7x32xi1>, vector<7x32xf32>
    %22 = arith.truncf %21 : vector<7x32xf32> to vector<7x32xbf16>
    %cst_27 = arith.constant dense<0.000000e+00> : vector<7x32xf32>
    %23 = tpu.matmul %22, %9, %cst_27 {dimension_numbers = #tpu.dot_dimension_numbers<[1], [0], [0], [1], [0, 0, 1, 1], [], []>} : vector<7x32xbf16>, vector<32x32xbf16>, vector<7x32xf32> -> vector<7x32xf32>
    %24 = vector.broadcast %10 : vector<1x32xf32> to vector<7x32xf32>
    %25 = arith.addf %23, %24 : vector<7x32xf32>
    %cst_28 = arith.constant 0.000000e+00 : f32
    %26 = vector.broadcast %cst_28 : f32 to vector<7x32xf32>
    %27 = arith.cmpf ogt, %25, %26 : vector<7x32xf32>
    %cst_29 = arith.constant 0.00999999977 : f32
    %28 = vector.broadcast %cst_29 : f32 to vector<7x32xf32>
    %29 = arith.mulf %28, %25 : vector<7x32xf32>
    %30 = arith.select %27, %25, %29 : vector<7x32xi1>, vector<7x32xf32>
    %31 = arith.truncf %30 : vector<7x32xf32> to vector<7x32xbf16>
    %cst_30 = arith.constant dense<0.000000e+00> : vector<7x32xf32>
    %32 = tpu.matmul %31, %11, %cst_30 {dimension_numbers = #tpu.dot_dimension_numbers<[1], [0], [0], [1], [0, 0, 1, 1], [], []>} : vector<7x32xbf16>, vector<32x32xbf16>, vector<7x32xf32> -> vector<7x32xf32>
    %33 = vector.broadcast %12 : vector<1x32xf32> to vector<7x32xf32>
    %34 = arith.addf %32, %33 : vector<7x32xf32>
    %c0_31 = arith.constant 0 : index
    %c0_32 = arith.constant 0 : index
    %35 = vector.load %arg2[%c0_31, %c0_32] : memref<10x4xf32, #tpu.memory_space<vmem>>, vector<10x4xf32>
    %c0_33 = arith.constant 0 : index
    %c0_34 = arith.constant 0 : index
    %36 = vector.load %arg24[%c0_33, %c0_34] : memref<4x32xbf16, #tpu.memory_space<vmem>>, vector<4x32xbf16>
    %c0_35 = arith.constant 0 : index
    %c0_36 = arith.constant 0 : index
    %37 = vector.load %arg25[%c0_35, %c0_36] : memref<1x32xf32, #tpu.memory_space<vmem>>, vector<1x32xf32>
    %c0_37 = arith.constant 0 : index
    %c0_38 = arith.constant 0 : index
    %38 = vector.load %arg26[%c0_37, %c0_38] : memref<32x32xbf16, #tpu.memory_space<vmem>>, vector<32x32xbf16>
    %c0_39 = arith.constant 0 : index
    %c0_40 = arith.constant 0 : index
    %39 = vector.load %arg27[%c0_39, %c0_40] : memref<1x32xf32, #tpu.memory_space<vmem>>, vector<1x32xf32>
    %c0_41 = arith.constant 0 : index
    %c0_42 = arith.constant 0 : index
    %40 = vector.load %arg28[%c0_41, %c0_42] : memref<32x32xbf16, #tpu.memory_space<vmem>>, vector<32x32xbf16>
    %c0_43 = arith.constant 0 : index
    %c0_44 = arith.constant 0 : index
    %41 = vector.load %arg29[%c0_43, %c0_44] : memref<1x32xf32, #tpu.memory_space<vmem>>, vector<1x32xf32>
    %42 = arith.truncf %35 : vector<10x4xf32> to vector<10x4xbf16>
    %cst_45 = arith.constant dense<0.000000e+00> : vector<10x32xf32>
    %43 = tpu.matmul %42, %36, %cst_45 {dimension_numbers = #tpu.dot_dimension_numbers<[1], [0], [0], [1], [0, 0, 1, 1], [], []>} : vector<10x4xbf16>, vector<4x32xbf16>, vector<10x32xf32> -> vector<10x32xf32>
    %44 = vector.broadcast %37 : vector<1x32xf32> to vector<10x32xf32>
    %45 = arith.addf %43, %44 : vector<10x32xf32>
    %cst_46 = arith.constant 0.000000e+00 : f32
    %46 = vector.broadcast %cst_46 : f32 to vector<10x32xf32>
    %47 = arith.cmpf ogt, %45, %46 : vector<10x32xf32>
    %cst_47 = arith.constant 0.00999999977 : f32
    %48 = vector.broadcast %cst_47 : f32 to vector<10x32xf32>
    %49 = arith.mulf %48, %45 : vector<10x32xf32>
    %50 = arith.select %47, %45, %49 : vector<10x32xi1>, vector<10x32xf32>
    %51 = arith.truncf %50 : vector<10x32xf32> to vector<10x32xbf16>
    %cst_48 = arith.constant dense<0.000000e+00> : vector<10x32xf32>
    %52 = tpu.matmul %51, %38, %cst_48 {dimension_numbers = #tpu.dot_dimension_numbers<[1], [0], [0], [1], [0, 0, 1, 1], [], []>} : vector<10x32xbf16>, vector<32x32xbf16>, vector<10x32xf32> -> vector<10x32xf32>
    %53 = vector.broadcast %39 : vector<1x32xf32> to vector<10x32xf32>
    %54 = arith.addf %52, %53 : vector<10x32xf32>
    %cst_49 = arith.constant 0.000000e+00 : f32
    %55 = vector.broadcast %cst_49 : f32 to vector<10x32xf32>
    %56 = arith.cmpf ogt, %54, %55 : vector<10x32xf32>
    %cst_50 = arith.constant 0.00999999977 : f32
    %57 = vector.broadcast %cst_50 : f32 to vector<10x32xf32>
    %58 = arith.mulf %57, %54 : vector<10x32xf32>
    %59 = arith.select %56, %54, %58 : vector<10x32xi1>, vector<10x32xf32>
    %60 = arith.truncf %59 : vector<10x32xf32> to vector<10x32xbf16>
    %cst_51 = arith.constant dense<0.000000e+00> : vector<10x32xf32>
    %61 = tpu.matmul %60, %40, %cst_51 {dimension_numbers = #tpu.dot_dimension_numbers<[1], [0], [0], [1], [0, 0, 1, 1], [], []>} : vector<10x32xbf16>, vector<32x32xbf16>, vector<10x32xf32> -> vector<10x32xf32>
    %62 = vector.broadcast %41 : vector<1x32xf32> to vector<10x32xf32>
    %63 = arith.addf %61, %62 : vector<10x32xf32>
    %c0_52 = arith.constant 0 : index
    %c0_53 = arith.constant 0 : index
    %64 = vector.load %arg3[%c0_52, %c0_53] : memref<2x16xf32, #tpu.memory_space<vmem>>, vector<2x16xf32>
    %c0_54 = arith.constant 0 : index
    %c0_55 = arith.constant 0 : index
    %65 = vector.load %arg30[%c0_54, %c0_55] : memref<16x32xbf16, #tpu.memory_space<vmem>>, vector<16x32xbf16>
    %c0_56 = arith.constant 0 : index
    %c0_57 = arith.constant 0 : index
    %66 = vector.load %arg31[%c0_56, %c0_57] : memref<1x32xf32, #tpu.memory_space<vmem>>, vector<1x32xf32>
    %c0_58 = arith.constant 0 : index
    %c0_59 = arith.constant 0 : index
    %67 = vector.load %arg32[%c0_58, %c0_59] : memref<32x32xbf16, #tpu.memory_space<vmem>>, vector<32x32xbf16>
    %c0_60 = arith.constant 0 : index
    %c0_61 = arith.constant 0 : index
    %68 = vector.load %arg33[%c0_60, %c0_61] : memref<1x32xf32, #tpu.memory_space<vmem>>, vector<1x32xf32>
    %c0_62 = arith.constant 0 : index
    %c0_63 = arith.constant 0 : index
    %69 = vector.load %arg34[%c0_62, %c0_63] : memref<32x32xbf16, #tpu.memory_space<vmem>>, vector<32x32xbf16>
    %c0_64 = arith.constant 0 : index
    %c0_65 = arith.constant 0 : index
    %70 = vector.load %arg35[%c0_64, %c0_65] : memref<1x32xf32, #tpu.memory_space<vmem>>, vector<1x32xf32>
    %71 = arith.truncf %64 : vector<2x16xf32> to vector<2x16xbf16>
    %cst_66 = arith.constant dense<0.000000e+00> : vector<2x32xf32>
    %72 = tpu.matmul %71, %65, %cst_66 {dimension_numbers = #tpu.dot_dimension_numbers<[1], [0], [0], [1], [0, 0, 1, 1], [], []>} : vector<2x16xbf16>, vector<16x32xbf16>, vector<2x32xf32> -> vector<2x32xf32>
    %73 = vector.broadcast %66 : vector<1x32xf32> to vector<2x32xf32>
    %74 = arith.addf %72, %73 : vector<2x32xf32>
    %cst_67 = arith.constant 0.000000e+00 : f32
    %75 = vector.broadcast %cst_67 : f32 to vector<2x32xf32>
    %76 = arith.cmpf ogt, %74, %75 : vector<2x32xf32>
    %cst_68 = arith.constant 0.00999999977 : f32
    %77 = vector.broadcast %cst_68 : f32 to vector<2x32xf32>
    %78 = arith.mulf %77, %74 : vector<2x32xf32>
    %79 = arith.select %76, %74, %78 : vector<2x32xi1>, vector<2x32xf32>
    %80 = arith.truncf %79 : vector<2x32xf32> to vector<2x32xbf16>
    %cst_69 = arith.constant dense<0.000000e+00> : vector<2x32xf32>
    %81 = tpu.matmul %80, %67, %cst_69 {dimension_numbers = #tpu.dot_dimension_numbers<[1], [0], [0], [1], [0, 0, 1, 1], [], []>} : vector<2x32xbf16>, vector<32x32xbf16>, vector<2x32xf32> -> vector<2x32xf32>
    %82 = vector.broadcast %68 : vector<1x32xf32> to vector<2x32xf32>
    %83 = arith.addf %81, %82 : vector<2x32xf32>
    %cst_70 = arith.constant 0.000000e+00 : f32
    %84 = vector.broadcast %cst_70 : f32 to vector<2x32xf32>
    %85 = arith.cmpf ogt, %83, %84 : vector<2x32xf32>
    %cst_71 = arith.constant 0.00999999977 : f32
    %86 = vector.broadcast %cst_71 : f32 to vector<2x32xf32>
    %87 = arith.mulf %86, %83 : vector<2x32xf32>
    %88 = arith.select %85, %83, %87 : vector<2x32xi1>, vector<2x32xf32>
    %89 = arith.truncf %88 : vector<2x32xf32> to vector<2x32xbf16>
    %cst_72 = arith.constant dense<0.000000e+00> : vector<2x32xf32>
    %90 = tpu.matmul %89, %69, %cst_72 {dimension_numbers = #tpu.dot_dimension_numbers<[1], [0], [0], [1], [0, 0, 1, 1], [], []>} : vector<2x32xbf16>, vector<32x32xbf16>, vector<2x32xf32> -> vector<2x32xf32>
    %91 = vector.broadcast %70 : vector<1x32xf32> to vector<2x32xf32>
    %92 = arith.addf %90, %91 : vector<2x32xf32>
    %c0_73 = arith.constant 0 : index
    %c0_74 = arith.constant 0 : index
    %93 = vector.load %arg11[%c0_73, %c0_74] : memref<9x7xf32, #tpu.memory_space<vmem>>, vector<9x7xf32>
    %cst_75 = arith.constant dense<0.000000e+00> : vector<9x32xf32>
    %94 = tpu.matmul %93, %34, %cst_75 {dimension_numbers = #tpu.dot_dimension_numbers<[1], [0], [0], [1], [0, 0, 1, 1], [], []>} : vector<9x7xf32>, vector<7x32xf32>, vector<9x32xf32> -> vector<9x32xf32>
    %c0_76 = arith.constant 0 : index
    %c0_77 = arith.constant 0 : index
    %95 = vector.load %arg12[%c0_76, %c0_77] : memref<9x2xf32, #tpu.memory_space<vmem>>, vector<9x2xf32>
    %cst_78 = arith.constant dense<0.000000e+00> : vector<9x32xf32>
    %96 = tpu.matmul %95, %92, %cst_78 {dimension_numbers = #tpu.dot_dimension_numbers<[1], [0], [0], [1], [0, 0, 1, 1], [], []>} : vector<9x2xf32>, vector<2x32xf32>, vector<9x32xf32> -> vector<9x32xf32>
    %97 = arith.addf %94, %96 : vector<9x32xf32>
    %c0_79 = arith.constant 0 : index
    %c0_80 = arith.constant 0 : index
    %98 = vector.load %arg9[%c0_79, %c0_80] : memref<33x10xf32, #tpu.memory_space<vmem>>, vector<33x10xf32>
    %cst_81 = arith.constant dense<0.000000e+00> : vector<33x32xf32>
    %99 = tpu.matmul %98, %63, %cst_81 {dimension_numbers = #tpu.dot_dimension_numbers<[1], [0], [0], [1], [0, 0, 1, 1], [], []>} : vector<33x10xf32>, vector<10x32xf32>, vector<33x32xf32> -> vector<33x32xf32>
    %c0_82 = arith.constant 0 : index
    %c0_83 = arith.constant 0 : index
    %100 = vector.load %arg10[%c0_82, %c0_83] : memref<33x32xf32, #tpu.memory_space<vmem>>, vector<33x32xf32>
    %101 = arith.addf %99, %100 : vector<33x32xf32>
    %cst_84 = arith.constant dense<0.000000e+00> : vector<33x32xf32>
    %102 = tpu.matmul %0, %97, %cst_84 {dimension_numbers = #tpu.dot_dimension_numbers<[1], [0], [0], [1], [0, 0, 1, 1], [], []>} : vector<33x9xf32>, vector<9x32xf32>, vector<33x32xf32> -> vector<33x32xf32>
    %103 = arith.addf %102, %101 : vector<33x32xf32>
    %cst_85 = arith.constant 0.000000e+00 : f32
    %104 = vector.broadcast %cst_85 : f32 to vector<33x32xf32>
    %105 = arith.maximumf %103, %104 : vector<33x32xf32>
    %cst_86 = arith.constant 1.000000e-07 : f32
    %106 = vector.broadcast %cst_86 : f32 to vector<33x32xf32>
    %107 = arith.addf %105, %106 : vector<33x32xf32>
    %cst_87 = arith.constant dense<0.000000e+00> : vector<9x32xf32>
    %108 = tpu.matmul %1, %107, %cst_87 {dimension_numbers = #tpu.dot_dimension_numbers<[0], [0], [1], [1], [0, 1, 1, 1], [], []>} : vector<33x9xf32>, vector<33x32xf32>, vector<9x32xf32> -> vector<9x32xf32>
    %c0_88 = arith.constant 0 : index
    %c0_89 = arith.constant 0 : index
    %c0_90 = arith.constant 0 : index
    %109 = vector.load %arg36[%c0_88, %c0_89, %c0_90] : memref<3x32x256xbf16, #tpu.memory_space<vmem>>, vector<1x32x256xbf16>
    %110 = vector.shape_cast %109 : vector<1x32x256xbf16> to vector<32x256xbf16>
    %111 = arith.truncf %97 : vector<9x32xf32> to vector<9x32xbf16>
    %cst_91 = arith.constant dense<0.000000e+00> : vector<9x256xf32>
    %112 = tpu.matmul %111, %110, %cst_91 {dimension_numbers = #tpu.dot_dimension_numbers<[1], [0], [0], [1], [0, 0, 1, 1], [], []>} : vector<9x32xbf16>, vector<32x256xbf16>, vector<9x256xf32> -> vector<9x256xf32>
    %113 = arith.addf %97, %108 : vector<9x32xf32>
    %c0_92 = arith.constant 0 : index
    %c0_93 = arith.constant 0 : index
    %c0_94 = arith.constant 0 : index
    %114 = vector.load %arg37[%c0_92, %c0_93, %c0_94] : memref<3x32x256xbf16, #tpu.memory_space<vmem>>, vector<1x32x256xbf16>
    %115 = vector.shape_cast %114 : vector<1x32x256xbf16> to vector<32x256xbf16>
    %116 = arith.truncf %113 : vector<9x32xf32> to vector<9x32xbf16>
    %cst_95 = arith.constant dense<0.000000e+00> : vector<9x256xf32>
    %117 = tpu.matmul %116, %115, %cst_95 {dimension_numbers = #tpu.dot_dimension_numbers<[1], [0], [0], [1], [0, 0, 1, 1], [], []>} : vector<9x32xbf16>, vector<32x256xbf16>, vector<9x256xf32> -> vector<9x256xf32>
    %118 = arith.addf %112, %117 : vector<9x256xf32>
    %c0_96 = arith.constant 0 : index
    %c0_97 = arith.constant 0 : index
    %c0_98 = arith.constant 0 : index
    %119 = vector.load %arg38[%c0_96, %c0_97, %c0_98] : memref<3x1x256xf32, #tpu.memory_space<vmem>>, vector<1x1x256xf32>
    %120 = vector.shape_cast %119 : vector<1x1x256xf32> to vector<1x256xf32>
    %121 = vector.broadcast %120 : vector<1x256xf32> to vector<9x256xf32>
    %122 = arith.addf %118, %121 : vector<9x256xf32>
    %c0_99 = arith.constant 0 : index
    %c0_100 = arith.constant 0 : index
    %c0_101 = arith.constant 0 : index
    %123 = vector.load %arg39[%c0_99, %c0_100, %c0_101] : memref<3x32x64xbf16, #tpu.memory_space<vmem>>, vector<1x32x64xbf16>
    %124 = vector.shape_cast %123 : vector<1x32x64xbf16> to vector<32x64xbf16>
    %125 = arith.truncf %101 : vector<33x32xf32> to vector<33x32xbf16>
    %cst_102 = arith.constant dense<0.000000e+00> : vector<33x64xf32>
    %126 = tpu.matmul %125, %124, %cst_102 {dimension_numbers = #tpu.dot_dimension_numbers<[1], [0], [0], [1], [0, 0, 1, 1], [], []>} : vector<33x32xbf16>, vector<32x64xbf16>, vector<33x64xf32> -> vector<33x64xf32>
    %127 = vector.extract_strided_slice %122 {offsets = [0, 0], sizes = [9, 64], strides = [1, 1]} : vector<9x256xf32> to vector<9x64xf32>
    %128 = vector.extract_strided_slice %122 {offsets = [0, 64], sizes = [9, 64], strides = [1, 1]} : vector<9x256xf32> to vector<9x64xf32>
    %129 = vector.extract_strided_slice %122 {offsets = [0, 128], sizes = [9, 64], strides = [1, 1]} : vector<9x256xf32> to vector<9x64xf32>
    %130 = vector.extract_strided_slice %122 {offsets = [0, 192], sizes = [9, 64], strides = [1, 1]} : vector<9x256xf32> to vector<9x64xf32>
    %cst_103 = arith.constant dense<0.000000e+00> : vector<33x64xf32>
    %131 = tpu.matmul %1, %127, %cst_103 {dimension_numbers = #tpu.dot_dimension_numbers<[1], [0], [0], [1], [0, 0, 1, 1], [], []>} : vector<33x9xf32>, vector<9x64xf32>, vector<33x64xf32> -> vector<33x64xf32>
    %cst_104 = arith.constant dense<0.000000e+00> : vector<33x64xf32>
    %132 = tpu.matmul %0, %128, %cst_104 {dimension_numbers = #tpu.dot_dimension_numbers<[1], [0], [0], [1], [0, 0, 1, 1], [], []>} : vector<33x9xf32>, vector<9x64xf32>, vector<33x64xf32> -> vector<33x64xf32>
    %133 = arith.addf %132, %126 : vector<33x64xf32>
    %cst_105 = arith.constant dense<0.000000e+00> : vector<33x64xf32>
    %134 = tpu.matmul %0, %129, %cst_105 {dimension_numbers = #tpu.dot_dimension_numbers<[1], [0], [0], [1], [0, 0, 1, 1], [], []>} : vector<33x9xf32>, vector<9x64xf32>, vector<33x64xf32> -> vector<33x64xf32>
    %135 = arith.addf %134, %126 : vector<33x64xf32>
    %136 = arith.mulf %131, %133 : vector<33x64xf32>
    %137 = vector.extract_strided_slice %5 {offsets = [0, 0], sizes = [1, 64], strides = [1, 1]} : vector<2x64xf32> to vector<1x64xf32>
    %138 = vector.broadcast %137 : vector<1x64xf32> to vector<33x64xf32>
    %139 = arith.mulf %136, %138 : vector<33x64xf32>
    %cst_106 = arith.constant dense<0.000000e+00> : vector<33xf32>
    %140 = vector.multi_reduction <add>, %139, %cst_106 [1] : vector<33x64xf32> to vector<33xf32>
    %141 = vector.shape_cast %140 : vector<33xf32> to vector<33x1xf32>
    %cst_107 = arith.constant 0.176776692 : f32
    %142 = vector.broadcast %cst_107 : f32 to vector<33x1xf32>
    %143 = arith.mulf %141, %142 : vector<33x1xf32>
    %144 = vector.broadcast %143 : vector<33x1xf32> to vector<33x9xf32>
    %145 = arith.addf %144, %2 : vector<33x9xf32>
    %cst_108 = arith.constant dense<0xFF800000> : vector<9xf32>
    %146 = vector.multi_reduction <maximumf>, %145, %cst_108 [0] : vector<33x9xf32> to vector<9xf32>
    %147 = vector.shape_cast %146 : vector<9xf32> to vector<1x9xf32>
    %148 = vector.broadcast %147 : vector<1x9xf32> to vector<33x9xf32>
    %149 = arith.mulf %1, %148 : vector<33x9xf32>
    %cst_109 = arith.constant dense<0.000000e+00> : vector<33xf32>
    %150 = vector.multi_reduction <add>, %149, %cst_109 [1] : vector<33x9xf32> to vector<33xf32>
    %151 = vector.shape_cast %150 : vector<33xf32> to vector<33x1xf32>
    %152 = arith.subf %143, %151 : vector<33x1xf32>
    %153 = math.exp %152 : vector<33x1xf32>
    %154 = vector.broadcast %153 : vector<33x1xf32> to vector<33x9xf32>
    %155 = arith.mulf %1, %154 : vector<33x9xf32>
    %cst_110 = arith.constant dense<0.000000e+00> : vector<9xf32>
    %156 = vector.multi_reduction <add>, %155, %cst_110 [0] : vector<33x9xf32> to vector<9xf32>
    %157 = vector.shape_cast %156 : vector<9xf32> to vector<1x9xf32>
    %cst_111 = arith.constant 1.000000e-16 : f32
    %158 = vector.broadcast %cst_111 : f32 to vector<1x9xf32>
    %159 = arith.addf %157, %158 : vector<1x9xf32>
    %160 = vector.broadcast %159 : vector<1x9xf32> to vector<33x9xf32>
    %161 = arith.mulf %1, %160 : vector<33x9xf32>
    %cst_112 = arith.constant dense<0.000000e+00> : vector<33xf32>
    %162 = vector.multi_reduction <add>, %161, %cst_112 [1] : vector<33x9xf32> to vector<33xf32>
    %163 = vector.shape_cast %162 : vector<33xf32> to vector<33x1xf32>
    %164 = arith.divf %153, %163 : vector<33x1xf32>
    %165 = vector.broadcast %164 : vector<33x1xf32> to vector<33x64xf32>
    %166 = vector.broadcast %137 : vector<1x64xf32> to vector<33x64xf32>
    %167 = arith.mulf %165, %166 : vector<33x64xf32>
    %168 = vector.extract_strided_slice %5 {offsets = [1, 0], sizes = [1, 64], strides = [1, 1]} : vector<2x64xf32> to vector<1x64xf32>
    %169 = vector.broadcast %168 : vector<1x64xf32> to vector<33x64xf32>
    %170 = arith.mulf %136, %169 : vector<33x64xf32>
    %cst_113 = arith.constant dense<0.000000e+00> : vector<33xf32>
    %171 = vector.multi_reduction <add>, %170, %cst_113 [1] : vector<33x64xf32> to vector<33xf32>
    %172 = vector.shape_cast %171 : vector<33xf32> to vector<33x1xf32>
    %cst_114 = arith.constant 0.176776692 : f32
    %173 = vector.broadcast %cst_114 : f32 to vector<33x1xf32>
    %174 = arith.mulf %172, %173 : vector<33x1xf32>
    %175 = vector.broadcast %174 : vector<33x1xf32> to vector<33x9xf32>
    %176 = arith.addf %175, %2 : vector<33x9xf32>
    %cst_115 = arith.constant dense<0xFF800000> : vector<9xf32>
    %177 = vector.multi_reduction <maximumf>, %176, %cst_115 [0] : vector<33x9xf32> to vector<9xf32>
    %178 = vector.shape_cast %177 : vector<9xf32> to vector<1x9xf32>
    %179 = vector.broadcast %178 : vector<1x9xf32> to vector<33x9xf32>
    %180 = arith.mulf %1, %179 : vector<33x9xf32>
    %cst_116 = arith.constant dense<0.000000e+00> : vector<33xf32>
    %181 = vector.multi_reduction <add>, %180, %cst_116 [1] : vector<33x9xf32> to vector<33xf32>
    %182 = vector.shape_cast %181 : vector<33xf32> to vector<33x1xf32>
    %183 = arith.subf %174, %182 : vector<33x1xf32>
    %184 = math.exp %183 : vector<33x1xf32>
    %185 = vector.broadcast %184 : vector<33x1xf32> to vector<33x9xf32>
    %186 = arith.mulf %1, %185 : vector<33x9xf32>
    %cst_117 = arith.constant dense<0.000000e+00> : vector<9xf32>
    %187 = vector.multi_reduction <add>, %186, %cst_117 [0] : vector<33x9xf32> to vector<9xf32>
    %188 = vector.shape_cast %187 : vector<9xf32> to vector<1x9xf32>
    %cst_118 = arith.constant 1.000000e-16 : f32
    %189 = vector.broadcast %cst_118 : f32 to vector<1x9xf32>
    %190 = arith.addf %188, %189 : vector<1x9xf32>
    %191 = vector.broadcast %190 : vector<1x9xf32> to vector<33x9xf32>
    %192 = arith.mulf %1, %191 : vector<33x9xf32>
    %cst_119 = arith.constant dense<0.000000e+00> : vector<33xf32>
    %193 = vector.multi_reduction <add>, %192, %cst_119 [1] : vector<33x9xf32> to vector<33xf32>
    %194 = vector.shape_cast %193 : vector<33xf32> to vector<33x1xf32>
    %195 = arith.divf %184, %194 : vector<33x1xf32>
    %196 = vector.broadcast %195 : vector<33x1xf32> to vector<33x64xf32>
    %197 = vector.broadcast %168 : vector<1x64xf32> to vector<33x64xf32>
    %198 = arith.mulf %196, %197 : vector<33x64xf32>
    %199 = arith.addf %167, %198 : vector<33x64xf32>
    %200 = arith.mulf %135, %199 : vector<33x64xf32>
    %cst_120 = arith.constant dense<0.000000e+00> : vector<9x64xf32>
    %201 = tpu.matmul %1, %200, %cst_120 {dimension_numbers = #tpu.dot_dimension_numbers<[0], [0], [1], [1], [0, 1, 1, 1], [], []>} : vector<33x9xf32>, vector<33x64xf32>, vector<9x64xf32> -> vector<9x64xf32>
    %202 = arith.addf %201, %130 : vector<9x64xf32>
    %c0_121 = arith.constant 0 : index
    %c0_122 = arith.constant 0 : index
    %c0_123 = arith.constant 0 : index
    %203 = vector.load %arg40[%c0_121, %c0_122, %c0_123] : memref<3x64x32xbf16, #tpu.memory_space<vmem>>, vector<1x64x32xbf16>
    %204 = vector.shape_cast %203 : vector<1x64x32xbf16> to vector<64x32xbf16>
    %205 = arith.truncf %202 : vector<9x64xf32> to vector<9x64xbf16>
    %cst_124 = arith.constant dense<0.000000e+00> : vector<9x32xf32>
    %206 = tpu.matmul %205, %204, %cst_124 {dimension_numbers = #tpu.dot_dimension_numbers<[1], [0], [0], [1], [0, 0, 1, 1], [], []>} : vector<9x64xbf16>, vector<64x32xbf16>, vector<9x32xf32> -> vector<9x32xf32>
    %c0_125 = arith.constant 0 : index
    %c0_126 = arith.constant 0 : index
    %c0_127 = arith.constant 0 : index
    %207 = vector.load %arg41[%c0_125, %c0_126, %c0_127] : memref<3x1x32xf32, #tpu.memory_space<vmem>>, vector<1x1x32xf32>
    %208 = vector.shape_cast %207 : vector<1x1x32xf32> to vector<1x32xf32>
    %209 = vector.broadcast %208 : vector<1x32xf32> to vector<9x32xf32>
    %210 = arith.addf %206, %209 : vector<9x32xf32>
    %211 = arith.addf %97, %210 : vector<9x32xf32>
    %cst_128 = arith.constant dense<0.000000e+00> : vector<2x32xf32>
    %212 = tpu.matmul %3, %211, %cst_128 {dimension_numbers = #tpu.dot_dimension_numbers<[0], [0], [1], [1], [0, 1, 1, 1], [], []>} : vector<9x2xf32>, vector<9x32xf32>, vector<2x32xf32> -> vector<2x32xf32>
    %cst_129 = arith.constant dense<0.000000e+00> : vector<2xf32>
    %213 = vector.multi_reduction <add>, %212, %cst_129 [1] : vector<2x32xf32> to vector<2xf32>
    %214 = vector.shape_cast %213 : vector<2xf32> to vector<2x1xf32>
    %215 = arith.mulf %214, %4 : vector<2x1xf32>
    %cst_130 = arith.constant dense<0.000000e+00> : vector<9x1xf32>
    %216 = tpu.matmul %3, %215, %cst_130 {dimension_numbers = #tpu.dot_dimension_numbers<[1], [0], [0], [1], [0, 0, 1, 1], [], []>} : vector<9x2xf32>, vector<2x1xf32>, vector<9x1xf32> -> vector<9x1xf32>
    %217 = vector.broadcast %216 : vector<9x1xf32> to vector<9x32xf32>
    %218 = arith.subf %211, %217 : vector<9x32xf32>
    %219 = arith.mulf %218, %218 : vector<9x32xf32>
    %cst_131 = arith.constant dense<0.000000e+00> : vector<2x32xf32>
    %220 = tpu.matmul %3, %219, %cst_131 {dimension_numbers = #tpu.dot_dimension_numbers<[0], [0], [1], [1], [0, 1, 1, 1], [], []>} : vector<9x2xf32>, vector<9x32xf32>, vector<2x32xf32> -> vector<2x32xf32>
    %cst_132 = arith.constant dense<0.000000e+00> : vector<2xf32>
    %221 = vector.multi_reduction <add>, %220, %cst_132 [1] : vector<2x32xf32> to vector<2xf32>
    %222 = vector.shape_cast %221 : vector<2xf32> to vector<2x1xf32>
    %223 = arith.mulf %222, %4 : vector<2x1xf32>
    %cst_133 = arith.constant 9.99999974E-6 : f32
    %224 = vector.broadcast %cst_133 : f32 to vector<2x1xf32>
    %225 = arith.addf %223, %224 : vector<2x1xf32>
    %226 = math.rsqrt %225 : vector<2x1xf32>
    %cst_134 = arith.constant dense<0.000000e+00> : vector<9x1xf32>
    %227 = tpu.matmul %3, %226, %cst_134 {dimension_numbers = #tpu.dot_dimension_numbers<[1], [0], [0], [1], [0, 0, 1, 1], [], []>} : vector<9x2xf32>, vector<2x1xf32>, vector<9x1xf32> -> vector<9x1xf32>
    %228 = vector.broadcast %227 : vector<9x1xf32> to vector<9x32xf32>
    %229 = arith.mulf %218, %228 : vector<9x32xf32>
    %c0_135 = arith.constant 0 : index
    %c0_136 = arith.constant 0 : index
    %c0_137 = arith.constant 0 : index
    %230 = vector.load %arg42[%c0_135, %c0_136, %c0_137] : memref<3x32x128xbf16, #tpu.memory_space<vmem>>, vector<1x32x128xbf16>
    %231 = vector.shape_cast %230 : vector<1x32x128xbf16> to vector<32x128xbf16>
    %232 = arith.truncf %229 : vector<9x32xf32> to vector<9x32xbf16>
    %cst_138 = arith.constant dense<0.000000e+00> : vector<9x128xf32>
    %233 = tpu.matmul %232, %231, %cst_138 {dimension_numbers = #tpu.dot_dimension_numbers<[1], [0], [0], [1], [0, 0, 1, 1], [], []>} : vector<9x32xbf16>, vector<32x128xbf16>, vector<9x128xf32> -> vector<9x128xf32>
    %c0_139 = arith.constant 0 : index
    %c0_140 = arith.constant 0 : index
    %c0_141 = arith.constant 0 : index
    %234 = vector.load %arg43[%c0_139, %c0_140, %c0_141] : memref<3x1x128xf32, #tpu.memory_space<vmem>>, vector<1x1x128xf32>
    %235 = vector.shape_cast %234 : vector<1x1x128xf32> to vector<1x128xf32>
    %236 = vector.broadcast %235 : vector<1x128xf32> to vector<9x128xf32>
    %237 = arith.addf %233, %236 : vector<9x128xf32>
    %cst_142 = arith.constant 0.000000e+00 : f32
    %238 = vector.broadcast %cst_142 : f32 to vector<9x128xf32>
    %239 = arith.cmpf ogt, %237, %238 : vector<9x128xf32>
    %cst_143 = arith.constant 0.00999999977 : f32
    %240 = vector.broadcast %cst_143 : f32 to vector<9x128xf32>
    %241 = arith.mulf %240, %237 : vector<9x128xf32>
    %242 = arith.select %239, %237, %241 : vector<9x128xi1>, vector<9x128xf32>
    %c0_144 = arith.constant 0 : index
    %c0_145 = arith.constant 0 : index
    %c0_146 = arith.constant 0 : index
    %243 = vector.load %arg44[%c0_144, %c0_145, %c0_146] : memref<3x128x32xbf16, #tpu.memory_space<vmem>>, vector<1x128x32xbf16>
    %244 = vector.shape_cast %243 : vector<1x128x32xbf16> to vector<128x32xbf16>
    %245 = arith.truncf %242 : vector<9x128xf32> to vector<9x128xbf16>
    %cst_147 = arith.constant dense<0.000000e+00> : vector<9x32xf32>
    %246 = tpu.matmul %245, %244, %cst_147 {dimension_numbers = #tpu.dot_dimension_numbers<[1], [0], [0], [1], [0, 0, 1, 1], [], []>} : vector<9x128xbf16>, vector<128x32xbf16>, vector<9x32xf32> -> vector<9x32xf32>
    %c0_148 = arith.constant 0 : index
    %c0_149 = arith.constant 0 : index
    %c0_150 = arith.constant 0 : index
    %247 = vector.load %arg45[%c0_148, %c0_149, %c0_150] : memref<3x1x32xf32, #tpu.memory_space<vmem>>, vector<1x1x32xf32>
    %248 = vector.shape_cast %247 : vector<1x1x32xf32> to vector<1x32xf32>
    %249 = vector.broadcast %248 : vector<1x32xf32> to vector<9x32xf32>
    %250 = arith.addf %246, %249 : vector<9x32xf32>
    %251 = arith.addf %229, %250 : vector<9x32xf32>
    %cst_151 = arith.constant dense<0.000000e+00> : vector<2x32xf32>
    %252 = tpu.matmul %3, %251, %cst_151 {dimension_numbers = #tpu.dot_dimension_numbers<[0], [0], [1], [1], [0, 1, 1, 1], [], []>} : vector<9x2xf32>, vector<9x32xf32>, vector<2x32xf32> -> vector<2x32xf32>
    %cst_152 = arith.constant dense<0.000000e+00> : vector<2xf32>
    %253 = vector.multi_reduction <add>, %252, %cst_152 [1] : vector<2x32xf32> to vector<2xf32>
    %254 = vector.shape_cast %253 : vector<2xf32> to vector<2x1xf32>
    %255 = arith.mulf %254, %4 : vector<2x1xf32>
    %cst_153 = arith.constant dense<0.000000e+00> : vector<9x1xf32>
    %256 = tpu.matmul %3, %255, %cst_153 {dimension_numbers = #tpu.dot_dimension_numbers<[1], [0], [0], [1], [0, 0, 1, 1], [], []>} : vector<9x2xf32>, vector<2x1xf32>, vector<9x1xf32> -> vector<9x1xf32>
    %257 = vector.broadcast %256 : vector<9x1xf32> to vector<9x32xf32>
    %258 = arith.subf %251, %257 : vector<9x32xf32>
    %259 = arith.mulf %258, %258 : vector<9x32xf32>
    %cst_154 = arith.constant dense<0.000000e+00> : vector<2x32xf32>
    %260 = tpu.matmul %3, %259, %cst_154 {dimension_numbers = #tpu.dot_dimension_numbers<[0], [0], [1], [1], [0, 1, 1, 1], [], []>} : vector<9x2xf32>, vector<9x32xf32>, vector<2x32xf32> -> vector<2x32xf32>
    %cst_155 = arith.constant dense<0.000000e+00> : vector<2xf32>
    %261 = vector.multi_reduction <add>, %260, %cst_155 [1] : vector<2x32xf32> to vector<2xf32>
    %262 = vector.shape_cast %261 : vector<2xf32> to vector<2x1xf32>
    %263 = arith.mulf %262, %4 : vector<2x1xf32>
    %cst_156 = arith.constant 9.99999974E-6 : f32
    %264 = vector.broadcast %cst_156 : f32 to vector<2x1xf32>
    %265 = arith.addf %263, %264 : vector<2x1xf32>
    %266 = math.rsqrt %265 : vector<2x1xf32>
    %cst_157 = arith.constant dense<0.000000e+00> : vector<9x1xf32>
    %267 = tpu.matmul %3, %266, %cst_157 {dimension_numbers = #tpu.dot_dimension_numbers<[1], [0], [0], [1], [0, 0, 1, 1], [], []>} : vector<9x2xf32>, vector<2x1xf32>, vector<9x1xf32> -> vector<9x1xf32>
    %268 = vector.broadcast %267 : vector<9x1xf32> to vector<9x32xf32>
    %269 = arith.mulf %258, %268 : vector<9x32xf32>
    %cst_158 = arith.constant dense<0.000000e+00> : vector<33x32xf32>
    %270 = tpu.matmul %0, %269, %cst_158 {dimension_numbers = #tpu.dot_dimension_numbers<[1], [0], [0], [1], [0, 0, 1, 1], [], []>} : vector<33x9xf32>, vector<9x32xf32>, vector<33x32xf32> -> vector<33x32xf32>
    %271 = arith.addf %270, %101 : vector<33x32xf32>
    %cst_159 = arith.constant 0.000000e+00 : f32
    %272 = vector.broadcast %cst_159 : f32 to vector<33x32xf32>
    %273 = arith.maximumf %271, %272 : vector<33x32xf32>
    %cst_160 = arith.constant 1.000000e-07 : f32
    %274 = vector.broadcast %cst_160 : f32 to vector<33x32xf32>
    %275 = arith.addf %273, %274 : vector<33x32xf32>
    %cst_161 = arith.constant dense<0.000000e+00> : vector<9x32xf32>
    %276 = tpu.matmul %1, %275, %cst_161 {dimension_numbers = #tpu.dot_dimension_numbers<[0], [0], [1], [1], [0, 1, 1, 1], [], []>} : vector<33x9xf32>, vector<33x32xf32>, vector<9x32xf32> -> vector<9x32xf32>
    %c1 = arith.constant 1 : index
    %c0_162 = arith.constant 0 : index
    %c0_163 = arith.constant 0 : index
    %277 = vector.load %arg36[%c1, %c0_162, %c0_163] : memref<3x32x256xbf16, #tpu.memory_space<vmem>>, vector<1x32x256xbf16>
    %278 = vector.shape_cast %277 : vector<1x32x256xbf16> to vector<32x256xbf16>
    %279 = arith.truncf %269 : vector<9x32xf32> to vector<9x32xbf16>
    %cst_164 = arith.constant dense<0.000000e+00> : vector<9x256xf32>
    %280 = tpu.matmul %279, %278, %cst_164 {dimension_numbers = #tpu.dot_dimension_numbers<[1], [0], [0], [1], [0, 0, 1, 1], [], []>} : vector<9x32xbf16>, vector<32x256xbf16>, vector<9x256xf32> -> vector<9x256xf32>
    %281 = arith.addf %269, %276 : vector<9x32xf32>
    %c1_165 = arith.constant 1 : index
    %c0_166 = arith.constant 0 : index
    %c0_167 = arith.constant 0 : index
    %282 = vector.load %arg37[%c1_165, %c0_166, %c0_167] : memref<3x32x256xbf16, #tpu.memory_space<vmem>>, vector<1x32x256xbf16>
    %283 = vector.shape_cast %282 : vector<1x32x256xbf16> to vector<32x256xbf16>
    %284 = arith.truncf %281 : vector<9x32xf32> to vector<9x32xbf16>
    %cst_168 = arith.constant dense<0.000000e+00> : vector<9x256xf32>
    %285 = tpu.matmul %284, %283, %cst_168 {dimension_numbers = #tpu.dot_dimension_numbers<[1], [0], [0], [1], [0, 0, 1, 1], [], []>} : vector<9x32xbf16>, vector<32x256xbf16>, vector<9x256xf32> -> vector<9x256xf32>
    %286 = arith.addf %280, %285 : vector<9x256xf32>
    %c1_169 = arith.constant 1 : index
    %c0_170 = arith.constant 0 : index
    %c0_171 = arith.constant 0 : index
    %287 = vector.load %arg38[%c1_169, %c0_170, %c0_171] : memref<3x1x256xf32, #tpu.memory_space<vmem>>, vector<1x1x256xf32>
    %288 = vector.shape_cast %287 : vector<1x1x256xf32> to vector<1x256xf32>
    %289 = vector.broadcast %288 : vector<1x256xf32> to vector<9x256xf32>
    %290 = arith.addf %286, %289 : vector<9x256xf32>
    %c1_172 = arith.constant 1 : index
    %c0_173 = arith.constant 0 : index
    %c0_174 = arith.constant 0 : index
    %291 = vector.load %arg39[%c1_172, %c0_173, %c0_174] : memref<3x32x64xbf16, #tpu.memory_space<vmem>>, vector<1x32x64xbf16>
    %292 = vector.shape_cast %291 : vector<1x32x64xbf16> to vector<32x64xbf16>
    %293 = arith.truncf %101 : vector<33x32xf32> to vector<33x32xbf16>
    %cst_175 = arith.constant dense<0.000000e+00> : vector<33x64xf32>
    %294 = tpu.matmul %293, %292, %cst_175 {dimension_numbers = #tpu.dot_dimension_numbers<[1], [0], [0], [1], [0, 0, 1, 1], [], []>} : vector<33x32xbf16>, vector<32x64xbf16>, vector<33x64xf32> -> vector<33x64xf32>
    %295 = vector.extract_strided_slice %290 {offsets = [0, 0], sizes = [9, 64], strides = [1, 1]} : vector<9x256xf32> to vector<9x64xf32>
    %296 = vector.extract_strided_slice %290 {offsets = [0, 64], sizes = [9, 64], strides = [1, 1]} : vector<9x256xf32> to vector<9x64xf32>
    %297 = vector.extract_strided_slice %290 {offsets = [0, 128], sizes = [9, 64], strides = [1, 1]} : vector<9x256xf32> to vector<9x64xf32>
    %298 = vector.extract_strided_slice %290 {offsets = [0, 192], sizes = [9, 64], strides = [1, 1]} : vector<9x256xf32> to vector<9x64xf32>
    %cst_176 = arith.constant dense<0.000000e+00> : vector<33x64xf32>
    %299 = tpu.matmul %1, %295, %cst_176 {dimension_numbers = #tpu.dot_dimension_numbers<[1], [0], [0], [1], [0, 0, 1, 1], [], []>} : vector<33x9xf32>, vector<9x64xf32>, vector<33x64xf32> -> vector<33x64xf32>
    %cst_177 = arith.constant dense<0.000000e+00> : vector<33x64xf32>
    %300 = tpu.matmul %0, %296, %cst_177 {dimension_numbers = #tpu.dot_dimension_numbers<[1], [0], [0], [1], [0, 0, 1, 1], [], []>} : vector<33x9xf32>, vector<9x64xf32>, vector<33x64xf32> -> vector<33x64xf32>
    %301 = arith.addf %300, %294 : vector<33x64xf32>
    %cst_178 = arith.constant dense<0.000000e+00> : vector<33x64xf32>
    %302 = tpu.matmul %0, %297, %cst_178 {dimension_numbers = #tpu.dot_dimension_numbers<[1], [0], [0], [1], [0, 0, 1, 1], [], []>} : vector<33x9xf32>, vector<9x64xf32>, vector<33x64xf32> -> vector<33x64xf32>
    %303 = arith.addf %302, %294 : vector<33x64xf32>
    %304 = arith.mulf %299, %301 : vector<33x64xf32>
    %305 = vector.extract_strided_slice %5 {offsets = [0, 0], sizes = [1, 64], strides = [1, 1]} : vector<2x64xf32> to vector<1x64xf32>
    %306 = vector.broadcast %305 : vector<1x64xf32> to vector<33x64xf32>
    %307 = arith.mulf %304, %306 : vector<33x64xf32>
    %cst_179 = arith.constant dense<0.000000e+00> : vector<33xf32>
    %308 = vector.multi_reduction <add>, %307, %cst_179 [1] : vector<33x64xf32> to vector<33xf32>
    %309 = vector.shape_cast %308 : vector<33xf32> to vector<33x1xf32>
    %cst_180 = arith.constant 0.176776692 : f32
    %310 = vector.broadcast %cst_180 : f32 to vector<33x1xf32>
    %311 = arith.mulf %309, %310 : vector<33x1xf32>
    %312 = vector.broadcast %311 : vector<33x1xf32> to vector<33x9xf32>
    %313 = arith.addf %312, %2 : vector<33x9xf32>
    %cst_181 = arith.constant dense<0xFF800000> : vector<9xf32>
    %314 = vector.multi_reduction <maximumf>, %313, %cst_181 [0] : vector<33x9xf32> to vector<9xf32>
    %315 = vector.shape_cast %314 : vector<9xf32> to vector<1x9xf32>
    %316 = vector.broadcast %315 : vector<1x9xf32> to vector<33x9xf32>
    %317 = arith.mulf %1, %316 : vector<33x9xf32>
    %cst_182 = arith.constant dense<0.000000e+00> : vector<33xf32>
    %318 = vector.multi_reduction <add>, %317, %cst_182 [1] : vector<33x9xf32> to vector<33xf32>
    %319 = vector.shape_cast %318 : vector<33xf32> to vector<33x1xf32>
    %320 = arith.subf %311, %319 : vector<33x1xf32>
    %321 = math.exp %320 : vector<33x1xf32>
    %322 = vector.broadcast %321 : vector<33x1xf32> to vector<33x9xf32>
    %323 = arith.mulf %1, %322 : vector<33x9xf32>
    %cst_183 = arith.constant dense<0.000000e+00> : vector<9xf32>
    %324 = vector.multi_reduction <add>, %323, %cst_183 [0] : vector<33x9xf32> to vector<9xf32>
    %325 = vector.shape_cast %324 : vector<9xf32> to vector<1x9xf32>
    %cst_184 = arith.constant 1.000000e-16 : f32
    %326 = vector.broadcast %cst_184 : f32 to vector<1x9xf32>
    %327 = arith.addf %325, %326 : vector<1x9xf32>
    %328 = vector.broadcast %327 : vector<1x9xf32> to vector<33x9xf32>
    %329 = arith.mulf %1, %328 : vector<33x9xf32>
    %cst_185 = arith.constant dense<0.000000e+00> : vector<33xf32>
    %330 = vector.multi_reduction <add>, %329, %cst_185 [1] : vector<33x9xf32> to vector<33xf32>
    %331 = vector.shape_cast %330 : vector<33xf32> to vector<33x1xf32>
    %332 = arith.divf %321, %331 : vector<33x1xf32>
    %333 = vector.broadcast %332 : vector<33x1xf32> to vector<33x64xf32>
    %334 = vector.broadcast %305 : vector<1x64xf32> to vector<33x64xf32>
    %335 = arith.mulf %333, %334 : vector<33x64xf32>
    %336 = vector.extract_strided_slice %5 {offsets = [1, 0], sizes = [1, 64], strides = [1, 1]} : vector<2x64xf32> to vector<1x64xf32>
    %337 = vector.broadcast %336 : vector<1x64xf32> to vector<33x64xf32>
    %338 = arith.mulf %304, %337 : vector<33x64xf32>
    %cst_186 = arith.constant dense<0.000000e+00> : vector<33xf32>
    %339 = vector.multi_reduction <add>, %338, %cst_186 [1] : vector<33x64xf32> to vector<33xf32>
    %340 = vector.shape_cast %339 : vector<33xf32> to vector<33x1xf32>
    %cst_187 = arith.constant 0.176776692 : f32
    %341 = vector.broadcast %cst_187 : f32 to vector<33x1xf32>
    %342 = arith.mulf %340, %341 : vector<33x1xf32>
    %343 = vector.broadcast %342 : vector<33x1xf32> to vector<33x9xf32>
    %344 = arith.addf %343, %2 : vector<33x9xf32>
    %cst_188 = arith.constant dense<0xFF800000> : vector<9xf32>
    %345 = vector.multi_reduction <maximumf>, %344, %cst_188 [0] : vector<33x9xf32> to vector<9xf32>
    %346 = vector.shape_cast %345 : vector<9xf32> to vector<1x9xf32>
    %347 = vector.broadcast %346 : vector<1x9xf32> to vector<33x9xf32>
    %348 = arith.mulf %1, %347 : vector<33x9xf32>
    %cst_189 = arith.constant dense<0.000000e+00> : vector<33xf32>
    %349 = vector.multi_reduction <add>, %348, %cst_189 [1] : vector<33x9xf32> to vector<33xf32>
    %350 = vector.shape_cast %349 : vector<33xf32> to vector<33x1xf32>
    %351 = arith.subf %342, %350 : vector<33x1xf32>
    %352 = math.exp %351 : vector<33x1xf32>
    %353 = vector.broadcast %352 : vector<33x1xf32> to vector<33x9xf32>
    %354 = arith.mulf %1, %353 : vector<33x9xf32>
    %cst_190 = arith.constant dense<0.000000e+00> : vector<9xf32>
    %355 = vector.multi_reduction <add>, %354, %cst_190 [0] : vector<33x9xf32> to vector<9xf32>
    %356 = vector.shape_cast %355 : vector<9xf32> to vector<1x9xf32>
    %cst_191 = arith.constant 1.000000e-16 : f32
    %357 = vector.broadcast %cst_191 : f32 to vector<1x9xf32>
    %358 = arith.addf %356, %357 : vector<1x9xf32>
    %359 = vector.broadcast %358 : vector<1x9xf32> to vector<33x9xf32>
    %360 = arith.mulf %1, %359 : vector<33x9xf32>
    %cst_192 = arith.constant dense<0.000000e+00> : vector<33xf32>
    %361 = vector.multi_reduction <add>, %360, %cst_192 [1] : vector<33x9xf32> to vector<33xf32>
    %362 = vector.shape_cast %361 : vector<33xf32> to vector<33x1xf32>
    %363 = arith.divf %352, %362 : vector<33x1xf32>
    %364 = vector.broadcast %363 : vector<33x1xf32> to vector<33x64xf32>
    %365 = vector.broadcast %336 : vector<1x64xf32> to vector<33x64xf32>
    %366 = arith.mulf %364, %365 : vector<33x64xf32>
    %367 = arith.addf %335, %366 : vector<33x64xf32>
    %368 = arith.mulf %303, %367 : vector<33x64xf32>
    %cst_193 = arith.constant dense<0.000000e+00> : vector<9x64xf32>
    %369 = tpu.matmul %1, %368, %cst_193 {dimension_numbers = #tpu.dot_dimension_numbers<[0], [0], [1], [1], [0, 1, 1, 1], [], []>} : vector<33x9xf32>, vector<33x64xf32>, vector<9x64xf32> -> vector<9x64xf32>
    %370 = arith.addf %369, %298 : vector<9x64xf32>
    %c1_194 = arith.constant 1 : index
    %c0_195 = arith.constant 0 : index
    %c0_196 = arith.constant 0 : index
    %371 = vector.load %arg40[%c1_194, %c0_195, %c0_196] : memref<3x64x32xbf16, #tpu.memory_space<vmem>>, vector<1x64x32xbf16>
    %372 = vector.shape_cast %371 : vector<1x64x32xbf16> to vector<64x32xbf16>
    %373 = arith.truncf %370 : vector<9x64xf32> to vector<9x64xbf16>
    %cst_197 = arith.constant dense<0.000000e+00> : vector<9x32xf32>
    %374 = tpu.matmul %373, %372, %cst_197 {dimension_numbers = #tpu.dot_dimension_numbers<[1], [0], [0], [1], [0, 0, 1, 1], [], []>} : vector<9x64xbf16>, vector<64x32xbf16>, vector<9x32xf32> -> vector<9x32xf32>
    %c1_198 = arith.constant 1 : index
    %c0_199 = arith.constant 0 : index
    %c0_200 = arith.constant 0 : index
    %375 = vector.load %arg41[%c1_198, %c0_199, %c0_200] : memref<3x1x32xf32, #tpu.memory_space<vmem>>, vector<1x1x32xf32>
    %376 = vector.shape_cast %375 : vector<1x1x32xf32> to vector<1x32xf32>
    %377 = vector.broadcast %376 : vector<1x32xf32> to vector<9x32xf32>
    %378 = arith.addf %374, %377 : vector<9x32xf32>
    %379 = arith.addf %269, %378 : vector<9x32xf32>
    %cst_201 = arith.constant dense<0.000000e+00> : vector<2x32xf32>
    %380 = tpu.matmul %3, %379, %cst_201 {dimension_numbers = #tpu.dot_dimension_numbers<[0], [0], [1], [1], [0, 1, 1, 1], [], []>} : vector<9x2xf32>, vector<9x32xf32>, vector<2x32xf32> -> vector<2x32xf32>
    %cst_202 = arith.constant dense<0.000000e+00> : vector<2xf32>
    %381 = vector.multi_reduction <add>, %380, %cst_202 [1] : vector<2x32xf32> to vector<2xf32>
    %382 = vector.shape_cast %381 : vector<2xf32> to vector<2x1xf32>
    %383 = arith.mulf %382, %4 : vector<2x1xf32>
    %cst_203 = arith.constant dense<0.000000e+00> : vector<9x1xf32>
    %384 = tpu.matmul %3, %383, %cst_203 {dimension_numbers = #tpu.dot_dimension_numbers<[1], [0], [0], [1], [0, 0, 1, 1], [], []>} : vector<9x2xf32>, vector<2x1xf32>, vector<9x1xf32> -> vector<9x1xf32>
    %385 = vector.broadcast %384 : vector<9x1xf32> to vector<9x32xf32>
    %386 = arith.subf %379, %385 : vector<9x32xf32>
    %387 = arith.mulf %386, %386 : vector<9x32xf32>
    %cst_204 = arith.constant dense<0.000000e+00> : vector<2x32xf32>
    %388 = tpu.matmul %3, %387, %cst_204 {dimension_numbers = #tpu.dot_dimension_numbers<[0], [0], [1], [1], [0, 1, 1, 1], [], []>} : vector<9x2xf32>, vector<9x32xf32>, vector<2x32xf32> -> vector<2x32xf32>
    %cst_205 = arith.constant dense<0.000000e+00> : vector<2xf32>
    %389 = vector.multi_reduction <add>, %388, %cst_205 [1] : vector<2x32xf32> to vector<2xf32>
    %390 = vector.shape_cast %389 : vector<2xf32> to vector<2x1xf32>
    %391 = arith.mulf %390, %4 : vector<2x1xf32>
    %cst_206 = arith.constant 9.99999974E-6 : f32
    %392 = vector.broadcast %cst_206 : f32 to vector<2x1xf32>
    %393 = arith.addf %391, %392 : vector<2x1xf32>
    %394 = math.rsqrt %393 : vector<2x1xf32>
    %cst_207 = arith.constant dense<0.000000e+00> : vector<9x1xf32>
    %395 = tpu.matmul %3, %394, %cst_207 {dimension_numbers = #tpu.dot_dimension_numbers<[1], [0], [0], [1], [0, 0, 1, 1], [], []>} : vector<9x2xf32>, vector<2x1xf32>, vector<9x1xf32> -> vector<9x1xf32>
    %396 = vector.broadcast %395 : vector<9x1xf32> to vector<9x32xf32>
    %397 = arith.mulf %386, %396 : vector<9x32xf32>
    %c1_208 = arith.constant 1 : index
    %c0_209 = arith.constant 0 : index
    %c0_210 = arith.constant 0 : index
    %398 = vector.load %arg42[%c1_208, %c0_209, %c0_210] : memref<3x32x128xbf16, #tpu.memory_space<vmem>>, vector<1x32x128xbf16>
    %399 = vector.shape_cast %398 : vector<1x32x128xbf16> to vector<32x128xbf16>
    %400 = arith.truncf %397 : vector<9x32xf32> to vector<9x32xbf16>
    %cst_211 = arith.constant dense<0.000000e+00> : vector<9x128xf32>
    %401 = tpu.matmul %400, %399, %cst_211 {dimension_numbers = #tpu.dot_dimension_numbers<[1], [0], [0], [1], [0, 0, 1, 1], [], []>} : vector<9x32xbf16>, vector<32x128xbf16>, vector<9x128xf32> -> vector<9x128xf32>
    %c1_212 = arith.constant 1 : index
    %c0_213 = arith.constant 0 : index
    %c0_214 = arith.constant 0 : index
    %402 = vector.load %arg43[%c1_212, %c0_213, %c0_214] : memref<3x1x128xf32, #tpu.memory_space<vmem>>, vector<1x1x128xf32>
    %403 = vector.shape_cast %402 : vector<1x1x128xf32> to vector<1x128xf32>
    %404 = vector.broadcast %403 : vector<1x128xf32> to vector<9x128xf32>
    %405 = arith.addf %401, %404 : vector<9x128xf32>
    %cst_215 = arith.constant 0.000000e+00 : f32
    %406 = vector.broadcast %cst_215 : f32 to vector<9x128xf32>
    %407 = arith.cmpf ogt, %405, %406 : vector<9x128xf32>
    %cst_216 = arith.constant 0.00999999977 : f32
    %408 = vector.broadcast %cst_216 : f32 to vector<9x128xf32>
    %409 = arith.mulf %408, %405 : vector<9x128xf32>
    %410 = arith.select %407, %405, %409 : vector<9x128xi1>, vector<9x128xf32>
    %c1_217 = arith.constant 1 : index
    %c0_218 = arith.constant 0 : index
    %c0_219 = arith.constant 0 : index
    %411 = vector.load %arg44[%c1_217, %c0_218, %c0_219] : memref<3x128x32xbf16, #tpu.memory_space<vmem>>, vector<1x128x32xbf16>
    %412 = vector.shape_cast %411 : vector<1x128x32xbf16> to vector<128x32xbf16>
    %413 = arith.truncf %410 : vector<9x128xf32> to vector<9x128xbf16>
    %cst_220 = arith.constant dense<0.000000e+00> : vector<9x32xf32>
    %414 = tpu.matmul %413, %412, %cst_220 {dimension_numbers = #tpu.dot_dimension_numbers<[1], [0], [0], [1], [0, 0, 1, 1], [], []>} : vector<9x128xbf16>, vector<128x32xbf16>, vector<9x32xf32> -> vector<9x32xf32>
    %c1_221 = arith.constant 1 : index
    %c0_222 = arith.constant 0 : index
    %c0_223 = arith.constant 0 : index
    %415 = vector.load %arg45[%c1_221, %c0_222, %c0_223] : memref<3x1x32xf32, #tpu.memory_space<vmem>>, vector<1x1x32xf32>
    %416 = vector.shape_cast %415 : vector<1x1x32xf32> to vector<1x32xf32>
    %417 = vector.broadcast %416 : vector<1x32xf32> to vector<9x32xf32>
    %418 = arith.addf %414, %417 : vector<9x32xf32>
    %419 = arith.addf %397, %418 : vector<9x32xf32>
    %cst_224 = arith.constant dense<0.000000e+00> : vector<2x32xf32>
    %420 = tpu.matmul %3, %419, %cst_224 {dimension_numbers = #tpu.dot_dimension_numbers<[0], [0], [1], [1], [0, 1, 1, 1], [], []>} : vector<9x2xf32>, vector<9x32xf32>, vector<2x32xf32> -> vector<2x32xf32>
    %cst_225 = arith.constant dense<0.000000e+00> : vector<2xf32>
    %421 = vector.multi_reduction <add>, %420, %cst_225 [1] : vector<2x32xf32> to vector<2xf32>
    %422 = vector.shape_cast %421 : vector<2xf32> to vector<2x1xf32>
    %423 = arith.mulf %422, %4 : vector<2x1xf32>
    %cst_226 = arith.constant dense<0.000000e+00> : vector<9x1xf32>
    %424 = tpu.matmul %3, %423, %cst_226 {dimension_numbers = #tpu.dot_dimension_numbers<[1], [0], [0], [1], [0, 0, 1, 1], [], []>} : vector<9x2xf32>, vector<2x1xf32>, vector<9x1xf32> -> vector<9x1xf32>
    %425 = vector.broadcast %424 : vector<9x1xf32> to vector<9x32xf32>
    %426 = arith.subf %419, %425 : vector<9x32xf32>
    %427 = arith.mulf %426, %426 : vector<9x32xf32>
    %cst_227 = arith.constant dense<0.000000e+00> : vector<2x32xf32>
    %428 = tpu.matmul %3, %427, %cst_227 {dimension_numbers = #tpu.dot_dimension_numbers<[0], [0], [1], [1], [0, 1, 1, 1], [], []>} : vector<9x2xf32>, vector<9x32xf32>, vector<2x32xf32> -> vector<2x32xf32>
    %cst_228 = arith.constant dense<0.000000e+00> : vector<2xf32>
    %429 = vector.multi_reduction <add>, %428, %cst_228 [1] : vector<2x32xf32> to vector<2xf32>
    %430 = vector.shape_cast %429 : vector<2xf32> to vector<2x1xf32>
    %431 = arith.mulf %430, %4 : vector<2x1xf32>
    %cst_229 = arith.constant 9.99999974E-6 : f32
    %432 = vector.broadcast %cst_229 : f32 to vector<2x1xf32>
    %433 = arith.addf %431, %432 : vector<2x1xf32>
    %434 = math.rsqrt %433 : vector<2x1xf32>
    %cst_230 = arith.constant dense<0.000000e+00> : vector<9x1xf32>
    %435 = tpu.matmul %3, %434, %cst_230 {dimension_numbers = #tpu.dot_dimension_numbers<[1], [0], [0], [1], [0, 0, 1, 1], [], []>} : vector<9x2xf32>, vector<2x1xf32>, vector<9x1xf32> -> vector<9x1xf32>
    %436 = vector.broadcast %435 : vector<9x1xf32> to vector<9x32xf32>
    %437 = arith.mulf %426, %436 : vector<9x32xf32>
    %cst_231 = arith.constant dense<0.000000e+00> : vector<33x32xf32>
    %438 = tpu.matmul %0, %437, %cst_231 {dimension_numbers = #tpu.dot_dimension_numbers<[1], [0], [0], [1], [0, 0, 1, 1], [], []>} : vector<33x9xf32>, vector<9x32xf32>, vector<33x32xf32> -> vector<33x32xf32>
    %439 = arith.addf %438, %101 : vector<33x32xf32>
    %cst_232 = arith.constant 0.000000e+00 : f32
    %440 = vector.broadcast %cst_232 : f32 to vector<33x32xf32>
    %441 = arith.maximumf %439, %440 : vector<33x32xf32>
    %cst_233 = arith.constant 1.000000e-07 : f32
    %442 = vector.broadcast %cst_233 : f32 to vector<33x32xf32>
    %443 = arith.addf %441, %442 : vector<33x32xf32>
    %cst_234 = arith.constant dense<0.000000e+00> : vector<9x32xf32>
    %444 = tpu.matmul %1, %443, %cst_234 {dimension_numbers = #tpu.dot_dimension_numbers<[0], [0], [1], [1], [0, 1, 1, 1], [], []>} : vector<33x9xf32>, vector<33x32xf32>, vector<9x32xf32> -> vector<9x32xf32>
    %c2 = arith.constant 2 : index
    %c0_235 = arith.constant 0 : index
    %c0_236 = arith.constant 0 : index
    %445 = vector.load %arg36[%c2, %c0_235, %c0_236] : memref<3x32x256xbf16, #tpu.memory_space<vmem>>, vector<1x32x256xbf16>
    %446 = vector.shape_cast %445 : vector<1x32x256xbf16> to vector<32x256xbf16>
    %447 = arith.truncf %437 : vector<9x32xf32> to vector<9x32xbf16>
    %cst_237 = arith.constant dense<0.000000e+00> : vector<9x256xf32>
    %448 = tpu.matmul %447, %446, %cst_237 {dimension_numbers = #tpu.dot_dimension_numbers<[1], [0], [0], [1], [0, 0, 1, 1], [], []>} : vector<9x32xbf16>, vector<32x256xbf16>, vector<9x256xf32> -> vector<9x256xf32>
    %449 = arith.addf %437, %444 : vector<9x32xf32>
    %c2_238 = arith.constant 2 : index
    %c0_239 = arith.constant 0 : index
    %c0_240 = arith.constant 0 : index
    %450 = vector.load %arg37[%c2_238, %c0_239, %c0_240] : memref<3x32x256xbf16, #tpu.memory_space<vmem>>, vector<1x32x256xbf16>
    %451 = vector.shape_cast %450 : vector<1x32x256xbf16> to vector<32x256xbf16>
    %452 = arith.truncf %449 : vector<9x32xf32> to vector<9x32xbf16>
    %cst_241 = arith.constant dense<0.000000e+00> : vector<9x256xf32>
    %453 = tpu.matmul %452, %451, %cst_241 {dimension_numbers = #tpu.dot_dimension_numbers<[1], [0], [0], [1], [0, 0, 1, 1], [], []>} : vector<9x32xbf16>, vector<32x256xbf16>, vector<9x256xf32> -> vector<9x256xf32>
    %454 = arith.addf %448, %453 : vector<9x256xf32>
    %c2_242 = arith.constant 2 : index
    %c0_243 = arith.constant 0 : index
    %c0_244 = arith.constant 0 : index
    %455 = vector.load %arg38[%c2_242, %c0_243, %c0_244] : memref<3x1x256xf32, #tpu.memory_space<vmem>>, vector<1x1x256xf32>
    %456 = vector.shape_cast %455 : vector<1x1x256xf32> to vector<1x256xf32>
    %457 = vector.broadcast %456 : vector<1x256xf32> to vector<9x256xf32>
    %458 = arith.addf %454, %457 : vector<9x256xf32>
    %c2_245 = arith.constant 2 : index
    %c0_246 = arith.constant 0 : index
    %c0_247 = arith.constant 0 : index
    %459 = vector.load %arg39[%c2_245, %c0_246, %c0_247] : memref<3x32x64xbf16, #tpu.memory_space<vmem>>, vector<1x32x64xbf16>
    %460 = vector.shape_cast %459 : vector<1x32x64xbf16> to vector<32x64xbf16>
    %461 = arith.truncf %101 : vector<33x32xf32> to vector<33x32xbf16>
    %cst_248 = arith.constant dense<0.000000e+00> : vector<33x64xf32>
    %462 = tpu.matmul %461, %460, %cst_248 {dimension_numbers = #tpu.dot_dimension_numbers<[1], [0], [0], [1], [0, 0, 1, 1], [], []>} : vector<33x32xbf16>, vector<32x64xbf16>, vector<33x64xf32> -> vector<33x64xf32>
    %463 = vector.extract_strided_slice %458 {offsets = [0, 0], sizes = [9, 64], strides = [1, 1]} : vector<9x256xf32> to vector<9x64xf32>
    %464 = vector.extract_strided_slice %458 {offsets = [0, 64], sizes = [9, 64], strides = [1, 1]} : vector<9x256xf32> to vector<9x64xf32>
    %465 = vector.extract_strided_slice %458 {offsets = [0, 128], sizes = [9, 64], strides = [1, 1]} : vector<9x256xf32> to vector<9x64xf32>
    %466 = vector.extract_strided_slice %458 {offsets = [0, 192], sizes = [9, 64], strides = [1, 1]} : vector<9x256xf32> to vector<9x64xf32>
    %cst_249 = arith.constant dense<0.000000e+00> : vector<33x64xf32>
    %467 = tpu.matmul %1, %463, %cst_249 {dimension_numbers = #tpu.dot_dimension_numbers<[1], [0], [0], [1], [0, 0, 1, 1], [], []>} : vector<33x9xf32>, vector<9x64xf32>, vector<33x64xf32> -> vector<33x64xf32>
    %cst_250 = arith.constant dense<0.000000e+00> : vector<33x64xf32>
    %468 = tpu.matmul %0, %464, %cst_250 {dimension_numbers = #tpu.dot_dimension_numbers<[1], [0], [0], [1], [0, 0, 1, 1], [], []>} : vector<33x9xf32>, vector<9x64xf32>, vector<33x64xf32> -> vector<33x64xf32>
    %469 = arith.addf %468, %462 : vector<33x64xf32>
    %cst_251 = arith.constant dense<0.000000e+00> : vector<33x64xf32>
    %470 = tpu.matmul %0, %465, %cst_251 {dimension_numbers = #tpu.dot_dimension_numbers<[1], [0], [0], [1], [0, 0, 1, 1], [], []>} : vector<33x9xf32>, vector<9x64xf32>, vector<33x64xf32> -> vector<33x64xf32>
    %471 = arith.addf %470, %462 : vector<33x64xf32>
    %472 = arith.mulf %467, %469 : vector<33x64xf32>
    %473 = vector.extract_strided_slice %5 {offsets = [0, 0], sizes = [1, 64], strides = [1, 1]} : vector<2x64xf32> to vector<1x64xf32>
    %474 = vector.broadcast %473 : vector<1x64xf32> to vector<33x64xf32>
    %475 = arith.mulf %472, %474 : vector<33x64xf32>
    %cst_252 = arith.constant dense<0.000000e+00> : vector<33xf32>
    %476 = vector.multi_reduction <add>, %475, %cst_252 [1] : vector<33x64xf32> to vector<33xf32>
    %477 = vector.shape_cast %476 : vector<33xf32> to vector<33x1xf32>
    %cst_253 = arith.constant 0.176776692 : f32
    %478 = vector.broadcast %cst_253 : f32 to vector<33x1xf32>
    %479 = arith.mulf %477, %478 : vector<33x1xf32>
    %480 = vector.broadcast %479 : vector<33x1xf32> to vector<33x9xf32>
    %481 = arith.addf %480, %2 : vector<33x9xf32>
    %cst_254 = arith.constant dense<0xFF800000> : vector<9xf32>
    %482 = vector.multi_reduction <maximumf>, %481, %cst_254 [0] : vector<33x9xf32> to vector<9xf32>
    %483 = vector.shape_cast %482 : vector<9xf32> to vector<1x9xf32>
    %484 = vector.broadcast %483 : vector<1x9xf32> to vector<33x9xf32>
    %485 = arith.mulf %1, %484 : vector<33x9xf32>
    %cst_255 = arith.constant dense<0.000000e+00> : vector<33xf32>
    %486 = vector.multi_reduction <add>, %485, %cst_255 [1] : vector<33x9xf32> to vector<33xf32>
    %487 = vector.shape_cast %486 : vector<33xf32> to vector<33x1xf32>
    %488 = arith.subf %479, %487 : vector<33x1xf32>
    %489 = math.exp %488 : vector<33x1xf32>
    %490 = vector.broadcast %489 : vector<33x1xf32> to vector<33x9xf32>
    %491 = arith.mulf %1, %490 : vector<33x9xf32>
    %cst_256 = arith.constant dense<0.000000e+00> : vector<9xf32>
    %492 = vector.multi_reduction <add>, %491, %cst_256 [0] : vector<33x9xf32> to vector<9xf32>
    %493 = vector.shape_cast %492 : vector<9xf32> to vector<1x9xf32>
    %cst_257 = arith.constant 1.000000e-16 : f32
    %494 = vector.broadcast %cst_257 : f32 to vector<1x9xf32>
    %495 = arith.addf %493, %494 : vector<1x9xf32>
    %496 = vector.broadcast %495 : vector<1x9xf32> to vector<33x9xf32>
    %497 = arith.mulf %1, %496 : vector<33x9xf32>
    %cst_258 = arith.constant dense<0.000000e+00> : vector<33xf32>
    %498 = vector.multi_reduction <add>, %497, %cst_258 [1] : vector<33x9xf32> to vector<33xf32>
    %499 = vector.shape_cast %498 : vector<33xf32> to vector<33x1xf32>
    %500 = arith.divf %489, %499 : vector<33x1xf32>
    %501 = vector.broadcast %500 : vector<33x1xf32> to vector<33x64xf32>
    %502 = vector.broadcast %473 : vector<1x64xf32> to vector<33x64xf32>
    %503 = arith.mulf %501, %502 : vector<33x64xf32>
    %504 = vector.extract_strided_slice %5 {offsets = [1, 0], sizes = [1, 64], strides = [1, 1]} : vector<2x64xf32> to vector<1x64xf32>
    %505 = vector.broadcast %504 : vector<1x64xf32> to vector<33x64xf32>
    %506 = arith.mulf %472, %505 : vector<33x64xf32>
    %cst_259 = arith.constant dense<0.000000e+00> : vector<33xf32>
    %507 = vector.multi_reduction <add>, %506, %cst_259 [1] : vector<33x64xf32> to vector<33xf32>
    %508 = vector.shape_cast %507 : vector<33xf32> to vector<33x1xf32>
    %cst_260 = arith.constant 0.176776692 : f32
    %509 = vector.broadcast %cst_260 : f32 to vector<33x1xf32>
    %510 = arith.mulf %508, %509 : vector<33x1xf32>
    %511 = vector.broadcast %510 : vector<33x1xf32> to vector<33x9xf32>
    %512 = arith.addf %511, %2 : vector<33x9xf32>
    %cst_261 = arith.constant dense<0xFF800000> : vector<9xf32>
    %513 = vector.multi_reduction <maximumf>, %512, %cst_261 [0] : vector<33x9xf32> to vector<9xf32>
    %514 = vector.shape_cast %513 : vector<9xf32> to vector<1x9xf32>
    %515 = vector.broadcast %514 : vector<1x9xf32> to vector<33x9xf32>
    %516 = arith.mulf %1, %515 : vector<33x9xf32>
    %cst_262 = arith.constant dense<0.000000e+00> : vector<33xf32>
    %517 = vector.multi_reduction <add>, %516, %cst_262 [1] : vector<33x9xf32> to vector<33xf32>
    %518 = vector.shape_cast %517 : vector<33xf32> to vector<33x1xf32>
    %519 = arith.subf %510, %518 : vector<33x1xf32>
    %520 = math.exp %519 : vector<33x1xf32>
    %521 = vector.broadcast %520 : vector<33x1xf32> to vector<33x9xf32>
    %522 = arith.mulf %1, %521 : vector<33x9xf32>
    %cst_263 = arith.constant dense<0.000000e+00> : vector<9xf32>
    %523 = vector.multi_reduction <add>, %522, %cst_263 [0] : vector<33x9xf32> to vector<9xf32>
    %524 = vector.shape_cast %523 : vector<9xf32> to vector<1x9xf32>
    %cst_264 = arith.constant 1.000000e-16 : f32
    %525 = vector.broadcast %cst_264 : f32 to vector<1x9xf32>
    %526 = arith.addf %524, %525 : vector<1x9xf32>
    %527 = vector.broadcast %526 : vector<1x9xf32> to vector<33x9xf32>
    %528 = arith.mulf %1, %527 : vector<33x9xf32>
    %cst_265 = arith.constant dense<0.000000e+00> : vector<33xf32>
    %529 = vector.multi_reduction <add>, %528, %cst_265 [1] : vector<33x9xf32> to vector<33xf32>
    %530 = vector.shape_cast %529 : vector<33xf32> to vector<33x1xf32>
    %531 = arith.divf %520, %530 : vector<33x1xf32>
    %532 = vector.broadcast %531 : vector<33x1xf32> to vector<33x64xf32>
    %533 = vector.broadcast %504 : vector<1x64xf32> to vector<33x64xf32>
    %534 = arith.mulf %532, %533 : vector<33x64xf32>
    %535 = arith.addf %503, %534 : vector<33x64xf32>
    %536 = arith.mulf %471, %535 : vector<33x64xf32>
    %cst_266 = arith.constant dense<0.000000e+00> : vector<9x64xf32>
    %537 = tpu.matmul %1, %536, %cst_266 {dimension_numbers = #tpu.dot_dimension_numbers<[0], [0], [1], [1], [0, 1, 1, 1], [], []>} : vector<33x9xf32>, vector<33x64xf32>, vector<9x64xf32> -> vector<9x64xf32>
    %538 = arith.addf %537, %466 : vector<9x64xf32>
    %c2_267 = arith.constant 2 : index
    %c0_268 = arith.constant 0 : index
    %c0_269 = arith.constant 0 : index
    %539 = vector.load %arg40[%c2_267, %c0_268, %c0_269] : memref<3x64x32xbf16, #tpu.memory_space<vmem>>, vector<1x64x32xbf16>
    %540 = vector.shape_cast %539 : vector<1x64x32xbf16> to vector<64x32xbf16>
    %541 = arith.truncf %538 : vector<9x64xf32> to vector<9x64xbf16>
    %cst_270 = arith.constant dense<0.000000e+00> : vector<9x32xf32>
    %542 = tpu.matmul %541, %540, %cst_270 {dimension_numbers = #tpu.dot_dimension_numbers<[1], [0], [0], [1], [0, 0, 1, 1], [], []>} : vector<9x64xbf16>, vector<64x32xbf16>, vector<9x32xf32> -> vector<9x32xf32>
    %c2_271 = arith.constant 2 : index
    %c0_272 = arith.constant 0 : index
    %c0_273 = arith.constant 0 : index
    %543 = vector.load %arg41[%c2_271, %c0_272, %c0_273] : memref<3x1x32xf32, #tpu.memory_space<vmem>>, vector<1x1x32xf32>
    %544 = vector.shape_cast %543 : vector<1x1x32xf32> to vector<1x32xf32>
    %545 = vector.broadcast %544 : vector<1x32xf32> to vector<9x32xf32>
    %546 = arith.addf %542, %545 : vector<9x32xf32>
    %547 = arith.addf %437, %546 : vector<9x32xf32>
    %cst_274 = arith.constant dense<0.000000e+00> : vector<2x32xf32>
    %548 = tpu.matmul %3, %547, %cst_274 {dimension_numbers = #tpu.dot_dimension_numbers<[0], [0], [1], [1], [0, 1, 1, 1], [], []>} : vector<9x2xf32>, vector<9x32xf32>, vector<2x32xf32> -> vector<2x32xf32>
    %cst_275 = arith.constant dense<0.000000e+00> : vector<2xf32>
    %549 = vector.multi_reduction <add>, %548, %cst_275 [1] : vector<2x32xf32> to vector<2xf32>
    %550 = vector.shape_cast %549 : vector<2xf32> to vector<2x1xf32>
    %551 = arith.mulf %550, %4 : vector<2x1xf32>
    %cst_276 = arith.constant dense<0.000000e+00> : vector<9x1xf32>
    %552 = tpu.matmul %3, %551, %cst_276 {dimension_numbers = #tpu.dot_dimension_numbers<[1], [0], [0], [1], [0, 0, 1, 1], [], []>} : vector<9x2xf32>, vector<2x1xf32>, vector<9x1xf32> -> vector<9x1xf32>
    %553 = vector.broadcast %552 : vector<9x1xf32> to vector<9x32xf32>
    %554 = arith.subf %547, %553 : vector<9x32xf32>
    %555 = arith.mulf %554, %554 : vector<9x32xf32>
    %cst_277 = arith.constant dense<0.000000e+00> : vector<2x32xf32>
    %556 = tpu.matmul %3, %555, %cst_277 {dimension_numbers = #tpu.dot_dimension_numbers<[0], [0], [1], [1], [0, 1, 1, 1], [], []>} : vector<9x2xf32>, vector<9x32xf32>, vector<2x32xf32> -> vector<2x32xf32>
    %cst_278 = arith.constant dense<0.000000e+00> : vector<2xf32>
    %557 = vector.multi_reduction <add>, %556, %cst_278 [1] : vector<2x32xf32> to vector<2xf32>
    %558 = vector.shape_cast %557 : vector<2xf32> to vector<2x1xf32>
    %559 = arith.mulf %558, %4 : vector<2x1xf32>
    %cst_279 = arith.constant 9.99999974E-6 : f32
    %560 = vector.broadcast %cst_279 : f32 to vector<2x1xf32>
    %561 = arith.addf %559, %560 : vector<2x1xf32>
    %562 = math.rsqrt %561 : vector<2x1xf32>
    %cst_280 = arith.constant dense<0.000000e+00> : vector<9x1xf32>
    %563 = tpu.matmul %3, %562, %cst_280 {dimension_numbers = #tpu.dot_dimension_numbers<[1], [0], [0], [1], [0, 0, 1, 1], [], []>} : vector<9x2xf32>, vector<2x1xf32>, vector<9x1xf32> -> vector<9x1xf32>
    %564 = vector.broadcast %563 : vector<9x1xf32> to vector<9x32xf32>
    %565 = arith.mulf %554, %564 : vector<9x32xf32>
    %c2_281 = arith.constant 2 : index
    %c0_282 = arith.constant 0 : index
    %c0_283 = arith.constant 0 : index
    %566 = vector.load %arg42[%c2_281, %c0_282, %c0_283] : memref<3x32x128xbf16, #tpu.memory_space<vmem>>, vector<1x32x128xbf16>
    %567 = vector.shape_cast %566 : vector<1x32x128xbf16> to vector<32x128xbf16>
    %568 = arith.truncf %565 : vector<9x32xf32> to vector<9x32xbf16>
    %cst_284 = arith.constant dense<0.000000e+00> : vector<9x128xf32>
    %569 = tpu.matmul %568, %567, %cst_284 {dimension_numbers = #tpu.dot_dimension_numbers<[1], [0], [0], [1], [0, 0, 1, 1], [], []>} : vector<9x32xbf16>, vector<32x128xbf16>, vector<9x128xf32> -> vector<9x128xf32>
    %c2_285 = arith.constant 2 : index
    %c0_286 = arith.constant 0 : index
    %c0_287 = arith.constant 0 : index
    %570 = vector.load %arg43[%c2_285, %c0_286, %c0_287] : memref<3x1x128xf32, #tpu.memory_space<vmem>>, vector<1x1x128xf32>
    %571 = vector.shape_cast %570 : vector<1x1x128xf32> to vector<1x128xf32>
    %572 = vector.broadcast %571 : vector<1x128xf32> to vector<9x128xf32>
    %573 = arith.addf %569, %572 : vector<9x128xf32>
    %cst_288 = arith.constant 0.000000e+00 : f32
    %574 = vector.broadcast %cst_288 : f32 to vector<9x128xf32>
    %575 = arith.cmpf ogt, %573, %574 : vector<9x128xf32>
    %cst_289 = arith.constant 0.00999999977 : f32
    %576 = vector.broadcast %cst_289 : f32 to vector<9x128xf32>
    %577 = arith.mulf %576, %573 : vector<9x128xf32>
    %578 = arith.select %575, %573, %577 : vector<9x128xi1>, vector<9x128xf32>
    %c2_290 = arith.constant 2 : index
    %c0_291 = arith.constant 0 : index
    %c0_292 = arith.constant 0 : index
    %579 = vector.load %arg44[%c2_290, %c0_291, %c0_292] : memref<3x128x32xbf16, #tpu.memory_space<vmem>>, vector<1x128x32xbf16>
    %580 = vector.shape_cast %579 : vector<1x128x32xbf16> to vector<128x32xbf16>
    %581 = arith.truncf %578 : vector<9x128xf32> to vector<9x128xbf16>
    %cst_293 = arith.constant dense<0.000000e+00> : vector<9x32xf32>
    %582 = tpu.matmul %581, %580, %cst_293 {dimension_numbers = #tpu.dot_dimension_numbers<[1], [0], [0], [1], [0, 0, 1, 1], [], []>} : vector<9x128xbf16>, vector<128x32xbf16>, vector<9x32xf32> -> vector<9x32xf32>
    %c2_294 = arith.constant 2 : index
    %c0_295 = arith.constant 0 : index
    %c0_296 = arith.constant 0 : index
    %583 = vector.load %arg45[%c2_294, %c0_295, %c0_296] : memref<3x1x32xf32, #tpu.memory_space<vmem>>, vector<1x1x32xf32>
    %584 = vector.shape_cast %583 : vector<1x1x32xf32> to vector<1x32xf32>
    %585 = vector.broadcast %584 : vector<1x32xf32> to vector<9x32xf32>
    %586 = arith.addf %582, %585 : vector<9x32xf32>
    %587 = arith.addf %565, %586 : vector<9x32xf32>
    %cst_297 = arith.constant dense<0.000000e+00> : vector<2x32xf32>
    %588 = tpu.matmul %3, %587, %cst_297 {dimension_numbers = #tpu.dot_dimension_numbers<[0], [0], [1], [1], [0, 1, 1, 1], [], []>} : vector<9x2xf32>, vector<9x32xf32>, vector<2x32xf32> -> vector<2x32xf32>
    %cst_298 = arith.constant dense<0.000000e+00> : vector<2xf32>
    %589 = vector.multi_reduction <add>, %588, %cst_298 [1] : vector<2x32xf32> to vector<2xf32>
    %590 = vector.shape_cast %589 : vector<2xf32> to vector<2x1xf32>
    %591 = arith.mulf %590, %4 : vector<2x1xf32>
    %cst_299 = arith.constant dense<0.000000e+00> : vector<9x1xf32>
    %592 = tpu.matmul %3, %591, %cst_299 {dimension_numbers = #tpu.dot_dimension_numbers<[1], [0], [0], [1], [0, 0, 1, 1], [], []>} : vector<9x2xf32>, vector<2x1xf32>, vector<9x1xf32> -> vector<9x1xf32>
    %593 = vector.broadcast %592 : vector<9x1xf32> to vector<9x32xf32>
    %594 = arith.subf %587, %593 : vector<9x32xf32>
    %595 = arith.mulf %594, %594 : vector<9x32xf32>
    %cst_300 = arith.constant dense<0.000000e+00> : vector<2x32xf32>
    %596 = tpu.matmul %3, %595, %cst_300 {dimension_numbers = #tpu.dot_dimension_numbers<[0], [0], [1], [1], [0, 1, 1, 1], [], []>} : vector<9x2xf32>, vector<9x32xf32>, vector<2x32xf32> -> vector<2x32xf32>
    %cst_301 = arith.constant dense<0.000000e+00> : vector<2xf32>
    %597 = vector.multi_reduction <add>, %596, %cst_301 [1] : vector<2x32xf32> to vector<2xf32>
    %598 = vector.shape_cast %597 : vector<2xf32> to vector<2x1xf32>
    %599 = arith.mulf %598, %4 : vector<2x1xf32>
    %cst_302 = arith.constant 9.99999974E-6 : f32
    %600 = vector.broadcast %cst_302 : f32 to vector<2x1xf32>
    %601 = arith.addf %599, %600 : vector<2x1xf32>
    %602 = math.rsqrt %601 : vector<2x1xf32>
    %cst_303 = arith.constant dense<0.000000e+00> : vector<9x1xf32>
    %603 = tpu.matmul %3, %602, %cst_303 {dimension_numbers = #tpu.dot_dimension_numbers<[1], [0], [0], [1], [0, 0, 1, 1], [], []>} : vector<9x2xf32>, vector<2x1xf32>, vector<9x1xf32> -> vector<9x1xf32>
    %604 = vector.broadcast %603 : vector<9x1xf32> to vector<9x32xf32>
    %605 = arith.mulf %594, %604 : vector<9x32xf32>
    %c0_304 = arith.constant 0 : index
    %c0_305 = arith.constant 0 : index
    %606 = vector.load %arg11[%c0_304, %c0_305] : memref<9x7xf32, #tpu.memory_space<vmem>>, vector<9x7xf32>
    %cst_306 = arith.constant dense<0.000000e+00> : vector<7x32xf32>
    %607 = tpu.matmul %606, %605, %cst_306 {dimension_numbers = #tpu.dot_dimension_numbers<[0], [0], [1], [1], [0, 1, 1, 1], [], []>} : vector<9x7xf32>, vector<9x32xf32>, vector<7x32xf32> -> vector<7x32xf32>
    %c0_307 = arith.constant 0 : index
    %c0_308 = arith.constant 0 : index
    %608 = vector.load %arg12[%c0_307, %c0_308] : memref<9x2xf32, #tpu.memory_space<vmem>>, vector<9x2xf32>
    %cst_309 = arith.constant dense<0.000000e+00> : vector<2x32xf32>
    %609 = tpu.matmul %608, %605, %cst_309 {dimension_numbers = #tpu.dot_dimension_numbers<[0], [0], [1], [1], [0, 1, 1, 1], [], []>} : vector<9x2xf32>, vector<9x32xf32>, vector<2x32xf32> -> vector<2x32xf32>
    %c0_310 = arith.constant 0 : index
    %c0_311 = arith.constant 0 : index
    %610 = vector.load %arg13[%c0_310, %c0_311] : memref<7x2xf32, #tpu.memory_space<vmem>>, vector<7x2xf32>
    %cst_312 = arith.constant dense<0.000000e+00> : vector<7x32xf32>
    %611 = tpu.matmul %610, %92, %cst_312 {dimension_numbers = #tpu.dot_dimension_numbers<[1], [0], [0], [1], [0, 0, 1, 1], [], []>} : vector<7x2xf32>, vector<2x32xf32>, vector<7x32xf32> -> vector<7x32xf32>
    %c0_313 = arith.constant 0 : index
    %c0_314 = arith.constant 0 : index
    %612 = vector.load %arg46[%c0_313, %c0_314] : memref<32x128xbf16, #tpu.memory_space<vmem>>, vector<32x128xbf16>
    %613 = arith.truncf %607 : vector<7x32xf32> to vector<7x32xbf16>
    %cst_315 = arith.constant dense<0.000000e+00> : vector<7x128xf32>
    %614 = tpu.matmul %613, %612, %cst_315 {dimension_numbers = #tpu.dot_dimension_numbers<[1], [0], [0], [1], [0, 0, 1, 1], [], []>} : vector<7x32xbf16>, vector<32x128xbf16>, vector<7x128xf32> -> vector<7x128xf32>
    %c0_316 = arith.constant 0 : index
    %c0_317 = arith.constant 0 : index
    %615 = vector.load %arg47[%c0_316, %c0_317] : memref<32x128xbf16, #tpu.memory_space<vmem>>, vector<32x128xbf16>
    %616 = arith.truncf %611 : vector<7x32xf32> to vector<7x32xbf16>
    %cst_318 = arith.constant dense<0.000000e+00> : vector<7x128xf32>
    %617 = tpu.matmul %616, %615, %cst_318 {dimension_numbers = #tpu.dot_dimension_numbers<[1], [0], [0], [1], [0, 0, 1, 1], [], []>} : vector<7x32xbf16>, vector<32x128xbf16>, vector<7x128xf32> -> vector<7x128xf32>
    %618 = arith.addf %614, %617 : vector<7x128xf32>
    %c0_319 = arith.constant 0 : index
    %c0_320 = arith.constant 0 : index
    %619 = vector.load %arg48[%c0_319, %c0_320] : memref<1x128xf32, #tpu.memory_space<vmem>>, vector<1x128xf32>
    %620 = vector.broadcast %619 : vector<1x128xf32> to vector<7x128xf32>
    %621 = arith.addf %618, %620 : vector<7x128xf32>
    %c0_321 = arith.constant 0 : index
    %c0_322 = arith.constant 0 : index
    %622 = vector.load %arg54[%c0_321, %c0_322] : memref<7x128xf32, #tpu.memory_space<vmem>>, vector<7x128xf32>
    tpu.vector_store %arg54[%c0_321, %c0_322], %621 {strides = array<i32>} : memref<7x128xf32, #tpu.memory_space<vmem>>, vector<7x128xf32>,
    %c0_323 = arith.constant 0 : index
    %c0_324 = arith.constant 0 : index
    %623 = vector.load %arg16[%c0_323, %c0_324] : memref<3x7xf32, #tpu.memory_space<vmem>>, vector<3x7xf32>
    %cst_325 = arith.constant dense<0.000000e+00> : vector<3x128xf32>
    %624 = tpu.matmul %623, %621, %cst_325 {dimension_numbers = #tpu.dot_dimension_numbers<[1], [0], [0], [1], [0, 0, 1, 1], [], []>} : vector<3x7xf32>, vector<7x128xf32>, vector<3x128xf32> -> vector<3x128xf32>
    %c0_326 = arith.constant 0 : index
    %c0_327 = arith.constant 0 : index
    %625 = vector.load %arg49[%c0_326, %c0_327] : memref<1x128xf32, #tpu.memory_space<vmem>>, vector<1x128xf32>
    %626 = vector.broadcast %625 : vector<1x128xf32> to vector<3x128xf32>
    %627 = arith.addf %624, %626 : vector<3x128xf32>
    %c0_328 = arith.constant 0 : index
    %c0_329 = arith.constant 0 : index
    %628 = vector.load %arg55[%c0_328, %c0_329] : memref<3x128xf32, #tpu.memory_space<vmem>>, vector<3x128xf32>
    tpu.vector_store %arg55[%c0_328, %c0_329], %627 {strides = array<i32>} : memref<3x128xf32, #tpu.memory_space<vmem>>, vector<3x128xf32>,
    %c0_330 = arith.constant 0 : index
    %c0_331 = arith.constant 0 : index
    %629 = vector.load %arg17[%c0_330, %c0_331] : memref<5x7xf32, #tpu.memory_space<vmem>>, vector<5x7xf32>
    %cst_332 = arith.constant dense<0.000000e+00> : vector<5x128xf32>
    %630 = tpu.matmul %629, %621, %cst_332 {dimension_numbers = #tpu.dot_dimension_numbers<[1], [0], [0], [1], [0, 0, 1, 1], [], []>} : vector<5x7xf32>, vector<7x128xf32>, vector<5x128xf32> -> vector<5x128xf32>
    %c0_333 = arith.constant 0 : index
    %c0_334 = arith.constant 0 : index
    %631 = vector.load %arg49[%c0_333, %c0_334] : memref<1x128xf32, #tpu.memory_space<vmem>>, vector<1x128xf32>
    %632 = vector.broadcast %631 : vector<1x128xf32> to vector<5x128xf32>
    %633 = arith.addf %630, %632 : vector<5x128xf32>
    %c0_335 = arith.constant 0 : index
    %c0_336 = arith.constant 0 : index
    %634 = vector.load %arg56[%c0_335, %c0_336] : memref<5x128xf32, #tpu.memory_space<vmem>>, vector<5x128xf32>
    tpu.vector_store %arg56[%c0_335, %c0_336], %633 {strides = array<i32>} : memref<5x128xf32, #tpu.memory_space<vmem>>, vector<5x128xf32>,
    %c0_337 = arith.constant 0 : index
    %c0_338 = arith.constant 0 : index
    %635 = vector.load %arg13[%c0_337, %c0_338] : memref<7x2xf32, #tpu.memory_space<vmem>>, vector<7x2xf32>
    %cst_339 = arith.constant dense<0.000000e+00> : vector<2x32xf32>
    %636 = tpu.matmul %635, %607, %cst_339 {dimension_numbers = #tpu.dot_dimension_numbers<[0], [0], [1], [1], [0, 1, 1, 1], [], []>} : vector<7x2xf32>, vector<7x32xf32>, vector<2x32xf32> -> vector<2x32xf32>
    %c0_340 = arith.constant 0 : index
    %c0_341 = arith.constant 0 : index
    %637 = vector.load %arg14[%c0_340, %c0_341] : memref<2x1xf32, #tpu.memory_space<vmem>>, vector<2x1xf32>
    %638 = vector.broadcast %637 : vector<2x1xf32> to vector<2x32xf32>
    %639 = arith.mulf %636, %638 : vector<2x32xf32>
    %c0_342 = arith.constant 0 : index
    %c0_343 = arith.constant 0 : index
    %640 = vector.load %arg50[%c0_342, %c0_343] : memref<32x128xbf16, #tpu.memory_space<vmem>>, vector<32x128xbf16>
    %641 = arith.truncf %639 : vector<2x32xf32> to vector<2x32xbf16>
    %cst_344 = arith.constant dense<0.000000e+00> : vector<2x128xf32>
    %642 = tpu.matmul %641, %640, %cst_344 {dimension_numbers = #tpu.dot_dimension_numbers<[1], [0], [0], [1], [0, 0, 1, 1], [], []>} : vector<2x32xbf16>, vector<32x128xbf16>, vector<2x128xf32> -> vector<2x128xf32>
    %c0_345 = arith.constant 0 : index
    %c0_346 = arith.constant 0 : index
    %643 = vector.load %arg51[%c0_345, %c0_346] : memref<32x128xbf16, #tpu.memory_space<vmem>>, vector<32x128xbf16>
    %644 = arith.truncf %609 : vector<2x32xf32> to vector<2x32xbf16>
    %cst_347 = arith.constant dense<0.000000e+00> : vector<2x128xf32>
    %645 = tpu.matmul %644, %643, %cst_347 {dimension_numbers = #tpu.dot_dimension_numbers<[1], [0], [0], [1], [0, 0, 1, 1], [], []>} : vector<2x32xbf16>, vector<32x128xbf16>, vector<2x128xf32> -> vector<2x128xf32>
    %646 = arith.addf %642, %645 : vector<2x128xf32>
    %c0_348 = arith.constant 0 : index
    %c0_349 = arith.constant 0 : index
    %647 = vector.load %arg52[%c0_348, %c0_349] : memref<32x128xbf16, #tpu.memory_space<vmem>>, vector<32x128xbf16>
    %648 = arith.truncf %92 : vector<2x32xf32> to vector<2x32xbf16>
    %cst_350 = arith.constant dense<0.000000e+00> : vector<2x128xf32>
    %649 = tpu.matmul %648, %647, %cst_350 {dimension_numbers = #tpu.dot_dimension_numbers<[1], [0], [0], [1], [0, 0, 1, 1], [], []>} : vector<2x32xbf16>, vector<32x128xbf16>, vector<2x128xf32> -> vector<2x128xf32>
    %650 = arith.addf %646, %649 : vector<2x128xf32>
    %c0_351 = arith.constant 0 : index
    %c0_352 = arith.constant 0 : index
    %651 = vector.load %arg53[%c0_351, %c0_352] : memref<1x128xf32, #tpu.memory_space<vmem>>, vector<1x128xf32>
    %652 = vector.broadcast %651 : vector<1x128xf32> to vector<2x128xf32>
    %653 = arith.addf %650, %652 : vector<2x128xf32>
    %c0_353 = arith.constant 0 : index
    %c0_354 = arith.constant 0 : index
    %654 = vector.load %arg57[%c0_353, %c0_354] : memref<2x128xf32, #tpu.memory_space<vmem>>, vector<2x128xf32>
    tpu.vector_store %arg57[%c0_353, %c0_354], %653 {strides = array<i32>} : memref<2x128xf32, #tpu.memory_space<vmem>>, vector<2x128xf32>,
    return
  }
  func.func @transform_0(%arg0: i32) -> (i32, i32) {
    %c0_i32 = arith.constant 0 : i32
    %c0_i32_0 = arith.constant 0 : i32
    %c0_i32_1 = arith.constant 0 : i32
    return %c0_i32, %c0_i32_0 : i32, i32
  }
  func.func @transform_1(%arg0: i32) -> (i32, i32) {
    %c0_i32 = arith.constant 0 : i32
    %c0_i32_0 = arith.constant 0 : i32
    %c0_i32_1 = arith.constant 0 : i32
    return %c0_i32, %c0_i32_0 : i32, i32
  }
  func.func @transform_2(%arg0: i32) -> (i32, i32) {
    %c0_i32 = arith.constant 0 : i32
    %c0_i32_0 = arith.constant 0 : i32
    %c0_i32_1 = arith.constant 0 : i32
    return %c0_i32, %c0_i32_0 : i32, i32
  }
  func.func @transform_3(%arg0: i32) -> (i32, i32) {
    %c0_i32 = arith.constant 0 : i32
    %c0_i32_0 = arith.constant 0 : i32
    %c0_i32_1 = arith.constant 0 : i32
    return %c0_i32, %c0_i32_0 : i32, i32
  }
  func.func @transform_4(%arg0: i32) -> (i32, i32) {
    %c0_i32 = arith.constant 0 : i32
    %c0_i32_0 = arith.constant 0 : i32
    %c0_i32_1 = arith.constant 0 : i32
    return %c0_i32, %c0_i32_0 : i32, i32
  }
  func.func @transform_5(%arg0: i32) -> (i32, i32) {
    %c0_i32 = arith.constant 0 : i32
    %c0_i32_0 = arith.constant 0 : i32
    %c0_i32_1 = arith.constant 0 : i32
    return %c0_i32, %c0_i32_0 : i32, i32
  }
  func.func @transform_6(%arg0: i32) -> (i32, i32) {
    %c0_i32 = arith.constant 0 : i32
    %c0_i32_0 = arith.constant 0 : i32
    %c0_i32_1 = arith.constant 0 : i32
    return %c0_i32, %c0_i32_0 : i32, i32
  }
  func.func @transform_7(%arg0: i32) -> (i32, i32) {
    %c0_i32 = arith.constant 0 : i32
    %c0_i32_0 = arith.constant 0 : i32
    %c0_i32_1 = arith.constant 0 : i32
    return %c0_i32, %c0_i32_0 : i32, i32
  }
  func.func @transform_8(%arg0: i32) -> (i32, i32) {
    %c0_i32 = arith.constant 0 : i32
    %c0_i32_0 = arith.constant 0 : i32
    %c0_i32_1 = arith.constant 0 : i32
    return %c0_i32, %c0_i32_0 : i32, i32
  }
  func.func @transform_9(%arg0: i32) -> (i32, i32) {
    %c0_i32 = arith.constant 0 : i32
    %c0_i32_0 = arith.constant 0 : i32
    %c0_i32_1 = arith.constant 0 : i32
    return %c0_i32, %c0_i32_0 : i32, i32
  }
  func.func @transform_10(%arg0: i32) -> (i32, i32) {
    %c0_i32 = arith.constant 0 : i32
    %c0_i32_0 = arith.constant 0 : i32
    %c0_i32_1 = arith.constant 0 : i32
    return %c0_i32, %c0_i32_0 : i32, i32
  }
  func.func @transform_11(%arg0: i32) -> (i32, i32) {
    %c0_i32 = arith.constant 0 : i32
    %c0_i32_0 = arith.constant 0 : i32
    %c0_i32_1 = arith.constant 0 : i32
    return %c0_i32, %c0_i32_0 : i32, i32
  }
  func.func @transform_12(%arg0: i32) -> (i32, i32) {
    %c0_i32 = arith.constant 0 : i32
    %c0_i32_0 = arith.constant 0 : i32
    %c0_i32_1 = arith.constant 0 : i32
    return %c0_i32, %c0_i32_0 : i32, i32
  }
  func.func @transform_13(%arg0: i32) -> (i32, i32) {
    %c0_i32 = arith.constant 0 : i32
    %c0_i32_0 = arith.constant 0 : i32
    %c0_i32_1 = arith.constant 0 : i32
    return %c0_i32, %c0_i32_0 : i32, i32
  }
  func.func @transform_14(%arg0: i32) -> (i32, i32) {
    %c0_i32 = arith.constant 0 : i32
    %c0_i32_0 = arith.constant 0 : i32
    %c0_i32_1 = arith.constant 0 : i32
    return %c0_i32, %c0_i32_0 : i32, i32
  }
  func.func @transform_15(%arg0: i32) -> (i32, i32) {
    %c0_i32 = arith.constant 0 : i32
    %c0_i32_0 = arith.constant 0 : i32
    %c0_i32_1 = arith.constant 0 : i32
    return %c0_i32, %c0_i32_0 : i32, i32
  }
  func.func @transform_16(%arg0: i32) -> (i32, i32) {
    %c0_i32 = arith.constant 0 : i32
    %c0_i32_0 = arith.constant 0 : i32
    %c0_i32_1 = arith.constant 0 : i32
    return %c0_i32, %c0_i32_0 : i32, i32
  }
  func.func @transform_17(%arg0: i32) -> (i32, i32) {
    %c0_i32 = arith.constant 0 : i32
    %c0_i32_0 = arith.constant 0 : i32
    %c0_i32_1 = arith.constant 0 : i32
    return %c0_i32, %c0_i32_0 : i32, i32
  }
  func.func @transform_18(%arg0: i32) -> (i32, i32) {
    %c0_i32 = arith.constant 0 : i32
    %c0_i32_0 = arith.constant 0 : i32
    %c0_i32_1 = arith.constant 0 : i32
    return %c0_i32, %c0_i32_0 : i32, i32
  }
  func.func @transform_19(%arg0: i32) -> (i32, i32) {
    %c0_i32 = arith.constant 0 : i32
    %c0_i32_0 = arith.constant 0 : i32
    %c0_i32_1 = arith.constant 0 : i32
    return %c0_i32, %c0_i32_0 : i32, i32
  }
  func.func @transform_20(%arg0: i32) -> (i32, i32) {
    %c0_i32 = arith.constant 0 : i32
    %c0_i32_0 = arith.constant 0 : i32
    %c0_i32_1 = arith.constant 0 : i32
    return %c0_i32, %c0_i32_0 : i32, i32
  }
  func.func @transform_21(%arg0: i32) -> (i32, i32) {
    %c0_i32 = arith.constant 0 : i32
    %c0_i32_0 = arith.constant 0 : i32
    %c0_i32_1 = arith.constant 0 : i32
    return %c0_i32, %c0_i32_0 : i32, i32
  }
  func.func @transform_22(%arg0: i32) -> (i32, i32) {
    %c0_i32 = arith.constant 0 : i32
    %c0_i32_0 = arith.constant 0 : i32
    %c0_i32_1 = arith.constant 0 : i32
    return %c0_i32, %c0_i32_0 : i32, i32
  }
  func.func @transform_23(%arg0: i32) -> (i32, i32) {
    %c0_i32 = arith.constant 0 : i32
    %c0_i32_0 = arith.constant 0 : i32
    %c0_i32_1 = arith.constant 0 : i32
    return %c0_i32, %c0_i32_0 : i32, i32
  }
  func.func @transform_24(%arg0: i32) -> (i32, i32) {
    %c0_i32 = arith.constant 0 : i32
    %c0_i32_0 = arith.constant 0 : i32
    %c0_i32_1 = arith.constant 0 : i32
    return %c0_i32, %c0_i32_0 : i32, i32
  }
  func.func @transform_25(%arg0: i32) -> (i32, i32) {
    %c0_i32 = arith.constant 0 : i32
    %c0_i32_0 = arith.constant 0 : i32
    %c0_i32_1 = arith.constant 0 : i32
    return %c0_i32, %c0_i32_0 : i32, i32
  }
  func.func @transform_26(%arg0: i32) -> (i32, i32) {
    %c0_i32 = arith.constant 0 : i32
    %c0_i32_0 = arith.constant 0 : i32
    %c0_i32_1 = arith.constant 0 : i32
    return %c0_i32, %c0_i32_0 : i32, i32
  }
  func.func @transform_27(%arg0: i32) -> (i32, i32) {
    %c0_i32 = arith.constant 0 : i32
    %c0_i32_0 = arith.constant 0 : i32
    %c0_i32_1 = arith.constant 0 : i32
    return %c0_i32, %c0_i32_0 : i32, i32
  }
  func.func @transform_28(%arg0: i32) -> (i32, i32) {
    %c0_i32 = arith.constant 0 : i32
    %c0_i32_0 = arith.constant 0 : i32
    %c0_i32_1 = arith.constant 0 : i32
    return %c0_i32, %c0_i32_0 : i32, i32
  }
  func.func @transform_29(%arg0: i32) -> (i32, i32) {
    %c0_i32 = arith.constant 0 : i32
    %c0_i32_0 = arith.constant 0 : i32
    %c0_i32_1 = arith.constant 0 : i32
    return %c0_i32, %c0_i32_0 : i32, i32
  }
  func.func @transform_30(%arg0: i32) -> (i32, i32) {
    %c0_i32 = arith.constant 0 : i32
    %c0_i32_0 = arith.constant 0 : i32
    %c0_i32_1 = arith.constant 0 : i32
    return %c0_i32, %c0_i32_0 : i32, i32
  }
  func.func @transform_31(%arg0: i32) -> (i32, i32) {
    %c0_i32 = arith.constant 0 : i32
    %c0_i32_0 = arith.constant 0 : i32
    %c0_i32_1 = arith.constant 0 : i32
    return %c0_i32, %c0_i32_0 : i32, i32
  }
  func.func @transform_32(%arg0: i32) -> (i32, i32) {
    %c0_i32 = arith.constant 0 : i32
    %c0_i32_0 = arith.constant 0 : i32
    %c0_i32_1 = arith.constant 0 : i32
    return %c0_i32, %c0_i32_0 : i32, i32
  }
  func.func @transform_33(%arg0: i32) -> (i32, i32) {
    %c0_i32 = arith.constant 0 : i32
    %c0_i32_0 = arith.constant 0 : i32
    %c0_i32_1 = arith.constant 0 : i32
    return %c0_i32, %c0_i32_0 : i32, i32
  }
  func.func @transform_34(%arg0: i32) -> (i32, i32) {
    %c0_i32 = arith.constant 0 : i32
    %c0_i32_0 = arith.constant 0 : i32
    %c0_i32_1 = arith.constant 0 : i32
    return %c0_i32, %c0_i32_0 : i32, i32
  }
  func.func @transform_35(%arg0: i32) -> (i32, i32, i32) {
    %c0_i32 = arith.constant 0 : i32
    %c0_i32_0 = arith.constant 0 : i32
    %c0_i32_1 = arith.constant 0 : i32
    %c0_i32_2 = arith.constant 0 : i32
    return %c0_i32, %c0_i32_0, %c0_i32_1 : i32, i32, i32
  }
  func.func @transform_36(%arg0: i32) -> (i32, i32, i32) {
    %c0_i32 = arith.constant 0 : i32
    %c0_i32_0 = arith.constant 0 : i32
    %c0_i32_1 = arith.constant 0 : i32
    %c0_i32_2 = arith.constant 0 : i32
    return %c0_i32, %c0_i32_0, %c0_i32_1 : i32, i32, i32
  }
  func.func @transform_37(%arg0: i32) -> (i32, i32, i32) {
    %c0_i32 = arith.constant 0 : i32
    %c0_i32_0 = arith.constant 0 : i32
    %c0_i32_1 = arith.constant 0 : i32
    %c0_i32_2 = arith.constant 0 : i32
    return %c0_i32, %c0_i32_0, %c0_i32_1 : i32, i32, i32
  }
  func.func @transform_38(%arg0: i32) -> (i32, i32, i32) {
    %c0_i32 = arith.constant 0 : i32
    %c0_i32_0 = arith.constant 0 : i32
    %c0_i32_1 = arith.constant 0 : i32
    %c0_i32_2 = arith.constant 0 : i32
    return %c0_i32, %c0_i32_0, %c0_i32_1 : i32, i32, i32
  }
  func.func @transform_39(%arg0: i32) -> (i32, i32, i32) {
    %c0_i32 = arith.constant 0 : i32
    %c0_i32_0 = arith.constant 0 : i32
    %c0_i32_1 = arith.constant 0 : i32
    %c0_i32_2 = arith.constant 0 : i32
    return %c0_i32, %c0_i32_0, %c0_i32_1 : i32, i32, i32
  }
  func.func @transform_40(%arg0: i32) -> (i32, i32, i32) {
    %c0_i32 = arith.constant 0 : i32
    %c0_i32_0 = arith.constant 0 : i32
    %c0_i32_1 = arith.constant 0 : i32
    %c0_i32_2 = arith.constant 0 : i32
    return %c0_i32, %c0_i32_0, %c0_i32_1 : i32, i32, i32
  }
  func.func @transform_41(%arg0: i32) -> (i32, i32, i32) {
    %c0_i32 = arith.constant 0 : i32
    %c0_i32_0 = arith.constant 0 : i32
    %c0_i32_1 = arith.constant 0 : i32
    %c0_i32_2 = arith.constant 0 : i32
    return %c0_i32, %c0_i32_0, %c0_i32_1 : i32, i32, i32
  }
  func.func @transform_42(%arg0: i32) -> (i32, i32, i32) {
    %c0_i32 = arith.constant 0 : i32
    %c0_i32_0 = arith.constant 0 : i32
    %c0_i32_1 = arith.constant 0 : i32
    %c0_i32_2 = arith.constant 0 : i32
    return %c0_i32, %c0_i32_0, %c0_i32_1 : i32, i32, i32
  }
  func.func @transform_43(%arg0: i32) -> (i32, i32, i32) {
    %c0_i32 = arith.constant 0 : i32
    %c0_i32_0 = arith.constant 0 : i32
    %c0_i32_1 = arith.constant 0 : i32
    %c0_i32_2 = arith.constant 0 : i32
    return %c0_i32, %c0_i32_0, %c0_i32_1 : i32, i32, i32
  }
  func.func @transform_44(%arg0: i32) -> (i32, i32, i32) {
    %c0_i32 = arith.constant 0 : i32
    %c0_i32_0 = arith.constant 0 : i32
    %c0_i32_1 = arith.constant 0 : i32
    %c0_i32_2 = arith.constant 0 : i32
    return %c0_i32, %c0_i32_0, %c0_i32_1 : i32, i32, i32
  }
  func.func @transform_45(%arg0: i32) -> (i32, i32) {
    %c0_i32 = arith.constant 0 : i32
    %c0_i32_0 = arith.constant 0 : i32
    %c0_i32_1 = arith.constant 0 : i32
    return %c0_i32, %c0_i32_0 : i32, i32
  }
  func.func @transform_46(%arg0: i32) -> (i32, i32) {
    %c0_i32 = arith.constant 0 : i32
    %c0_i32_0 = arith.constant 0 : i32
    %c0_i32_1 = arith.constant 0 : i32
    return %c0_i32, %c0_i32_0 : i32, i32
  }
  func.func @transform_47(%arg0: i32) -> (i32, i32) {
    %c0_i32 = arith.constant 0 : i32
    %c0_i32_0 = arith.constant 0 : i32
    %c0_i32_1 = arith.constant 0 : i32
    return %c0_i32, %c0_i32_0 : i32, i32
  }
  func.func @transform_48(%arg0: i32) -> (i32, i32) {
    %c0_i32 = arith.constant 0 : i32
    %c0_i32_0 = arith.constant 0 : i32
    %c0_i32_1 = arith.constant 0 : i32
    return %c0_i32, %c0_i32_0 : i32, i32
  }
  func.func @transform_49(%arg0: i32) -> (i32, i32) {
    %c0_i32 = arith.constant 0 : i32
    %c0_i32_0 = arith.constant 0 : i32
    %c0_i32_1 = arith.constant 0 : i32
    return %c0_i32, %c0_i32_0 : i32, i32
  }
  func.func @transform_50(%arg0: i32) -> (i32, i32) {
    %c0_i32 = arith.constant 0 : i32
    %c0_i32_0 = arith.constant 0 : i32
    %c0_i32_1 = arith.constant 0 : i32
    return %c0_i32, %c0_i32_0 : i32, i32
  }
  func.func @transform_51(%arg0: i32) -> (i32, i32) {
    %c0_i32 = arith.constant 0 : i32
    %c0_i32_0 = arith.constant 0 : i32
    %c0_i32_1 = arith.constant 0 : i32
    return %c0_i32, %c0_i32_0 : i32, i32
  }
  func.func @transform_52(%arg0: i32) -> (i32, i32) {
    %c0_i32 = arith.constant 0 : i32
    %c0_i32_0 = arith.constant 0 : i32
    %c0_i32_1 = arith.constant 0 : i32
    return %c0_i32, %c0_i32_0 : i32, i32
  }
  func.func @transform_53(%arg0: i32) -> (i32, i32) {
    %c0_i32 = arith.constant 0 : i32
    %c0_i32_0 = arith.constant 0 : i32
    %c0_i32_1 = arith.constant 0 : i32
    return %c0_i32, %c0_i32_0 : i32, i32
  }
  func.func @transform_54(%arg0: i32) -> (i32, i32) {
    %c0_i32 = arith.constant 0 : i32
    %c0_i32_0 = arith.constant 0 : i32
    %c0_i32_1 = arith.constant 0 : i32
    return %c0_i32, %c0_i32_0 : i32, i32
  }
  func.func @transform_55(%arg0: i32) -> (i32, i32) {
    %c0_i32 = arith.constant 0 : i32
    %c0_i32_0 = arith.constant 0 : i32
    %c0_i32_1 = arith.constant 0 : i32
    return %c0_i32, %c0_i32_0 : i32, i32
  }
  func.func @transform_56(%arg0: i32) -> (i32, i32) {
    %c0_i32 = arith.constant 0 : i32
    %c0_i32_0 = arith.constant 0 : i32
    %c0_i32_1 = arith.constant 0 : i32
    return %c0_i32, %c0_i32_0 : i32, i32
  }
}

</mosaic_0001>

<llo_original>
// kernel: graph_transformer_gfn_forward.1
$region0: #{graph_transformer_gfn_forward.1}
  #allocation0 [shape = 'u32[]', space=smem, size = 0x4, offset = 0x4, fixed_abs, tag = 'smem constant byte address 0x4 - core index']
  #allocation1 [shape = 'u32[144,128]{1,0:T(1,128)}', space=vmem, size = 0x12000, scoped, tag = 'internal scratch']
  %s0 = inlined_call_operand.smem [shape: u32[57], index: -1, kind: input, shape index: {}]
  %s1 = sld [smem:[%s0]]
  %s2 = scalar_lea.smem %s0, 1
  %s3 = sld [smem:[%s2]]
  %s4 = scalar_lea.smem %s0, 2
  %s5 = sld [smem:[%s4]]
  %s6 = scalar_lea.smem %s0, 3
  %s7 = sld [smem:[%s6]]
  %s8 = scalar_lea.smem %s0, 4
  %s9 = sld [smem:[%s8]]
  %s10 = scalar_lea.smem %s0, 5
  %s11 = sld [smem:[%s10]]
  %s12 = scalar_lea.smem %s0, 6
  %s13 = sld [smem:[%s12]]
  %s14 = scalar_lea.smem %s0, 7
  %s15 = sld [smem:[%s14]]
  %s16 = scalar_lea.smem %s0, 8
  %s17 = sld [smem:[%s16]]
  %s18 = scalar_lea.smem %s0, 9
  %s19 = sld [smem:[%s18]]
  %s20 = scalar_lea.smem %s0, 10
  %s21 = sld [smem:[%s20]]
  %s22 = scalar_lea.smem %s0, 11
  %s23 = sld [smem:[%s22]]
  %s24 = scalar_lea.smem %s0, 12
  %s25 = sld [smem:[%s24]]
  %s26 = scalar_lea.smem %s0, 13
  %s27 = sld [smem:[%s26]]
  %s28 = scalar_lea.smem %s0, 14
  %s29 = sld [smem:[%s28]]
  %s30 = scalar_lea.smem %s0, 15
  %s31 = sld [smem:[%s30]]
  %s32 = scalar_lea.smem %s0, 16
  %s33 = sld [smem:[%s32]]
  %s34 = scalar_lea.smem %s0, 17
  %s35 = sld [smem:[%s34]]
  %s36 = scalar_lea.smem %s0, 18
  %s37 = sld [smem:[%s36]]
  %s38 = scalar_lea.smem %s0, 19
  %s39 = sld [smem:[%s38]]
  %s40 = scalar_lea.smem %s0, 20
  %s41 = sld [smem:[%s40]]
  %s42 = scalar_lea.smem %s0, 21
  %s43 = sld [smem:[%s42]]
  %s44 = scalar_lea.smem %s0, 22
  %s45 = sld [smem:[%s44]]
  %s46 = scalar_lea.smem %s0, 23
  %s47 = sld [smem:[%s46]]
  %s48 = scalar_lea.smem %s0, 24
  %s49 = sld [smem:[%s48]]
  %s50 = scalar_lea.smem %s0, 25
  %s51 = sld [smem:[%s50]]
  %s52 = scalar_lea.smem %s0, 26
  %s53 = sld [smem:[%s52]]
  %s54 = scalar_lea.smem %s0, 27
  %s55 = sld [smem:[%s54]]
  %s56 = scalar_lea.smem %s0, 28
  %s57 = sld [smem:[%s56]]
  %s58 = scalar_lea.smem %s0, 29
  %s59 = sld [smem:[%s58]]
  %s60 = scalar_lea.smem %s0, 30
  %s61 = sld [smem:[%s60]]
  %s62 = scalar_lea.smem %s0, 31
  %s63 = sld [smem:[%s62]]
  %s64 = scalar_lea.smem %s0, 32
  %s65 = sld [smem:[%s64]]
  %s66 = scalar_lea.smem %s0, 33
  %s67 = sld [smem:[%s66]]
  %s68 = scalar_lea.smem %s0, 34
  %s69 = sld [smem:[%s68]]
  %s70 = scalar_lea.smem %s0, 35
  %s71 = sld [smem:[%s70]]
  %s72 = scalar_lea.smem %s0, 36
  %s73 = sld [smem:[%s72]]
  %s74 = scalar_lea.smem %s0, 37
  %s75 = sld [smem:[%s74]]
  %s76 = scalar_lea.smem %s0, 38
  %s77 = sld [smem:[%s76]]
  %s78 = scalar_lea.smem %s0, 39
  %s79 = sld [smem:[%s78]]
  %s80 = scalar_lea.smem %s0, 40
  %s81 = sld [smem:[%s80]]
  %s82 = scalar_lea.smem %s0, 41
  %s83 = sld [smem:[%s82]]
  %s84 = scalar_lea.smem %s0, 42
  %s85 = sld [smem:[%s84]]
  %s86 = scalar_lea.smem %s0, 43
  %s87 = sld [smem:[%s86]]
  %s88 = scalar_lea.smem %s0, 44
  %s89 = sld [smem:[%s88]]
  %s90 = scalar_lea.smem %s0, 45
  %s91 = sld [smem:[%s90]]
  %s92 = scalar_lea.smem %s0, 46
  %s93 = sld [smem:[%s92]]
  %s94 = scalar_lea.smem %s0, 47
  %s95 = sld [smem:[%s94]]
  %s96 = scalar_lea.smem %s0, 48
  %s97 = sld [smem:[%s96]]
  %s98 = scalar_lea.smem %s0, 49
  %s99 = sld [smem:[%s98]]
  %s100 = scalar_lea.smem %s0, 50
  %s101 = sld [smem:[%s100]]
  %s102 = scalar_lea.smem %s0, 51
  %s103 = sld [smem:[%s102]]
  %s104 = scalar_lea.smem %s0, 52
  %s105 = sld [smem:[%s104]]
  %s106 = scalar_lea.smem %s0, 53
  %s107 = sld [smem:[%s106]]
  %s108 = scalar_lea.smem %s0, 54
  %s109 = sld [smem:[%s108]]
  %s110 = scalar_lea.smem %s0, 55
  %s111 = sld [smem:[%s110]]
  %s112 = scalar_lea.smem %s0, 56
  %s113 = sld [smem:[%s112]]
  %114 = xla_tuple %s107, %s109, %s111, %s113
  %s115 = sld [smem:[#allocation0]]
  $region246: #{graph_transformer_gfn_forward.1} parent=0
    _
  %s117 = ssub.s32 1, %s115
  %s118 = scalar_select 0, %s117, %s115
  // Predicated region
  $region2: #{graph_transformer_gfn_forward.1} parent=0 // pred_check
    _
  $region3: #{graph_transformer_gfn_forward.1} parent=0 // pred_check_branch
    %120 = sbr.rel (0) target = $region5
  $region4: #{graph_transformer_gfn_forward.1} parent=0 // pred_region
    _
  $region5: #{graph_transformer_gfn_forward.1} parent=0 // pred_fallthru
    _
  // Predicated region
  $region6: #{graph_transformer_gfn_forward.1} parent=0 // pred_check
    _
  $region7: #{graph_transformer_gfn_forward.1} parent=0 // pred_check_branch
    %122 = sbr.rel (0) target = $region9
  $region8: #{graph_transformer_gfn_forward.1} parent=0 // pred_region
    _
  $region9: #{graph_transformer_gfn_forward.1} parent=0 // pred_fallthru
    _
  // Predicated region
  $region10: #{graph_transformer_gfn_forward.1} parent=0 // pred_check
    _
  $region11: #{graph_transformer_gfn_forward.1} parent=0 // pred_check_branch
    %124 = sbr.rel (0) target = $region13
  $region12: #{graph_transformer_gfn_forward.1} parent=0 // pred_region
    _
  $region13: #{graph_transformer_gfn_forward.1} parent=0 // pred_fallthru
    _
  // Predicated region
  $region14: #{graph_transformer_gfn_forward.1} parent=0 // pred_check
    _
  $region15: #{graph_transformer_gfn_forward.1} parent=0 // pred_check_branch
    %126 = sbr.rel (0) target = $region17
  $region16: #{graph_transformer_gfn_forward.1} parent=0 // pred_region
    _
  $region17: #{graph_transformer_gfn_forward.1} parent=0 // pred_fallthru
    _
  // Predicated region
  $region18: #{graph_transformer_gfn_forward.1} parent=0 // pred_check
    _
  $region19: #{graph_transformer_gfn_forward.1} parent=0 // pred_check_branch
    %128 = sbr.rel (0) target = $region21
  $region20: #{graph_transformer_gfn_forward.1} parent=0 // pred_region
    _
  $region21: #{graph_transformer_gfn_forward.1} parent=0 // pred_fallthru
    _
  // Predicated region
  $region22: #{graph_transformer_gfn_forward.1} parent=0 // pred_check
    _
  $region23: #{graph_transformer_gfn_forward.1} parent=0 // pred_check_branch
    %130 = sbr.rel (0) target = $region25
  $region24: #{graph_transformer_gfn_forward.1} parent=0 // pred_region
    _
  $region25: #{graph_transformer_gfn_forward.1} parent=0 // pred_fallthru
    _
  // Predicated region
  $region26: #{graph_transformer_gfn_forward.1} parent=0 // pred_check
    _
  $region27: #{graph_transformer_gfn_forward.1} parent=0 // pred_check_branch
    %132 = sbr.rel (0) target = $region29
  $region28: #{graph_transformer_gfn_forward.1} parent=0 // pred_region
    _
  $region29: #{graph_transformer_gfn_forward.1} parent=0 // pred_fallthru
    _
  // Predicated region
  $region30: #{graph_transformer_gfn_forward.1} parent=0 // pred_check
    _
  $region31: #{graph_transformer_gfn_forward.1} parent=0 // pred_check_branch
    %134 = sbr.rel (0) target = $region33
  $region32: #{graph_transformer_gfn_forward.1} parent=0 // pred_region
    _
  $region33: #{graph_transformer_gfn_forward.1} parent=0 // pred_fallthru
    _
  // Predicated region
  $region34: #{graph_transformer_gfn_forward.1} parent=0 // pred_check
    _
  $region35: #{graph_transformer_gfn_forward.1} parent=0 // pred_check_branch
    %136 = sbr.rel (0) target = $region37
  $region36: #{graph_transformer_gfn_forward.1} parent=0 // pred_region
    _
  $region37: #{graph_transformer_gfn_forward.1} parent=0 // pred_fallthru
    _
  // Predicated region
  $region38: #{graph_transformer_gfn_forward.1} parent=0 // pred_check
    _
  $region39: #{graph_transformer_gfn_forward.1} parent=0 // pred_check_branch
    %138 = sbr.rel (0) target = $region41
  $region40: #{graph_transformer_gfn_forward.1} parent=0 // pred_region
    _
  $region41: #{graph_transformer_gfn_forward.1} parent=0 // pred_fallthru
    _
  // Predicated region
  $region42: #{graph_transformer_gfn_forward.1} parent=0 // pred_check
    _
  $region43: #{graph_transformer_gfn_forward.1} parent=0 // pred_check_branch
    %140 = sbr.rel (0) target = $region45
  $region44: #{graph_transformer_gfn_forward.1} parent=0 // pred_region
    _
  $region45: #{graph_transformer_gfn_forward.1} parent=0 // pred_fallthru
    _
  // Predicated region
  $region46: #{graph_transformer_gfn_forward.1} parent=0 // pred_check
    _
  $region47: #{graph_transformer_gfn_forward.1} parent=0 // pred_check_branch
    %142 = sbr.rel (0) target = $region49
  $region48: #{graph_transformer_gfn_forward.1} parent=0 // pred_region
    _
  $region49: #{graph_transformer_gfn_forward.1} parent=0 // pred_fallthru
    _
  // Predicated region
  $region50: #{graph_transformer_gfn_forward.1} parent=0 // pred_check
    _
  $region51: #{graph_transformer_gfn_forward.1} parent=0 // pred_check_branch
    %144 = sbr.rel (0) target = $region53
  $region52: #{graph_transformer_gfn_forward.1} parent=0 // pred_region
    _
  $region53: #{graph_transformer_gfn_forward.1} parent=0 // pred_fallthru
    _
  // Predicated region
  $region54: #{graph_transformer_gfn_forward.1} parent=0 // pred_check
    _
  $region55: #{graph_transformer_gfn_forward.1} parent=0 // pred_check_branch
    %146 = sbr.rel (0) target = $region57
  $region56: #{graph_transformer_gfn_forward.1} parent=0 // pred_region
    _
  $region57: #{graph_transformer_gfn_forward.1} parent=0 // pred_fallthru
    _
  // Predicated region
  $region58: #{graph_transformer_gfn_forward.1} parent=0 // pred_check
    _
  $region59: #{graph_transformer_gfn_forward.1} parent=0 // pred_check_branch
    %148 = sbr.rel (0) target = $region61
  $region60: #{graph_transformer_gfn_forward.1} parent=0 // pred_region
    _
  $region61: #{graph_transformer_gfn_forward.1} parent=0 // pred_fallthru
    _
  // Predicated region
  $region62: #{graph_transformer_gfn_forward.1} parent=0 // pred_check
    _
  $region63: #{graph_transformer_gfn_forward.1} parent=0 // pred_check_branch
    %150 = sbr.rel (0) target = $region65
  $region64: #{graph_transformer_gfn_forward.1} parent=0 // pred_region
    _
  $region65: #{graph_transformer_gfn_forward.1} parent=0 // pred_fallthru
    _
  // Predicated region
  $region66: #{graph_transformer_gfn_forward.1} parent=0 // pred_check
    _
  $region67: #{graph_transformer_gfn_forward.1} parent=0 // pred_check_branch
    %152 = sbr.rel (0) target = $region69
  $region68: #{graph_transformer_gfn_forward.1} parent=0 // pred_region
    _
  $region69: #{graph_transformer_gfn_forward.1} parent=0 // pred_fallthru
    _
  // Predicated region
  $region70: #{graph_transformer_gfn_forward.1} parent=0 // pred_check
    _
  $region71: #{graph_transformer_gfn_forward.1} parent=0 // pred_check_branch
    %154 = sbr.rel (0) target = $region73
  $region72: #{graph_transformer_gfn_forward.1} parent=0 // pred_region
    _
  $region73: #{graph_transformer_gfn_forward.1} parent=0 // pred_fallthru
    _
  // Predicated region
  $region74: #{graph_transformer_gfn_forward.1} parent=0 // pred_check
    _
  $region75: #{graph_transformer_gfn_forward.1} parent=0 // pred_check_branch
    %156 = sbr.rel (0) target = $region77
  $region76: #{graph_transformer_gfn_forward.1} parent=0 // pred_region
    _
  $region77: #{graph_transformer_gfn_forward.1} parent=0 // pred_fallthru
    _
  // Predicated region
  $region78: #{graph_transformer_gfn_forward.1} parent=0 // pred_check
    _
  $region79: #{graph_transformer_gfn_forward.1} parent=0 // pred_check_branch
    %158 = sbr.rel (0) target = $region81
  $region80: #{graph_transformer_gfn_forward.1} parent=0 // pred_region
    _
  $region81: #{graph_transformer_gfn_forward.1} parent=0 // pred_fallthru
    _
  // Predicated region
  $region82: #{graph_transformer_gfn_forward.1} parent=0 // pred_check
    _
  $region83: #{graph_transformer_gfn_forward.1} parent=0 // pred_check_branch
    %160 = sbr.rel (0) target = $region85
  $region84: #{graph_transformer_gfn_forward.1} parent=0 // pred_region
    _
  $region85: #{graph_transformer_gfn_forward.1} parent=0 // pred_fallthru
    _
  // Predicated region
  $region86: #{graph_transformer_gfn_forward.1} parent=0 // pred_check
    _
  $region87: #{graph_transformer_gfn_forward.1} parent=0 // pred_check_branch
    %162 = sbr.rel (0) target = $region89
  $region88: #{graph_transformer_gfn_forward.1} parent=0 // pred_region
    _
  $region89: #{graph_transformer_gfn_forward.1} parent=0 // pred_fallthru
    _
  // Predicated region
  $region90: #{graph_transformer_gfn_forward.1} parent=0 // pred_check
    _
  $region91: #{graph_transformer_gfn_forward.1} parent=0 // pred_check_branch
    %164 = sbr.rel (0) target = $region93
  $region92: #{graph_transformer_gfn_forward.1} parent=0 // pred_region
    _
  $region93: #{graph_transformer_gfn_forward.1} parent=0 // pred_fallthru
    _
  // Predicated region
  $region94: #{graph_transformer_gfn_forward.1} parent=0 // pred_check
    _
  $region95: #{graph_transformer_gfn_forward.1} parent=0 // pred_check_branch
    %166 = sbr.rel (0) target = $region97
  $region96: #{graph_transformer_gfn_forward.1} parent=0 // pred_region
    _
  $region97: #{graph_transformer_gfn_forward.1} parent=0 // pred_fallthru
    _
  // Predicated region
  $region98: #{graph_transformer_gfn_forward.1} parent=0 // pred_check
    _
  $region99: #{graph_transformer_gfn_forward.1} parent=0 // pred_check_branch
    %168 = sbr.rel (0) target = $region101
  $region100: #{graph_transformer_gfn_forward.1} parent=0 // pred_region
    _
  $region101: #{graph_transformer_gfn_forward.1} parent=0 // pred_fallthru
    _
  // Predicated region
  $region102: #{graph_transformer_gfn_forward.1} parent=0 // pred_check
    _
  $region103: #{graph_transformer_gfn_forward.1} parent=0 // pred_check_branch
    %170 = sbr.rel (0) target = $region105
  $region104: #{graph_transformer_gfn_forward.1} parent=0 // pred_region
    _
  $region105: #{graph_transformer_gfn_forward.1} parent=0 // pred_fallthru
    _
  // Predicated region
  $region106: #{graph_transformer_gfn_forward.1} parent=0 // pred_check
    _
  $region107: #{graph_transformer_gfn_forward.1} parent=0 // pred_check_branch
    %172 = sbr.rel (0) target = $region109
  $region108: #{graph_transformer_gfn_forward.1} parent=0 // pred_region
    _
  $region109: #{graph_transformer_gfn_forward.1} parent=0 // pred_fallthru
    _
  // Predicated region
  $region110: #{graph_transformer_gfn_forward.1} parent=0 // pred_check
    _
  $region111: #{graph_transformer_gfn_forward.1} parent=0 // pred_check_branch
    %174 = sbr.rel (0) target = $region113
  $region112: #{graph_transformer_gfn_forward.1} parent=0 // pred_region
    _
  $region113: #{graph_transformer_gfn_forward.1} parent=0 // pred_fallthru
    _
  // Predicated region
  $region114: #{graph_transformer_gfn_forward.1} parent=0 // pred_check
    _
  $region115: #{graph_transformer_gfn_forward.1} parent=0 // pred_check_branch
    %176 = sbr.rel (0) target = $region117
  $region116: #{graph_transformer_gfn_forward.1} parent=0 // pred_region
    _
  $region117: #{graph_transformer_gfn_forward.1} parent=0 // pred_fallthru
    _
  // Predicated region
  $region118: #{graph_transformer_gfn_forward.1} parent=0 // pred_check
    _
  $region119: #{graph_transformer_gfn_forward.1} parent=0 // pred_check_branch
    %178 = sbr.rel (0) target = $region121
  $region120: #{graph_transformer_gfn_forward.1} parent=0 // pred_region
    _
  $region121: #{graph_transformer_gfn_forward.1} parent=0 // pred_fallthru
    _
  // Predicated region
  $region122: #{graph_transformer_gfn_forward.1} parent=0 // pred_check
    _
  $region123: #{graph_transformer_gfn_forward.1} parent=0 // pred_check_branch
    %180 = sbr.rel (0) target = $region125
  $region124: #{graph_transformer_gfn_forward.1} parent=0 // pred_region
    _
  $region125: #{graph_transformer_gfn_forward.1} parent=0 // pred_fallthru
    _
  // Predicated region
  $region126: #{graph_transformer_gfn_forward.1} parent=0 // pred_check
    _
  $region127: #{graph_transformer_gfn_forward.1} parent=0 // pred_check_branch
    %182 = sbr.rel (0) target = $region129
  $region128: #{graph_transformer_gfn_forward.1} parent=0 // pred_region
    _
  $region129: #{graph_transformer_gfn_forward.1} parent=0 // pred_fallthru
    _
  // Predicated region
  $region130: #{graph_transformer_gfn_forward.1} parent=0 // pred_check
    _
  $region131: #{graph_transformer_gfn_forward.1} parent=0 // pred_check_branch
    %184 = sbr.rel (0) target = $region133
  $region132: #{graph_transformer_gfn_forward.1} parent=0 // pred_region
    _
  $region133: #{graph_transformer_gfn_forward.1} parent=0 // pred_fallthru
    _
  // Predicated region
  $region134: #{graph_transformer_gfn_forward.1} parent=0 // pred_check
    _
  $region135: #{graph_transformer_gfn_forward.1} parent=0 // pred_check_branch
    %186 = sbr.rel (0) target = $region137
  $region136: #{graph_transformer_gfn_forward.1} parent=0 // pred_region
    _
  $region137: #{graph_transformer_gfn_forward.1} parent=0 // pred_fallthru
    _
  // Predicated region
  $region138: #{graph_transformer_gfn_forward.1} parent=0 // pred_check
    _
  $region139: #{graph_transformer_gfn_forward.1} parent=0 // pred_check_branch
    %188 = sbr.rel (0) target = $region141
  $region140: #{graph_transformer_gfn_forward.1} parent=0 // pred_region
    _
  $region141: #{graph_transformer_gfn_forward.1} parent=0 // pred_fallthru
    _
  // Predicated region
  $region142: #{graph_transformer_gfn_forward.1} parent=0 // pred_check
    _
  $region143: #{graph_transformer_gfn_forward.1} parent=0 // pred_check_branch
    %190 = sbr.rel (0) target = $region145
  $region144: #{graph_transformer_gfn_forward.1} parent=0 // pred_region
    _
  $region145: #{graph_transformer_gfn_forward.1} parent=0 // pred_fallthru
    _
  // Predicated region
  $region146: #{graph_transformer_gfn_forward.1} parent=0 // pred_check
    _
  $region147: #{graph_transformer_gfn_forward.1} parent=0 // pred_check_branch
    %192 = sbr.rel (0) target = $region149
  $region148: #{graph_transformer_gfn_forward.1} parent=0 // pred_region
    _
  $region149: #{graph_transformer_gfn_forward.1} parent=0 // pred_fallthru
    _
  // Predicated region
  $region150: #{graph_transformer_gfn_forward.1} parent=0 // pred_check
    _
  $region151: #{graph_transformer_gfn_forward.1} parent=0 // pred_check_branch
    %194 = sbr.rel (0) target = $region153
  $region152: #{graph_transformer_gfn_forward.1} parent=0 // pred_region
    _
  $region153: #{graph_transformer_gfn_forward.1} parent=0 // pred_fallthru
    _
  // Predicated region
  $region154: #{graph_transformer_gfn_forward.1} parent=0 // pred_check
    _
  $region155: #{graph_transformer_gfn_forward.1} parent=0 // pred_check_branch
    %196 = sbr.rel (0) target = $region157
  $region156: #{graph_transformer_gfn_forward.1} parent=0 // pred_region
    _
  $region157: #{graph_transformer_gfn_forward.1} parent=0 // pred_fallthru
    _
  // Predicated region
  $region158: #{graph_transformer_gfn_forward.1} parent=0 // pred_check
    _
  $region159: #{graph_transformer_gfn_forward.1} parent=0 // pred_check_branch
    %198 = sbr.rel (0) target = $region161
  $region160: #{graph_transformer_gfn_forward.1} parent=0 // pred_region
    _
  $region161: #{graph_transformer_gfn_forward.1} parent=0 // pred_fallthru
    _
  // Predicated region
  $region162: #{graph_transformer_gfn_forward.1} parent=0 // pred_check
    _
  $region163: #{graph_transformer_gfn_forward.1} parent=0 // pred_check_branch
    %200 = sbr.rel (0) target = $region165
  $region164: #{graph_transformer_gfn_forward.1} parent=0 // pred_region
    _
  $region165: #{graph_transformer_gfn_forward.1} parent=0 // pred_fallthru
    _
  // Predicated region
  $region166: #{graph_transformer_gfn_forward.1} parent=0 // pred_check
    _
  $region167: #{graph_transformer_gfn_forward.1} parent=0 // pred_check_branch
    %202 = sbr.rel (0) target = $region169
  $region168: #{graph_transformer_gfn_forward.1} parent=0 // pred_region
    _
  $region169: #{graph_transformer_gfn_forward.1} parent=0 // pred_fallthru
    _
  // Predicated region
  $region170: #{graph_transformer_gfn_forward.1} parent=0 // pred_check
    _
  $region171: #{graph_transformer_gfn_forward.1} parent=0 // pred_check_branch
    %204 = sbr.rel (0) target = $region173
  $region172: #{graph_transformer_gfn_forward.1} parent=0 // pred_region
    _
  $region173: #{graph_transformer_gfn_forward.1} parent=0 // pred_fallthru
    _
  // Predicated region
  $region174: #{graph_transformer_gfn_forward.1} parent=0 // pred_check
    _
  $region175: #{graph_transformer_gfn_forward.1} parent=0 // pred_check_branch
    %206 = sbr.rel (0) target = $region177
  $region176: #{graph_transformer_gfn_forward.1} parent=0 // pred_region
    _
  $region177: #{graph_transformer_gfn_forward.1} parent=0 // pred_fallthru
    _
  // Predicated region
  $region178: #{graph_transformer_gfn_forward.1} parent=0 // pred_check
    _
  $region179: #{graph_transformer_gfn_forward.1} parent=0 // pred_check_branch
    %208 = sbr.rel (0) target = $region181
  $region180: #{graph_transformer_gfn_forward.1} parent=0 // pred_region
    _
  $region181: #{graph_transformer_gfn_forward.1} parent=0 // pred_fallthru
    _
  // Predicated region
  $region182: #{graph_transformer_gfn_forward.1} parent=0 // pred_check
    _
  $region183: #{graph_transformer_gfn_forward.1} parent=0 // pred_check_branch
    %210 = sbr.rel (0) target = $region185
  $region184: #{graph_transformer_gfn_forward.1} parent=0 // pred_region
    _
  $region185: #{graph_transformer_gfn_forward.1} parent=0 // pred_fallthru
    _
  // Predicated region
  $region186: #{graph_transformer_gfn_forward.1} parent=0 // pred_check
    _
  $region187: #{graph_transformer_gfn_forward.1} parent=0 // pred_check_branch
    %212 = sbr.rel (0) target = $region189
  $region188: #{graph_transformer_gfn_forward.1} parent=0 // pred_region
    _
  $region189: #{graph_transformer_gfn_forward.1} parent=0 // pred_fallthru
    _
  // Predicated region
  $region190: #{graph_transformer_gfn_forward.1} parent=0 // pred_check
    _
  $region191: #{graph_transformer_gfn_forward.1} parent=0 // pred_check_branch
    %214 = sbr.rel (0) target = $region193
  $region192: #{graph_transformer_gfn_forward.1} parent=0 // pred_region
    _
  $region193: #{graph_transformer_gfn_forward.1} parent=0 // pred_fallthru
    _
  // Predicated region
  $region194: #{graph_transformer_gfn_forward.1} parent=0 // pred_check
    _
  $region195: #{graph_transformer_gfn_forward.1} parent=0 // pred_check_branch
    %216 = sbr.rel (0) target = $region197
  $region196: #{graph_transformer_gfn_forward.1} parent=0 // pred_region
    _
  $region197: #{graph_transformer_gfn_forward.1} parent=0 // pred_fallthru
    _
  // Predicated region
  $region198: #{graph_transformer_gfn_forward.1} parent=0 // pred_check
    _
  $region199: #{graph_transformer_gfn_forward.1} parent=0 // pred_check_branch
    %218 = sbr.rel (0) target = $region201
  $region200: #{graph_transformer_gfn_forward.1} parent=0 // pred_region
    _
  $region201: #{graph_transformer_gfn_forward.1} parent=0 // pred_fallthru
    _
  // Predicated region
  $region202: #{graph_transformer_gfn_forward.1} parent=0 // pred_check
    _
  $region203: #{graph_transformer_gfn_forward.1} parent=0 // pred_check_branch
    %220 = sbr.rel (0) target = $region205
  $region204: #{graph_transformer_gfn_forward.1} parent=0 // pred_region
    _
  $region205: #{graph_transformer_gfn_forward.1} parent=0 // pred_fallthru
    _
  // Predicated region
  $region206: #{graph_transformer_gfn_forward.1} parent=0 // pred_check
    _
  $region207: #{graph_transformer_gfn_forward.1} parent=0 // pred_check_branch
    %222 = sbr.rel (0) target = $region209
  $region208: #{graph_transformer_gfn_forward.1} parent=0 // pred_region
    _
  $region209: #{graph_transformer_gfn_forward.1} parent=0 // pred_fallthru
    _
  // Predicated region
  $region210: #{graph_transformer_gfn_forward.1} parent=0 // pred_check
    _
  $region211: #{graph_transformer_gfn_forward.1} parent=0 // pred_check_branch
    %224 = sbr.rel (0) target = $region213
  $region212: #{graph_transformer_gfn_forward.1} parent=0 // pred_region
    _
  $region213: #{graph_transformer_gfn_forward.1} parent=0 // pred_fallthru
    _
  %v226 = vld [vmem:[%s7] sm:$0xff]
  %v227 = vld [vmem:[%s7 + $0x8] sm:$0xff]
  %v228 = vld [vmem:[%s7 + $0x10] sm:$0xff]
  %v229 = vld [vmem:[%s7 + $0x18] sm:$0xff]
  %v230 = vld [vmem:[%s7 + $0x20] sm:$0x1]
  %v231 = vld [vmem:[%s9] sm:$0xff]
  %v232 = vld [vmem:[%s9 + $0x8] sm:$0xff]
  %v233 = vld [vmem:[%s9 + $0x10] sm:$0xff]
  %v234 = vld [vmem:[%s9 + $0x18] sm:$0xff]
  %v235 = vld [vmem:[%s9 + $0x20] sm:$0x1]
  %v236 = vld [vmem:[%s11] sm:$0xff]
  %v237 = vld [vmem:[%s11 + $0x8] sm:$0xff]
  %v238 = vld [vmem:[%s11 + $0x10] sm:$0xff]
  %v239 = vld [vmem:[%s11 + $0x18] sm:$0xff]
  %v240 = vld [vmem:[%s11 + $0x20] sm:$0x1]
  %v241 = vld [vmem:[%s13] sm:$0xff]
  %v242 = vld [vmem:[%s13 + $0x8] sm:$0x1]
  %v243 = vld [vmem:[%s15] sm:$0x3]
  %v244 = vld [vmem:[%s29] sm:$0x3]
  %v245 = vld [vmem:[%s1] sm:$0x7f]
  %v246 = vld [vmem:[%s35] sm:$0xf]
  %v247 = vld [vmem:[%s37] sm:$0x1]
  %v248 = vld [vmem:[%s39] sm:$0xf]
  %v249 = vld [vmem:[%s39 + $0x4] sm:$0xf]
  %v250 = vld [vmem:[%s39 + $0x8] sm:$0xf]
  %v251 = vld [vmem:[%s39 + $0xc] sm:$0xf]
  %v252 = vld [vmem:[%s41] sm:$0x1]
  %v253 = vld [vmem:[%s43] sm:$0xf]
  %v254 = vld [vmem:[%s43 + $0x4] sm:$0xf]
  %v255 = vld [vmem:[%s43 + $0x8] sm:$0xf]
  %v256 = vld [vmem:[%s43 + $0xc] sm:$0xf]
  %v257 = vld [vmem:[%s45] sm:$0x1]
  %v258 = vpack.c.bf16 %v245, %v245
  %v260 = vlaneseq
  %v261 = vshrl.u32 %v260, 7
  %v262 = vsub.s32 0, %v261
  %v263 = vrot.slane %v247, %v262
  %vm265 = vcmask 64512
  %v267 = vsel %vm265, %v258, 0
  %vm269 = vcmask 1043456
  %v271 = vsel %vm269, %v246, 0
  %273 = vmatprep.subr.bf16.mxu0 0
  %274 = vmatpush1.bf16.msra.mxu0 0
  %275 = vmatprep.subr.bf16.mxu0 0
  %276 = vmatpush1.bf16.msra.mxu0 0
  %277 = vmatprep.subr.bf16.mxu0 0
  %278 = vmatpush1.bf16.msra.mxu0 0
  %279 = vmatprep.subr.bf16.mxu0 0
  %280 = vmatpush1.bf16.msra.mxu0 0
  %281 = vmatprep.subr.bf16.mxu0 0
  %282 = vmatpush1.bf16.msra.mxu0 0
  %283 = vmatprep.subr.bf16.mxu0 0
  %284 = vmatpush1.bf16.msra.mxu0 0
  %285 = vmatprep.subr.bf16.mxu0 0
  %286 = vmatpush1.bf16.msra.mxu0 0
  %287 = vmatprep.subr.bf16.mxu0 0
  %288 = vmatpush1.bf16.msra.mxu0 %v271
  %289 = vmatprep.subr.bf16.mxu0 0
  %290 = vmatpush2.bf16.msra.mxu0 0
  %291 = vmatprep.subr.bf16.mxu0 0
  %292 = vmatpush2.bf16.msra.mxu0 0
  %293 = vmatprep.subr.bf16.mxu0 0
  %294 = vmatpush2.bf16.msra.mxu0 0
  %295 = vmatprep.subr.bf16.mxu0 0
  %296 = vmatpush2.bf16.msra.mxu0 0
  %297 = vmatprep.subr.bf16.mxu0 0
  %298 = vmatpush2.bf16.msra.mxu0 0
  %299 = vmatprep.subr.bf16.mxu0 0
  %300 = vmatpush2.bf16.msra.mxu0 0
  %301 = vmatprep.subr.bf16.mxu0 0
  %302 = vmatpush2.bf16.msra.mxu0 0
  %303 = vmatprep.subr.bf16.mxu0 0
  %304 = vmatpush2.bf16.msra.mxu0 0
  %305 = vmatprep.mubr.bf16.mxu0 0
  %306 = vmatmul.mubr.bf16.gmra.mxu0 %v267
  %v307 = vpop.f32.mrf.mxu0
  %v308 = vadd.f32 %v263, %v307
  %v309 = vpop.f32.mrf.mxu0
  %v310 = vpop.f32.mrf.mxu0
  %v311 = vpop.f32.mrf.mxu0
  %312 = vdwg.mxu0
  %vm313 = vcmp.gt.f32.partialorder %v308, 0.0
  %v314 = vmul.f32 %v308, 0.01
  %v315 = vsel %vm313, %v308, %v314
  %v316 = vpack.c.bf16 %v315, %v315
  %v318 = vlaneseq
  %v319 = vshrl.u32 %v318, 7
  %v320 = vsub.s32 0, %v319
  %v321 = vrot.slane %v252, %v320
  %v327 = vunpack.c.l.b16 %v248
  %v328 = vunpack.c.l.b16 %v249
  %v329 = vunpack.c.l.b16 %v250
  %v330 = vunpack.c.l.b16 %v251
  %v331 = vpack.c.b16 %v328, %v327
  %v332 = vpack.c.b16 %v330, %v329
  %vm335 = vcmask 261120
  %v337 = vsel %vm335, %v316, 0
  %339 = vmatprep.subr.bf16.mxu0 0
  %340 = vmatpush1.bf16.msra.mxu0 0
  %341 = vmatprep.subr.bf16.mxu0 0
  %342 = vmatpush1.bf16.msra.mxu0 0
  %343 = vmatprep.subr.bf16.mxu0 0
  %344 = vmatpush1.bf16.msra.mxu0 0
  %345 = vmatprep.subr.bf16.mxu0 0
  %346 = vmatpush1.bf16.msra.mxu0 0
  %347 = vmatprep.subr.bf16.mxu0 0
  %348 = vmatpush1.bf16.msra.mxu0 0
  %349 = vmatprep.subr.bf16.mxu0 0
  %350 = vmatpush1.bf16.msra.mxu0 0
  %351 = vmatprep.subr.bf16.mxu0 0
  %352 = vmatpush1.bf16.msra.mxu0 %v332
  %353 = vmatprep.subr.bf16.mxu0 0
  %354 = vmatpush1.bf16.msra.mxu0 %v331
  %355 = vmatprep.subr.bf16.mxu0 0
  %356 = vmatpush2.bf16.msra.mxu0 0
  %357 = vmatprep.subr.bf16.mxu0 0
  %358 = vmatpush2.bf16.msra.mxu0 0
  %359 = vmatprep.subr.bf16.mxu0 0
  %360 = vmatpush2.bf16.msra.mxu0 0
  %361 = vmatprep.subr.bf16.mxu0 0
  %362 = vmatpush2.bf16.msra.mxu0 0
  %363 = vmatprep.subr.bf16.mxu0 0
  %364 = vmatpush2.bf16.msra.mxu0 0
  %365 = vmatprep.subr.bf16.mxu0 0
  %366 = vmatpush2.bf16.msra.mxu0 0
  %367 = vmatprep.subr.bf16.mxu0 0
  %368 = vmatpush2.bf16.msra.mxu0 0
  %369 = vmatprep.subr.bf16.mxu0 0
  %370 = vmatpush2.bf16.msra.mxu0 0
  %371 = vmatprep.mubr.bf16.mxu0 0
  %372 = vmatmul.mubr.bf16.gmra.mxu0 %v337
  %v373 = vpop.f32.mrf.mxu0
  %v374 = vadd.f32 %v321, %v373
  %v375 = vpop.f32.mrf.mxu0
  %v376 = vpop.f32.mrf.mxu0
  %v377 = vpop.f32.mrf.mxu0
  %378 = vdwg.mxu0
  %vm379 = vcmp.gt.f32.partialorder %v374, 0.0
  %v380 = vmul.f32 %v374, 0.01
  %v381 = vsel %vm379, %v374, %v380
  %v382 = vpack.c.bf16 %v381, %v381
  %v384 = vlaneseq
  %v385 = vshrl.u32 %v384, 7
  %v386 = vsub.s32 0, %v385
  %v387 = vrot.slane %v257, %v386
  %v393 = vunpack.c.l.b16 %v253
  %v394 = vunpack.c.l.b16 %v254
  %v395 = vunpack.c.l.b16 %v255
  %v396 = vunpack.c.l.b16 %v256
  %v397 = vpack.c.b16 %v394, %v393
  %v398 = vpack.c.b16 %v396, %v395
  %v402 = vsel %vm335, %v382, 0
  %404 = vmatprep.subr.bf16.mxu0 0
  %405 = vmatpush1.bf16.msra.mxu0 0
  %406 = vmatprep.subr.bf16.mxu0 0
  %407 = vmatpush1.bf16.msra.mxu0 0
  %408 = vmatprep.subr.bf16.mxu0 0
  %409 = vmatpush1.bf16.msra.mxu0 0
  %410 = vmatprep.subr.bf16.mxu0 0
  %411 = vmatpush1.bf16.msra.mxu0 0
  %412 = vmatprep.subr.bf16.mxu0 0
  %413 = vmatpush1.bf16.msra.mxu0 0
  %414 = vmatprep.subr.bf16.mxu0 0
  %415 = vmatpush1.bf16.msra.mxu0 0
  %416 = vmatprep.subr.bf16.mxu0 0
  %417 = vmatpush1.bf16.msra.mxu0 %v398
  %418 = vmatprep.subr.bf16.mxu0 0
  %419 = vmatpush1.bf16.msra.mxu0 %v397
  %420 = vmatprep.subr.bf16.mxu0 0
  %421 = vmatpush2.bf16.msra.mxu0 0
  %422 = vmatprep.subr.bf16.mxu0 0
  %423 = vmatpush2.bf16.msra.mxu0 0
  %424 = vmatprep.subr.bf16.mxu0 0
  %425 = vmatpush2.bf16.msra.mxu0 0
  %426 = vmatprep.subr.bf16.mxu0 0
  %427 = vmatpush2.bf16.msra.mxu0 0
  %428 = vmatprep.subr.bf16.mxu0 0
  %429 = vmatpush2.bf16.msra.mxu0 0
  %430 = vmatprep.subr.bf16.mxu0 0
  %431 = vmatpush2.bf16.msra.mxu0 0
  %432 = vmatprep.subr.bf16.mxu0 0
  %433 = vmatpush2.bf16.msra.mxu0 0
  %434 = vmatprep.subr.bf16.mxu0 0
  %435 = vmatpush2.bf16.msra.mxu0 0
  %436 = vmatprep.mubr.bf16.mxu0 0
  %437 = vmatmul.mubr.bf16.gmra.mxu0 %v402
  %v438 = vpop.f32.mrf.mxu0
  %v439 = vadd.f32 %v387, %v438
  %v440 = vpop.f32.mrf.mxu0
  %v441 = vpop.f32.mrf.mxu0
  %v442 = vpop.f32.mrf.mxu0
  %443 = vdwg.mxu0
  %v444 = vld [vmem:[%s3] sm:$0xff]
  %v445 = vld [vmem:[%s3 + $0x8] sm:$0x3]
  %v446 = vld [vmem:[%s47] sm:$0x3]
  %v447 = vld [vmem:[%s49] sm:$0x1]
  %v448 = vld [vmem:[%s51] sm:$0xf]
  %v449 = vld [vmem:[%s51 + $0x4] sm:$0xf]
  %v450 = vld [vmem:[%s51 + $0x8] sm:$0xf]
  %v451 = vld [vmem:[%s51 + $0xc] sm:$0xf]
  %v452 = vld [vmem:[%s53] sm:$0x1]
  %v453 = vld [vmem:[%s55] sm:$0xf]
  %v454 = vld [vmem:[%s55 + $0x4] sm:$0xf]
  %v455 = vld [vmem:[%s55 + $0x8] sm:$0xf]
  %v456 = vld [vmem:[%s55 + $0xc] sm:$0xf]
  %v457 = vld [vmem:[%s57] sm:$0x1]
  %v458 = vpack.c.bf16 %v445, %v444
  %v460 = vlaneseq
  %v461 = vshrl.u32 %v460, 7
  %v462 = vsub.s32 0, %v461
  %v463 = vrot.slane %v447, %v462
  %vm465 = vcmask 31744
  %v467 = vsel %vm465, %v458, 0
  %vm469 = vcmask 1041408
  %v471 = vsel %vm469, %v446, 0
  %473 = vmatprep.subr.bf16.mxu0 0
  %474 = vmatpush1.bf16.msra.mxu0 0
  %475 = vmatprep.subr.bf16.mxu0 0
  %476 = vmatpush1.bf16.msra.mxu0 0
  %477 = vmatprep.subr.bf16.mxu0 0
  %478 = vmatpush1.bf16.msra.mxu0 0
  %479 = vmatprep.subr.bf16.mxu0 0
  %480 = vmatpush1.bf16.msra.mxu0 0
  %481 = vmatprep.subr.bf16.mxu0 0
  %482 = vmatpush1.bf16.msra.mxu0 0
  %483 = vmatprep.subr.bf16.mxu0 0
  %484 = vmatpush1.bf16.msra.mxu0 0
  %485 = vmatprep.subr.bf16.mxu0 0
  %486 = vmatpush1.bf16.msra.mxu0 0
  %487 = vmatprep.subr.bf16.mxu0 0
  %488 = vmatpush1.bf16.msra.mxu0 %v471
  %489 = vmatprep.subr.bf16.mxu0 0
  %490 = vmatpush2.bf16.msra.mxu0 0
  %491 = vmatprep.subr.bf16.mxu0 0
  %492 = vmatpush2.bf16.msra.mxu0 0
  %493 = vmatprep.subr.bf16.mxu0 0
  %494 = vmatpush2.bf16.msra.mxu0 0
  %495 = vmatprep.subr.bf16.mxu0 0
  %496 = vmatpush2.bf16.msra.mxu0 0
  %497 = vmatprep.subr.bf16.mxu0 0
  %498 = vmatpush2.bf16.msra.mxu0 0
  %499 = vmatprep.subr.bf16.mxu0 0
  %500 = vmatpush2.bf16.msra.mxu0 0
  %501 = vmatprep.subr.bf16.mxu0 0
  %502 = vmatpush2.bf16.msra.mxu0 0
  %503 = vmatprep.subr.bf16.mxu0 0
  %504 = vmatpush2.bf16.msra.mxu0 0
  %505 = vmatprep.mubr.bf16.mxu0 0
  %506 = vmatmul.mubr.bf16.gmra.mxu0 %v467
  %v507 = vpop.f32.mrf.mxu0
  %v508 = vadd.f32 %v463, %v507
  %v509 = vpop.f32.mrf.mxu0
  %v510 = vpop.f32.mrf.mxu0
  %v511 = vadd.f32 %v463, %v510
  %v512 = vpop.f32.mrf.mxu0
  %513 = vdwg.mxu0
  %vm514 = vcmp.gt.f32.partialorder %v508, 0.0
  %vm515 = vcmp.gt.f32.partialorder %v511, 0.0
  %v516 = vmul.f32 %v508, 0.01
  %v517 = vmul.f32 %v511, 0.01
  %v518 = vsel %vm514, %v508, %v516
  %v519 = vsel %vm515, %v511, %v517
  %v520 = vpack.c.bf16 %v519, %v518
  %v522 = vlaneseq
  %v523 = vshrl.u32 %v522, 7
  %v524 = vsub.s32 0, %v523
  %v525 = vrot.slane %v452, %v524
  %v531 = vunpack.c.l.b16 %v448
  %v532 = vunpack.c.l.b16 %v449
  %v533 = vunpack.c.l.b16 %v450
  %v534 = vunpack.c.l.b16 %v451
  %v535 = vpack.c.b16 %v532, %v531
  %v536 = vpack.c.b16 %v534, %v533
  %v540 = vsel %vm335, %v520, 0
  %542 = vmatprep.subr.bf16.mxu0 0
  %543 = vmatpush1.bf16.msra.mxu0 0
  %544 = vmatprep.subr.bf16.mxu0 0
  %545 = vmatpush1.bf16.msra.mxu0 0
  %546 = vmatprep.subr.bf16.mxu0 0
  %547 = vmatpush1.bf16.msra.mxu0 0
  %548 = vmatprep.subr.bf16.mxu0 0
  %549 = vmatpush1.bf16.msra.mxu0 0
  %550 = vmatprep.subr.bf16.mxu0 0
  %551 = vmatpush1.bf16.msra.mxu0 0
  %552 = vmatprep.subr.bf16.mxu0 0
  %553 = vmatpush1.bf16.msra.mxu0 0
  %554 = vmatprep.subr.bf16.mxu0 0
  %555 = vmatpush1.bf16.msra.mxu0 %v536
  %556 = vmatprep.subr.bf16.mxu0 0
  %557 = vmatpush1.bf16.msra.mxu0 %v535
  %558 = vmatprep.subr.bf16.mxu0 0
  %559 = vmatpush2.bf16.msra.mxu0 0
  %560 = vmatprep.subr.bf16.mxu0 0
  %561 = vmatpush2.bf16.msra.mxu0 0
  %562 = vmatprep.subr.bf16.mxu0 0
  %563 = vmatpush2.bf16.msra.mxu0 0
  %564 = vmatprep.subr.bf16.mxu0 0
  %565 = vmatpush2.bf16.msra.mxu0 0
  %566 = vmatprep.subr.bf16.mxu0 0
  %567 = vmatpush2.bf16.msra.mxu0 0
  %568 = vmatprep.subr.bf16.mxu0 0
  %569 = vmatpush2.bf16.msra.mxu0 0
  %570 = vmatprep.subr.bf16.mxu0 0
  %571 = vmatpush2.bf16.msra.mxu0 0
  %572 = vmatprep.subr.bf16.mxu0 0
  %573 = vmatpush2.bf16.msra.mxu0 0
  %574 = vmatprep.mubr.bf16.mxu0 0
  %575 = vmatmul.mubr.bf16.gmra.mxu0 %v540
  %v576 = vpop.f32.mrf.mxu0
  %v577 = vadd.f32 %v525, %v576
  %v578 = vpop.f32.mrf.mxu0
  %v579 = vpop.f32.mrf.mxu0
  %v580 = vadd.f32 %v525, %v579
  %v581 = vpop.f32.mrf.mxu0
  %582 = vdwg.mxu0
  %vm583 = vcmp.gt.f32.partialorder %v577, 0.0
  %vm584 = vcmp.gt.f32.partialorder %v580, 0.0
  %v585 = vmul.f32 %v577, 0.01
  %v586 = vmul.f32 %v580, 0.01
  %v587 = vsel %vm583, %v577, %v585
  %v588 = vsel %vm584, %v580, %v586
  %v589 = vpack.c.bf16 %v588, %v587
  %v591 = vlaneseq
  %v592 = vshrl.u32 %v591, 7
  %v593 = vsub.s32 0, %v592
  %v594 = vrot.slane %v457, %v593
  %v600 = vunpack.c.l.b16 %v453
  %v601 = vunpack.c.l.b16 %v454
  %v602 = vunpack.c.l.b16 %v455
  %v603 = vunpack.c.l.b16 %v456
  %v604 = vpack.c.b16 %v601, %v600
  %v605 = vpack.c.b16 %v603, %v602
  %v609 = vsel %vm335, %v589, 0
  %611 = vmatprep.subr.bf16.mxu0 0
  %612 = vmatpush1.bf16.msra.mxu0 0
  %613 = vmatprep.subr.bf16.mxu0 0
  %614 = vmatpush1.bf16.msra.mxu0 0
  %615 = vmatprep.subr.bf16.mxu0 0
  %616 = vmatpush1.bf16.msra.mxu0 0
  %617 = vmatprep.subr.bf16.mxu0 0
  %618 = vmatpush1.bf16.msra.mxu0 0
  %619 = vmatprep.subr.bf16.mxu0 0
  %620 = vmatpush1.bf16.msra.mxu0 0
  %621 = vmatprep.subr.bf16.mxu0 0
  %622 = vmatpush1.bf16.msra.mxu0 0
  %623 = vmatprep.subr.bf16.mxu0 0
  %624 = vmatpush1.bf16.msra.mxu0 %v605
  %625 = vmatprep.subr.bf16.mxu0 0
  %626 = vmatpush1.bf16.msra.mxu0 %v604
  %627 = vmatprep.subr.bf16.mxu0 0
  %628 = vmatpush2.bf16.msra.mxu0 0
  %629 = vmatprep.subr.bf16.mxu0 0
  %630 = vmatpush2.bf16.msra.mxu0 0
  %631 = vmatprep.subr.bf16.mxu0 0
  %632 = vmatpush2.bf16.msra.mxu0 0
  %633 = vmatprep.subr.bf16.mxu0 0
  %634 = vmatpush2.bf16.msra.mxu0 0
  %635 = vmatprep.subr.bf16.mxu0 0
  %636 = vmatpush2.bf16.msra.mxu0 0
  %637 = vmatprep.subr.bf16.mxu0 0
  %638 = vmatpush2.bf16.msra.mxu0 0
  %639 = vmatprep.subr.bf16.mxu0 0
  %640 = vmatpush2.bf16.msra.mxu0 0
  %641 = vmatprep.subr.bf16.mxu0 0
  %642 = vmatpush2.bf16.msra.mxu0 0
  %643 = vmatprep.mubr.bf16.mxu0 0
  %644 = vmatmul.mubr.bf16.gmra.mxu0 %v609
  %v645 = vpop.f32.mrf.mxu0
  %v646 = vadd.f32 %v594, %v645
  %v647 = vpop.f32.mrf.mxu0
  %v648 = vpop.f32.mrf.mxu0
  %v649 = vadd.f32 %v594, %v648
  %v650 = vpop.f32.mrf.mxu0
  %651 = vdwg.mxu0
  %v652 = vld [vmem:[%s5] sm:$0x3]
  %v653 = vld [vmem:[%s59] sm:$0xf]
  %v654 = vld [vmem:[%s59 + $0x4] sm:$0xf]
  %v655 = vld [vmem:[%s61] sm:$0x1]
  %v656 = vld [vmem:[%s63] sm:$0xf]
  %v657 = vld [vmem:[%s63 + $0x4] sm:$0xf]
  %v658 = vld [vmem:[%s63 + $0x8] sm:$0xf]
  %v659 = vld [vmem:[%s63 + $0xc] sm:$0xf]
  %v660 = vld [vmem:[%s65] sm:$0x1]
  %v661 = vld [vmem:[%s67] sm:$0xf]
  %v662 = vld [vmem:[%s67 + $0x4] sm:$0xf]
  %v663 = vld [vmem:[%s67 + $0x8] sm:$0xf]
  %v664 = vld [vmem:[%s67 + $0xc] sm:$0xf]
  %v665 = vld [vmem:[%s69] sm:$0x1]
  %v666 = vpack.c.bf16 %v652, %v652
  %v668 = vlaneseq
  %v669 = vshrl.u32 %v668, 7
  %v670 = vsub.s32 0, %v669
  %v671 = vrot.slane %v655, %v670
  %v675 = vunpack.c.l.b16 %v653
  %v676 = vunpack.c.l.b16 %v654
  %v677 = vpack.c.b16 %v676, %v675
  %vm679 = vcmask 130048
  %v681 = vsel %vm679, %v666, 0
  %683 = vmatprep.subr.bf16.mxu0 0
  %684 = vmatpush1.bf16.msra.mxu0 0
  %685 = vmatprep.subr.bf16.mxu0 0
  %686 = vmatpush1.bf16.msra.mxu0 0
  %687 = vmatprep.subr.bf16.mxu0 0
  %688 = vmatpush1.bf16.msra.mxu0 0
  %689 = vmatprep.subr.bf16.mxu0 0
  %690 = vmatpush1.bf16.msra.mxu0 0
  %691 = vmatprep.subr.bf16.mxu0 0
  %692 = vmatpush1.bf16.msra.mxu0 0
  %693 = vmatprep.subr.bf16.mxu0 0
  %694 = vmatpush1.bf16.msra.mxu0 0
  %695 = vmatprep.subr.bf16.mxu0 0
  %696 = vmatpush1.bf16.msra.mxu0 0
  %697 = vmatprep.subr.bf16.mxu0 0
  %698 = vmatpush1.bf16.msra.mxu0 %v677
  %699 = vmatprep.subr.bf16.mxu0 0
  %700 = vmatpush2.bf16.msra.mxu0 0
  %701 = vmatprep.subr.bf16.mxu0 0
  %702 = vmatpush2.bf16.msra.mxu0 0
  %703 = vmatprep.subr.bf16.mxu0 0
  %704 = vmatpush2.bf16.msra.mxu0 0
  %705 = vmatprep.subr.bf16.mxu0 0
  %706 = vmatpush2.bf16.msra.mxu0 0
  %707 = vmatprep.subr.bf16.mxu0 0
  %708 = vmatpush2.bf16.msra.mxu0 0
  %709 = vmatprep.subr.bf16.mxu0 0
  %710 = vmatpush2.bf16.msra.mxu0 0
  %711 = vmatprep.subr.bf16.mxu0 0
  %712 = vmatpush2.bf16.msra.mxu0 0
  %713 = vmatprep.subr.bf16.mxu0 0
  %714 = vmatpush2.bf16.msra.mxu0 0
  %715 = vmatprep.mubr.bf16.mxu0 0
  %716 = vmatmul.mubr.bf16.gmra.mxu0 %v681
  %v717 = vpop.f32.mrf.mxu0
  %v718 = vadd.f32 %v671, %v717
  %v719 = vpop.f32.mrf.mxu0
  %v720 = vpop.f32.mrf.mxu0
  %v721 = vpop.f32.mrf.mxu0
  %722 = vdwg.mxu0
  %vm723 = vcmp.gt.f32.partialorder %v718, 0.0
  %v724 = vmul.f32 %v718, 0.01
  %v725 = vsel %vm723, %v718, %v724
  %v726 = vpack.c.bf16 %v725, %v725
  %v728 = vlaneseq
  %v729 = vshrl.u32 %v728, 7
  %v730 = vsub.s32 0, %v729
  %v731 = vrot.slane %v660, %v730
  %v737 = vunpack.c.l.b16 %v656
  %v738 = vunpack.c.l.b16 %v657
  %v739 = vunpack.c.l.b16 %v658
  %v740 = vunpack.c.l.b16 %v659
  %v741 = vpack.c.b16 %v738, %v737
  %v742 = vpack.c.b16 %v740, %v739
  %v746 = vsel %vm335, %v726, 0
  %748 = vmatprep.subr.bf16.mxu0 0
  %749 = vmatpush1.bf16.msra.mxu0 0
  %750 = vmatprep.subr.bf16.mxu0 0
  %751 = vmatpush1.bf16.msra.mxu0 0
  %752 = vmatprep.subr.bf16.mxu0 0
  %753 = vmatpush1.bf16.msra.mxu0 0
  %754 = vmatprep.subr.bf16.mxu0 0
  %755 = vmatpush1.bf16.msra.mxu0 0
  %756 = vmatprep.subr.bf16.mxu0 0
  %757 = vmatpush1.bf16.msra.mxu0 0
  %758 = vmatprep.subr.bf16.mxu0 0
  %759 = vmatpush1.bf16.msra.mxu0 0
  %760 = vmatprep.subr.bf16.mxu0 0
  %761 = vmatpush1.bf16.msra.mxu0 %v742
  %762 = vmatprep.subr.bf16.mxu0 0
  %763 = vmatpush1.bf16.msra.mxu0 %v741
  %764 = vmatprep.subr.bf16.mxu0 0
  %765 = vmatpush2.bf16.msra.mxu0 0
  %766 = vmatprep.subr.bf16.mxu0 0
  %767 = vmatpush2.bf16.msra.mxu0 0
  %768 = vmatprep.subr.bf16.mxu0 0
  %769 = vmatpush2.bf16.msra.mxu0 0
  %770 = vmatprep.subr.bf16.mxu0 0
  %771 = vmatpush2.bf16.msra.mxu0 0
  %772 = vmatprep.subr.bf16.mxu0 0
  %773 = vmatpush2.bf16.msra.mxu0 0
  %774 = vmatprep.subr.bf16.mxu0 0
  %775 = vmatpush2.bf16.msra.mxu0 0
  %776 = vmatprep.subr.bf16.mxu0 0
  %777 = vmatpush2.bf16.msra.mxu0 0
  %778 = vmatprep.subr.bf16.mxu0 0
  %779 = vmatpush2.bf16.msra.mxu0 0
  %780 = vmatprep.mubr.bf16.mxu0 0
  %781 = vmatmul.mubr.bf16.gmra.mxu0 %v746
  %v782 = vpop.f32.mrf.mxu0
  %v783 = vadd.f32 %v731, %v782
  %v784 = vpop.f32.mrf.mxu0
  %v785 = vpop.f32.mrf.mxu0
  %v786 = vpop.f32.mrf.mxu0
  %787 = vdwg.mxu0
  %vm788 = vcmp.gt.f32.partialorder %v783, 0.0
  %v789 = vmul.f32 %v783, 0.01
  %v790 = vsel %vm788, %v783, %v789
  %v791 = vpack.c.bf16 %v790, %v790
  %v793 = vlaneseq
  %v794 = vshrl.u32 %v793, 7
  %v795 = vsub.s32 0, %v794
  %v796 = vrot.slane %v665, %v795
  %v802 = vunpack.c.l.b16 %v661
  %v803 = vunpack.c.l.b16 %v662
  %v804 = vunpack.c.l.b16 %v663
  %v805 = vunpack.c.l.b16 %v664
  %v806 = vpack.c.b16 %v803, %v802
  %v807 = vpack.c.b16 %v805, %v804
  %v811 = vsel %vm335, %v791, 0
  %813 = vmatprep.subr.bf16.mxu0 0
  %814 = vmatpush1.bf16.msra.mxu0 0
  %815 = vmatprep.subr.bf16.mxu0 0
  %816 = vmatpush1.bf16.msra.mxu0 0
  %817 = vmatprep.subr.bf16.mxu0 0
  %818 = vmatpush1.bf16.msra.mxu0 0
  %819 = vmatprep.subr.bf16.mxu0 0
  %820 = vmatpush1.bf16.msra.mxu0 0
  %821 = vmatprep.subr.bf16.mxu0 0
  %822 = vmatpush1.bf16.msra.mxu0 0
  %823 = vmatprep.subr.bf16.mxu0 0
  %824 = vmatpush1.bf16.msra.mxu0 0
  %825 = vmatprep.subr.bf16.mxu0 0
  %826 = vmatpush1.bf16.msra.mxu0 %v807
  %827 = vmatprep.subr.bf16.mxu0 0
  %828 = vmatpush1.bf16.msra.mxu0 %v806
  %829 = vmatprep.subr.bf16.mxu0 0
  %830 = vmatpush2.bf16.msra.mxu0 0
  %831 = vmatprep.subr.bf16.mxu0 0
  %832 = vmatpush2.bf16.msra.mxu0 0
  %833 = vmatprep.subr.bf16.mxu0 0
  %834 = vmatpush2.bf16.msra.mxu0 0
  %835 = vmatprep.subr.bf16.mxu0 0
  %836 = vmatpush2.bf16.msra.mxu0 0
  %837 = vmatprep.subr.bf16.mxu0 0
  %838 = vmatpush2.bf16.msra.mxu0 0
  %839 = vmatprep.subr.bf16.mxu0 0
  %840 = vmatpush2.bf16.msra.mxu0 0
  %841 = vmatprep.subr.bf16.mxu0 0
  %842 = vmatpush2.bf16.msra.mxu0 0
  %843 = vmatprep.subr.bf16.mxu0 0
  %844 = vmatpush2.bf16.msra.mxu0 0
  %845 = vmatprep.mubr.bf16.mxu0 0
  %846 = vmatmul.mubr.bf16.gmra.mxu0 %v811
  %v847 = vpop.f32.mrf.mxu0
  %v848 = vadd.f32 %v796, %v847
  %v849 = vpop.f32.mrf.mxu0
  %v850 = vpop.f32.mrf.mxu0
  %v851 = vpop.f32.mrf.mxu0
  %852 = vdwg.mxu0
  %v853 = vld [vmem:[%s21] sm:$0xff]
  %v854 = vld [vmem:[%s21 + $0x8] sm:$0x1]
  %v855 = vld [vmem:[%s23] sm:$0xff]
  %v856 = vld [vmem:[%s23 + $0x8] sm:$0x1]
  %vm857 = vcmask 15360
  %v859 = vsel %vm857, %v855, 0
  %v862 = vsel %vm857, %v856, 0
  %v865 = vsel %vm469, %v848, 0
  %867 = vmatprep.subr.mxu0 0.0
  %868 = vmatpush1.msra.mxu0 0.0
  %869 = vmatprep.subr.mxu0 0.0
  %870 = vmatpush1.msra.mxu0 0.0
  %871 = vmatprep.subr.mxu0 0.0
  %872 = vmatpush1.msra.mxu0 0.0
  %873 = vmatprep.subr.mxu0 0.0
  %874 = vmatpush1.msra.mxu0 0.0
  %875 = vmatprep.subr.mxu0 0.0
  %876 = vmatpush1.msra.mxu0 0.0
  %877 = vmatprep.subr.mxu0 0.0
  %878 = vmatpush1.msra.mxu0 0.0
  %879 = vmatprep.subr.mxu0 0.0
  %880 = vmatpush1.msra.mxu0 0.0
  %881 = vmatprep.subr.mxu0 0.0
  %882 = vmatpush1.msra.mxu0 0.0
  %883 = vmatprep.subr.mxu0 0.0
  %884 = vmatpush1.msra.mxu0 0.0
  %885 = vmatprep.subr.mxu0 0.0
  %886 = vmatpush1.msra.mxu0 0.0
  %887 = vmatprep.subr.mxu0 0.0
  %888 = vmatpush1.msra.mxu0 0.0
  %889 = vmatprep.subr.mxu0 0.0
  %890 = vmatpush1.msra.mxu0 0.0
  %891 = vmatprep.subr.mxu0 0.0
  %892 = vmatpush1.msra.mxu0 0.0
  %893 = vmatprep.subr.mxu0 0.0
  %894 = vmatpush1.msra.mxu0 0.0
  %895 = vmatprep.subr.mxu0 0.0
  %896 = vmatpush1.msra.mxu0 0.0
  %897 = vmatprep.subr.mxu0 0.0
  %898 = vmatpush1.msra.mxu0 %v865
  %899 = vmatprep.subr.mxu0 0.0
  %900 = vmatpush2.msra.mxu0 0.0
  %901 = vmatprep.subr.mxu0 0.0
  %902 = vmatpush2.msra.mxu0 0.0
  %903 = vmatprep.subr.mxu0 0.0
  %904 = vmatpush2.msra.mxu0 0.0
  %905 = vmatprep.subr.mxu0 0.0
  %906 = vmatpush2.msra.mxu0 0.0
  %907 = vmatprep.subr.mxu0 0.0
  %908 = vmatpush2.msra.mxu0 0.0
  %909 = vmatprep.subr.mxu0 0.0
  %910 = vmatpush2.msra.mxu0 0.0
  %911 = vmatprep.subr.mxu0 0.0
  %912 = vmatpush2.msra.mxu0 0.0
  %913 = vmatprep.subr.mxu0 0.0
  %914 = vmatpush2.msra.mxu0 0.0
  %915 = vmatprep.subr.mxu0 0.0
  %916 = vmatpush2.msra.mxu0 0.0
  %917 = vmatprep.subr.mxu0 0.0
  %918 = vmatpush2.msra.mxu0 0.0
  %919 = vmatprep.subr.mxu0 0.0
  %920 = vmatpush2.msra.mxu0 0.0
  %921 = vmatprep.subr.mxu0 0.0
  %922 = vmatpush2.msra.mxu0 0.0
  %923 = vmatprep.subr.mxu0 0.0
  %924 = vmatpush2.msra.mxu0 0.0
  %925 = vmatprep.subr.mxu0 0.0
  %926 = vmatpush2.msra.mxu0 0.0
  %927 = vmatprep.subr.mxu0 0.0
  %928 = vmatpush2.msra.mxu0 0.0
  %929 = vmatprep.subr.mxu0 0.0
  %930 = vmatpush2.msra.mxu0 0.0
  %931 = vmatprep.mubr.f32.mxu0 0.0
  %932 = vmatmul.mubr.f32.gmra.mxu0 %v859
  %v933 = vpop.f32.mrf.mxu0
  %v934 = vadd.f32 0.0, %v933
  %v935 = vpop.f32.mrf.mxu0
  %936 = vmatprep.mubr.f32.mxu0 0.0
  %937 = vmatmul.mubr.f32.gmra.mxu0 %v862
  %v938 = vpop.f32.mrf.mxu0
  %v939 = vadd.f32 0.0, %v938
  %v940 = vpop.f32.mrf.mxu0
  %941 = vdwg.mxu0
  %vm942 = vcmask 56320
  %v944 = vsel %vm942, %v853, 0
  %v947 = vsel %vm942, %v854, 0
  %vm949 = vcmask 1046528
  %v951 = vsel %vm949, %v439, 0
  %953 = vmatprep.subr.mxu0 0.0
  %954 = vmatpush1.msra.mxu0 0.0
  %955 = vmatprep.subr.mxu0 0.0
  %956 = vmatpush1.msra.mxu0 0.0
  %957 = vmatprep.subr.mxu0 0.0
  %958 = vmatpush1.msra.mxu0 0.0
  %959 = vmatprep.subr.mxu0 0.0
  %960 = vmatpush1.msra.mxu0 0.0
  %961 = vmatprep.subr.mxu0 0.0
  %962 = vmatpush1.msra.mxu0 0.0
  %963 = vmatprep.subr.mxu0 0.0
  %964 = vmatpush1.msra.mxu0 0.0
  %965 = vmatprep.subr.mxu0 0.0
  %966 = vmatpush1.msra.mxu0 0.0
  %967 = vmatprep.subr.mxu0 0.0
  %968 = vmatpush1.msra.mxu0 0.0
  %969 = vmatprep.subr.mxu0 0.0
  %970 = vmatpush1.msra.mxu0 0.0
  %971 = vmatprep.subr.mxu0 0.0
  %972 = vmatpush1.msra.mxu0 0.0
  %973 = vmatprep.subr.mxu0 0.0
  %974 = vmatpush1.msra.mxu0 0.0
  %975 = vmatprep.subr.mxu0 0.0
  %976 = vmatpush1.msra.mxu0 0.0
  %977 = vmatprep.subr.mxu0 0.0
  %978 = vmatpush1.msra.mxu0 0.0
  %979 = vmatprep.subr.mxu0 0.0
  %980 = vmatpush1.msra.mxu0 0.0
  %981 = vmatprep.subr.mxu0 0.0
  %982 = vmatpush1.msra.mxu0 0.0
  %983 = vmatprep.subr.mxu0 0.0
  %984 = vmatpush1.msra.mxu0 %v951
  %985 = vmatprep.subr.mxu0 0.0
  %986 = vmatpush2.msra.mxu0 0.0
  %987 = vmatprep.subr.mxu0 0.0
  %988 = vmatpush2.msra.mxu0 0.0
  %989 = vmatprep.subr.mxu0 0.0
  %990 = vmatpush2.msra.mxu0 0.0
  %991 = vmatprep.subr.mxu0 0.0
  %992 = vmatpush2.msra.mxu0 0.0
  %993 = vmatprep.subr.mxu0 0.0
  %994 = vmatpush2.msra.mxu0 0.0
  %995 = vmatprep.subr.mxu0 0.0
  %996 = vmatpush2.msra.mxu0 0.0
  %997 = vmatprep.subr.mxu0 0.0
  %998 = vmatpush2.msra.mxu0 0.0
  %999 = vmatprep.subr.mxu0 0.0
  %1000 = vmatpush2.msra.mxu0 0.0
  %1001 = vmatprep.subr.mxu0 0.0
  %1002 = vmatpush2.msra.mxu0 0.0
  %1003 = vmatprep.subr.mxu0 0.0
  %1004 = vmatpush2.msra.mxu0 0.0
  %1005 = vmatprep.subr.mxu0 0.0
  %1006 = vmatpush2.msra.mxu0 0.0
  %1007 = vmatprep.subr.mxu0 0.0
  %1008 = vmatpush2.msra.mxu0 0.0
  %1009 = vmatprep.subr.mxu0 0.0
  %1010 = vmatpush2.msra.mxu0 0.0
  %1011 = vmatprep.subr.mxu0 0.0
  %1012 = vmatpush2.msra.mxu0 0.0
  %1013 = vmatprep.subr.mxu0 0.0
  %1014 = vmatpush2.msra.mxu0 0.0
  %1015 = vmatprep.subr.mxu0 0.0
  %1016 = vmatpush2.msra.mxu0 0.0
  %1017 = vmatprep.mubr.f32.mxu0 0.0
  %1018 = vmatmul.mubr.f32.gmra.mxu0 %v944
  %v1019 = vpop.f32.mrf.mxu0
  %v1020 = vadd.f32 %v934, %v1019
  %v1021 = vpop.f32.mrf.mxu0
  %1022 = vmatprep.mubr.f32.mxu0 0.0
  %1023 = vmatmul.mubr.f32.gmra.mxu0 %v947
  %v1024 = vpop.f32.mrf.mxu0
  %v1025 = vadd.f32 %v939, %v1024
  %v1026 = vpop.f32.mrf.mxu0
  %1027 = vdwg.mxu0
  %v1028 = vld [vmem:[%s17] sm:$0xff]
  %v1029 = vld [vmem:[%s17 + $0x8] sm:$0xff]
  %v1030 = vld [vmem:[%s17 + $0x10] sm:$0xff]
  %v1031 = vld [vmem:[%s17 + $0x18] sm:$0xff]
  %v1032 = vld [vmem:[%s17 + $0x20] sm:$0x1]
  %v1033 = vld [vmem:[%s19] sm:$0xff]
  %v1034 = vld [vmem:[%s19 + $0x8] sm:$0xff]
  %v1035 = vld [vmem:[%s19 + $0x10] sm:$0xff]
  %v1036 = vld [vmem:[%s19 + $0x18] sm:$0xff]
  %v1037 = vld [vmem:[%s19 + $0x20] sm:$0x1]
  %vm1038 = vcmask 80896
  %v1040 = vsel %vm1038, %v1028, 0
  %v1043 = vsel %vm1038, %v1029, 0
  %v1046 = vsel %vm1038, %v1030, 0
  %v1049 = vsel %vm1038, %v1031, 0
  %v1052 = vsel %vm1038, %v1032, 0
  %v1055 = vsel %vm469, %v649, 0
  %1057 = vmatprep.subr.mxu0 0.0
  %1058 = vmatpush1.msra.mxu0 0.0
  %1059 = vmatprep.subr.mxu0 0.0
  %1060 = vmatpush1.msra.mxu0 0.0
  %1061 = vmatprep.subr.mxu0 0.0
  %1062 = vmatpush1.msra.mxu0 0.0
  %1063 = vmatprep.subr.mxu0 0.0
  %1064 = vmatpush1.msra.mxu0 0.0
  %1065 = vmatprep.subr.mxu0 0.0
  %1066 = vmatpush1.msra.mxu0 0.0
  %1067 = vmatprep.subr.mxu0 0.0
  %1068 = vmatpush1.msra.mxu0 0.0
  %1069 = vmatprep.subr.mxu0 0.0
  %1070 = vmatpush1.msra.mxu0 0.0
  %1071 = vmatprep.subr.mxu0 0.0
  %1072 = vmatpush1.msra.mxu0 0.0
  %1073 = vmatprep.subr.mxu0 0.0
  %1074 = vmatpush1.msra.mxu0 0.0
  %1075 = vmatprep.subr.mxu0 0.0
  %1076 = vmatpush1.msra.mxu0 0.0
  %1077 = vmatprep.subr.mxu0 0.0
  %1078 = vmatpush1.msra.mxu0 0.0
  %1079 = vmatprep.subr.mxu0 0.0
  %1080 = vmatpush1.msra.mxu0 0.0
  %1081 = vmatprep.subr.mxu0 0.0
  %1082 = vmatpush1.msra.mxu0 0.0
  %1083 = vmatprep.subr.mxu0 0.0
  %1084 = vmatpush1.msra.mxu0 0.0
  %1085 = vmatprep.subr.mxu0 0.0
  %1086 = vmatpush1.msra.mxu0 %v1055
  %1087 = vmatprep.subr.mxu0 0.0
  %1088 = vmatpush1.msra.mxu0 %v646
  %1089 = vmatprep.subr.mxu0 0.0
  %1090 = vmatpush2.msra.mxu0 0.0
  %1091 = vmatprep.subr.mxu0 0.0
  %1092 = vmatpush2.msra.mxu0 0.0
  %1093 = vmatprep.subr.mxu0 0.0
  %1094 = vmatpush2.msra.mxu0 0.0
  %1095 = vmatprep.subr.mxu0 0.0
  %1096 = vmatpush2.msra.mxu0 0.0
  %1097 = vmatprep.subr.mxu0 0.0
  %1098 = vmatpush2.msra.mxu0 0.0
  %1099 = vmatprep.subr.mxu0 0.0
  %1100 = vmatpush2.msra.mxu0 0.0
  %1101 = vmatprep.subr.mxu0 0.0
  %1102 = vmatpush2.msra.mxu0 0.0
  %1103 = vmatprep.subr.mxu0 0.0
  %1104 = vmatpush2.msra.mxu0 0.0
  %1105 = vmatprep.subr.mxu0 0.0
  %1106 = vmatpush2.msra.mxu0 0.0
  %1107 = vmatprep.subr.mxu0 0.0
  %1108 = vmatpush2.msra.mxu0 0.0
  %1109 = vmatprep.subr.mxu0 0.0
  %1110 = vmatpush2.msra.mxu0 0.0
  %1111 = vmatprep.subr.mxu0 0.0
  %1112 = vmatpush2.msra.mxu0 0.0
  %1113 = vmatprep.subr.mxu0 0.0
  %1114 = vmatpush2.msra.mxu0 0.0
  %1115 = vmatprep.subr.mxu0 0.0
  %1116 = vmatpush2.msra.mxu0 0.0
  %1117 = vmatprep.subr.mxu0 0.0
  %1118 = vmatpush2.msra.mxu0 0.0
  %1119 = vmatprep.subr.mxu0 0.0
  %1120 = vmatpush2.msra.mxu0 0.0
  %1121 = vmatprep.mubr.f32.mxu0 0.0
  %1122 = vmatmul.mubr.f32.gmra.mxu0 %v1040
  %v1123 = vpop.f32.mrf.mxu0
  %v1124 = vadd.f32 %v1033, %v1123
  %v1125 = vpop.f32.mrf.mxu0
  %1126 = vmatprep.mubr.f32.mxu0 0.0
  %1127 = vmatmul.mubr.f32.gmra.mxu0 %v1043
  %v1128 = vpop.f32.mrf.mxu0
  %v1129 = vadd.f32 %v1034, %v1128
  %v1130 = vpop.f32.mrf.mxu0
  %1131 = vmatprep.mubr.f32.mxu0 0.0
  %1132 = vmatmul.mubr.f32.gmra.mxu0 %v1046
  %v1133 = vpop.f32.mrf.mxu0
  %v1134 = vadd.f32 %v1035, %v1133
  %v1135 = vpop.f32.mrf.mxu0
  %1136 = vmatprep.mubr.f32.mxu0 0.0
  %1137 = vmatmul.mubr.f32.gmra.mxu0 %v1049
  %v1138 = vpop.f32.mrf.mxu0
  %v1139 = vadd.f32 %v1036, %v1138
  %v1140 = vpop.f32.mrf.mxu0
  %1141 = vmatprep.mubr.f32.mxu0 0.0
  %1142 = vmatmul.mubr.f32.gmra.mxu0 %v1052
  %v1143 = vpop.f32.mrf.mxu0
  %v1144 = vadd.f32 %v1037, %v1143
  %v1145 = vpop.f32.mrf.mxu0
  %1146 = vdwg.mxu0
  %vm1147 = vcmask 72704
  %v1149 = vsel %vm1147, %v226, 0
  %v1152 = vsel %vm1147, %v227, 0
  %v1155 = vsel %vm1147, %v228, 0
  %v1158 = vsel %vm1147, %v229, 0
  %v1161 = vsel %vm1147, %v230, 0
  %vm1163 = vcmask 1040384
  %v1165 = vsel %vm1163, %v1025, 0
  %1167 = vmatprep.subr.mxu0 0.0
  %1168 = vmatpush1.msra.mxu0 0.0
  %1169 = vmatprep.subr.mxu0 0.0
  %1170 = vmatpush1.msra.mxu0 0.0
  %1171 = vmatprep.subr.mxu0 0.0
  %1172 = vmatpush1.msra.mxu0 0.0
  %1173 = vmatprep.subr.mxu0 0.0
  %1174 = vmatpush1.msra.mxu0 0.0
  %1175 = vmatprep.subr.mxu0 0.0
  %1176 = vmatpush1.msra.mxu0 0.0
  %1177 = vmatprep.subr.mxu0 0.0
  %1178 = vmatpush1.msra.mxu0 0.0
  %1179 = vmatprep.subr.mxu0 0.0
  %1180 = vmatpush1.msra.mxu0 0.0
  %1181 = vmatprep.subr.mxu0 0.0
  %1182 = vmatpush1.msra.mxu0 0.0
  %1183 = vmatprep.subr.mxu0 0.0
  %1184 = vmatpush1.msra.mxu0 0.0
  %1185 = vmatprep.subr.mxu0 0.0
  %1186 = vmatpush1.msra.mxu0 0.0
  %1187 = vmatprep.subr.mxu0 0.0
  %1188 = vmatpush1.msra.mxu0 0.0
  %1189 = vmatprep.subr.mxu0 0.0
  %1190 = vmatpush1.msra.mxu0 0.0
  %1191 = vmatprep.subr.mxu0 0.0
  %1192 = vmatpush1.msra.mxu0 0.0
  %1193 = vmatprep.subr.mxu0 0.0
  %1194 = vmatpush1.msra.mxu0 0.0
  %1195 = vmatprep.subr.mxu0 0.0
  %1196 = vmatpush1.msra.mxu0 %v1165
  %1197 = vmatprep.subr.mxu0 0.0
  %1198 = vmatpush1.msra.mxu0 %v1020
  %1199 = vmatprep.subr.mxu0 0.0
  %1200 = vmatpush2.msra.mxu0 0.0
  %1201 = vmatprep.subr.mxu0 0.0
  %1202 = vmatpush2.msra.mxu0 0.0
  %1203 = vmatprep.subr.mxu0 0.0
  %1204 = vmatpush2.msra.mxu0 0.0
  %1205 = vmatprep.subr.mxu0 0.0
  %1206 = vmatpush2.msra.mxu0 0.0
  %1207 = vmatprep.subr.mxu0 0.0
  %1208 = vmatpush2.msra.mxu0 0.0
  %1209 = vmatprep.subr.mxu0 0.0
  %1210 = vmatpush2.msra.mxu0 0.0
  %1211 = vmatprep.subr.mxu0 0.0
  %1212 = vmatpush2.msra.mxu0 0.0
  %1213 = vmatprep.subr.mxu0 0.0
  %1214 = vmatpush2.msra.mxu0 0.0
  %1215 = vmatprep.subr.mxu0 0.0
  %1216 = vmatpush2.msra.mxu0 0.0
  %1217 = vmatprep.subr.mxu0 0.0
  %1218 = vmatpush2.msra.mxu0 0.0
  %1219 = vmatprep.subr.mxu0 0.0
  %1220 = vmatpush2.msra.mxu0 0.0
  %1221 = vmatprep.subr.mxu0 0.0
  %1222 = vmatpush2.msra.mxu0 0.0
  %1223 = vmatprep.subr.mxu0 0.0
  %1224 = vmatpush2.msra.mxu0 0.0
  %1225 = vmatprep.subr.mxu0 0.0
  %1226 = vmatpush2.msra.mxu0 0.0
  %1227 = vmatprep.subr.mxu0 0.0
  %1228 = vmatpush2.msra.mxu0 0.0
  %1229 = vmatprep.subr.mxu0 0.0
  %1230 = vmatpush2.msra.mxu0 0.0
  %1231 = vmatprep.mubr.f32.mxu0 0.0
  %1232 = vmatmul.mubr.f32.gmra.mxu0 %v1149
  %v1233 = vpop.f32.mrf.mxu0
  %v1234 = vadd.f32 %v1124, %v1233
  %v1235 = vpop.f32.mrf.mxu0
  %1236 = vmatprep.mubr.f32.mxu0 0.0
  %1237 = vmatmul.mubr.f32.gmra.mxu0 %v1152
  %v1238 = vpop.f32.mrf.mxu0
  %v1239 = vadd.f32 %v1129, %v1238
  %v1240 = vpop.f32.mrf.mxu0
  %1241 = vmatprep.mubr.f32.mxu0 0.0
  %1242 = vmatmul.mubr.f32.gmra.mxu0 %v1155
  %v1243 = vpop.f32.mrf.mxu0
  %v1244 = vadd.f32 %v1134, %v1243
  %v1245 = vpop.f32.mrf.mxu0
  %1246 = vmatprep.mubr.f32.mxu0 0.0
  %1247 = vmatmul.mubr.f32.gmra.mxu0 %v1158
  %v1248 = vpop.f32.mrf.mxu0
  %v1249 = vadd.f32 %v1139, %v1248
  %v1250 = vpop.f32.mrf.mxu0
  %1251 = vmatprep.mubr.f32.mxu0 0.0
  %1252 = vmatmul.mubr.f32.gmra.mxu0 %v1161
  %v1253 = vpop.f32.mrf.mxu0
  %v1254 = vadd.f32 %v1144, %v1253
  %v1255 = vpop.f32.mrf.mxu0
  %1256 = vdwg.mxu0
  %v1257 = vmax.f32 %v1234, 0.0
  %v1258 = vmax.f32 %v1239, 0.0
  %v1259 = vmax.f32 %v1244, 0.0
  %v1260 = vmax.f32 %v1249, 0.0
  %v1261 = vmax.f32 %v1254, 0.0
  %v1262 = vadd.f32 %v1257, 1e-07
  %v1263 = vadd.f32 %v1258, 1e-07
  %v1264 = vadd.f32 %v1259, 1e-07
  %v1265 = vadd.f32 %v1260, 1e-07
  %v1266 = vadd.f32 %v1261, 1e-07
  %1267 = vxpose.xlu0.b32.start [1/16] %v231, 128
  %1268 = vxpose.xlu0.b32.cont [2/16] %v232, 128
  %1269 = vxpose.xlu0.b32.cont [3/16] %v233, 128
  %1270 = vxpose.xlu0.b32.cont [4/16] %v234, 128
  %1271 = vxpose.xlu0.b32.cont [5/16] %v235, 128
  %1272 = vxpose.xlu0.b32.cont [6/16] 0.0, 128
  %1273 = vxpose.xlu0.b32.cont [7/16] 0.0, 128
  %1274 = vxpose.xlu0.b32.cont [8/16] 0.0, 128
  %1275 = vxpose.xlu0.b32.cont [9/16] 0.0, 128
  %1276 = vxpose.xlu0.b32.cont [10/16] 0.0, 128
  %1277 = vxpose.xlu0.b32.cont [11/16] 0.0, 128
  %1278 = vxpose.xlu0.b32.cont [12/16] 0.0, 128
  %1279 = vxpose.xlu0.b32.cont [13/16] 0.0, 128
  %1280 = vxpose.xlu0.b32.cont [14/16] 0.0, 128
  %1281 = vxpose.xlu0.b32.cont [15/16] 0.0, 128
  %1282 = vxpose.xlu0.b32.end [16/16] 0.0, 128
  %v1283 = vpop.trf.xlu0
  %v1284 = vpop.trf.xlu0
  %v1285 = vpop.trf.xlu0
  %v1286 = vpop.trf.xlu0
  %v1287 = vpop.trf.xlu0
  %v1288 = vpop.trf.xlu0
  %v1289 = vpop.trf.xlu0
  %v1290 = vpop.trf.xlu0
  %v1291 = vpop.trf.xlu0
  %v1292 = vpop.trf.xlu0
  %v1293 = vpop.trf.xlu0
  %v1294 = vpop.trf.xlu0
  %v1295 = vpop.trf.xlu0
  %v1296 = vpop.trf.xlu0
  %v1297 = vpop.trf.xlu0
  %v1298 = vpop.trf.xlu0
  %vm1299 = vcmask 269312
  %v1301 = vsel %vm1299, %v1283, 0
  %v1304 = vsel %vm1299, %v1284, 0
  %v1307 = vsel %vm1163, %v1266, 0
  %1309 = vmatprep.subr.mxu0 0.0
  %1310 = vmatpush1.msra.mxu0 0.0
  %1311 = vmatprep.subr.mxu0 0.0
  %1312 = vmatpush1.msra.mxu0 0.0
  %1313 = vmatprep.subr.mxu0 0.0
  %1314 = vmatpush1.msra.mxu0 0.0
  %1315 = vmatprep.subr.mxu0 0.0
  %1316 = vmatpush1.msra.mxu0 0.0
  %1317 = vmatprep.subr.mxu0 0.0
  %1318 = vmatpush1.msra.mxu0 0.0
  %1319 = vmatprep.subr.mxu0 0.0
  %1320 = vmatpush1.msra.mxu0 0.0
  %1321 = vmatprep.subr.mxu0 0.0
  %1322 = vmatpush1.msra.mxu0 0.0
  %1323 = vmatprep.subr.mxu0 0.0
  %1324 = vmatpush1.msra.mxu0 0.0
  %1325 = vmatprep.subr.mxu0 0.0
  %1326 = vmatpush1.msra.mxu0 0.0
  %1327 = vmatprep.subr.mxu0 0.0
  %1328 = vmatpush1.msra.mxu0 0.0
  %1329 = vmatprep.subr.mxu0 0.0
  %1330 = vmatpush1.msra.mxu0 0.0
  %1331 = vmatprep.subr.mxu0 0.0
  %1332 = vmatpush1.msra.mxu0 %v1307
  %1333 = vmatprep.subr.mxu0 0.0
  %1334 = vmatpush1.msra.mxu0 %v1265
  %1335 = vmatprep.subr.mxu0 0.0
  %1336 = vmatpush1.msra.mxu0 %v1264
  %1337 = vmatprep.subr.mxu0 0.0
  %1338 = vmatpush1.msra.mxu0 %v1263
  %1339 = vmatprep.subr.mxu0 0.0
  %1340 = vmatpush1.msra.mxu0 %v1262
  %1341 = vmatprep.subr.mxu0 0.0
  %1342 = vmatpush2.msra.mxu0 0.0
  %1343 = vmatprep.subr.mxu0 0.0
  %1344 = vmatpush2.msra.mxu0 0.0
  %1345 = vmatprep.subr.mxu0 0.0
  %1346 = vmatpush2.msra.mxu0 0.0
  %1347 = vmatprep.subr.mxu0 0.0
  %1348 = vmatpush2.msra.mxu0 0.0
  %1349 = vmatprep.subr.mxu0 0.0
  %1350 = vmatpush2.msra.mxu0 0.0
  %1351 = vmatprep.subr.mxu0 0.0
  %1352 = vmatpush2.msra.mxu0 0.0
  %1353 = vmatprep.subr.mxu0 0.0
  %1354 = vmatpush2.msra.mxu0 0.0
  %1355 = vmatprep.subr.mxu0 0.0
  %1356 = vmatpush2.msra.mxu0 0.0
  %1357 = vmatprep.subr.mxu0 0.0
  %1358 = vmatpush2.msra.mxu0 0.0
  %1359 = vmatprep.subr.mxu0 0.0
  %1360 = vmatpush2.msra.mxu0 0.0
  %1361 = vmatprep.subr.mxu0 0.0
  %1362 = vmatpush2.msra.mxu0 0.0
  %1363 = vmatprep.subr.mxu0 0.0
  %1364 = vmatpush2.msra.mxu0 0.0
  %1365 = vmatprep.subr.mxu0 0.0
  %1366 = vmatpush2.msra.mxu0 0.0
  %1367 = vmatprep.subr.mxu0 0.0
  %1368 = vmatpush2.msra.mxu0 0.0
  %1369 = vmatprep.subr.mxu0 0.0
  %1370 = vmatpush2.msra.mxu0 0.0
  %1371 = vmatprep.subr.mxu0 0.0
  %1372 = vmatpush2.msra.mxu0 0.0
  %1373 = vmatprep.mubr.f32.mxu0 0.0
  %1374 = vmatmul.mubr.f32.gmra.mxu0 %v1301
  %v1375 = vpop.f32.mrf.mxu0
  %v1376 = vadd.f32 0.0, %v1375
  %v1377 = vpop.f32.mrf.mxu0
  %1378 = vmatprep.mubr.f32.mxu0 0.0
  %1379 = vmatmul.mubr.f32.gmra.mxu0 %v1304
  %v1380 = vpop.f32.mrf.mxu0
  %v1381 = vadd.f32 0.0, %v1380
  %v1382 = vpop.f32.mrf.mxu0
  %1383 = vdwg.mxu0
  %v1384 = vld [vmem:[%s71] sm:$0xff]
  %v1385 = vld [vmem:[%s71 + $0x8] sm:$0xff]
  %v1386 = vld [vmem:[%s71 + $0x10] sm:$0xff]
  %v1387 = vld [vmem:[%s71 + $0x18] sm:$0xff]
  %v1388 = vpack.c.bf16 %v1025, %v1020
  %v1389 = vadd.f32 %v1020, %v1376
  %v1390 = vadd.f32 %v1025, %v1381
  %v1391 = vld [vmem:[%s73] sm:$0xff]
  %v1392 = vld [vmem:[%s73 + $0x8] sm:$0xff]
  %v1393 = vld [vmem:[%s73 + $0x10] sm:$0xff]
  %v1394 = vld [vmem:[%s73 + $0x18] sm:$0xff]
  %v1395 = vpack.c.bf16 %v1390, %v1389
  %v1400 = vunpack.c.l.b16 %v1391
  %v1401 = vunpack.c.h.b16 %v1391
  %v1402 = vunpack.c.l.b16 %v1392
  %v1403 = vunpack.c.h.b16 %v1392
  %v1404 = vunpack.c.l.b16 %v1393
  %v1405 = vunpack.c.h.b16 %v1393
  %v1406 = vunpack.c.l.b16 %v1394
  %v1407 = vunpack.c.h.b16 %v1394
  %v1408 = vpack.c.b16 %v1402, %v1400
  %v1409 = vpack.c.b16 %v1403, %v1401
  %v1410 = vpack.c.b16 %v1406, %v1404
  %v1411 = vpack.c.b16 %v1407, %v1405
  %v1417 = vsel %vm335, %v1395, 0
  %1419 = vmatprep.subr.bf16.mxu0 0
  %1420 = vmatpush1.bf16.msra.mxu0 0
  %1421 = vmatprep.subr.bf16.mxu0 0
  %1422 = vmatpush1.bf16.msra.mxu0 0
  %1423 = vmatprep.subr.bf16.mxu0 0
  %1424 = vmatpush1.bf16.msra.mxu0 0
  %1425 = vmatprep.subr.bf16.mxu0 0
  %1426 = vmatpush1.bf16.msra.mxu0 0
  %1427 = vmatprep.subr.bf16.mxu0 0
  %1428 = vmatpush1.bf16.msra.mxu0 0
  %1429 = vmatprep.subr.bf16.mxu0 0
  %1430 = vmatpush1.bf16.msra.mxu0 0
  %1431 = vmatprep.subr.bf16.mxu0 %v1411
  %1432 = vmatpush1.bf16.msra.mxu0 %v1410
  %1433 = vmatprep.subr.bf16.mxu0 %v1409
  %1434 = vmatpush1.bf16.msra.mxu0 %v1408
  %1435 = vmatprep.subr.bf16.mxu0 0
  %1436 = vmatpush2.bf16.msra.mxu0 0
  %1437 = vmatprep.subr.bf16.mxu0 0
  %1438 = vmatpush2.bf16.msra.mxu0 0
  %1439 = vmatprep.subr.bf16.mxu0 0
  %1440 = vmatpush2.bf16.msra.mxu0 0
  %1441 = vmatprep.subr.bf16.mxu0 0
  %1442 = vmatpush2.bf16.msra.mxu0 0
  %1443 = vmatprep.subr.bf16.mxu0 0
  %1444 = vmatpush2.bf16.msra.mxu0 0
  %1445 = vmatprep.subr.bf16.mxu0 0
  %1446 = vmatpush2.bf16.msra.mxu0 0
  %1447 = vmatprep.subr.bf16.mxu0 0
  %1448 = vmatpush2.bf16.msra.mxu0 0
  %1449 = vmatprep.subr.bf16.mxu0 0
  %1450 = vmatpush2.bf16.msra.mxu0 0
  %1451 = vmatprep.mubr.bf16.mxu0 0
  %1452 = vmatmul.mubr.bf16.gmra.mxu0 %v1417
  %v1453 = vpop.f32.mrf.mxu0
  %v1454 = vadd.f32 0.0, %v1453
  %v1455 = vpop.f32.mrf.mxu0
  %v1456 = vadd.f32 0.0, %v1455
  %v1457 = vpop.f32.mrf.mxu0
  %v1458 = vadd.f32 0.0, %v1457
  %v1459 = vpop.f32.mrf.mxu0
  %v1460 = vadd.f32 0.0, %v1459
  %1461 = vdwg.mxu0
  %v1466 = vunpack.c.l.b16 %v1384
  %v1467 = vunpack.c.h.b16 %v1384
  %v1468 = vunpack.c.l.b16 %v1385
  %v1469 = vunpack.c.h.b16 %v1385
  %v1470 = vunpack.c.l.b16 %v1386
  %v1471 = vunpack.c.h.b16 %v1386
  %v1472 = vunpack.c.l.b16 %v1387
  %v1473 = vunpack.c.h.b16 %v1387
  %v1474 = vpack.c.b16 %v1468, %v1466
  %v1475 = vpack.c.b16 %v1469, %v1467
  %v1476 = vpack.c.b16 %v1472, %v1470
  %v1477 = vpack.c.b16 %v1473, %v1471
  %v1483 = vsel %vm335, %v1388, 0
  %1485 = vmatprep.subr.bf16.mxu0 0
  %1486 = vmatpush1.bf16.msra.mxu0 0
  %1487 = vmatprep.subr.bf16.mxu0 0
  %1488 = vmatpush1.bf16.msra.mxu0 0
  %1489 = vmatprep.subr.bf16.mxu0 0
  %1490 = vmatpush1.bf16.msra.mxu0 0
  %1491 = vmatprep.subr.bf16.mxu0 0
  %1492 = vmatpush1.bf16.msra.mxu0 0
  %1493 = vmatprep.subr.bf16.mxu0 0
  %1494 = vmatpush1.bf16.msra.mxu0 0
  %1495 = vmatprep.subr.bf16.mxu0 0
  %1496 = vmatpush1.bf16.msra.mxu0 0
  %1497 = vmatprep.subr.bf16.mxu0 %v1477
  %1498 = vmatpush1.bf16.msra.mxu0 %v1476
  %1499 = vmatprep.subr.bf16.mxu0 %v1475
  %1500 = vmatpush1.bf16.msra.mxu0 %v1474
  %1501 = vmatprep.subr.bf16.mxu0 0
  %1502 = vmatpush2.bf16.msra.mxu0 0
  %1503 = vmatprep.subr.bf16.mxu0 0
  %1504 = vmatpush2.bf16.msra.mxu0 0
  %1505 = vmatprep.subr.bf16.mxu0 0
  %1506 = vmatpush2.bf16.msra.mxu0 0
  %1507 = vmatprep.subr.bf16.mxu0 0
  %1508 = vmatpush2.bf16.msra.mxu0 0
  %1509 = vmatprep.subr.bf16.mxu0 0
  %1510 = vmatpush2.bf16.msra.mxu0 0
  %1511 = vmatprep.subr.bf16.mxu0 0
  %1512 = vmatpush2.bf16.msra.mxu0 0
  %1513 = vmatprep.subr.bf16.mxu0 0
  %1514 = vmatpush2.bf16.msra.mxu0 0
  %1515 = vmatprep.subr.bf16.mxu0 0
  %1516 = vmatpush2.bf16.msra.mxu0 0
  %1517 = vmatprep.mubr.bf16.mxu0 0
  %1518 = vmatmul.mubr.bf16.gmra.mxu0 %v1483
  %v1519 = vpop.f32.mrf.mxu0
  %v1520 = vadd.f32 %v1454, %v1519
  %v1521 = vpop.f32.mrf.mxu0
  %v1522 = vadd.f32 %v1456, %v1521
  %v1523 = vpop.f32.mrf.mxu0
  %v1524 = vadd.f32 %v1458, %v1523
  %v1525 = vpop.f32.mrf.mxu0
  %v1526 = vadd.f32 %v1460, %v1525
  %1527 = vdwg.mxu0
  %v1528 = vld [vmem:[%s75] sm:$0x3]
  %v1530 = vlaneseq
  %v1531 = vshrl.u32 %v1530, 7
  %v1532 = vsub.s32 0, %v1531
  %v1533 = vrot.slane %v1528, %v1532
  %v1534 = vlaneseq
  %v1535 = vshrl.u32 %v1534, 7
  %v1536 = vsub.s32 1, %v1535
  %v1537 = vrot.slane %v1528, %v1536
  %v1540 = vadd.f32 %v1520, %v1533
  %v1541 = vadd.f32 %v1522, %v1537
  %v1542 = vadd.f32 %v1524, %v1533
  %v1543 = vadd.f32 %v1526, %v1537
  %v1544 = vld [vmem:[%s77] sm:$0xf]
  %v1545 = vld [vmem:[%s77 + $0x4] sm:$0xf]
  %v1546 = vld [vmem:[%s77 + $0x8] sm:$0xf]
  %v1547 = vld [vmem:[%s77 + $0xc] sm:$0xf]
  %v1548 = vpack.c.bf16 %v1129, %v1124
  %v1549 = vpack.c.bf16 %v1139, %v1134
  %v1550 = vpack.c.bf16 %v1144, %v1144
  %v1555 = vunpack.c.l.b16 %v1544
  %v1556 = vunpack.c.l.b16 %v1545
  %v1557 = vunpack.c.l.b16 %v1546
  %v1558 = vunpack.c.l.b16 %v1547
  %v1559 = vpack.c.b16 %v1556, %v1555
  %v1560 = vpack.c.b16 %v1558, %v1557
  %v1564 = vsel %vm335, %v1548, 0
  %v1567 = vsel %vm335, %v1549, 0
  %v1570 = vsel %vm335, %v1550, 0
  %1572 = vmatprep.subr.bf16.mxu0 0
  %1573 = vmatpush1.bf16.msra.mxu0 0
  %1574 = vmatprep.subr.bf16.mxu0 0
  %1575 = vmatpush1.bf16.msra.mxu0 0
  %1576 = vmatprep.subr.bf16.mxu0 0
  %1577 = vmatpush1.bf16.msra.mxu0 0
  %1578 = vmatprep.subr.bf16.mxu0 0
  %1579 = vmatpush1.bf16.msra.mxu0 0
  %1580 = vmatprep.subr.bf16.mxu0 0
  %1581 = vmatpush1.bf16.msra.mxu0 0
  %1582 = vmatprep.subr.bf16.mxu0 0
  %1583 = vmatpush1.bf16.msra.mxu0 0
  %1584 = vmatprep.subr.bf16.mxu0 0
  %1585 = vmatpush1.bf16.msra.mxu0 %v1560
  %1586 = vmatprep.subr.bf16.mxu0 0
  %1587 = vmatpush1.bf16.msra.mxu0 %v1559
  %1588 = vmatprep.subr.bf16.mxu0 0
  %1589 = vmatpush2.bf16.msra.mxu0 0
  %1590 = vmatprep.subr.bf16.mxu0 0
  %1591 = vmatpush2.bf16.msra.mxu0 0
  %1592 = vmatprep.subr.bf16.mxu0 0
  %1593 = vmatpush2.bf16.msra.mxu0 0
  %1594 = vmatprep.subr.bf16.mxu0 0
  %1595 = vmatpush2.bf16.msra.mxu0 0
  %1596 = vmatprep.subr.bf16.mxu0 0
  %1597 = vmatpush2.bf16.msra.mxu0 0
  %1598 = vmatprep.subr.bf16.mxu0 0
  %1599 = vmatpush2.bf16.msra.mxu0 0
  %1600 = vmatprep.subr.bf16.mxu0 0
  %1601 = vmatpush2.bf16.msra.mxu0 0
  %1602 = vmatprep.subr.bf16.mxu0 0
  %1603 = vmatpush2.bf16.msra.mxu0 0
  %1604 = vmatprep.mubr.bf16.mxu0 0
  %1605 = vmatmul.mubr.bf16.gmra.mxu0 %v1564
  %v1606 = vpop.f32.mrf.mxu0
  %v1607 = vadd.f32 0.0, %v1606
  %v1608 = vpop.f32.mrf.mxu0
  %v1609 = vpop.f32.mrf.mxu0
  %v1610 = vadd.f32 0.0, %v1609
  %v1611 = vpop.f32.mrf.mxu0
  %1612 = vmatprep.mubr.bf16.mxu0 0
  %1613 = vmatmul.mubr.bf16.gmra.mxu0 %v1567
  %v1614 = vpop.f32.mrf.mxu0
  %v1615 = vadd.f32 0.0, %v1614
  %v1616 = vpop.f32.mrf.mxu0
  %v1617 = vpop.f32.mrf.mxu0
  %v1618 = vadd.f32 0.0, %v1617
  %v1619 = vpop.f32.mrf.mxu0
  %1620 = vmatprep.mubr.bf16.mxu0 0
  %1621 = vmatmul.mubr.bf16.gmra.mxu0 %v1570
  %v1622 = vpop.f32.mrf.mxu0
  %v1623 = vadd.f32 0.0, %v1622
  %v1624 = vpop.f32.mrf.mxu0
  %v1625 = vpop.f32.mrf.mxu0
  %v1626 = vpop.f32.mrf.mxu0
  %1627 = vdwg.mxu0
  %v1629 = vsel %vm1147, %v231, 0
  %v1632 = vsel %vm1147, %v232, 0
  %v1635 = vsel %vm1147, %v233, 0
  %v1638 = vsel %vm1147, %v234, 0
  %v1641 = vsel %vm1147, %v235, 0
  %v1644 = vsel %vm1163, %v1542, 0
  %1646 = vmatprep.subr.mxu0 0.0
  %1647 = vmatpush1.msra.mxu0 0.0
  %1648 = vmatprep.subr.mxu0 0.0
  %1649 = vmatpush1.msra.mxu0 0.0
  %1650 = vmatprep.subr.mxu0 0.0
  %1651 = vmatpush1.msra.mxu0 0.0
  %1652 = vmatprep.subr.mxu0 0.0
  %1653 = vmatpush1.msra.mxu0 0.0
  %1654 = vmatprep.subr.mxu0 0.0
  %1655 = vmatpush1.msra.mxu0 0.0
  %1656 = vmatprep.subr.mxu0 0.0
  %1657 = vmatpush1.msra.mxu0 0.0
  %1658 = vmatprep.subr.mxu0 0.0
  %1659 = vmatpush1.msra.mxu0 0.0
  %1660 = vmatprep.subr.mxu0 0.0
  %1661 = vmatpush1.msra.mxu0 0.0
  %1662 = vmatprep.subr.mxu0 0.0
  %1663 = vmatpush1.msra.mxu0 0.0
  %1664 = vmatprep.subr.mxu0 0.0
  %1665 = vmatpush1.msra.mxu0 0.0
  %1666 = vmatprep.subr.mxu0 0.0
  %1667 = vmatpush1.msra.mxu0 0.0
  %1668 = vmatprep.subr.mxu0 0.0
  %1669 = vmatpush1.msra.mxu0 0.0
  %1670 = vmatprep.subr.mxu0 0.0
  %1671 = vmatpush1.msra.mxu0 0.0
  %1672 = vmatprep.subr.mxu0 0.0
  %1673 = vmatpush1.msra.mxu0 0.0
  %1674 = vmatprep.subr.mxu0 0.0
  %1675 = vmatpush1.msra.mxu0 %v1644
  %1676 = vmatprep.subr.mxu0 0.0
  %1677 = vmatpush1.msra.mxu0 %v1540
  %1678 = vmatprep.subr.mxu0 0.0
  %1679 = vmatpush2.msra.mxu0 0.0
  %1680 = vmatprep.subr.mxu0 0.0
  %1681 = vmatpush2.msra.mxu0 0.0
  %1682 = vmatprep.subr.mxu0 0.0
  %1683 = vmatpush2.msra.mxu0 0.0
  %1684 = vmatprep.subr.mxu0 0.0
  %1685 = vmatpush2.msra.mxu0 0.0
  %1686 = vmatprep.subr.mxu0 0.0
  %1687 = vmatpush2.msra.mxu0 0.0
  %1688 = vmatprep.subr.mxu0 0.0
  %1689 = vmatpush2.msra.mxu0 0.0
  %1690 = vmatprep.subr.mxu0 0.0
  %1691 = vmatpush2.msra.mxu0 0.0
  %1692 = vmatprep.subr.mxu0 0.0
  %1693 = vmatpush2.msra.mxu0 0.0
  %1694 = vmatprep.subr.mxu0 0.0
  %1695 = vmatpush2.msra.mxu0 0.0
  %1696 = vmatprep.subr.mxu0 0.0
  %1697 = vmatpush2.msra.mxu0 0.0
  %1698 = vmatprep.subr.mxu0 0.0
  %1699 = vmatpush2.msra.mxu0 0.0
  %1700 = vmatprep.subr.mxu0 0.0
  %1701 = vmatpush2.msra.mxu0 0.0
  %1702 = vmatprep.subr.mxu0 0.0
  %1703 = vmatpush2.msra.mxu0 0.0
  %1704 = vmatprep.subr.mxu0 0.0
  %1705 = vmatpush2.msra.mxu0 0.0
  %1706 = vmatprep.subr.mxu0 0.0
  %1707 = vmatpush2.msra.mxu0 0.0
  %1708 = vmatprep.subr.mxu0 0.0
  %1709 = vmatpush2.msra.mxu0 0.0
  %1710 = vmatprep.mubr.f32.mxu0 0.0
  %1711 = vmatmul.mubr.f32.gmra.mxu0 %v1629
  %v1712 = vpop.f32.mrf.mxu0
  %v1713 = vadd.f32 0.0, %v1712
  %v1714 = vpop.f32.mrf.mxu0
  %1715 = vmatprep.mubr.f32.mxu0 0.0
  %1716 = vmatmul.mubr.f32.gmra.mxu0 %v1632
  %v1717 = vpop.f32.mrf.mxu0
  %v1718 = vadd.f32 0.0, %v1717
  %v1719 = vpop.f32.mrf.mxu0
  %1720 = vmatprep.mubr.f32.mxu0 0.0
  %1721 = vmatmul.mubr.f32.gmra.mxu0 %v1635
  %v1722 = vpop.f32.mrf.mxu0
  %v1723 = vadd.f32 0.0, %v1722
  %v1724 = vpop.f32.mrf.mxu0
  %1725 = vmatprep.mubr.f32.mxu0 0.0
  %1726 = vmatmul.mubr.f32.gmra.mxu0 %v1638
  %v1727 = vpop.f32.mrf.mxu0
  %v1728 = vadd.f32 0.0, %v1727
  %v1729 = vpop.f32.mrf.mxu0
  %1730 = vmatprep.mubr.f32.mxu0 0.0
  %1731 = vmatmul.mubr.f32.gmra.mxu0 %v1641
  %v1732 = vpop.f32.mrf.mxu0
  %v1733 = vadd.f32 0.0, %v1732
  %v1734 = vpop.f32.mrf.mxu0
  %1735 = vdwg.mxu0
  %1737 = vrot.lane.b32.xlu0 %v1540, 64
  %v1738 = vpop.permute.xlu0 %1737
  %1739 = vrot.lane.b32.xlu0 %v1542, 64
  %v1740 = vpop.permute.xlu0 %1739
  %v1742 = vsel %vm1163, %v1740, 0
  %1744 = vmatprep.subr.mxu0 0.0
  %1745 = vmatpush1.msra.mxu0 0.0
  %1746 = vmatprep.subr.mxu0 0.0
  %1747 = vmatpush1.msra.mxu0 0.0
  %1748 = vmatprep.subr.mxu0 0.0
  %1749 = vmatpush1.msra.mxu0 0.0
  %1750 = vmatprep.subr.mxu0 0.0
  %1751 = vmatpush1.msra.mxu0 0.0
  %1752 = vmatprep.subr.mxu0 0.0
  %1753 = vmatpush1.msra.mxu0 0.0
  %1754 = vmatprep.subr.mxu0 0.0
  %1755 = vmatpush1.msra.mxu0 0.0
  %1756 = vmatprep.subr.mxu0 0.0
  %1757 = vmatpush1.msra.mxu0 0.0
  %1758 = vmatprep.subr.mxu0 0.0
  %1759 = vmatpush1.msra.mxu0 0.0
  %1760 = vmatprep.subr.mxu0 0.0
  %1761 = vmatpush1.msra.mxu0 0.0
  %1762 = vmatprep.subr.mxu0 0.0
  %1763 = vmatpush1.msra.mxu0 0.0
  %1764 = vmatprep.subr.mxu0 0.0
  %1765 = vmatpush1.msra.mxu0 0.0
  %1766 = vmatprep.subr.mxu0 0.0
  %1767 = vmatpush1.msra.mxu0 0.0
  %1768 = vmatprep.subr.mxu0 0.0
  %1769 = vmatpush1.msra.mxu0 0.0
  %1770 = vmatprep.subr.mxu0 0.0
  %1771 = vmatpush1.msra.mxu0 0.0
  %1772 = vmatprep.subr.mxu0 0.0
  %1773 = vmatpush1.msra.mxu0 %v1742
  %1774 = vmatprep.subr.mxu0 0.0
  %1775 = vmatpush1.msra.mxu0 %v1738
  %1776 = vmatprep.subr.mxu0 0.0
  %1777 = vmatpush2.msra.mxu0 0.0
  %1778 = vmatprep.subr.mxu0 0.0
  %1779 = vmatpush2.msra.mxu0 0.0
  %1780 = vmatprep.subr.mxu0 0.0
  %1781 = vmatpush2.msra.mxu0 0.0
  %1782 = vmatprep.subr.mxu0 0.0
  %1783 = vmatpush2.msra.mxu0 0.0
  %1784 = vmatprep.subr.mxu0 0.0
  %1785 = vmatpush2.msra.mxu0 0.0
  %1786 = vmatprep.subr.mxu0 0.0
  %1787 = vmatpush2.msra.mxu0 0.0
  %1788 = vmatprep.subr.mxu0 0.0
  %1789 = vmatpush2.msra.mxu0 0.0
  %1790 = vmatprep.subr.mxu0 0.0
  %1791 = vmatpush2.msra.mxu0 0.0
  %1792 = vmatprep.subr.mxu0 0.0
  %1793 = vmatpush2.msra.mxu0 0.0
  %1794 = vmatprep.subr.mxu0 0.0
  %1795 = vmatpush2.msra.mxu0 0.0
  %1796 = vmatprep.subr.mxu0 0.0
  %1797 = vmatpush2.msra.mxu0 0.0
  %1798 = vmatprep.subr.mxu0 0.0
  %1799 = vmatpush2.msra.mxu0 0.0
  %1800 = vmatprep.subr.mxu0 0.0
  %1801 = vmatpush2.msra.mxu0 0.0
  %1802 = vmatprep.subr.mxu0 0.0
  %1803 = vmatpush2.msra.mxu0 0.0
  %1804 = vmatprep.subr.mxu0 0.0
  %1805 = vmatpush2.msra.mxu0 0.0
  %1806 = vmatprep.subr.mxu0 0.0
  %1807 = vmatpush2.msra.mxu0 0.0
  %1808 = vmatprep.mubr.f32.mxu0 0.0
  %1809 = vmatmul.mubr.f32.gmra.mxu0 %v1149
  %v1810 = vpop.f32.mrf.mxu0
  %v1811 = vadd.f32 %v1607, %v1810
  %v1812 = vpop.f32.mrf.mxu0
  %1813 = vmatprep.mubr.f32.mxu0 0.0
  %1814 = vmatmul.mubr.f32.gmra.mxu0 %v1152
  %v1815 = vpop.f32.mrf.mxu0
  %v1816 = vadd.f32 %v1610, %v1815
  %v1817 = vpop.f32.mrf.mxu0
  %1818 = vmatprep.mubr.f32.mxu0 0.0
  %1819 = vmatmul.mubr.f32.gmra.mxu0 %v1155
  %v1820 = vpop.f32.mrf.mxu0
  %v1821 = vadd.f32 %v1615, %v1820
  %v1822 = vpop.f32.mrf.mxu0
  %1823 = vmatprep.mubr.f32.mxu0 0.0
  %1824 = vmatmul.mubr.f32.gmra.mxu0 %v1158
  %v1825 = vpop.f32.mrf.mxu0
  %v1826 = vadd.f32 %v1618, %v1825
  %v1827 = vpop.f32.mrf.mxu0
  %1828 = vmatprep.mubr.f32.mxu0 0.0
  %1829 = vmatmul.mubr.f32.gmra.mxu0 %v1161
  %v1830 = vpop.f32.mrf.mxu0
  %v1831 = vadd.f32 %v1623, %v1830
  %v1832 = vpop.f32.mrf.mxu0
  %1833 = vdwg.mxu0
  %v1835 = vsel %vm1163, %v1543, 0
  %1837 = vmatprep.subr.mxu0 0.0
  %1838 = vmatpush1.msra.mxu0 0.0
  %1839 = vmatprep.subr.mxu0 0.0
  %1840 = vmatpush1.msra.mxu0 0.0
  %1841 = vmatprep.subr.mxu0 0.0
  %1842 = vmatpush1.msra.mxu0 0.0
  %1843 = vmatprep.subr.mxu0 0.0
  %1844 = vmatpush1.msra.mxu0 0.0
  %1845 = vmatprep.subr.mxu0 0.0
  %1846 = vmatpush1.msra.mxu0 0.0
  %1847 = vmatprep.subr.mxu0 0.0
  %1848 = vmatpush1.msra.mxu0 0.0
  %1849 = vmatprep.subr.mxu0 0.0
  %1850 = vmatpush1.msra.mxu0 0.0
  %1851 = vmatprep.subr.mxu0 0.0
  %1852 = vmatpush1.msra.mxu0 0.0
  %1853 = vmatprep.subr.mxu0 0.0
  %1854 = vmatpush1.msra.mxu0 0.0
  %1855 = vmatprep.subr.mxu0 0.0
  %1856 = vmatpush1.msra.mxu0 0.0
  %1857 = vmatprep.subr.mxu0 0.0
  %1858 = vmatpush1.msra.mxu0 0.0
  %1859 = vmatprep.subr.mxu0 0.0
  %1860 = vmatpush1.msra.mxu0 0.0
  %1861 = vmatprep.subr.mxu0 0.0
  %1862 = vmatpush1.msra.mxu0 0.0
  %1863 = vmatprep.subr.mxu0 0.0
  %1864 = vmatpush1.msra.mxu0 0.0
  %1865 = vmatprep.subr.mxu0 0.0
  %1866 = vmatpush1.msra.mxu0 %v1835
  %1867 = vmatprep.subr.mxu0 0.0
  %1868 = vmatpush1.msra.mxu0 %v1541
  %1869 = vmatprep.subr.mxu0 0.0
  %1870 = vmatpush2.msra.mxu0 0.0
  %1871 = vmatprep.subr.mxu0 0.0
  %1872 = vmatpush2.msra.mxu0 0.0
  %1873 = vmatprep.subr.mxu0 0.0
  %1874 = vmatpush2.msra.mxu0 0.0
  %1875 = vmatprep.subr.mxu0 0.0
  %1876 = vmatpush2.msra.mxu0 0.0
  %1877 = vmatprep.subr.mxu0 0.0
  %1878 = vmatpush2.msra.mxu0 0.0
  %1879 = vmatprep.subr.mxu0 0.0
  %1880 = vmatpush2.msra.mxu0 0.0
  %1881 = vmatprep.subr.mxu0 0.0
  %1882 = vmatpush2.msra.mxu0 0.0
  %1883 = vmatprep.subr.mxu0 0.0
  %1884 = vmatpush2.msra.mxu0 0.0
  %1885 = vmatprep.subr.mxu0 0.0
  %1886 = vmatpush2.msra.mxu0 0.0
  %1887 = vmatprep.subr.mxu0 0.0
  %1888 = vmatpush2.msra.mxu0 0.0
  %1889 = vmatprep.subr.mxu0 0.0
  %1890 = vmatpush2.msra.mxu0 0.0
  %1891 = vmatprep.subr.mxu0 0.0
  %1892 = vmatpush2.msra.mxu0 0.0
  %1893 = vmatprep.subr.mxu0 0.0
  %1894 = vmatpush2.msra.mxu0 0.0
  %1895 = vmatprep.subr.mxu0 0.0
  %1896 = vmatpush2.msra.mxu0 0.0
  %1897 = vmatprep.subr.mxu0 0.0
  %1898 = vmatpush2.msra.mxu0 0.0
  %1899 = vmatprep.subr.mxu0 0.0
  %1900 = vmatpush2.msra.mxu0 0.0
  %1901 = vmatprep.mubr.f32.mxu0 0.0
  %1902 = vmatmul.mubr.f32.gmra.mxu0 %v1149
  %v1903 = vpop.f32.mrf.mxu0
  %v1904 = vadd.f32 %v1607, %v1903
  %v1905 = vpop.f32.mrf.mxu0
  %1906 = vmatprep.mubr.f32.mxu0 0.0
  %1907 = vmatmul.mubr.f32.gmra.mxu0 %v1152
  %v1908 = vpop.f32.mrf.mxu0
  %v1909 = vadd.f32 %v1610, %v1908
  %v1910 = vpop.f32.mrf.mxu0
  %1911 = vmatprep.mubr.f32.mxu0 0.0
  %1912 = vmatmul.mubr.f32.gmra.mxu0 %v1155
  %v1913 = vpop.f32.mrf.mxu0
  %v1914 = vadd.f32 %v1615, %v1913
  %v1915 = vpop.f32.mrf.mxu0
  %1916 = vmatprep.mubr.f32.mxu0 0.0
  %1917 = vmatmul.mubr.f32.gmra.mxu0 %v1158
  %v1918 = vpop.f32.mrf.mxu0
  %v1919 = vadd.f32 %v1618, %v1918
  %v1920 = vpop.f32.mrf.mxu0
  %1921 = vmatprep.mubr.f32.mxu0 0.0
  %1922 = vmatmul.mubr.f32.gmra.mxu0 %v1161
  %v1923 = vpop.f32.mrf.mxu0
  %v1924 = vadd.f32 %v1623, %v1923
  %v1925 = vpop.f32.mrf.mxu0
  %1926 = vdwg.mxu0
  %v1927 = vmul.f32 %v1713, %v1811
  %v1928 = vmul.f32 %v1718, %v1816
  %v1929 = vmul.f32 %v1723, %v1821
  %v1930 = vmul.f32 %v1728, %v1826
  %v1931 = vmul.f32 %v1733, %v1831
  %v1932 = vlaneseq
  %v1933 = vshrl.u32 %v1932, 7
  %v1934 = vsub.s32 0, %v1933
  %v1935 = vrot.slane %v244, %v1934
  %v1936 = vmul.f32 %v1927, %v1935
  %v1937 = vmul.f32 %v1928, %v1935
  %v1938 = vmul.f32 %v1929, %v1935
  %v1939 = vmul.f32 %v1930, %v1935
  %v1940 = vmul.f32 %v1931, %v1935
  %vm1941 = vcmask 523264
  %v1942 = vsel %vm1941, %v1936, 0.0
  %1943 = vadd.xlane.f32.xlu0 %v1942
  %v1944 = vpop.xlane.xlu0 %1943
  %v1945 = vsel %vm1941, %v1937, 0.0
  %1946 = vadd.xlane.f32.xlu0 %v1945
  %v1947 = vpop.xlane.xlu0 %1946
  %v1948 = vsel %vm1941, %v1938, 0.0
  %1949 = vadd.xlane.f32.xlu0 %v1948
  %v1950 = vpop.xlane.xlu0 %1949
  %v1951 = vsel %vm1941, %v1939, 0.0
  %1952 = vadd.xlane.f32.xlu0 %v1951
  %v1953 = vpop.xlane.xlu0 %1952
  %vm1954 = vcmask 516096
  %v1955 = vsel %vm1954, %v1940, 0.0
  %1956 = vadd.xlane.f32.xlu0 %v1955
  %v1957 = vpop.xlane.xlu0 %1956
  %v1958 = vmul.f32 %v1944, 0.17677669
  %v1959 = vmul.f32 %v1947, 0.17677669
  %v1960 = vmul.f32 %v1950, 0.17677669
  %v1961 = vmul.f32 %v1953, 0.17677669
  %v1962 = vmul.f32 %v1957, 0.17677669
  %v1963 = vadd.f32 %v1958, %v236
  %v1964 = vadd.f32 %v1959, %v237
  %v1965 = vadd.f32 %v1960, %v238
  %v1966 = vadd.f32 %v1961, %v239
  %v1967 = vadd.f32 %v1962, %v240
  %v1968 = vsel %vm1147, %v1963, -inf
  %v1969 = vsel %vm1147, %v1964, -inf
  %v1970 = vsel %vm1147, %v1965, -inf
  %v1971 = vsel %vm1147, %v1966, -inf
  %vm1972 = vcmask 65536
  %v1973 = vsel %vm1972, %v1967, -inf
  %v1974 = vmax.f32 %v1968, %v1973
  %v1975 = vmax.f32 %v1974, %v1969
  %v1976 = vmax.f32 %v1970, %v1971
  %v1977 = vmax.f32 %v1975, %v1976
  %v1978 = vrot.slane %v1977, 4
  %v1979 = vmax.f32 %v1977, %v1978
  %v1980 = vrot.slane %v1979, 2
  %v1981 = vmax.f32 %v1979, %v1980
  %v1982 = vrot.slane %v1981, 1
  %v1983 = vmax.f32 %v1981, %v1982
  %v1984 = vmul.f32 %v231, %v1983
  %v1985 = vmul.f32 %v232, %v1983
  %v1986 = vmul.f32 %v233, %v1983
  %v1987 = vmul.f32 %v234, %v1983
  %v1988 = vmul.f32 %v235, %v1983
  %v1989 = vsel %vm1147, %v1984, 0.0
  %1990 = vadd.xlane.f32.xlu0 %v1989
  %v1991 = vpop.xlane.xlu0 %1990
  %v1992 = vsel %vm1147, %v1985, 0.0
  %1993 = vadd.xlane.f32.xlu0 %v1992
  %v1994 = vpop.xlane.xlu0 %1993
  %v1995 = vsel %vm1147, %v1986, 0.0
  %1996 = vadd.xlane.f32.xlu0 %v1995
  %v1997 = vpop.xlane.xlu0 %1996
  %v1998 = vsel %vm1147, %v1987, 0.0
  %1999 = vadd.xlane.f32.xlu0 %v1998
  %v2000 = vpop.xlane.xlu0 %1999
  %v2001 = vsel %vm1972, %v1988, 0.0
  %2002 = vadd.xlane.f32.xlu0 %v2001
  %v2003 = vpop.xlane.xlu0 %2002
  %v2004 = vsub.f32 %v1958, %v1991
  %v2005 = vsub.f32 %v1959, %v1994
  %v2006 = vsub.f32 %v1960, %v1997
  %v2007 = vsub.f32 %v1961, %v2000
  %v2008 = vsub.f32 %v1962, %v2003
  %v2009 = vmul.f32 %v2004, 1.442695
  %v2010 = vpow.pop %v2009
  %v2011 = vmul.f32 %v2005, 1.442695
  %v2012 = vpow.pop %v2011
  %v2013 = vmul.f32 %v2006, 1.442695
  %v2014 = vpow.pop %v2013
  %v2015 = vmul.f32 %v2007, 1.442695
  %v2016 = vpow.pop %v2015
  %v2017 = vmul.f32 %v2008, 1.442695
  %v2018 = vpow.pop %v2017
  %v2019 = vmul.f32 %v231, %v2010
  %v2020 = vmul.f32 %v232, %v2012
  %v2021 = vmul.f32 %v233, %v2014
  %v2022 = vmul.f32 %v234, %v2016
  %v2023 = vmul.f32 %v235, %v2018
  %v2024 = vsel %vm1147, %v2019, 0.0
  %v2025 = vsel %vm1147, %v2020, 0.0
  %v2026 = vadd.f32 %v2024, %v2025
  %v2027 = vsel %vm1147, %v2021, 0.0
  %v2028 = vadd.f32 %v2026, %v2027
  %v2029 = vsel %vm1147, %v2022, 0.0
  %v2030 = vadd.f32 %v2028, %v2029
  %v2031 = vsel %vm1972, %v2023, 0.0
  %v2032 = vadd.f32 %v2030, %v2031
  %v2033 = vrot.slane %v2032, 4
  %v2034 = vadd.f32 %v2032, %v2033
  %v2035 = vrot.slane %v2034, 2
  %v2036 = vadd.f32 %v2034, %v2035
  %v2037 = vrot.slane %v2036, 1
  %v2038 = vadd.f32 %v2036, %v2037
  %v2039 = vadd.f32 %v2038, 1e-16
  %v2040 = vmul.f32 %v231, %v2039
  %v2041 = vmul.f32 %v232, %v2039
  %v2042 = vmul.f32 %v233, %v2039
  %v2043 = vmul.f32 %v234, %v2039
  %v2044 = vmul.f32 %v235, %v2039
  %v2045 = vsel %vm1147, %v2040, 0.0
  %2046 = vadd.xlane.f32.xlu0 %v2045
  %v2047 = vpop.xlane.xlu0 %2046
  %v2048 = vsel %vm1147, %v2041, 0.0
  %2049 = vadd.xlane.f32.xlu0 %v2048
  %v2050 = vpop.xlane.xlu0 %2049
  %v2051 = vsel %vm1147, %v2042, 0.0
  %2052 = vadd.xlane.f32.xlu0 %v2051
  %v2053 = vpop.xlane.xlu0 %2052
  %v2054 = vsel %vm1147, %v2043, 0.0
  %2055 = vadd.xlane.f32.xlu0 %v2054
  %v2056 = vpop.xlane.xlu0 %2055
  %v2057 = vsel %vm1972, %v2044, 0.0
  %2058 = vadd.xlane.f32.xlu0 %v2057
  %v2059 = vpop.xlane.xlu0 %2058
  %v2060 = vrcp.pop %v2047
  %v2061 = vmul.f32 %v2010, %v2060
  %v2062 = vrcp.pop %v2050
  %v2063 = vmul.f32 %v2012, %v2062
  %v2064 = vrcp.pop %v2053
  %v2065 = vmul.f32 %v2014, %v2064
  %v2066 = vrcp.pop %v2056
  %v2067 = vmul.f32 %v2016, %v2066
  %v2068 = vrcp.pop %v2059
  %v2069 = vmul.f32 %v2018, %v2068
  %v2070 = vmul.f32 %v2061, %v1935
  %v2071 = vmul.f32 %v2063, %v1935
  %v2072 = vmul.f32 %v2065, %v1935
  %v2073 = vmul.f32 %v2067, %v1935
  %v2074 = vmul.f32 %v2069, %v1935
  %v2075 = vlaneseq
  %v2076 = vshrl.u32 %v2075, 7
  %v2077 = vsub.s32 1, %v2076
  %v2078 = vrot.slane %v244, %v2077
  %v2079 = vmul.f32 %v1927, %v2078
  %v2080 = vmul.f32 %v1928, %v2078
  %v2081 = vmul.f32 %v1929, %v2078
  %v2082 = vmul.f32 %v1930, %v2078
  %v2083 = vmul.f32 %v1931, %v2078
  %v2084 = vsel %vm1941, %v2079, 0.0
  %2085 = vadd.xlane.f32.xlu0 %v2084
  %v2086 = vpop.xlane.xlu0 %2085
  %v2087 = vsel %vm1941, %v2080, 0.0
  %2088 = vadd.xlane.f32.xlu0 %v2087
  %v2089 = vpop.xlane.xlu0 %2088
  %v2090 = vsel %vm1941, %v2081, 0.0
  %2091 = vadd.xlane.f32.xlu0 %v2090
  %v2092 = vpop.xlane.xlu0 %2091
  %v2093 = vsel %vm1941, %v2082, 0.0
  %2094 = vadd.xlane.f32.xlu0 %v2093
  %v2095 = vpop.xlane.xlu0 %2094
  %v2096 = vsel %vm1954, %v2083, 0.0
  %2097 = vadd.xlane.f32.xlu0 %v2096
  %v2098 = vpop.xlane.xlu0 %2097
  %v2099 = vmul.f32 %v2086, 0.17677669
  %v2100 = vmul.f32 %v2089, 0.17677669
  %v2101 = vmul.f32 %v2092, 0.17677669
  %v2102 = vmul.f32 %v2095, 0.17677669
  %v2103 = vmul.f32 %v2098, 0.17677669
  %v2104 = vadd.f32 %v2099, %v236
  %v2105 = vadd.f32 %v2100, %v237
  %v2106 = vadd.f32 %v2101, %v238
  %v2107 = vadd.f32 %v2102, %v239
  %v2108 = vadd.f32 %v2103, %v240
  %v2109 = vsel %vm1147, %v2104, -inf
  %v2110 = vsel %vm1147, %v2105, -inf
  %v2111 = vsel %vm1147, %v2106, -inf
  %v2112 = vsel %vm1147, %v2107, -inf
  %v2113 = vsel %vm1972, %v2108, -inf
  %v2114 = vmax.f32 %v2109, %v2113
  %v2115 = vmax.f32 %v2114, %v2110
  %v2116 = vmax.f32 %v2111, %v2112
  %v2117 = vmax.f32 %v2115, %v2116
  %v2118 = vrot.slane %v2117, 4
  %v2119 = vmax.f32 %v2117, %v2118
  %v2120 = vrot.slane %v2119, 2
  %v2121 = vmax.f32 %v2119, %v2120
  %v2122 = vrot.slane %v2121, 1
  %v2123 = vmax.f32 %v2121, %v2122
  %v2124 = vmul.f32 %v231, %v2123
  %v2125 = vmul.f32 %v232, %v2123
  %v2126 = vmul.f32 %v233, %v2123
  %v2127 = vmul.f32 %v234, %v2123
  %v2128 = vmul.f32 %v235, %v2123
  %v2129 = vsel %vm1147, %v2124, 0.0
  %2130 = vadd.xlane.f32.xlu0 %v2129
  %v2131 = vpop.xlane.xlu0 %2130
  %v2132 = vsel %vm1147, %v2125, 0.0
  %2133 = vadd.xlane.f32.xlu0 %v2132
  %v2134 = vpop.xlane.xlu0 %2133
  %v2135 = vsel %vm1147, %v2126, 0.0
  %2136 = vadd.xlane.f32.xlu0 %v2135
  %v2137 = vpop.xlane.xlu0 %2136
  %v2138 = vsel %vm1147, %v2127, 0.0
  %2139 = vadd.xlane.f32.xlu0 %v2138
  %v2140 = vpop.xlane.xlu0 %2139
  %v2141 = vsel %vm1972, %v2128, 0.0
  %2142 = vadd.xlane.f32.xlu0 %v2141
  %v2143 = vpop.xlane.xlu0 %2142
  %v2144 = vsub.f32 %v2099, %v2131
  %v2145 = vsub.f32 %v2100, %v2134
  %v2146 = vsub.f32 %v2101, %v2137
  %v2147 = vsub.f32 %v2102, %v2140
  %v2148 = vsub.f32 %v2103, %v2143
  %v2149 = vmul.f32 %v2144, 1.442695
  %v2150 = vpow.pop %v2149
  %v2151 = vmul.f32 %v2145, 1.442695
  %v2152 = vpow.pop %v2151
  %v2153 = vmul.f32 %v2146, 1.442695
  %v2154 = vpow.pop %v2153
  %v2155 = vmul.f32 %v2147, 1.442695
  %v2156 = vpow.pop %v2155
  %v2157 = vmul.f32 %v2148, 1.442695
  %v2158 = vpow.pop %v2157
  %v2159 = vmul.f32 %v231, %v2150
  %v2160 = vmul.f32 %v232, %v2152
  %v2161 = vmul.f32 %v233, %v2154
  %v2162 = vmul.f32 %v234, %v2156
  %v2163 = vmul.f32 %v235, %v2158
  %v2164 = vsel %vm1147, %v2159, 0.0
  %v2165 = vsel %vm1147, %v2160, 0.0
  %v2166 = vadd.f32 %v2164, %v2165
  %v2167 = vsel %vm1147, %v2161, 0.0
  %v2168 = vadd.f32 %v2166, %v2167
  %v2169 = vsel %vm1147, %v2162, 0.0
  %v2170 = vadd.f32 %v2168, %v2169
  %v2171 = vsel %vm1972, %v2163, 0.0
  %v2172 = vadd.f32 %v2170, %v2171
  %v2173 = vrot.slane %v2172, 4
  %v2174 = vadd.f32 %v2172, %v2173
  %v2175 = vrot.slane %v2174, 2
  %v2176 = vadd.f32 %v2174, %v2175
  %v2177 = vrot.slane %v2176, 1
  %v2178 = vadd.f32 %v2176, %v2177
  %v2179 = vadd.f32 %v2178, 1e-16
  %v2180 = vmul.f32 %v231, %v2179
  %v2181 = vmul.f32 %v232, %v2179
  %v2182 = vmul.f32 %v233, %v2179
  %v2183 = vmul.f32 %v234, %v2179
  %v2184 = vmul.f32 %v235, %v2179
  %v2185 = vsel %vm1147, %v2180, 0.0
  %2186 = vadd.xlane.f32.xlu0 %v2185
  %v2187 = vpop.xlane.xlu0 %2186
  %v2188 = vsel %vm1147, %v2181, 0.0
  %2189 = vadd.xlane.f32.xlu0 %v2188
  %v2190 = vpop.xlane.xlu0 %2189
  %v2191 = vsel %vm1147, %v2182, 0.0
  %2192 = vadd.xlane.f32.xlu0 %v2191
  %v2193 = vpop.xlane.xlu0 %2192
  %v2194 = vsel %vm1147, %v2183, 0.0
  %2195 = vadd.xlane.f32.xlu0 %v2194
  %v2196 = vpop.xlane.xlu0 %2195
  %v2197 = vsel %vm1972, %v2184, 0.0
  %2198 = vadd.xlane.f32.xlu0 %v2197
  %v2199 = vpop.xlane.xlu0 %2198
  %v2200 = vrcp.pop %v2187
  %v2201 = vmul.f32 %v2150, %v2200
  %v2202 = vrcp.pop %v2190
  %v2203 = vmul.f32 %v2152, %v2202
  %v2204 = vrcp.pop %v2193
  %v2205 = vmul.f32 %v2154, %v2204
  %v2206 = vrcp.pop %v2196
  %v2207 = vmul.f32 %v2156, %v2206
  %v2208 = vrcp.pop %v2199
  %v2209 = vmul.f32 %v2158, %v2208
  %v2210 = vmul.f32 %v2201, %v2078
  %v2211 = vmul.f32 %v2203, %v2078
  %v2212 = vmul.f32 %v2205, %v2078
  %v2213 = vmul.f32 %v2207, %v2078
  %v2214 = vmul.f32 %v2209, %v2078
  %v2215 = vadd.f32 %v2070, %v2210
  %v2216 = vadd.f32 %v2071, %v2211
  %v2217 = vadd.f32 %v2072, %v2212
  %v2218 = vadd.f32 %v2073, %v2213
  %v2219 = vadd.f32 %v2074, %v2214
  %v2220 = vmul.f32 %v1904, %v2215
  %v2221 = vmul.f32 %v1909, %v2216
  %v2222 = vmul.f32 %v1914, %v2217
  %v2223 = vmul.f32 %v1919, %v2218
  %v2224 = vmul.f32 %v1924, %v2219
  %2226 = vrot.lane.b32.xlu0 %v1541, 64
  %v2227 = vpop.permute.xlu0 %2226
  %2228 = vrot.lane.b32.xlu0 %v1543, 64
  %v2229 = vpop.permute.xlu0 %2228
  %v2233 = vsel %vm1163, %v2224, 0
  %2235 = vmatprep.subr.mxu0 0.0
  %2236 = vmatpush1.msra.mxu0 0.0
  %2237 = vmatprep.subr.mxu0 0.0
  %2238 = vmatpush1.msra.mxu0 0.0
  %2239 = vmatprep.subr.mxu0 0.0
  %2240 = vmatpush1.msra.mxu0 0.0
  %2241 = vmatprep.subr.mxu0 0.0
  %2242 = vmatpush1.msra.mxu0 0.0
  %2243 = vmatprep.subr.mxu0 0.0
  %2244 = vmatpush1.msra.mxu0 0.0
  %2245 = vmatprep.subr.mxu0 0.0
  %2246 = vmatpush1.msra.mxu0 0.0
  %2247 = vmatprep.subr.mxu0 0.0
  %2248 = vmatpush1.msra.mxu0 0.0
  %2249 = vmatprep.subr.mxu0 0.0
  %2250 = vmatpush1.msra.mxu0 0.0
  %2251 = vmatprep.subr.mxu0 0.0
  %2252 = vmatpush1.msra.mxu0 0.0
  %2253 = vmatprep.subr.mxu0 0.0
  %2254 = vmatpush1.msra.mxu0 0.0
  %2255 = vmatprep.subr.mxu0 0.0
  %2256 = vmatpush1.msra.mxu0 0.0
  %2257 = vmatprep.subr.mxu0 0.0
  %2258 = vmatpush1.msra.mxu0 %v2233
  %2259 = vmatprep.subr.mxu0 0.0
  %2260 = vmatpush1.msra.mxu0 %v2223
  %2261 = vmatprep.subr.mxu0 0.0
  %2262 = vmatpush1.msra.mxu0 %v2222
  %2263 = vmatprep.subr.mxu0 0.0
  %2264 = vmatpush1.msra.mxu0 %v2221
  %2265 = vmatprep.subr.mxu0 0.0
  %2266 = vmatpush1.msra.mxu0 %v2220
  %2267 = vmatprep.subr.mxu0 0.0
  %2268 = vmatpush2.msra.mxu0 0.0
  %2269 = vmatprep.subr.mxu0 0.0
  %2270 = vmatpush2.msra.mxu0 0.0
  %2271 = vmatprep.subr.mxu0 0.0
  %2272 = vmatpush2.msra.mxu0 0.0
  %2273 = vmatprep.subr.mxu0 0.0
  %2274 = vmatpush2.msra.mxu0 0.0
  %2275 = vmatprep.subr.mxu0 0.0
  %2276 = vmatpush2.msra.mxu0 0.0
  %2277 = vmatprep.subr.mxu0 0.0
  %2278 = vmatpush2.msra.mxu0 0.0
  %2279 = vmatprep.subr.mxu0 0.0
  %2280 = vmatpush2.msra.mxu0 0.0
  %2281 = vmatprep.subr.mxu0 0.0
  %2282 = vmatpush2.msra.mxu0 0.0
  %2283 = vmatprep.subr.mxu0 0.0
  %2284 = vmatpush2.msra.mxu0 0.0
  %2285 = vmatprep.subr.mxu0 0.0
  %2286 = vmatpush2.msra.mxu0 0.0
  %2287 = vmatprep.subr.mxu0 0.0
  %2288 = vmatpush2.msra.mxu0 0.0
  %2289 = vmatprep.subr.mxu0 0.0
  %2290 = vmatpush2.msra.mxu0 0.0
  %2291 = vmatprep.subr.mxu0 0.0
  %2292 = vmatpush2.msra.mxu0 0.0
  %2293 = vmatprep.subr.mxu0 0.0
  %2294 = vmatpush2.msra.mxu0 0.0
  %2295 = vmatprep.subr.mxu0 0.0
  %2296 = vmatpush2.msra.mxu0 0.0
  %2297 = vmatprep.subr.mxu0 0.0
  %2298 = vmatpush2.msra.mxu0 0.0
  %2299 = vmatprep.mubr.f32.mxu0 0.0
  %2300 = vmatmul.mubr.f32.gmra.mxu0 %v1301
  %v2301 = vpop.f32.mrf.mxu0
  %v2302 = vadd.f32 %v2227, %v2301
  %v2303 = vpop.f32.mrf.mxu0
  %2304 = vmatprep.mubr.f32.mxu0 0.0
  %2305 = vmatmul.mubr.f32.gmra.mxu0 %v1304
  %v2306 = vpop.f32.mrf.mxu0
  %v2307 = vadd.f32 %v2229, %v2306
  %v2308 = vpop.f32.mrf.mxu0
  %2309 = vdwg.mxu0
  %v2310 = vld [vmem:[%s79] sm:$0xf]
  %v2311 = vld [vmem:[%s79 + $0x4] sm:$0xf]
  %v2312 = vld [vmem:[%s79 + $0x8] sm:$0xf]
  %v2313 = vld [vmem:[%s79 + $0xc] sm:$0xf]
  %v2314 = vld [vmem:[%s79 + $0x10] sm:$0xf]
  %v2315 = vld [vmem:[%s79 + $0x14] sm:$0xf]
  %v2316 = vld [vmem:[%s79 + $0x18] sm:$0xf]
  %v2317 = vld [vmem:[%s79 + $0x1c] sm:$0xf]
  %v2318 = vpack.c.bf16 %v2307, %v2302
  %v2319 = vld [vmem:[%s81] sm:$0x1]
  %v2321 = vlaneseq
  %v2322 = vshrl.u32 %v2321, 7
  %v2323 = vsub.s32 0, %v2322
  %v2324 = vrot.slane %v2319, %v2323
  %v2334 = vunpack.c.l.b16 %v2310
  %v2335 = vunpack.c.l.b16 %v2311
  %v2336 = vunpack.c.l.b16 %v2312
  %v2337 = vunpack.c.l.b16 %v2313
  %v2338 = vunpack.c.l.b16 %v2314
  %v2339 = vunpack.c.l.b16 %v2315
  %v2340 = vunpack.c.l.b16 %v2316
  %v2341 = vunpack.c.l.b16 %v2317
  %v2342 = vpack.c.b16 %v2335, %v2334
  %v2343 = vpack.c.b16 %v2337, %v2336
  %v2344 = vpack.c.b16 %v2339, %v2338
  %v2345 = vpack.c.b16 %v2341, %v2340
  %v2351 = vsel %vm1941, %v2318, 0
  %2353 = vmatprep.subr.bf16.mxu0 0
  %2354 = vmatpush1.bf16.msra.mxu0 0
  %2355 = vmatprep.subr.bf16.mxu0 0
  %2356 = vmatpush1.bf16.msra.mxu0 0
  %2357 = vmatprep.subr.bf16.mxu0 0
  %2358 = vmatpush1.bf16.msra.mxu0 0
  %2359 = vmatprep.subr.bf16.mxu0 0
  %2360 = vmatpush1.bf16.msra.mxu0 0
  %2361 = vmatprep.subr.bf16.mxu0 0
  %2362 = vmatpush1.bf16.msra.mxu0 %v2345
  %2363 = vmatprep.subr.bf16.mxu0 0
  %2364 = vmatpush1.bf16.msra.mxu0 %v2344
  %2365 = vmatprep.subr.bf16.mxu0 0
  %2366 = vmatpush1.bf16.msra.mxu0 %v2343
  %2367 = vmatprep.subr.bf16.mxu0 0
  %2368 = vmatpush1.bf16.msra.mxu0 %v2342
  %2369 = vmatprep.subr.bf16.mxu0 0
  %2370 = vmatpush2.bf16.msra.mxu0 0
  %2371 = vmatprep.subr.bf16.mxu0 0
  %2372 = vmatpush2.bf16.msra.mxu0 0
  %2373 = vmatprep.subr.bf16.mxu0 0
  %2374 = vmatpush2.bf16.msra.mxu0 0
  %2375 = vmatprep.subr.bf16.mxu0 0
  %2376 = vmatpush2.bf16.msra.mxu0 0
  %2377 = vmatprep.subr.bf16.mxu0 0
  %2378 = vmatpush2.bf16.msra.mxu0 0
  %2379 = vmatprep.subr.bf16.mxu0 0
  %2380 = vmatpush2.bf16.msra.mxu0 0
  %2381 = vmatprep.subr.bf16.mxu0 0
  %2382 = vmatpush2.bf16.msra.mxu0 0
  %2383 = vmatprep.subr.bf16.mxu0 0
  %2384 = vmatpush2.bf16.msra.mxu0 0
  %2385 = vmatprep.mubr.bf16.mxu0 0
  %2386 = vmatmul.mubr.bf16.gmra.mxu0 %v2351
  %v2387 = vpop.f32.mrf.mxu0
  %v2388 = vadd.f32 %v2324, %v2387
  %v2389 = vpop.f32.mrf.mxu0
  %v2390 = vpop.f32.mrf.mxu0
  %v2391 = vadd.f32 %v2324, %v2390
  %v2392 = vpop.f32.mrf.mxu0
  %2393 = vdwg.mxu0
  %v2394 = vadd.f32 %v1020, %v2388
  %v2395 = vadd.f32 %v1025, %v2391
  %2396 = vxpose.xlu0.b32.start [1/16] %v241, 128
  %2397 = vxpose.xlu0.b32.cont [2/16] %v242, 128
  %2398 = vxpose.xlu0.b32.cont [3/16] 0.0, 128
  %2399 = vxpose.xlu0.b32.cont [4/16] 0.0, 128
  %2400 = vxpose.xlu0.b32.cont [5/16] 0.0, 128
  %2401 = vxpose.xlu0.b32.cont [6/16] 0.0, 128
  %2402 = vxpose.xlu0.b32.cont [7/16] 0.0, 128
  %2403 = vxpose.xlu0.b32.cont [8/16] 0.0, 128
  %2404 = vxpose.xlu0.b32.cont [9/16] 0.0, 128
  %2405 = vxpose.xlu0.b32.cont [10/16] 0.0, 128
  %2406 = vxpose.xlu0.b32.cont [11/16] 0.0, 128
  %2407 = vxpose.xlu0.b32.cont [12/16] 0.0, 128
  %2408 = vxpose.xlu0.b32.cont [13/16] 0.0, 128
  %2409 = vxpose.xlu0.b32.cont [14/16] 0.0, 128
  %2410 = vxpose.xlu0.b32.cont [15/16] 0.0, 128
  %2411 = vxpose.xlu0.b32.end [16/16] 0.0, 128
  %v2412 = vpop.trf.xlu0
  %v2413 = vpop.trf.xlu0
  %v2414 = vpop.trf.xlu0
  %v2415 = vpop.trf.xlu0
  %v2416 = vpop.trf.xlu0
  %v2417 = vpop.trf.xlu0
  %v2418 = vpop.trf.xlu0
  %v2419 = vpop.trf.xlu0
  %v2420 = vpop.trf.xlu0
  %v2421 = vpop.trf.xlu0
  %v2422 = vpop.trf.xlu0
  %v2423 = vpop.trf.xlu0
  %v2424 = vpop.trf.xlu0
  %v2425 = vpop.trf.xlu0
  %v2426 = vpop.trf.xlu0
  %v2427 = vpop.trf.xlu0
  %v2429 = vsel %vm1147, %v2412, 0
  %v2432 = vsel %vm1163, %v2395, 0
  %2434 = vmatprep.subr.mxu0 0.0
  %2435 = vmatpush1.msra.mxu0 0.0
  %2436 = vmatprep.subr.mxu0 0.0
  %2437 = vmatpush1.msra.mxu0 0.0
  %2438 = vmatprep.subr.mxu0 0.0
  %2439 = vmatpush1.msra.mxu0 0.0
  %2440 = vmatprep.subr.mxu0 0.0
  %2441 = vmatpush1.msra.mxu0 0.0
  %2442 = vmatprep.subr.mxu0 0.0
  %2443 = vmatpush1.msra.mxu0 0.0
  %2444 = vmatprep.subr.mxu0 0.0
  %2445 = vmatpush1.msra.mxu0 0.0
  %2446 = vmatprep.subr.mxu0 0.0
  %2447 = vmatpush1.msra.mxu0 0.0
  %2448 = vmatprep.subr.mxu0 0.0
  %2449 = vmatpush1.msra.mxu0 0.0
  %2450 = vmatprep.subr.mxu0 0.0
  %2451 = vmatpush1.msra.mxu0 0.0
  %2452 = vmatprep.subr.mxu0 0.0
  %2453 = vmatpush1.msra.mxu0 0.0
  %2454 = vmatprep.subr.mxu0 0.0
  %2455 = vmatpush1.msra.mxu0 0.0
  %2456 = vmatprep.subr.mxu0 0.0
  %2457 = vmatpush1.msra.mxu0 0.0
  %2458 = vmatprep.subr.mxu0 0.0
  %2459 = vmatpush1.msra.mxu0 0.0
  %2460 = vmatprep.subr.mxu0 0.0
  %2461 = vmatpush1.msra.mxu0 0.0
  %2462 = vmatprep.subr.mxu0 0.0
  %2463 = vmatpush1.msra.mxu0 %v2432
  %2464 = vmatprep.subr.mxu0 0.0
  %2465 = vmatpush1.msra.mxu0 %v2394
  %2466 = vmatprep.subr.mxu0 0.0
  %2467 = vmatpush2.msra.mxu0 0.0
  %2468 = vmatprep.subr.mxu0 0.0
  %2469 = vmatpush2.msra.mxu0 0.0
  %2470 = vmatprep.subr.mxu0 0.0
  %2471 = vmatpush2.msra.mxu0 0.0
  %2472 = vmatprep.subr.mxu0 0.0
  %2473 = vmatpush2.msra.mxu0 0.0
  %2474 = vmatprep.subr.mxu0 0.0
  %2475 = vmatpush2.msra.mxu0 0.0
  %2476 = vmatprep.subr.mxu0 0.0
  %2477 = vmatpush2.msra.mxu0 0.0
  %2478 = vmatprep.subr.mxu0 0.0
  %2479 = vmatpush2.msra.mxu0 0.0
  %2480 = vmatprep.subr.mxu0 0.0
  %2481 = vmatpush2.msra.mxu0 0.0
  %2482 = vmatprep.subr.mxu0 0.0
  %2483 = vmatpush2.msra.mxu0 0.0
  %2484 = vmatprep.subr.mxu0 0.0
  %2485 = vmatpush2.msra.mxu0 0.0
  %2486 = vmatprep.subr.mxu0 0.0
  %2487 = vmatpush2.msra.mxu0 0.0
  %2488 = vmatprep.subr.mxu0 0.0
  %2489 = vmatpush2.msra.mxu0 0.0
  %2490 = vmatprep.subr.mxu0 0.0
  %2491 = vmatpush2.msra.mxu0 0.0
  %2492 = vmatprep.subr.mxu0 0.0
  %2493 = vmatpush2.msra.mxu0 0.0
  %2494 = vmatprep.subr.mxu0 0.0
  %2495 = vmatpush2.msra.mxu0 0.0
  %2496 = vmatprep.subr.mxu0 0.0
  %2497 = vmatpush2.msra.mxu0 0.0
  %2498 = vmatprep.mubr.f32.mxu0 0.0
  %2499 = vmatmul.mubr.f32.gmra.mxu0 %v2429
  %v2500 = vpop.f32.mrf.mxu0
  %v2501 = vadd.f32 0.0, %v2500
  %v2502 = vpop.f32.mrf.mxu0
  %2503 = vdwg.mxu0
  %vm2504 = vcmask 254976
  %v2505 = vsel %vm2504, %v2501, 0.0
  %2506 = vadd.xlane.f32.xlu0 %v2505
  %v2507 = vpop.xlane.xlu0 %2506
  %v2508 = vmul.f32 %v2507, %v243
  %v2510 = vsel %vm857, %v241, 0
  %v2513 = vsel %vm857, %v242, 0
  %v2516 = vsel %vm469, %v2508, 0
  %2518 = vmatprep.subr.mxu0 0.0
  %2519 = vmatpush1.msra.mxu0 0.0
  %2520 = vmatprep.subr.mxu0 0.0
  %2521 = vmatpush1.msra.mxu0 0.0
  %2522 = vmatprep.subr.mxu0 0.0
  %2523 = vmatpush1.msra.mxu0 0.0
  %2524 = vmatprep.subr.mxu0 0.0
  %2525 = vmatpush1.msra.mxu0 0.0
  %2526 = vmatprep.subr.mxu0 0.0
  %2527 = vmatpush1.msra.mxu0 0.0
  %2528 = vmatprep.subr.mxu0 0.0
  %2529 = vmatpush1.msra.mxu0 0.0
  %2530 = vmatprep.subr.mxu0 0.0
  %2531 = vmatpush1.msra.mxu0 0.0
  %2532 = vmatprep.subr.mxu0 0.0
  %2533 = vmatpush1.msra.mxu0 0.0
  %2534 = vmatprep.subr.mxu0 0.0
  %2535 = vmatpush1.msra.mxu0 0.0
  %2536 = vmatprep.subr.mxu0 0.0
  %2537 = vmatpush1.msra.mxu0 0.0
  %2538 = vmatprep.subr.mxu0 0.0
  %2539 = vmatpush1.msra.mxu0 0.0
  %2540 = vmatprep.subr.mxu0 0.0
  %2541 = vmatpush1.msra.mxu0 0.0
  %2542 = vmatprep.subr.mxu0 0.0
  %2543 = vmatpush1.msra.mxu0 0.0
  %2544 = vmatprep.subr.mxu0 0.0
  %2545 = vmatpush1.msra.mxu0 0.0
  %2546 = vmatprep.subr.mxu0 0.0
  %2547 = vmatpush1.msra.mxu0 0.0
  %2548 = vmatprep.subr.mxu0 0.0
  %2549 = vmatpush1.msra.mxu0 %v2516
  %2550 = vmatprep.subr.mxu0 0.0
  %2551 = vmatpush2.msra.mxu0 0.0
  %2552 = vmatprep.subr.mxu0 0.0
  %2553 = vmatpush2.msra.mxu0 0.0
  %2554 = vmatprep.subr.mxu0 0.0
  %2555 = vmatpush2.msra.mxu0 0.0
  %2556 = vmatprep.subr.mxu0 0.0
  %2557 = vmatpush2.msra.mxu0 0.0
  %2558 = vmatprep.subr.mxu0 0.0
  %2559 = vmatpush2.msra.mxu0 0.0
  %2560 = vmatprep.subr.mxu0 0.0
  %2561 = vmatpush2.msra.mxu0 0.0
  %2562 = vmatprep.subr.mxu0 0.0
  %2563 = vmatpush2.msra.mxu0 0.0
  %2564 = vmatprep.subr.mxu0 0.0
  %2565 = vmatpush2.msra.mxu0 0.0
  %2566 = vmatprep.subr.mxu0 0.0
  %2567 = vmatpush2.msra.mxu0 0.0
  %2568 = vmatprep.subr.mxu0 0.0
  %2569 = vmatpush2.msra.mxu0 0.0
  %2570 = vmatprep.subr.mxu0 0.0
  %2571 = vmatpush2.msra.mxu0 0.0
  %2572 = vmatprep.subr.mxu0 0.0
  %2573 = vmatpush2.msra.mxu0 0.0
  %2574 = vmatprep.subr.mxu0 0.0
  %2575 = vmatpush2.msra.mxu0 0.0
  %2576 = vmatprep.subr.mxu0 0.0
  %2577 = vmatpush2.msra.mxu0 0.0
  %2578 = vmatprep.subr.mxu0 0.0
  %2579 = vmatpush2.msra.mxu0 0.0
  %2580 = vmatprep.subr.mxu0 0.0
  %2581 = vmatpush2.msra.mxu0 0.0
  %2582 = vmatprep.mubr.f32.mxu0 0.0
  %2583 = vmatmul.mubr.f32.gmra.mxu0 %v2510
  %v2584 = vpop.f32.mrf.mxu0
  %v2585 = vadd.f32 0.0, %v2584
  %v2586 = vpop.f32.mrf.mxu0
  %2587 = vmatprep.mubr.f32.mxu0 0.0
  %2588 = vmatmul.mubr.f32.gmra.mxu0 %v2513
  %v2589 = vpop.f32.mrf.mxu0
  %v2590 = vadd.f32 0.0, %v2589
  %v2591 = vpop.f32.mrf.mxu0
  %2592 = vdwg.mxu0
  %2594 = vset.pattern.permute.xlu0 0
  %2595 = vperm.xlu0 %2594, %v2585
  %v2596 = vpop.permute.xlu0 %2595
  %2599 = vset.pattern.permute.xlu0 0
  %2600 = vperm.xlu0 %2599, %v2590
  %v2601 = vpop.permute.xlu0 %2600
  %v2603 = vsub.f32 %v2394, %v2596
  %v2604 = vsub.f32 %v2395, %v2601
  %v2605 = vmul.f32 %v2603, %v2603
  %v2606 = vmul.f32 %v2604, %v2604
  %v2608 = vsel %vm1163, %v2606, 0
  %2610 = vmatprep.subr.mxu0 0.0
  %2611 = vmatpush1.msra.mxu0 0.0
  %2612 = vmatprep.subr.mxu0 0.0
  %2613 = vmatpush1.msra.mxu0 0.0
  %2614 = vmatprep.subr.mxu0 0.0
  %2615 = vmatpush1.msra.mxu0 0.0
  %2616 = vmatprep.subr.mxu0 0.0
  %2617 = vmatpush1.msra.mxu0 0.0
  %2618 = vmatprep.subr.mxu0 0.0
  %2619 = vmatpush1.msra.mxu0 0.0
  %2620 = vmatprep.subr.mxu0 0.0
  %2621 = vmatpush1.msra.mxu0 0.0
  %2622 = vmatprep.subr.mxu0 0.0
  %2623 = vmatpush1.msra.mxu0 0.0
  %2624 = vmatprep.subr.mxu0 0.0
  %2625 = vmatpush1.msra.mxu0 0.0
  %2626 = vmatprep.subr.mxu0 0.0
  %2627 = vmatpush1.msra.mxu0 0.0
  %2628 = vmatprep.subr.mxu0 0.0
  %2629 = vmatpush1.msra.mxu0 0.0
  %2630 = vmatprep.subr.mxu0 0.0
  %2631 = vmatpush1.msra.mxu0 0.0
  %2632 = vmatprep.subr.mxu0 0.0
  %2633 = vmatpush1.msra.mxu0 0.0
  %2634 = vmatprep.subr.mxu0 0.0
  %2635 = vmatpush1.msra.mxu0 0.0
  %2636 = vmatprep.subr.mxu0 0.0
  %2637 = vmatpush1.msra.mxu0 0.0
  %2638 = vmatprep.subr.mxu0 0.0
  %2639 = vmatpush1.msra.mxu0 %v2608
  %2640 = vmatprep.subr.mxu0 0.0
  %2641 = vmatpush1.msra.mxu0 %v2605
  %2642 = vmatprep.subr.mxu0 0.0
  %2643 = vmatpush2.msra.mxu0 0.0
  %2644 = vmatprep.subr.mxu0 0.0
  %2645 = vmatpush2.msra.mxu0 0.0
  %2646 = vmatprep.subr.mxu0 0.0
  %2647 = vmatpush2.msra.mxu0 0.0
  %2648 = vmatprep.subr.mxu0 0.0
  %2649 = vmatpush2.msra.mxu0 0.0
  %2650 = vmatprep.subr.mxu0 0.0
  %2651 = vmatpush2.msra.mxu0 0.0
  %2652 = vmatprep.subr.mxu0 0.0
  %2653 = vmatpush2.msra.mxu0 0.0
  %2654 = vmatprep.subr.mxu0 0.0
  %2655 = vmatpush2.msra.mxu0 0.0
  %2656 = vmatprep.subr.mxu0 0.0
  %2657 = vmatpush2.msra.mxu0 0.0
  %2658 = vmatprep.subr.mxu0 0.0
  %2659 = vmatpush2.msra.mxu0 0.0
  %2660 = vmatprep.subr.mxu0 0.0
  %2661 = vmatpush2.msra.mxu0 0.0
  %2662 = vmatprep.subr.mxu0 0.0
  %2663 = vmatpush2.msra.mxu0 0.0
  %2664 = vmatprep.subr.mxu0 0.0
  %2665 = vmatpush2.msra.mxu0 0.0
  %2666 = vmatprep.subr.mxu0 0.0
  %2667 = vmatpush2.msra.mxu0 0.0
  %2668 = vmatprep.subr.mxu0 0.0
  %2669 = vmatpush2.msra.mxu0 0.0
  %2670 = vmatprep.subr.mxu0 0.0
  %2671 = vmatpush2.msra.mxu0 0.0
  %2672 = vmatprep.subr.mxu0 0.0
  %2673 = vmatpush2.msra.mxu0 0.0
  %2674 = vmatprep.mubr.f32.mxu0 0.0
  %2675 = vmatmul.mubr.f32.gmra.mxu0 %v2429
  %v2676 = vpop.f32.mrf.mxu0
  %v2677 = vadd.f32 0.0, %v2676
  %v2678 = vpop.f32.mrf.mxu0
  %2679 = vdwg.mxu0
  %v2680 = vsel %vm2504, %v2677, 0.0
  %2681 = vadd.xlane.f32.xlu0 %v2680
  %v2682 = vpop.xlane.xlu0 %2681
  %v2683 = vmul.f32 %v2682, %v243
  %v2684 = vadd.f32 %v2683, 1e-05
  %v2685 = vrsqrt.pop %v2684
  %v2687 = vsel %vm469, %v2685, 0
  %2689 = vmatprep.subr.mxu0 0.0
  %2690 = vmatpush1.msra.mxu0 0.0
  %2691 = vmatprep.subr.mxu0 0.0
  %2692 = vmatpush1.msra.mxu0 0.0
  %2693 = vmatprep.subr.mxu0 0.0
  %2694 = vmatpush1.msra.mxu0 0.0
  %2695 = vmatprep.subr.mxu0 0.0
  %2696 = vmatpush1.msra.mxu0 0.0
  %2697 = vmatprep.subr.mxu0 0.0
  %2698 = vmatpush1.msra.mxu0 0.0
  %2699 = vmatprep.subr.mxu0 0.0
  %2700 = vmatpush1.msra.mxu0 0.0
  %2701 = vmatprep.subr.mxu0 0.0
  %2702 = vmatpush1.msra.mxu0 0.0
  %2703 = vmatprep.subr.mxu0 0.0
  %2704 = vmatpush1.msra.mxu0 0.0
  %2705 = vmatprep.subr.mxu0 0.0
  %2706 = vmatpush1.msra.mxu0 0.0
  %2707 = vmatprep.subr.mxu0 0.0
  %2708 = vmatpush1.msra.mxu0 0.0
  %2709 = vmatprep.subr.mxu0 0.0
  %2710 = vmatpush1.msra.mxu0 0.0
  %2711 = vmatprep.subr.mxu0 0.0
  %2712 = vmatpush1.msra.mxu0 0.0
  %2713 = vmatprep.subr.mxu0 0.0
  %2714 = vmatpush1.msra.mxu0 0.0
  %2715 = vmatprep.subr.mxu0 0.0
  %2716 = vmatpush1.msra.mxu0 0.0
  %2717 = vmatprep.subr.mxu0 0.0
  %2718 = vmatpush1.msra.mxu0 0.0
  %2719 = vmatprep.subr.mxu0 0.0
  %2720 = vmatpush1.msra.mxu0 %v2687
  %2721 = vmatprep.subr.mxu0 0.0
  %2722 = vmatpush2.msra.mxu0 0.0
  %2723 = vmatprep.subr.mxu0 0.0
  %2724 = vmatpush2.msra.mxu0 0.0
  %2725 = vmatprep.subr.mxu0 0.0
  %2726 = vmatpush2.msra.mxu0 0.0
  %2727 = vmatprep.subr.mxu0 0.0
  %2728 = vmatpush2.msra.mxu0 0.0
  %2729 = vmatprep.subr.mxu0 0.0
  %2730 = vmatpush2.msra.mxu0 0.0
  %2731 = vmatprep.subr.mxu0 0.0
  %2732 = vmatpush2.msra.mxu0 0.0
  %2733 = vmatprep.subr.mxu0 0.0
  %2734 = vmatpush2.msra.mxu0 0.0
  %2735 = vmatprep.subr.mxu0 0.0
  %2736 = vmatpush2.msra.mxu0 0.0
  %2737 = vmatprep.subr.mxu0 0.0
  %2738 = vmatpush2.msra.mxu0 0.0
  %2739 = vmatprep.subr.mxu0 0.0
  %2740 = vmatpush2.msra.mxu0 0.0
  %2741 = vmatprep.subr.mxu0 0.0
  %2742 = vmatpush2.msra.mxu0 0.0
  %2743 = vmatprep.subr.mxu0 0.0
  %2744 = vmatpush2.msra.mxu0 0.0
  %2745 = vmatprep.subr.mxu0 0.0
  %2746 = vmatpush2.msra.mxu0 0.0
  %2747 = vmatprep.subr.mxu0 0.0
  %2748 = vmatpush2.msra.mxu0 0.0
  %2749 = vmatprep.subr.mxu0 0.0
  %2750 = vmatpush2.msra.mxu0 0.0
  %2751 = vmatprep.subr.mxu0 0.0
  %2752 = vmatpush2.msra.mxu0 0.0
  %2753 = vmatprep.mubr.f32.mxu0 0.0
  %2754 = vmatmul.mubr.f32.gmra.mxu0 %v2510
  %v2755 = vpop.f32.mrf.mxu0
  %v2756 = vadd.f32 0.0, %v2755
  %v2757 = vpop.f32.mrf.mxu0
  %2758 = vmatprep.mubr.f32.mxu0 0.0
  %2759 = vmatmul.mubr.f32.gmra.mxu0 %v2513
  %v2760 = vpop.f32.mrf.mxu0
  %v2761 = vadd.f32 0.0, %v2760
  %v2762 = vpop.f32.mrf.mxu0
  %2763 = vdwg.mxu0
  %2765 = vset.pattern.permute.xlu0 0
  %2766 = vperm.xlu0 %2765, %v2756
  %v2767 = vpop.permute.xlu0 %2766
  %2770 = vset.pattern.permute.xlu0 0
  %2771 = vperm.xlu0 %2770, %v2761
  %v2772 = vpop.permute.xlu0 %2771
  %v2774 = vmul.f32 %v2603, %v2767
  %v2775 = vmul.f32 %v2604, %v2772
  %v2776 = vld [vmem:[%s83] sm:$0xf]
  %v2777 = vld [vmem:[%s83 + $0x4] sm:$0xf]
  %v2778 = vld [vmem:[%s83 + $0x8] sm:$0xf]
  %v2779 = vld [vmem:[%s83 + $0xc] sm:$0xf]
  %v2780 = vpack.c.bf16 %v2775, %v2774
  %v2781 = vld [vmem:[%s85] sm:$0x1]
  %v2783 = vlaneseq
  %v2784 = vshrl.u32 %v2783, 7
  %v2785 = vsub.s32 0, %v2784
  %v2786 = vrot.slane %v2781, %v2785
  %v2792 = vunpack.c.l.b16 %v2776
  %v2793 = vunpack.c.l.b16 %v2777
  %v2794 = vunpack.c.l.b16 %v2778
  %v2795 = vunpack.c.l.b16 %v2779
  %v2796 = vpack.c.b16 %v2793, %v2792
  %v2797 = vpack.c.b16 %v2795, %v2794
  %v2801 = vsel %vm335, %v2780, 0
  %2803 = vmatprep.subr.bf16.mxu0 0
  %2804 = vmatpush1.bf16.msra.mxu0 0
  %2805 = vmatprep.subr.bf16.mxu0 0
  %2806 = vmatpush1.bf16.msra.mxu0 0
  %2807 = vmatprep.subr.bf16.mxu0 0
  %2808 = vmatpush1.bf16.msra.mxu0 0
  %2809 = vmatprep.subr.bf16.mxu0 0
  %2810 = vmatpush1.bf16.msra.mxu0 0
  %2811 = vmatprep.subr.bf16.mxu0 0
  %2812 = vmatpush1.bf16.msra.mxu0 0
  %2813 = vmatprep.subr.bf16.mxu0 0
  %2814 = vmatpush1.bf16.msra.mxu0 0
  %2815 = vmatprep.subr.bf16.mxu0 0
  %2816 = vmatpush1.bf16.msra.mxu0 %v2797
  %2817 = vmatprep.subr.bf16.mxu0 0
  %2818 = vmatpush1.bf16.msra.mxu0 %v2796
  %2819 = vmatprep.subr.bf16.mxu0 0
  %2820 = vmatpush2.bf16.msra.mxu0 0
  %2821 = vmatprep.subr.bf16.mxu0 0
  %2822 = vmatpush2.bf16.msra.mxu0 0
  %2823 = vmatprep.subr.bf16.mxu0 0
  %2824 = vmatpush2.bf16.msra.mxu0 0
  %2825 = vmatprep.subr.bf16.mxu0 0
  %2826 = vmatpush2.bf16.msra.mxu0 0
  %2827 = vmatprep.subr.bf16.mxu0 0
  %2828 = vmatpush2.bf16.msra.mxu0 0
  %2829 = vmatprep.subr.bf16.mxu0 0
  %2830 = vmatpush2.bf16.msra.mxu0 0
  %2831 = vmatprep.subr.bf16.mxu0 0
  %2832 = vmatpush2.bf16.msra.mxu0 0
  %2833 = vmatprep.subr.bf16.mxu0 0
  %2834 = vmatpush2.bf16.msra.mxu0 0
  %2835 = vmatprep.mubr.bf16.mxu0 0
  %2836 = vmatmul.mubr.bf16.gmra.mxu0 %v2801
  %v2837 = vpop.f32.mrf.mxu0
  %v2838 = vadd.f32 %v2786, %v2837
  %v2839 = vpop.f32.mrf.mxu0
  %v2840 = vpop.f32.mrf.mxu0
  %v2841 = vadd.f32 %v2786, %v2840
  %v2842 = vpop.f32.mrf.mxu0
  %2843 = vdwg.mxu0
  %vm2844 = vcmp.gt.f32.partialorder %v2838, 0.0
  %vm2845 = vcmp.gt.f32.partialorder %v2841, 0.0
  %v2846 = vmul.f32 %v2838, 0.01
  %v2847 = vmul.f32 %v2841, 0.01
  %v2848 = vsel %vm2844, %v2838, %v2846
  %v2849 = vsel %vm2845, %v2841, %v2847
  %v2850 = vld [vmem:[%s87] sm:$0xf]
  %v2851 = vld [vmem:[%s87 + $0x4] sm:$0xf]
  %v2852 = vld [vmem:[%s87 + $0x8] sm:$0xf]
  %v2853 = vld [vmem:[%s87 + $0xc] sm:$0xf]
  %v2854 = vld [vmem:[%s87 + $0x10] sm:$0xf]
  %v2855 = vld [vmem:[%s87 + $0x14] sm:$0xf]
  %v2856 = vld [vmem:[%s87 + $0x18] sm:$0xf]
  %v2857 = vld [vmem:[%s87 + $0x1c] sm:$0xf]
  %v2858 = vld [vmem:[%s87 + $0x20] sm:$0xf]
  %v2859 = vld [vmem:[%s87 + $0x24] sm:$0xf]
  %v2860 = vld [vmem:[%s87 + $0x28] sm:$0xf]
  %v2861 = vld [vmem:[%s87 + $0x2c] sm:$0xf]
  %v2862 = vld [vmem:[%s87 + $0x30] sm:$0xf]
  %v2863 = vld [vmem:[%s87 + $0x34] sm:$0xf]
  %v2864 = vld [vmem:[%s87 + $0x38] sm:$0xf]
  %v2865 = vld [vmem:[%s87 + $0x3c] sm:$0xf]
  %v2866 = vpack.c.bf16 %v2849, %v2848
  %v2867 = vld [vmem:[%s89] sm:$0x1]
  %v2869 = vlaneseq
  %v2870 = vshrl.u32 %v2869, 7
  %v2871 = vsub.s32 0, %v2870
  %v2872 = vrot.slane %v2867, %v2871
  %v2890 = vunpack.c.l.b16 %v2850
  %v2891 = vunpack.c.l.b16 %v2851
  %v2892 = vunpack.c.l.b16 %v2852
  %v2893 = vunpack.c.l.b16 %v2853
  %v2894 = vunpack.c.l.b16 %v2854
  %v2895 = vunpack.c.l.b16 %v2855
  %v2896 = vunpack.c.l.b16 %v2856
  %v2897 = vunpack.c.l.b16 %v2857
  %v2898 = vunpack.c.l.b16 %v2858
  %v2899 = vunpack.c.l.b16 %v2859
  %v2900 = vunpack.c.l.b16 %v2860
  %v2901 = vunpack.c.l.b16 %v2861
  %v2902 = vunpack.c.l.b16 %v2862
  %v2903 = vunpack.c.l.b16 %v2863
  %v2904 = vunpack.c.l.b16 %v2864
  %v2905 = vunpack.c.l.b16 %v2865
  %v2906 = vpack.c.b16 %v2891, %v2890
  %v2907 = vpack.c.b16 %v2893, %v2892
  %v2908 = vpack.c.b16 %v2895, %v2894
  %v2909 = vpack.c.b16 %v2897, %v2896
  %v2910 = vpack.c.b16 %v2899, %v2898
  %v2911 = vpack.c.b16 %v2901, %v2900
  %v2912 = vpack.c.b16 %v2903, %v2902
  %v2913 = vpack.c.b16 %v2905, %v2904
  %2922 = vmatprep.subr.bf16.mxu0 0
  %2923 = vmatpush1.bf16.msra.mxu0 %v2913
  %2924 = vmatprep.subr.bf16.mxu0 0
  %2925 = vmatpush1.bf16.msra.mxu0 %v2912
  %2926 = vmatprep.subr.bf16.mxu0 0
  %2927 = vmatpush1.bf16.msra.mxu0 %v2911
  %2928 = vmatprep.subr.bf16.mxu0 0
  %2929 = vmatpush1.bf16.msra.mxu0 %v2910
  %2930 = vmatprep.subr.bf16.mxu0 0
  %2931 = vmatpush1.bf16.msra.mxu0 %v2909
  %2932 = vmatprep.subr.bf16.mxu0 0
  %2933 = vmatpush1.bf16.msra.mxu0 %v2908
  %2934 = vmatprep.subr.bf16.mxu0 0
  %2935 = vmatpush1.bf16.msra.mxu0 %v2907
  %2936 = vmatprep.subr.bf16.mxu0 0
  %2937 = vmatpush1.bf16.msra.mxu0 %v2906
  %2938 = vmatprep.subr.bf16.mxu0 0
  %2939 = vmatpush2.bf16.msra.mxu0 0
  %2940 = vmatprep.subr.bf16.mxu0 0
  %2941 = vmatpush2.bf16.msra.mxu0 0
  %2942 = vmatprep.subr.bf16.mxu0 0
  %2943 = vmatpush2.bf16.msra.mxu0 0
  %2944 = vmatprep.subr.bf16.mxu0 0
  %2945 = vmatpush2.bf16.msra.mxu0 0
  %2946 = vmatprep.subr.bf16.mxu0 0
  %2947 = vmatpush2.bf16.msra.mxu0 0
  %2948 = vmatprep.subr.bf16.mxu0 0
  %2949 = vmatpush2.bf16.msra.mxu0 0
  %2950 = vmatprep.subr.bf16.mxu0 0
  %2951 = vmatpush2.bf16.msra.mxu0 0
  %2952 = vmatprep.subr.bf16.mxu0 0
  %2953 = vmatpush2.bf16.msra.mxu0 0
  %2954 = vmatprep.mubr.bf16.mxu0 0
  %2955 = vmatmul.mubr.bf16.gmra.mxu0 %v2866
  %v2956 = vpop.f32.mrf.mxu0
  %v2957 = vadd.f32 %v2872, %v2956
  %v2958 = vpop.f32.mrf.mxu0
  %v2959 = vpop.f32.mrf.mxu0
  %v2960 = vadd.f32 %v2872, %v2959
  %v2961 = vpop.f32.mrf.mxu0
  %2962 = vdwg.mxu0
  %v2963 = vadd.f32 %v2774, %v2957
  %v2964 = vadd.f32 %v2775, %v2960
  %v2966 = vsel %vm1163, %v2964, 0
  %2968 = vmatprep.subr.mxu0 0.0
  %2969 = vmatpush1.msra.mxu0 0.0
  %2970 = vmatprep.subr.mxu0 0.0
  %2971 = vmatpush1.msra.mxu0 0.0
  %2972 = vmatprep.subr.mxu0 0.0
  %2973 = vmatpush1.msra.mxu0 0.0
  %2974 = vmatprep.subr.mxu0 0.0
  %2975 = vmatpush1.msra.mxu0 0.0
  %2976 = vmatprep.subr.mxu0 0.0
  %2977 = vmatpush1.msra.mxu0 0.0
  %2978 = vmatprep.subr.mxu0 0.0
  %2979 = vmatpush1.msra.mxu0 0.0
  %2980 = vmatprep.subr.mxu0 0.0
  %2981 = vmatpush1.msra.mxu0 0.0
  %2982 = vmatprep.subr.mxu0 0.0
  %2983 = vmatpush1.msra.mxu0 0.0
  %2984 = vmatprep.subr.mxu0 0.0
  %2985 = vmatpush1.msra.mxu0 0.0
  %2986 = vmatprep.subr.mxu0 0.0
  %2987 = vmatpush1.msra.mxu0 0.0
  %2988 = vmatprep.subr.mxu0 0.0
  %2989 = vmatpush1.msra.mxu0 0.0
  %2990 = vmatprep.subr.mxu0 0.0
  %2991 = vmatpush1.msra.mxu0 0.0
  %2992 = vmatprep.subr.mxu0 0.0
  %2993 = vmatpush1.msra.mxu0 0.0
  %2994 = vmatprep.subr.mxu0 0.0
  %2995 = vmatpush1.msra.mxu0 0.0
  %2996 = vmatprep.subr.mxu0 0.0
  %2997 = vmatpush1.msra.mxu0 %v2966
  %2998 = vmatprep.subr.mxu0 0.0
  %2999 = vmatpush1.msra.mxu0 %v2963
  %3000 = vmatprep.subr.mxu0 0.0
  %3001 = vmatpush2.msra.mxu0 0.0
  %3002 = vmatprep.subr.mxu0 0.0
  %3003 = vmatpush2.msra.mxu0 0.0
  %3004 = vmatprep.subr.mxu0 0.0
  %3005 = vmatpush2.msra.mxu0 0.0
  %3006 = vmatprep.subr.mxu0 0.0
  %3007 = vmatpush2.msra.mxu0 0.0
  %3008 = vmatprep.subr.mxu0 0.0
  %3009 = vmatpush2.msra.mxu0 0.0
  %3010 = vmatprep.subr.mxu0 0.0
  %3011 = vmatpush2.msra.mxu0 0.0
  %3012 = vmatprep.subr.mxu0 0.0
  %3013 = vmatpush2.msra.mxu0 0.0
  %3014 = vmatprep.subr.mxu0 0.0
  %3015 = vmatpush2.msra.mxu0 0.0
  %3016 = vmatprep.subr.mxu0 0.0
  %3017 = vmatpush2.msra.mxu0 0.0
  %3018 = vmatprep.subr.mxu0 0.0
  %3019 = vmatpush2.msra.mxu0 0.0
  %3020 = vmatprep.subr.mxu0 0.0
  %3021 = vmatpush2.msra.mxu0 0.0
  %3022 = vmatprep.subr.mxu0 0.0
  %3023 = vmatpush2.msra.mxu0 0.0
  %3024 = vmatprep.subr.mxu0 0.0
  %3025 = vmatpush2.msra.mxu0 0.0
  %3026 = vmatprep.subr.mxu0 0.0
  %3027 = vmatpush2.msra.mxu0 0.0
  %3028 = vmatprep.subr.mxu0 0.0
  %3029 = vmatpush2.msra.mxu0 0.0
  %3030 = vmatprep.subr.mxu0 0.0
  %3031 = vmatpush2.msra.mxu0 0.0
  %3032 = vmatprep.mubr.f32.mxu0 0.0
  %3033 = vmatmul.mubr.f32.gmra.mxu0 %v2429
  %v3034 = vpop.f32.mrf.mxu0
  %v3035 = vadd.f32 0.0, %v3034
  %v3036 = vpop.f32.mrf.mxu0
  %3037 = vdwg.mxu0
  %v3038 = vsel %vm2504, %v3035, 0.0
  %3039 = vadd.xlane.f32.xlu0 %v3038
  %v3040 = vpop.xlane.xlu0 %3039
  %v3041 = vmul.f32 %v3040, %v243
  %v3043 = vsel %vm469, %v3041, 0
  %3045 = vmatprep.subr.mxu0 0.0
  %3046 = vmatpush1.msra.mxu0 0.0
  %3047 = vmatprep.subr.mxu0 0.0
  %3048 = vmatpush1.msra.mxu0 0.0
  %3049 = vmatprep.subr.mxu0 0.0
  %3050 = vmatpush1.msra.mxu0 0.0
  %3051 = vmatprep.subr.mxu0 0.0
  %3052 = vmatpush1.msra.mxu0 0.0
  %3053 = vmatprep.subr.mxu0 0.0
  %3054 = vmatpush1.msra.mxu0 0.0
  %3055 = vmatprep.subr.mxu0 0.0
  %3056 = vmatpush1.msra.mxu0 0.0
  %3057 = vmatprep.subr.mxu0 0.0
  %3058 = vmatpush1.msra.mxu0 0.0
  %3059 = vmatprep.subr.mxu0 0.0
  %3060 = vmatpush1.msra.mxu0 0.0
  %3061 = vmatprep.subr.mxu0 0.0
  %3062 = vmatpush1.msra.mxu0 0.0
  %3063 = vmatprep.subr.mxu0 0.0
  %3064 = vmatpush1.msra.mxu0 0.0
  %3065 = vmatprep.subr.mxu0 0.0
  %3066 = vmatpush1.msra.mxu0 0.0
  %3067 = vmatprep.subr.mxu0 0.0
  %3068 = vmatpush1.msra.mxu0 0.0
  %3069 = vmatprep.subr.mxu0 0.0
  %3070 = vmatpush1.msra.mxu0 0.0
  %3071 = vmatprep.subr.mxu0 0.0
  %3072 = vmatpush1.msra.mxu0 0.0
  %3073 = vmatprep.subr.mxu0 0.0
  %3074 = vmatpush1.msra.mxu0 0.0
  %3075 = vmatprep.subr.mxu0 0.0
  %3076 = vmatpush1.msra.mxu0 %v3043
  %3077 = vmatprep.subr.mxu0 0.0
  %3078 = vmatpush2.msra.mxu0 0.0
  %3079 = vmatprep.subr.mxu0 0.0
  %3080 = vmatpush2.msra.mxu0 0.0
  %3081 = vmatprep.subr.mxu0 0.0
  %3082 = vmatpush2.msra.mxu0 0.0
  %3083 = vmatprep.subr.mxu0 0.0
  %3084 = vmatpush2.msra.mxu0 0.0
  %3085 = vmatprep.subr.mxu0 0.0
  %3086 = vmatpush2.msra.mxu0 0.0
  %3087 = vmatprep.subr.mxu0 0.0
  %3088 = vmatpush2.msra.mxu0 0.0
  %3089 = vmatprep.subr.mxu0 0.0
  %3090 = vmatpush2.msra.mxu0 0.0
  %3091 = vmatprep.subr.mxu0 0.0
  %3092 = vmatpush2.msra.mxu0 0.0
  %3093 = vmatprep.subr.mxu0 0.0
  %3094 = vmatpush2.msra.mxu0 0.0
  %3095 = vmatprep.subr.mxu0 0.0
  %3096 = vmatpush2.msra.mxu0 0.0
  %3097 = vmatprep.subr.mxu0 0.0
  %3098 = vmatpush2.msra.mxu0 0.0
  %3099 = vmatprep.subr.mxu0 0.0
  %3100 = vmatpush2.msra.mxu0 0.0
  %3101 = vmatprep.subr.mxu0 0.0
  %3102 = vmatpush2.msra.mxu0 0.0
  %3103 = vmatprep.subr.mxu0 0.0
  %3104 = vmatpush2.msra.mxu0 0.0
  %3105 = vmatprep.subr.mxu0 0.0
  %3106 = vmatpush2.msra.mxu0 0.0
  %3107 = vmatprep.subr.mxu0 0.0
  %3108 = vmatpush2.msra.mxu0 0.0
  %3109 = vmatprep.mubr.f32.mxu0 0.0
  %3110 = vmatmul.mubr.f32.gmra.mxu0 %v2510
  %v3111 = vpop.f32.mrf.mxu0
  %v3112 = vadd.f32 0.0, %v3111
  %v3113 = vpop.f32.mrf.mxu0
  %3114 = vmatprep.mubr.f32.mxu0 0.0
  %3115 = vmatmul.mubr.f32.gmra.mxu0 %v2513
  %v3116 = vpop.f32.mrf.mxu0
  %v3117 = vadd.f32 0.0, %v3116
  %v3118 = vpop.f32.mrf.mxu0
  %3119 = vdwg.mxu0
  %3121 = vset.pattern.permute.xlu0 0
  %3122 = vperm.xlu0 %3121, %v3112
  %v3123 = vpop.permute.xlu0 %3122
  %3126 = vset.pattern.permute.xlu0 0
  %3127 = vperm.xlu0 %3126, %v3117
  %v3128 = vpop.permute.xlu0 %3127
  %v3130 = vsub.f32 %v2963, %v3123
  %v3131 = vsub.f32 %v2964, %v3128
  %v3132 = vmul.f32 %v3130, %v3130
  %v3133 = vmul.f32 %v3131, %v3131
  %v3135 = vsel %vm1163, %v3133, 0
  %3137 = vmatprep.subr.mxu0 0.0
  %3138 = vmatpush1.msra.mxu0 0.0
  %3139 = vmatprep.subr.mxu0 0.0
  %3140 = vmatpush1.msra.mxu0 0.0
  %3141 = vmatprep.subr.mxu0 0.0
  %3142 = vmatpush1.msra.mxu0 0.0
  %3143 = vmatprep.subr.mxu0 0.0
  %3144 = vmatpush1.msra.mxu0 0.0
  %3145 = vmatprep.subr.mxu0 0.0
  %3146 = vmatpush1.msra.mxu0 0.0
  %3147 = vmatprep.subr.mxu0 0.0
  %3148 = vmatpush1.msra.mxu0 0.0
  %3149 = vmatprep.subr.mxu0 0.0
  %3150 = vmatpush1.msra.mxu0 0.0
  %3151 = vmatprep.subr.mxu0 0.0
  %3152 = vmatpush1.msra.mxu0 0.0
  %3153 = vmatprep.subr.mxu0 0.0
  %3154 = vmatpush1.msra.mxu0 0.0
  %3155 = vmatprep.subr.mxu0 0.0
  %3156 = vmatpush1.msra.mxu0 0.0
  %3157 = vmatprep.subr.mxu0 0.0
  %3158 = vmatpush1.msra.mxu0 0.0
  %3159 = vmatprep.subr.mxu0 0.0
  %3160 = vmatpush1.msra.mxu0 0.0
  %3161 = vmatprep.subr.mxu0 0.0
  %3162 = vmatpush1.msra.mxu0 0.0
  %3163 = vmatprep.subr.mxu0 0.0
  %3164 = vmatpush1.msra.mxu0 0.0
  %3165 = vmatprep.subr.mxu0 0.0
  %3166 = vmatpush1.msra.mxu0 %v3135
  %3167 = vmatprep.subr.mxu0 0.0
  %3168 = vmatpush1.msra.mxu0 %v3132
  %3169 = vmatprep.subr.mxu0 0.0
  %3170 = vmatpush2.msra.mxu0 0.0
  %3171 = vmatprep.subr.mxu0 0.0
  %3172 = vmatpush2.msra.mxu0 0.0
  %3173 = vmatprep.subr.mxu0 0.0
  %3174 = vmatpush2.msra.mxu0 0.0
  %3175 = vmatprep.subr.mxu0 0.0
  %3176 = vmatpush2.msra.mxu0 0.0
  %3177 = vmatprep.subr.mxu0 0.0
  %3178 = vmatpush2.msra.mxu0 0.0
  %3179 = vmatprep.subr.mxu0 0.0
  %3180 = vmatpush2.msra.mxu0 0.0
  %3181 = vmatprep.subr.mxu0 0.0
  %3182 = vmatpush2.msra.mxu0 0.0
  %3183 = vmatprep.subr.mxu0 0.0
  %3184 = vmatpush2.msra.mxu0 0.0
  %3185 = vmatprep.subr.mxu0 0.0
  %3186 = vmatpush2.msra.mxu0 0.0
  %3187 = vmatprep.subr.mxu0 0.0
  %3188 = vmatpush2.msra.mxu0 0.0
  %3189 = vmatprep.subr.mxu0 0.0
  %3190 = vmatpush2.msra.mxu0 0.0
  %3191 = vmatprep.subr.mxu0 0.0
  %3192 = vmatpush2.msra.mxu0 0.0
  %3193 = vmatprep.subr.mxu0 0.0
  %3194 = vmatpush2.msra.mxu0 0.0
  %3195 = vmatprep.subr.mxu0 0.0
  %3196 = vmatpush2.msra.mxu0 0.0
  %3197 = vmatprep.subr.mxu0 0.0
  %3198 = vmatpush2.msra.mxu0 0.0
  %3199 = vmatprep.subr.mxu0 0.0
  %3200 = vmatpush2.msra.mxu0 0.0
  %3201 = vmatprep.mubr.f32.mxu0 0.0
  %3202 = vmatmul.mubr.f32.gmra.mxu0 %v2429
  %v3203 = vpop.f32.mrf.mxu0
  %v3204 = vadd.f32 0.0, %v3203
  %v3205 = vpop.f32.mrf.mxu0
  %3206 = vdwg.mxu0
  %v3207 = vsel %vm2504, %v3204, 0.0
  %3208 = vadd.xlane.f32.xlu0 %v3207
  %v3209 = vpop.xlane.xlu0 %3208
  %v3210 = vmul.f32 %v3209, %v243
  %v3211 = vadd.f32 %v3210, 1e-05
  %v3212 = vrsqrt.pop %v3211
  %v3214 = vsel %vm469, %v3212, 0
  %3216 = vmatprep.subr.mxu0 0.0
  %3217 = vmatpush1.msra.mxu0 0.0
  %3218 = vmatprep.subr.mxu0 0.0
  %3219 = vmatpush1.msra.mxu0 0.0
  %3220 = vmatprep.subr.mxu0 0.0
  %3221 = vmatpush1.msra.mxu0 0.0
  %3222 = vmatprep.subr.mxu0 0.0
  %3223 = vmatpush1.msra.mxu0 0.0
  %3224 = vmatprep.subr.mxu0 0.0
  %3225 = vmatpush1.msra.mxu0 0.0
  %3226 = vmatprep.subr.mxu0 0.0
  %3227 = vmatpush1.msra.mxu0 0.0
  %3228 = vmatprep.subr.mxu0 0.0
  %3229 = vmatpush1.msra.mxu0 0.0
  %3230 = vmatprep.subr.mxu0 0.0
  %3231 = vmatpush1.msra.mxu0 0.0
  %3232 = vmatprep.subr.mxu0 0.0
  %3233 = vmatpush1.msra.mxu0 0.0
  %3234 = vmatprep.subr.mxu0 0.0
  %3235 = vmatpush1.msra.mxu0 0.0
  %3236 = vmatprep.subr.mxu0 0.0
  %3237 = vmatpush1.msra.mxu0 0.0
  %3238 = vmatprep.subr.mxu0 0.0
  %3239 = vmatpush1.msra.mxu0 0.0
  %3240 = vmatprep.subr.mxu0 0.0
  %3241 = vmatpush1.msra.mxu0 0.0
  %3242 = vmatprep.subr.mxu0 0.0
  %3243 = vmatpush1.msra.mxu0 0.0
  %3244 = vmatprep.subr.mxu0 0.0
  %3245 = vmatpush1.msra.mxu0 0.0
  %3246 = vmatprep.subr.mxu0 0.0
  %3247 = vmatpush1.msra.mxu0 %v3214
  %3248 = vmatprep.subr.mxu0 0.0
  %3249 = vmatpush2.msra.mxu0 0.0
  %3250 = vmatprep.subr.mxu0 0.0
  %3251 = vmatpush2.msra.mxu0 0.0
  %3252 = vmatprep.subr.mxu0 0.0
  %3253 = vmatpush2.msra.mxu0 0.0
  %3254 = vmatprep.subr.mxu0 0.0
  %3255 = vmatpush2.msra.mxu0 0.0
  %3256 = vmatprep.subr.mxu0 0.0
  %3257 = vmatpush2.msra.mxu0 0.0
  %3258 = vmatprep.subr.mxu0 0.0
  %3259 = vmatpush2.msra.mxu0 0.0
  %3260 = vmatprep.subr.mxu0 0.0
  %3261 = vmatpush2.msra.mxu0 0.0
  %3262 = vmatprep.subr.mxu0 0.0
  %3263 = vmatpush2.msra.mxu0 0.0
  %3264 = vmatprep.subr.mxu0 0.0
  %3265 = vmatpush2.msra.mxu0 0.0
  %3266 = vmatprep.subr.mxu0 0.0
  %3267 = vmatpush2.msra.mxu0 0.0
  %3268 = vmatprep.subr.mxu0 0.0
  %3269 = vmatpush2.msra.mxu0 0.0
  %3270 = vmatprep.subr.mxu0 0.0
  %3271 = vmatpush2.msra.mxu0 0.0
  %3272 = vmatprep.subr.mxu0 0.0
  %3273 = vmatpush2.msra.mxu0 0.0
  %3274 = vmatprep.subr.mxu0 0.0
  %3275 = vmatpush2.msra.mxu0 0.0
  %3276 = vmatprep.subr.mxu0 0.0
  %3277 = vmatpush2.msra.mxu0 0.0
  %3278 = vmatprep.subr.mxu0 0.0
  %3279 = vmatpush2.msra.mxu0 0.0
  %3280 = vmatprep.mubr.f32.mxu0 0.0
  %3281 = vmatmul.mubr.f32.gmra.mxu0 %v2510
  %v3282 = vpop.f32.mrf.mxu0
  %v3283 = vadd.f32 0.0, %v3282
  %v3284 = vpop.f32.mrf.mxu0
  %3285 = vmatprep.mubr.f32.mxu0 0.0
  %3286 = vmatmul.mubr.f32.gmra.mxu0 %v2513
  %v3287 = vpop.f32.mrf.mxu0
  %v3288 = vadd.f32 0.0, %v3287
  %v3289 = vpop.f32.mrf.mxu0
  %3290 = vdwg.mxu0
  %3292 = vset.pattern.permute.xlu0 0
  %3293 = vperm.xlu0 %3292, %v3283
  %v3294 = vpop.permute.xlu0 %3293
  %3297 = vset.pattern.permute.xlu0 0
  %3298 = vperm.xlu0 %3297, %v3288
  %v3299 = vpop.permute.xlu0 %3298
  %v3301 = vmul.f32 %v3130, %v3294
  %v3302 = vmul.f32 %v3131, %v3299
  %v3304 = vsel %vm1163, %v3302, 0
  %3306 = vmatprep.subr.mxu0 0.0
  %3307 = vmatpush1.msra.mxu0 0.0
  %3308 = vmatprep.subr.mxu0 0.0
  %3309 = vmatpush1.msra.mxu0 0.0
  %3310 = vmatprep.subr.mxu0 0.0
  %3311 = vmatpush1.msra.mxu0 0.0
  %3312 = vmatprep.subr.mxu0 0.0
  %3313 = vmatpush1.msra.mxu0 0.0
  %3314 = vmatprep.subr.mxu0 0.0
  %3315 = vmatpush1.msra.mxu0 0.0
  %3316 = vmatprep.subr.mxu0 0.0
  %3317 = vmatpush1.msra.mxu0 0.0
  %3318 = vmatprep.subr.mxu0 0.0
  %3319 = vmatpush1.msra.mxu0 0.0
  %3320 = vmatprep.subr.mxu0 0.0
  %3321 = vmatpush1.msra.mxu0 0.0
  %3322 = vmatprep.subr.mxu0 0.0
  %3323 = vmatpush1.msra.mxu0 0.0
  %3324 = vmatprep.subr.mxu0 0.0
  %3325 = vmatpush1.msra.mxu0 0.0
  %3326 = vmatprep.subr.mxu0 0.0
  %3327 = vmatpush1.msra.mxu0 0.0
  %3328 = vmatprep.subr.mxu0 0.0
  %3329 = vmatpush1.msra.mxu0 0.0
  %3330 = vmatprep.subr.mxu0 0.0
  %3331 = vmatpush1.msra.mxu0 0.0
  %3332 = vmatprep.subr.mxu0 0.0
  %3333 = vmatpush1.msra.mxu0 0.0
  %3334 = vmatprep.subr.mxu0 0.0
  %3335 = vmatpush1.msra.mxu0 %v3304
  %3336 = vmatprep.subr.mxu0 0.0
  %3337 = vmatpush1.msra.mxu0 %v3301
  %3338 = vmatprep.subr.mxu0 0.0
  %3339 = vmatpush2.msra.mxu0 0.0
  %3340 = vmatprep.subr.mxu0 0.0
  %3341 = vmatpush2.msra.mxu0 0.0
  %3342 = vmatprep.subr.mxu0 0.0
  %3343 = vmatpush2.msra.mxu0 0.0
  %3344 = vmatprep.subr.mxu0 0.0
  %3345 = vmatpush2.msra.mxu0 0.0
  %3346 = vmatprep.subr.mxu0 0.0
  %3347 = vmatpush2.msra.mxu0 0.0
  %3348 = vmatprep.subr.mxu0 0.0
  %3349 = vmatpush2.msra.mxu0 0.0
  %3350 = vmatprep.subr.mxu0 0.0
  %3351 = vmatpush2.msra.mxu0 0.0
  %3352 = vmatprep.subr.mxu0 0.0
  %3353 = vmatpush2.msra.mxu0 0.0
  %3354 = vmatprep.subr.mxu0 0.0
  %3355 = vmatpush2.msra.mxu0 0.0
  %3356 = vmatprep.subr.mxu0 0.0
  %3357 = vmatpush2.msra.mxu0 0.0
  %3358 = vmatprep.subr.mxu0 0.0
  %3359 = vmatpush2.msra.mxu0 0.0
  %3360 = vmatprep.subr.mxu0 0.0
  %3361 = vmatpush2.msra.mxu0 0.0
  %3362 = vmatprep.subr.mxu0 0.0
  %3363 = vmatpush2.msra.mxu0 0.0
  %3364 = vmatprep.subr.mxu0 0.0
  %3365 = vmatpush2.msra.mxu0 0.0
  %3366 = vmatprep.subr.mxu0 0.0
  %3367 = vmatpush2.msra.mxu0 0.0
  %3368 = vmatprep.subr.mxu0 0.0
  %3369 = vmatpush2.msra.mxu0 0.0
  %3370 = vmatprep.mubr.f32.mxu0 0.0
  %3371 = vmatmul.mubr.f32.gmra.mxu0 %v1149
  %v3372 = vpop.f32.mrf.mxu0
  %v3373 = vadd.f32 %v1124, %v3372
  %v3374 = vpop.f32.mrf.mxu0
  %3375 = vmatprep.mubr.f32.mxu0 0.0
  %3376 = vmatmul.mubr.f32.gmra.mxu0 %v1152
  %v3377 = vpop.f32.mrf.mxu0
  %v3378 = vadd.f32 %v1129, %v3377
  %v3379 = vpop.f32.mrf.mxu0
  %3380 = vmatprep.mubr.f32.mxu0 0.0
  %3381 = vmatmul.mubr.f32.gmra.mxu0 %v1155
  %v3382 = vpop.f32.mrf.mxu0
  %v3383 = vadd.f32 %v1134, %v3382
  %v3384 = vpop.f32.mrf.mxu0
  %3385 = vmatprep.mubr.f32.mxu0 0.0
  %3386 = vmatmul.mubr.f32.gmra.mxu0 %v1158
  %v3387 = vpop.f32.mrf.mxu0
  %v3388 = vadd.f32 %v1139, %v3387
  %v3389 = vpop.f32.mrf.mxu0
  %3390 = vmatprep.mubr.f32.mxu0 0.0
  %3391 = vmatmul.mubr.f32.gmra.mxu0 %v1161
  %v3392 = vpop.f32.mrf.mxu0
  %v3393 = vadd.f32 %v1144, %v3392
  %v3394 = vpop.f32.mrf.mxu0
  %3395 = vdwg.mxu0
  %v3396 = vmax.f32 %v3373, 0.0
  %v3397 = vmax.f32 %v3378, 0.0
  %v3398 = vmax.f32 %v3383, 0.0
  %v3399 = vmax.f32 %v3388, 0.0
  %v3400 = vmax.f32 %v3393, 0.0
  %v3401 = vadd.f32 %v3396, 1e-07
  %v3402 = vadd.f32 %v3397, 1e-07
  %v3403 = vadd.f32 %v3398, 1e-07
  %v3404 = vadd.f32 %v3399, 1e-07
  %v3405 = vadd.f32 %v3400, 1e-07
  %v3407 = vsel %vm1163, %v3405, 0
  %3409 = vmatprep.subr.mxu0 0.0
  %3410 = vmatpush1.msra.mxu0 0.0
  %3411 = vmatprep.subr.mxu0 0.0
  %3412 = vmatpush1.msra.mxu0 0.0
  %3413 = vmatprep.subr.mxu0 0.0
  %3414 = vmatpush1.msra.mxu0 0.0
  %3415 = vmatprep.subr.mxu0 0.0
  %3416 = vmatpush1.msra.mxu0 0.0
  %3417 = vmatprep.subr.mxu0 0.0
  %3418 = vmatpush1.msra.mxu0 0.0
  %3419 = vmatprep.subr.mxu0 0.0
  %3420 = vmatpush1.msra.mxu0 0.0
  %3421 = vmatprep.subr.mxu0 0.0
  %3422 = vmatpush1.msra.mxu0 0.0
  %3423 = vmatprep.subr.mxu0 0.0
  %3424 = vmatpush1.msra.mxu0 0.0
  %3425 = vmatprep.subr.mxu0 0.0
  %3426 = vmatpush1.msra.mxu0 0.0
  %3427 = vmatprep.subr.mxu0 0.0
  %3428 = vmatpush1.msra.mxu0 0.0
  %3429 = vmatprep.subr.mxu0 0.0
  %3430 = vmatpush1.msra.mxu0 0.0
  %3431 = vmatprep.subr.mxu0 0.0
  %3432 = vmatpush1.msra.mxu0 %v3407
  %3433 = vmatprep.subr.mxu0 0.0
  %3434 = vmatpush1.msra.mxu0 %v3404
  %3435 = vmatprep.subr.mxu0 0.0
  %3436 = vmatpush1.msra.mxu0 %v3403
  %3437 = vmatprep.subr.mxu0 0.0
  %3438 = vmatpush1.msra.mxu0 %v3402
  %3439 = vmatprep.subr.mxu0 0.0
  %3440 = vmatpush1.msra.mxu0 %v3401
  %3441 = vmatprep.subr.mxu0 0.0
  %3442 = vmatpush2.msra.mxu0 0.0
  %3443 = vmatprep.subr.mxu0 0.0
  %3444 = vmatpush2.msra.mxu0 0.0
  %3445 = vmatprep.subr.mxu0 0.0
  %3446 = vmatpush2.msra.mxu0 0.0
  %3447 = vmatprep.subr.mxu0 0.0
  %3448 = vmatpush2.msra.mxu0 0.0
  %3449 = vmatprep.subr.mxu0 0.0
  %3450 = vmatpush2.msra.mxu0 0.0
  %3451 = vmatprep.subr.mxu0 0.0
  %3452 = vmatpush2.msra.mxu0 0.0
  %3453 = vmatprep.subr.mxu0 0.0
  %3454 = vmatpush2.msra.mxu0 0.0
  %3455 = vmatprep.subr.mxu0 0.0
  %3456 = vmatpush2.msra.mxu0 0.0
  %3457 = vmatprep.subr.mxu0 0.0
  %3458 = vmatpush2.msra.mxu0 0.0
  %3459 = vmatprep.subr.mxu0 0.0
  %3460 = vmatpush2.msra.mxu0 0.0
  %3461 = vmatprep.subr.mxu0 0.0
  %3462 = vmatpush2.msra.mxu0 0.0
  %3463 = vmatprep.subr.mxu0 0.0
  %3464 = vmatpush2.msra.mxu0 0.0
  %3465 = vmatprep.subr.mxu0 0.0
  %3466 = vmatpush2.msra.mxu0 0.0
  %3467 = vmatprep.subr.mxu0 0.0
  %3468 = vmatpush2.msra.mxu0 0.0
  %3469 = vmatprep.subr.mxu0 0.0
  %3470 = vmatpush2.msra.mxu0 0.0
  %3471 = vmatprep.subr.mxu0 0.0
  %3472 = vmatpush2.msra.mxu0 0.0
  %3473 = vmatprep.mubr.f32.mxu0 0.0
  %3474 = vmatmul.mubr.f32.gmra.mxu0 %v1301
  %v3475 = vpop.f32.mrf.mxu0
  %v3476 = vadd.f32 0.0, %v3475
  %v3477 = vpop.f32.mrf.mxu0
  %3478 = vmatprep.mubr.f32.mxu0 0.0
  %3479 = vmatmul.mubr.f32.gmra.mxu0 %v1304
  %v3480 = vpop.f32.mrf.mxu0
  %v3481 = vadd.f32 0.0, %v3480
  %v3482 = vpop.f32.mrf.mxu0
  %3483 = vdwg.mxu0
  %s3484 = scalar_lea.vmem %s71, 32
  %v3485 = vld [vmem:[%s3484] sm:$0xff]
  %v3486 = vld [vmem:[%s3484 + $0x8] sm:$0xff]
  %v3487 = vld [vmem:[%s3484 + $0x10] sm:$0xff]
  %v3488 = vld [vmem:[%s3484 + $0x18] sm:$0xff]
  %v3489 = vpack.c.bf16 %v3302, %v3301
  %v3490 = vadd.f32 %v3301, %v3476
  %v3491 = vadd.f32 %v3302, %v3481
  %s3492 = scalar_lea.vmem %s73, 32
  %v3493 = vld [vmem:[%s3492] sm:$0xff]
  %v3494 = vld [vmem:[%s3492 + $0x8] sm:$0xff]
  %v3495 = vld [vmem:[%s3492 + $0x10] sm:$0xff]
  %v3496 = vld [vmem:[%s3492 + $0x18] sm:$0xff]
  %v3497 = vpack.c.bf16 %v3491, %v3490
  %v3502 = vunpack.c.l.b16 %v3493
  %v3503 = vunpack.c.h.b16 %v3493
  %v3504 = vunpack.c.l.b16 %v3494
  %v3505 = vunpack.c.h.b16 %v3494
  %v3506 = vunpack.c.l.b16 %v3495
  %v3507 = vunpack.c.h.b16 %v3495
  %v3508 = vunpack.c.l.b16 %v3496
  %v3509 = vunpack.c.h.b16 %v3496
  %v3510 = vpack.c.b16 %v3504, %v3502
  %v3511 = vpack.c.b16 %v3505, %v3503
  %v3512 = vpack.c.b16 %v3508, %v3506
  %v3513 = vpack.c.b16 %v3509, %v3507
  %v3519 = vsel %vm335, %v3497, 0
  %3521 = vmatprep.subr.bf16.mxu0 0
  %3522 = vmatpush1.bf16.msra.mxu0 0
  %3523 = vmatprep.subr.bf16.mxu0 0
  %3524 = vmatpush1.bf16.msra.mxu0 0
  %3525 = vmatprep.subr.bf16.mxu0 0
  %3526 = vmatpush1.bf16.msra.mxu0 0
  %3527 = vmatprep.subr.bf16.mxu0 0
  %3528 = vmatpush1.bf16.msra.mxu0 0
  %3529 = vmatprep.subr.bf16.mxu0 0
  %3530 = vmatpush1.bf16.msra.mxu0 0
  %3531 = vmatprep.subr.bf16.mxu0 0
  %3532 = vmatpush1.bf16.msra.mxu0 0
  %3533 = vmatprep.subr.bf16.mxu0 %v3513
  %3534 = vmatpush1.bf16.msra.mxu0 %v3512
  %3535 = vmatprep.subr.bf16.mxu0 %v3511
  %3536 = vmatpush1.bf16.msra.mxu0 %v3510
  %3537 = vmatprep.subr.bf16.mxu0 0
  %3538 = vmatpush2.bf16.msra.mxu0 0
  %3539 = vmatprep.subr.bf16.mxu0 0
  %3540 = vmatpush2.bf16.msra.mxu0 0
  %3541 = vmatprep.subr.bf16.mxu0 0
  %3542 = vmatpush2.bf16.msra.mxu0 0
  %3543 = vmatprep.subr.bf16.mxu0 0
  %3544 = vmatpush2.bf16.msra.mxu0 0
  %3545 = vmatprep.subr.bf16.mxu0 0
  %3546 = vmatpush2.bf16.msra.mxu0 0
  %3547 = vmatprep.subr.bf16.mxu0 0
  %3548 = vmatpush2.bf16.msra.mxu0 0
  %3549 = vmatprep.subr.bf16.mxu0 0
  %3550 = vmatpush2.bf16.msra.mxu0 0
  %3551 = vmatprep.subr.bf16.mxu0 0
  %3552 = vmatpush2.bf16.msra.mxu0 0
  %3553 = vmatprep.mubr.bf16.mxu0 0
  %3554 = vmatmul.mubr.bf16.gmra.mxu0 %v3519
  %v3555 = vpop.f32.mrf.mxu0
  %v3556 = vadd.f32 0.0, %v3555
  %v3557 = vpop.f32.mrf.mxu0
  %v3558 = vadd.f32 0.0, %v3557
  %v3559 = vpop.f32.mrf.mxu0
  %v3560 = vadd.f32 0.0, %v3559
  %v3561 = vpop.f32.mrf.mxu0
  %v3562 = vadd.f32 0.0, %v3561
  %3563 = vdwg.mxu0
  %v3568 = vunpack.c.l.b16 %v3485
  %v3569 = vunpack.c.h.b16 %v3485
  %v3570 = vunpack.c.l.b16 %v3486
  %v3571 = vunpack.c.h.b16 %v3486
  %v3572 = vunpack.c.l.b16 %v3487
  %v3573 = vunpack.c.h.b16 %v3487
  %v3574 = vunpack.c.l.b16 %v3488
  %v3575 = vunpack.c.h.b16 %v3488
  %v3576 = vpack.c.b16 %v3570, %v3568
  %v3577 = vpack.c.b16 %v3571, %v3569
  %v3578 = vpack.c.b16 %v3574, %v3572
  %v3579 = vpack.c.b16 %v3575, %v3573
  %v3585 = vsel %vm335, %v3489, 0
  %3587 = vmatprep.subr.bf16.mxu0 0
  %3588 = vmatpush1.bf16.msra.mxu0 0
  %3589 = vmatprep.subr.bf16.mxu0 0
  %3590 = vmatpush1.bf16.msra.mxu0 0
  %3591 = vmatprep.subr.bf16.mxu0 0
  %3592 = vmatpush1.bf16.msra.mxu0 0
  %3593 = vmatprep.subr.bf16.mxu0 0
  %3594 = vmatpush1.bf16.msra.mxu0 0
  %3595 = vmatprep.subr.bf16.mxu0 0
  %3596 = vmatpush1.bf16.msra.mxu0 0
  %3597 = vmatprep.subr.bf16.mxu0 0
  %3598 = vmatpush1.bf16.msra.mxu0 0
  %3599 = vmatprep.subr.bf16.mxu0 %v3579
  %3600 = vmatpush1.bf16.msra.mxu0 %v3578
  %3601 = vmatprep.subr.bf16.mxu0 %v3577
  %3602 = vmatpush1.bf16.msra.mxu0 %v3576
  %3603 = vmatprep.subr.bf16.mxu0 0
  %3604 = vmatpush2.bf16.msra.mxu0 0
  %3605 = vmatprep.subr.bf16.mxu0 0
  %3606 = vmatpush2.bf16.msra.mxu0 0
  %3607 = vmatprep.subr.bf16.mxu0 0
  %3608 = vmatpush2.bf16.msra.mxu0 0
  %3609 = vmatprep.subr.bf16.mxu0 0
  %3610 = vmatpush2.bf16.msra.mxu0 0
  %3611 = vmatprep.subr.bf16.mxu0 0
  %3612 = vmatpush2.bf16.msra.mxu0 0
  %3613 = vmatprep.subr.bf16.mxu0 0
  %3614 = vmatpush2.bf16.msra.mxu0 0
  %3615 = vmatprep.subr.bf16.mxu0 0
  %3616 = vmatpush2.bf16.msra.mxu0 0
  %3617 = vmatprep.subr.bf16.mxu0 0
  %3618 = vmatpush2.bf16.msra.mxu0 0
  %3619 = vmatprep.mubr.bf16.mxu0 0
  %3620 = vmatmul.mubr.bf16.gmra.mxu0 %v3585
  %v3621 = vpop.f32.mrf.mxu0
  %v3622 = vadd.f32 %v3556, %v3621
  %v3623 = vpop.f32.mrf.mxu0
  %v3624 = vadd.f32 %v3558, %v3623
  %v3625 = vpop.f32.mrf.mxu0
  %v3626 = vadd.f32 %v3560, %v3625
  %v3627 = vpop.f32.mrf.mxu0
  %v3628 = vadd.f32 %v3562, %v3627
  %3629 = vdwg.mxu0
  %s3630 = scalar_lea.vmem %s75, 2
  %v3631 = vld [vmem:[%s3630] sm:$0x3]
  %v3633 = vlaneseq
  %v3634 = vshrl.u32 %v3633, 7
  %v3635 = vsub.s32 0, %v3634
  %v3636 = vrot.slane %v3631, %v3635
  %v3637 = vlaneseq
  %v3638 = vshrl.u32 %v3637, 7
  %v3639 = vsub.s32 1, %v3638
  %v3640 = vrot.slane %v3631, %v3639
  %v3643 = vadd.f32 %v3622, %v3636
  %v3644 = vadd.f32 %v3624, %v3640
  %v3645 = vadd.f32 %v3626, %v3636
  %v3646 = vadd.f32 %v3628, %v3640
  %s3647 = scalar_lea.vmem %s77, 16
  %v3648 = vld [vmem:[%s3647] sm:$0xf]
  %v3649 = vld [vmem:[%s3647 + $0x4] sm:$0xf]
  %v3650 = vld [vmem:[%s3647 + $0x8] sm:$0xf]
  %v3651 = vld [vmem:[%s3647 + $0xc] sm:$0xf]
  %v3656 = vunpack.c.l.b16 %v3648
  %v3657 = vunpack.c.l.b16 %v3649
  %v3658 = vunpack.c.l.b16 %v3650
  %v3659 = vunpack.c.l.b16 %v3651
  %v3660 = vpack.c.b16 %v3657, %v3656
  %v3661 = vpack.c.b16 %v3659, %v3658
  %3664 = vmatprep.subr.bf16.mxu0 0
  %3665 = vmatpush1.bf16.msra.mxu0 0
  %3666 = vmatprep.subr.bf16.mxu0 0
  %3667 = vmatpush1.bf16.msra.mxu0 0
  %3668 = vmatprep.subr.bf16.mxu0 0
  %3669 = vmatpush1.bf16.msra.mxu0 0
  %3670 = vmatprep.subr.bf16.mxu0 0
  %3671 = vmatpush1.bf16.msra.mxu0 0
  %3672 = vmatprep.subr.bf16.mxu0 0
  %3673 = vmatpush1.bf16.msra.mxu0 0
  %3674 = vmatprep.subr.bf16.mxu0 0
  %3675 = vmatpush1.bf16.msra.mxu0 0
  %3676 = vmatprep.subr.bf16.mxu0 0
  %3677 = vmatpush1.bf16.msra.mxu0 %v3661
  %3678 = vmatprep.subr.bf16.mxu0 0
  %3679 = vmatpush1.bf16.msra.mxu0 %v3660
  %3680 = vmatprep.subr.bf16.mxu0 0
  %3681 = vmatpush2.bf16.msra.mxu0 0
  %3682 = vmatprep.subr.bf16.mxu0 0
  %3683 = vmatpush2.bf16.msra.mxu0 0
  %3684 = vmatprep.subr.bf16.mxu0 0
  %3685 = vmatpush2.bf16.msra.mxu0 0
  %3686 = vmatprep.subr.bf16.mxu0 0
  %3687 = vmatpush2.bf16.msra.mxu0 0
  %3688 = vmatprep.subr.bf16.mxu0 0
  %3689 = vmatpush2.bf16.msra.mxu0 0
  %3690 = vmatprep.subr.bf16.mxu0 0
  %3691 = vmatpush2.bf16.msra.mxu0 0
  %3692 = vmatprep.subr.bf16.mxu0 0
  %3693 = vmatpush2.bf16.msra.mxu0 0
  %3694 = vmatprep.subr.bf16.mxu0 0
  %3695 = vmatpush2.bf16.msra.mxu0 0
  %3696 = vmatprep.mubr.bf16.mxu0 0
  %3697 = vmatmul.mubr.bf16.gmra.mxu0 %v1564
  %v3698 = vpop.f32.mrf.mxu0
  %v3699 = vadd.f32 0.0, %v3698
  %v3700 = vpop.f32.mrf.mxu0
  %v3701 = vpop.f32.mrf.mxu0
  %v3702 = vadd.f32 0.0, %v3701
  %v3703 = vpop.f32.mrf.mxu0
  %3704 = vmatprep.mubr.bf16.mxu0 0
  %3705 = vmatmul.mubr.bf16.gmra.mxu0 %v1567
  %v3706 = vpop.f32.mrf.mxu0
  %v3707 = vadd.f32 0.0, %v3706
  %v3708 = vpop.f32.mrf.mxu0
  %v3709 = vpop.f32.mrf.mxu0
  %v3710 = vadd.f32 0.0, %v3709
  %v3711 = vpop.f32.mrf.mxu0
  %3712 = vmatprep.mubr.bf16.mxu0 0
  %3713 = vmatmul.mubr.bf16.gmra.mxu0 %v1570
  %v3714 = vpop.f32.mrf.mxu0
  %v3715 = vadd.f32 0.0, %v3714
  %v3716 = vpop.f32.mrf.mxu0
  %v3717 = vpop.f32.mrf.mxu0
  %v3718 = vpop.f32.mrf.mxu0
  %3719 = vdwg.mxu0
  %v3721 = vsel %vm1163, %v3645, 0
  %3723 = vmatprep.subr.mxu0 0.0
  %3724 = vmatpush1.msra.mxu0 0.0
  %3725 = vmatprep.subr.mxu0 0.0
  %3726 = vmatpush1.msra.mxu0 0.0
  %3727 = vmatprep.subr.mxu0 0.0
  %3728 = vmatpush1.msra.mxu0 0.0
  %3729 = vmatprep.subr.mxu0 0.0
  %3730 = vmatpush1.msra.mxu0 0.0
  %3731 = vmatprep.subr.mxu0 0.0
  %3732 = vmatpush1.msra.mxu0 0.0
  %3733 = vmatprep.subr.mxu0 0.0
  %3734 = vmatpush1.msra.mxu0 0.0
  %3735 = vmatprep.subr.mxu0 0.0
  %3736 = vmatpush1.msra.mxu0 0.0
  %3737 = vmatprep.subr.mxu0 0.0
  %3738 = vmatpush1.msra.mxu0 0.0
  %3739 = vmatprep.subr.mxu0 0.0
  %3740 = vmatpush1.msra.mxu0 0.0
  %3741 = vmatprep.subr.mxu0 0.0
  %3742 = vmatpush1.msra.mxu0 0.0
  %3743 = vmatprep.subr.mxu0 0.0
  %3744 = vmatpush1.msra.mxu0 0.0
  %3745 = vmatprep.subr.mxu0 0.0
  %3746 = vmatpush1.msra.mxu0 0.0
  %3747 = vmatprep.subr.mxu0 0.0
  %3748 = vmatpush1.msra.mxu0 0.0
  %3749 = vmatprep.subr.mxu0 0.0
  %3750 = vmatpush1.msra.mxu0 0.0
  %3751 = vmatprep.subr.mxu0 0.0
  %3752 = vmatpush1.msra.mxu0 %v3721
  %3753 = vmatprep.subr.mxu0 0.0
  %3754 = vmatpush1.msra.mxu0 %v3643
  %3755 = vmatprep.subr.mxu0 0.0
  %3756 = vmatpush2.msra.mxu0 0.0
  %3757 = vmatprep.subr.mxu0 0.0
  %3758 = vmatpush2.msra.mxu0 0.0
  %3759 = vmatprep.subr.mxu0 0.0
  %3760 = vmatpush2.msra.mxu0 0.0
  %3761 = vmatprep.subr.mxu0 0.0
  %3762 = vmatpush2.msra.mxu0 0.0
  %3763 = vmatprep.subr.mxu0 0.0
  %3764 = vmatpush2.msra.mxu0 0.0
  %3765 = vmatprep.subr.mxu0 0.0
  %3766 = vmatpush2.msra.mxu0 0.0
  %3767 = vmatprep.subr.mxu0 0.0
  %3768 = vmatpush2.msra.mxu0 0.0
  %3769 = vmatprep.subr.mxu0 0.0
  %3770 = vmatpush2.msra.mxu0 0.0
  %3771 = vmatprep.subr.mxu0 0.0
  %3772 = vmatpush2.msra.mxu0 0.0
  %3773 = vmatprep.subr.mxu0 0.0
  %3774 = vmatpush2.msra.mxu0 0.0
  %3775 = vmatprep.subr.mxu0 0.0
  %3776 = vmatpush2.msra.mxu0 0.0
  %3777 = vmatprep.subr.mxu0 0.0
  %3778 = vmatpush2.msra.mxu0 0.0
  %3779 = vmatprep.subr.mxu0 0.0
  %3780 = vmatpush2.msra.mxu0 0.0
  %3781 = vmatprep.subr.mxu0 0.0
  %3782 = vmatpush2.msra.mxu0 0.0
  %3783 = vmatprep.subr.mxu0 0.0
  %3784 = vmatpush2.msra.mxu0 0.0
  %3785 = vmatprep.subr.mxu0 0.0
  %3786 = vmatpush2.msra.mxu0 0.0
  %3787 = vmatprep.mubr.f32.mxu0 0.0
  %3788 = vmatmul.mubr.f32.gmra.mxu0 %v1629
  %v3789 = vpop.f32.mrf.mxu0
  %v3790 = vadd.f32 0.0, %v3789
  %v3791 = vpop.f32.mrf.mxu0
  %3792 = vmatprep.mubr.f32.mxu0 0.0
  %3793 = vmatmul.mubr.f32.gmra.mxu0 %v1632
  %v3794 = vpop.f32.mrf.mxu0
  %v3795 = vadd.f32 0.0, %v3794
  %v3796 = vpop.f32.mrf.mxu0
  %3797 = vmatprep.mubr.f32.mxu0 0.0
  %3798 = vmatmul.mubr.f32.gmra.mxu0 %v1635
  %v3799 = vpop.f32.mrf.mxu0
  %v3800 = vadd.f32 0.0, %v3799
  %v3801 = vpop.f32.mrf.mxu0
  %3802 = vmatprep.mubr.f32.mxu0 0.0
  %3803 = vmatmul.mubr.f32.gmra.mxu0 %v1638
  %v3804 = vpop.f32.mrf.mxu0
  %v3805 = vadd.f32 0.0, %v3804
  %v3806 = vpop.f32.mrf.mxu0
  %3807 = vmatprep.mubr.f32.mxu0 0.0
  %3808 = vmatmul.mubr.f32.gmra.mxu0 %v1641
  %v3809 = vpop.f32.mrf.mxu0
  %v3810 = vadd.f32 0.0, %v3809
  %v3811 = vpop.f32.mrf.mxu0
  %3812 = vdwg.mxu0
  %3814 = vrot.lane.b32.xlu0 %v3643, 64
  %v3815 = vpop.permute.xlu0 %3814
  %3816 = vrot.lane.b32.xlu0 %v3645, 64
  %v3817 = vpop.permute.xlu0 %3816
  %v3819 = vsel %vm1163, %v3817, 0
  %3821 = vmatprep.subr.mxu0 0.0
  %3822 = vmatpush1.msra.mxu0 0.0
  %3823 = vmatprep.subr.mxu0 0.0
  %3824 = vmatpush1.msra.mxu0 0.0
  %3825 = vmatprep.subr.mxu0 0.0
  %3826 = vmatpush1.msra.mxu0 0.0
  %3827 = vmatprep.subr.mxu0 0.0
  %3828 = vmatpush1.msra.mxu0 0.0
  %3829 = vmatprep.subr.mxu0 0.0
  %3830 = vmatpush1.msra.mxu0 0.0
  %3831 = vmatprep.subr.mxu0 0.0
  %3832 = vmatpush1.msra.mxu0 0.0
  %3833 = vmatprep.subr.mxu0 0.0
  %3834 = vmatpush1.msra.mxu0 0.0
  %3835 = vmatprep.subr.mxu0 0.0
  %3836 = vmatpush1.msra.mxu0 0.0
  %3837 = vmatprep.subr.mxu0 0.0
  %3838 = vmatpush1.msra.mxu0 0.0
  %3839 = vmatprep.subr.mxu0 0.0
  %3840 = vmatpush1.msra.mxu0 0.0
  %3841 = vmatprep.subr.mxu0 0.0
  %3842 = vmatpush1.msra.mxu0 0.0
  %3843 = vmatprep.subr.mxu0 0.0
  %3844 = vmatpush1.msra.mxu0 0.0
  %3845 = vmatprep.subr.mxu0 0.0
  %3846 = vmatpush1.msra.mxu0 0.0
  %3847 = vmatprep.subr.mxu0 0.0
  %3848 = vmatpush1.msra.mxu0 0.0
  %3849 = vmatprep.subr.mxu0 0.0
  %3850 = vmatpush1.msra.mxu0 %v3819
  %3851 = vmatprep.subr.mxu0 0.0
  %3852 = vmatpush1.msra.mxu0 %v3815
  %3853 = vmatprep.subr.mxu0 0.0
  %3854 = vmatpush2.msra.mxu0 0.0
  %3855 = vmatprep.subr.mxu0 0.0
  %3856 = vmatpush2.msra.mxu0 0.0
  %3857 = vmatprep.subr.mxu0 0.0
  %3858 = vmatpush2.msra.mxu0 0.0
  %3859 = vmatprep.subr.mxu0 0.0
  %3860 = vmatpush2.msra.mxu0 0.0
  %3861 = vmatprep.subr.mxu0 0.0
  %3862 = vmatpush2.msra.mxu0 0.0
  %3863 = vmatprep.subr.mxu0 0.0
  %3864 = vmatpush2.msra.mxu0 0.0
  %3865 = vmatprep.subr.mxu0 0.0
  %3866 = vmatpush2.msra.mxu0 0.0
  %3867 = vmatprep.subr.mxu0 0.0
  %3868 = vmatpush2.msra.mxu0 0.0
  %3869 = vmatprep.subr.mxu0 0.0
  %3870 = vmatpush2.msra.mxu0 0.0
  %3871 = vmatprep.subr.mxu0 0.0
  %3872 = vmatpush2.msra.mxu0 0.0
  %3873 = vmatprep.subr.mxu0 0.0
  %3874 = vmatpush2.msra.mxu0 0.0
  %3875 = vmatprep.subr.mxu0 0.0
  %3876 = vmatpush2.msra.mxu0 0.0
  %3877 = vmatprep.subr.mxu0 0.0
  %3878 = vmatpush2.msra.mxu0 0.0
  %3879 = vmatprep.subr.mxu0 0.0
  %3880 = vmatpush2.msra.mxu0 0.0
  %3881 = vmatprep.subr.mxu0 0.0
  %3882 = vmatpush2.msra.mxu0 0.0
  %3883 = vmatprep.subr.mxu0 0.0
  %3884 = vmatpush2.msra.mxu0 0.0
  %3885 = vmatprep.mubr.f32.mxu0 0.0
  %3886 = vmatmul.mubr.f32.gmra.mxu0 %v1149
  %v3887 = vpop.f32.mrf.mxu0
  %v3888 = vadd.f32 %v3699, %v3887
  %v3889 = vpop.f32.mrf.mxu0
  %3890 = vmatprep.mubr.f32.mxu0 0.0
  %3891 = vmatmul.mubr.f32.gmra.mxu0 %v1152
  %v3892 = vpop.f32.mrf.mxu0
  %v3893 = vadd.f32 %v3702, %v3892
  %v3894 = vpop.f32.mrf.mxu0
  %3895 = vmatprep.mubr.f32.mxu0 0.0
  %3896 = vmatmul.mubr.f32.gmra.mxu0 %v1155
  %v3897 = vpop.f32.mrf.mxu0
  %v3898 = vadd.f32 %v3707, %v3897
  %v3899 = vpop.f32.mrf.mxu0
  %3900 = vmatprep.mubr.f32.mxu0 0.0
  %3901 = vmatmul.mubr.f32.gmra.mxu0 %v1158
  %v3902 = vpop.f32.mrf.mxu0
  %v3903 = vadd.f32 %v3710, %v3902
  %v3904 = vpop.f32.mrf.mxu0
  %3905 = vmatprep.mubr.f32.mxu0 0.0
  %3906 = vmatmul.mubr.f32.gmra.mxu0 %v1161
  %v3907 = vpop.f32.mrf.mxu0
  %v3908 = vadd.f32 %v3715, %v3907
  %v3909 = vpop.f32.mrf.mxu0
  %3910 = vdwg.mxu0
  %v3912 = vsel %vm1163, %v3646, 0
  %3914 = vmatprep.subr.mxu0 0.0
  %3915 = vmatpush1.msra.mxu0 0.0
  %3916 = vmatprep.subr.mxu0 0.0
  %3917 = vmatpush1.msra.mxu0 0.0
  %3918 = vmatprep.subr.mxu0 0.0
  %3919 = vmatpush1.msra.mxu0 0.0
  %3920 = vmatprep.subr.mxu0 0.0
  %3921 = vmatpush1.msra.mxu0 0.0
  %3922 = vmatprep.subr.mxu0 0.0
  %3923 = vmatpush1.msra.mxu0 0.0
  %3924 = vmatprep.subr.mxu0 0.0
  %3925 = vmatpush1.msra.mxu0 0.0
  %3926 = vmatprep.subr.mxu0 0.0
  %3927 = vmatpush1.msra.mxu0 0.0
  %3928 = vmatprep.subr.mxu0 0.0
  %3929 = vmatpush1.msra.mxu0 0.0
  %3930 = vmatprep.subr.mxu0 0.0
  %3931 = vmatpush1.msra.mxu0 0.0
  %3932 = vmatprep.subr.mxu0 0.0
  %3933 = vmatpush1.msra.mxu0 0.0
  %3934 = vmatprep.subr.mxu0 0.0
  %3935 = vmatpush1.msra.mxu0 0.0
  %3936 = vmatprep.subr.mxu0 0.0
  %3937 = vmatpush1.msra.mxu0 0.0
  %3938 = vmatprep.subr.mxu0 0.0
  %3939 = vmatpush1.msra.mxu0 0.0
  %3940 = vmatprep.subr.mxu0 0.0
  %3941 = vmatpush1.msra.mxu0 0.0
  %3942 = vmatprep.subr.mxu0 0.0
  %3943 = vmatpush1.msra.mxu0 %v3912
  %3944 = vmatprep.subr.mxu0 0.0
  %3945 = vmatpush1.msra.mxu0 %v3644
  %3946 = vmatprep.subr.mxu0 0.0
  %3947 = vmatpush2.msra.mxu0 0.0
  %3948 = vmatprep.subr.mxu0 0.0
  %3949 = vmatpush2.msra.mxu0 0.0
  %3950 = vmatprep.subr.mxu0 0.0
  %3951 = vmatpush2.msra.mxu0 0.0
  %3952 = vmatprep.subr.mxu0 0.0
  %3953 = vmatpush2.msra.mxu0 0.0
  %3954 = vmatprep.subr.mxu0 0.0
  %3955 = vmatpush2.msra.mxu0 0.0
  %3956 = vmatprep.subr.mxu0 0.0
  %3957 = vmatpush2.msra.mxu0 0.0
  %3958 = vmatprep.subr.mxu0 0.0
  %3959 = vmatpush2.msra.mxu0 0.0
  %3960 = vmatprep.subr.mxu0 0.0
  %3961 = vmatpush2.msra.mxu0 0.0
  %3962 = vmatprep.subr.mxu0 0.0
  %3963 = vmatpush2.msra.mxu0 0.0
  %3964 = vmatprep.subr.mxu0 0.0
  %3965 = vmatpush2.msra.mxu0 0.0
  %3966 = vmatprep.subr.mxu0 0.0
  %3967 = vmatpush2.msra.mxu0 0.0
  %3968 = vmatprep.subr.mxu0 0.0
  %3969 = vmatpush2.msra.mxu0 0.0
  %3970 = vmatprep.subr.mxu0 0.0
  %3971 = vmatpush2.msra.mxu0 0.0
  %3972 = vmatprep.subr.mxu0 0.0
  %3973 = vmatpush2.msra.mxu0 0.0
  %3974 = vmatprep.subr.mxu0 0.0
  %3975 = vmatpush2.msra.mxu0 0.0
  %3976 = vmatprep.subr.mxu0 0.0
  %3977 = vmatpush2.msra.mxu0 0.0
  %3978 = vmatprep.mubr.f32.mxu0 0.0
  %3979 = vmatmul.mubr.f32.gmra.mxu0 %v1149
  %v3980 = vpop.f32.mrf.mxu0
  %v3981 = vadd.f32 %v3699, %v3980
  %v3982 = vpop.f32.mrf.mxu0
  %3983 = vmatprep.mubr.f32.mxu0 0.0
  %3984 = vmatmul.mubr.f32.gmra.mxu0 %v1152
  %v3985 = vpop.f32.mrf.mxu0
  %v3986 = vadd.f32 %v3702, %v3985
  %v3987 = vpop.f32.mrf.mxu0
  %3988 = vmatprep.mubr.f32.mxu0 0.0
  %3989 = vmatmul.mubr.f32.gmra.mxu0 %v1155
  %v3990 = vpop.f32.mrf.mxu0
  %v3991 = vadd.f32 %v3707, %v3990
  %v3992 = vpop.f32.mrf.mxu0
  %3993 = vmatprep.mubr.f32.mxu0 0.0
  %3994 = vmatmul.mubr.f32.gmra.mxu0 %v1158
  %v3995 = vpop.f32.mrf.mxu0
  %v3996 = vadd.f32 %v3710, %v3995
  %v3997 = vpop.f32.mrf.mxu0
  %3998 = vmatprep.mubr.f32.mxu0 0.0
  %3999 = vmatmul.mubr.f32.gmra.mxu0 %v1161
  %v4000 = vpop.f32.mrf.mxu0
  %v4001 = vadd.f32 %v3715, %v4000
  %v4002 = vpop.f32.mrf.mxu0
  %4003 = vdwg.mxu0
  %v4004 = vmul.f32 %v3790, %v3888
  %v4005 = vmul.f32 %v3795, %v3893
  %v4006 = vmul.f32 %v3800, %v3898
  %v4007 = vmul.f32 %v3805, %v3903
  %v4008 = vmul.f32 %v3810, %v3908
  %v4009 = vmul.f32 %v4004, %v1935
  %v4010 = vmul.f32 %v4005, %v1935
  %v4011 = vmul.f32 %v4006, %v1935
  %v4012 = vmul.f32 %v4007, %v1935
  %v4013 = vmul.f32 %v4008, %v1935
  %v4014 = vsel %vm1941, %v4009, 0.0
  %4015 = vadd.xlane.f32.xlu0 %v4014
  %v4016 = vpop.xlane.xlu0 %4015
  %v4017 = vsel %vm1941, %v4010, 0.0
  %4018 = vadd.xlane.f32.xlu0 %v4017
  %v4019 = vpop.xlane.xlu0 %4018
  %v4020 = vsel %vm1941, %v4011, 0.0
  %4021 = vadd.xlane.f32.xlu0 %v4020
  %v4022 = vpop.xlane.xlu0 %4021
  %v4023 = vsel %vm1941, %v4012, 0.0
  %4024 = vadd.xlane.f32.xlu0 %v4023
  %v4025 = vpop.xlane.xlu0 %4024
  %v4026 = vsel %vm1954, %v4013, 0.0
  %4027 = vadd.xlane.f32.xlu0 %v4026
  %v4028 = vpop.xlane.xlu0 %4027
  %v4029 = vmul.f32 %v4016, 0.17677669
  %v4030 = vmul.f32 %v4019, 0.17677669
  %v4031 = vmul.f32 %v4022, 0.17677669
  %v4032 = vmul.f32 %v4025, 0.17677669
  %v4033 = vmul.f32 %v4028, 0.17677669
  %v4034 = vadd.f32 %v4029, %v236
  %v4035 = vadd.f32 %v4030, %v237
  %v4036 = vadd.f32 %v4031, %v238
  %v4037 = vadd.f32 %v4032, %v239
  %v4038 = vadd.f32 %v4033, %v240
  %v4039 = vsel %vm1147, %v4034, -inf
  %v4040 = vsel %vm1147, %v4035, -inf
  %v4041 = vsel %vm1147, %v4036, -inf
  %v4042 = vsel %vm1147, %v4037, -inf
  %v4043 = vsel %vm1972, %v4038, -inf
  %v4044 = vmax.f32 %v4039, %v4043
  %v4045 = vmax.f32 %v4044, %v4040
  %v4046 = vmax.f32 %v4041, %v4042
  %v4047 = vmax.f32 %v4045, %v4046
  %v4048 = vrot.slane %v4047, 4
  %v4049 = vmax.f32 %v4047, %v4048
  %v4050 = vrot.slane %v4049, 2
  %v4051 = vmax.f32 %v4049, %v4050
  %v4052 = vrot.slane %v4051, 1
  %v4053 = vmax.f32 %v4051, %v4052
  %v4054 = vmul.f32 %v231, %v4053
  %v4055 = vmul.f32 %v232, %v4053
  %v4056 = vmul.f32 %v233, %v4053
  %v4057 = vmul.f32 %v234, %v4053
  %v4058 = vmul.f32 %v235, %v4053
  %v4059 = vsel %vm1147, %v4054, 0.0
  %4060 = vadd.xlane.f32.xlu0 %v4059
  %v4061 = vpop.xlane.xlu0 %4060
  %v4062 = vsel %vm1147, %v4055, 0.0
  %4063 = vadd.xlane.f32.xlu0 %v4062
  %v4064 = vpop.xlane.xlu0 %4063
  %v4065 = vsel %vm1147, %v4056, 0.0
  %4066 = vadd.xlane.f32.xlu0 %v4065
  %v4067 = vpop.xlane.xlu0 %4066
  %v4068 = vsel %vm1147, %v4057, 0.0
  %4069 = vadd.xlane.f32.xlu0 %v4068
  %v4070 = vpop.xlane.xlu0 %4069
  %v4071 = vsel %vm1972, %v4058, 0.0
  %4072 = vadd.xlane.f32.xlu0 %v4071
  %v4073 = vpop.xlane.xlu0 %4072
  %v4074 = vsub.f32 %v4029, %v4061
  %v4075 = vsub.f32 %v4030, %v4064
  %v4076 = vsub.f32 %v4031, %v4067
  %v4077 = vsub.f32 %v4032, %v4070
  %v4078 = vsub.f32 %v4033, %v4073
  %v4079 = vmul.f32 %v4074, 1.442695
  %v4080 = vpow.pop %v4079
  %v4081 = vmul.f32 %v4075, 1.442695
  %v4082 = vpow.pop %v4081
  %v4083 = vmul.f32 %v4076, 1.442695
  %v4084 = vpow.pop %v4083
  %v4085 = vmul.f32 %v4077, 1.442695
  %v4086 = vpow.pop %v4085
  %v4087 = vmul.f32 %v4078, 1.442695
  %v4088 = vpow.pop %v4087
  %v4089 = vmul.f32 %v231, %v4080
  %v4090 = vmul.f32 %v232, %v4082
  %v4091 = vmul.f32 %v233, %v4084
  %v4092 = vmul.f32 %v234, %v4086
  %v4093 = vmul.f32 %v235, %v4088
  %v4094 = vsel %vm1147, %v4089, 0.0
  %v4095 = vsel %vm1147, %v4090, 0.0
  %v4096 = vadd.f32 %v4094, %v4095
  %v4097 = vsel %vm1147, %v4091, 0.0
  %v4098 = vadd.f32 %v4096, %v4097
  %v4099 = vsel %vm1147, %v4092, 0.0
  %v4100 = vadd.f32 %v4098, %v4099
  %v4101 = vsel %vm1972, %v4093, 0.0
  %v4102 = vadd.f32 %v4100, %v4101
  %v4103 = vrot.slane %v4102, 4
  %v4104 = vadd.f32 %v4102, %v4103
  %v4105 = vrot.slane %v4104, 2
  %v4106 = vadd.f32 %v4104, %v4105
  %v4107 = vrot.slane %v4106, 1
  %v4108 = vadd.f32 %v4106, %v4107
  %v4109 = vadd.f32 %v4108, 1e-16
  %v4110 = vmul.f32 %v231, %v4109
  %v4111 = vmul.f32 %v232, %v4109
  %v4112 = vmul.f32 %v233, %v4109
  %v4113 = vmul.f32 %v234, %v4109
  %v4114 = vmul.f32 %v235, %v4109
  %v4115 = vsel %vm1147, %v4110, 0.0
  %4116 = vadd.xlane.f32.xlu0 %v4115
  %v4117 = vpop.xlane.xlu0 %4116
  %v4118 = vsel %vm1147, %v4111, 0.0
  %4119 = vadd.xlane.f32.xlu0 %v4118
  %v4120 = vpop.xlane.xlu0 %4119
  %v4121 = vsel %vm1147, %v4112, 0.0
  %4122 = vadd.xlane.f32.xlu0 %v4121
  %v4123 = vpop.xlane.xlu0 %4122
  %v4124 = vsel %vm1147, %v4113, 0.0
  %4125 = vadd.xlane.f32.xlu0 %v4124
  %v4126 = vpop.xlane.xlu0 %4125
  %v4127 = vsel %vm1972, %v4114, 0.0
  %4128 = vadd.xlane.f32.xlu0 %v4127
  %v4129 = vpop.xlane.xlu0 %4128
  %v4130 = vrcp.pop %v4117
  %v4131 = vmul.f32 %v4080, %v4130
  %v4132 = vrcp.pop %v4120
  %v4133 = vmul.f32 %v4082, %v4132
  %v4134 = vrcp.pop %v4123
  %v4135 = vmul.f32 %v4084, %v4134
  %v4136 = vrcp.pop %v4126
  %v4137 = vmul.f32 %v4086, %v4136
  %v4138 = vrcp.pop %v4129
  %v4139 = vmul.f32 %v4088, %v4138
  %v4140 = vmul.f32 %v4131, %v1935
  %v4141 = vmul.f32 %v4133, %v1935
  %v4142 = vmul.f32 %v4135, %v1935
  %v4143 = vmul.f32 %v4137, %v1935
  %v4144 = vmul.f32 %v4139, %v1935
  %v4145 = vmul.f32 %v4004, %v2078
  %v4146 = vmul.f32 %v4005, %v2078
  %v4147 = vmul.f32 %v4006, %v2078
  %v4148 = vmul.f32 %v4007, %v2078
  %v4149 = vmul.f32 %v4008, %v2078
  %v4150 = vsel %vm1941, %v4145, 0.0
  %4151 = vadd.xlane.f32.xlu0 %v4150
  %v4152 = vpop.xlane.xlu0 %4151
  %v4153 = vsel %vm1941, %v4146, 0.0
  %4154 = vadd.xlane.f32.xlu0 %v4153
  %v4155 = vpop.xlane.xlu0 %4154
  %v4156 = vsel %vm1941, %v4147, 0.0
  %4157 = vadd.xlane.f32.xlu0 %v4156
  %v4158 = vpop.xlane.xlu0 %4157
  %v4159 = vsel %vm1941, %v4148, 0.0
  %4160 = vadd.xlane.f32.xlu0 %v4159
  %v4161 = vpop.xlane.xlu0 %4160
  %v4162 = vsel %vm1954, %v4149, 0.0
  %4163 = vadd.xlane.f32.xlu0 %v4162
  %v4164 = vpop.xlane.xlu0 %4163
  %v4165 = vmul.f32 %v4152, 0.17677669
  %v4166 = vmul.f32 %v4155, 0.17677669
  %v4167 = vmul.f32 %v4158, 0.17677669
  %v4168 = vmul.f32 %v4161, 0.17677669
  %v4169 = vmul.f32 %v4164, 0.17677669
  %v4170 = vadd.f32 %v4165, %v236
  %v4171 = vadd.f32 %v4166, %v237
  %v4172 = vadd.f32 %v4167, %v238
  %v4173 = vadd.f32 %v4168, %v239
  %v4174 = vadd.f32 %v4169, %v240
  %v4175 = vsel %vm1147, %v4170, -inf
  %v4176 = vsel %vm1147, %v4171, -inf
  %v4177 = vsel %vm1147, %v4172, -inf
  %v4178 = vsel %vm1147, %v4173, -inf
  %v4179 = vsel %vm1972, %v4174, -inf
  %v4180 = vmax.f32 %v4175, %v4179
  %v4181 = vmax.f32 %v4180, %v4176
  %v4182 = vmax.f32 %v4177, %v4178
  %v4183 = vmax.f32 %v4181, %v4182
  %v4184 = vrot.slane %v4183, 4
  %v4185 = vmax.f32 %v4183, %v4184
  %v4186 = vrot.slane %v4185, 2
  %v4187 = vmax.f32 %v4185, %v4186
  %v4188 = vrot.slane %v4187, 1
  %v4189 = vmax.f32 %v4187, %v4188
  %v4190 = vmul.f32 %v231, %v4189
  %v4191 = vmul.f32 %v232, %v4189
  %v4192 = vmul.f32 %v233, %v4189
  %v4193 = vmul.f32 %v234, %v4189
  %v4194 = vmul.f32 %v235, %v4189
  %v4195 = vsel %vm1147, %v4190, 0.0
  %4196 = vadd.xlane.f32.xlu0 %v4195
  %v4197 = vpop.xlane.xlu0 %4196
  %v4198 = vsel %vm1147, %v4191, 0.0
  %4199 = vadd.xlane.f32.xlu0 %v4198
  %v4200 = vpop.xlane.xlu0 %4199
  %v4201 = vsel %vm1147, %v4192, 0.0
  %4202 = vadd.xlane.f32.xlu0 %v4201
  %v4203 = vpop.xlane.xlu0 %4202
  %v4204 = vsel %vm1147, %v4193, 0.0
  %4205 = vadd.xlane.f32.xlu0 %v4204
  %v4206 = vpop.xlane.xlu0 %4205
  %v4207 = vsel %vm1972, %v4194, 0.0
  %4208 = vadd.xlane.f32.xlu0 %v4207
  %v4209 = vpop.xlane.xlu0 %4208
  %v4210 = vsub.f32 %v4165, %v4197
  %v4211 = vsub.f32 %v4166, %v4200
  %v4212 = vsub.f32 %v4167, %v4203
  %v4213 = vsub.f32 %v4168, %v4206
  %v4214 = vsub.f32 %v4169, %v4209
  %v4215 = vmul.f32 %v4210, 1.442695
  %v4216 = vpow.pop %v4215
  %v4217 = vmul.f32 %v4211, 1.442695
  %v4218 = vpow.pop %v4217
  %v4219 = vmul.f32 %v4212, 1.442695
  %v4220 = vpow.pop %v4219
  %v4221 = vmul.f32 %v4213, 1.442695
  %v4222 = vpow.pop %v4221
  %v4223 = vmul.f32 %v4214, 1.442695
  %v4224 = vpow.pop %v4223
  %v4225 = vmul.f32 %v231, %v4216
  %v4226 = vmul.f32 %v232, %v4218
  %v4227 = vmul.f32 %v233, %v4220
  %v4228 = vmul.f32 %v234, %v4222
  %v4229 = vmul.f32 %v235, %v4224
  %v4230 = vsel %vm1147, %v4225, 0.0
  %v4231 = vsel %vm1147, %v4226, 0.0
  %v4232 = vadd.f32 %v4230, %v4231
  %v4233 = vsel %vm1147, %v4227, 0.0
  %v4234 = vadd.f32 %v4232, %v4233
  %v4235 = vsel %vm1147, %v4228, 0.0
  %v4236 = vadd.f32 %v4234, %v4235
  %v4237 = vsel %vm1972, %v4229, 0.0
  %v4238 = vadd.f32 %v4236, %v4237
  %v4239 = vrot.slane %v4238, 4
  %v4240 = vadd.f32 %v4238, %v4239
  %v4241 = vrot.slane %v4240, 2
  %v4242 = vadd.f32 %v4240, %v4241
  %v4243 = vrot.slane %v4242, 1
  %v4244 = vadd.f32 %v4242, %v4243
  %v4245 = vadd.f32 %v4244, 1e-16
  %v4246 = vmul.f32 %v231, %v4245
  %v4247 = vmul.f32 %v232, %v4245
  %v4248 = vmul.f32 %v233, %v4245
  %v4249 = vmul.f32 %v234, %v4245
  %v4250 = vmul.f32 %v235, %v4245
  %v4251 = vsel %vm1147, %v4246, 0.0
  %4252 = vadd.xlane.f32.xlu0 %v4251
  %v4253 = vpop.xlane.xlu0 %4252
  %v4254 = vsel %vm1147, %v4247, 0.0
  %4255 = vadd.xlane.f32.xlu0 %v4254
  %v4256 = vpop.xlane.xlu0 %4255
  %v4257 = vsel %vm1147, %v4248, 0.0
  %4258 = vadd.xlane.f32.xlu0 %v4257
  %v4259 = vpop.xlane.xlu0 %4258
  %v4260 = vsel %vm1147, %v4249, 0.0
  %4261 = vadd.xlane.f32.xlu0 %v4260
  %v4262 = vpop.xlane.xlu0 %4261
  %v4263 = vsel %vm1972, %v4250, 0.0
  %4264 = vadd.xlane.f32.xlu0 %v4263
  %v4265 = vpop.xlane.xlu0 %4264
  %v4266 = vrcp.pop %v4253
  %v4267 = vmul.f32 %v4216, %v4266
  %v4268 = vrcp.pop %v4256
  %v4269 = vmul.f32 %v4218, %v4268
  %v4270 = vrcp.pop %v4259
  %v4271 = vmul.f32 %v4220, %v4270
  %v4272 = vrcp.pop %v4262
  %v4273 = vmul.f32 %v4222, %v4272
  %v4274 = vrcp.pop %v4265
  %v4275 = vmul.f32 %v4224, %v4274
  %v4276 = vmul.f32 %v4267, %v2078
  %v4277 = vmul.f32 %v4269, %v2078
  %v4278 = vmul.f32 %v4271, %v2078
  %v4279 = vmul.f32 %v4273, %v2078
  %v4280 = vmul.f32 %v4275, %v2078
  %v4281 = vadd.f32 %v4140, %v4276
  %v4282 = vadd.f32 %v4141, %v4277
  %v4283 = vadd.f32 %v4142, %v4278
  %v4284 = vadd.f32 %v4143, %v4279
  %v4285 = vadd.f32 %v4144, %v4280
  %v4286 = vmul.f32 %v3981, %v4281
  %v4287 = vmul.f32 %v3986, %v4282
  %v4288 = vmul.f32 %v3991, %v4283
  %v4289 = vmul.f32 %v3996, %v4284
  %v4290 = vmul.f32 %v4001, %v4285
  %4292 = vrot.lane.b32.xlu0 %v3644, 64
  %v4293 = vpop.permute.xlu0 %4292
  %4294 = vrot.lane.b32.xlu0 %v3646, 64
  %v4295 = vpop.permute.xlu0 %4294
  %v4299 = vsel %vm1163, %v4290, 0
  %4301 = vmatprep.subr.mxu0 0.0
  %4302 = vmatpush1.msra.mxu0 0.0
  %4303 = vmatprep.subr.mxu0 0.0
  %4304 = vmatpush1.msra.mxu0 0.0
  %4305 = vmatprep.subr.mxu0 0.0
  %4306 = vmatpush1.msra.mxu0 0.0
  %4307 = vmatprep.subr.mxu0 0.0
  %4308 = vmatpush1.msra.mxu0 0.0
  %4309 = vmatprep.subr.mxu0 0.0
  %4310 = vmatpush1.msra.mxu0 0.0
  %4311 = vmatprep.subr.mxu0 0.0
  %4312 = vmatpush1.msra.mxu0 0.0
  %4313 = vmatprep.subr.mxu0 0.0
  %4314 = vmatpush1.msra.mxu0 0.0
  %4315 = vmatprep.subr.mxu0 0.0
  %4316 = vmatpush1.msra.mxu0 0.0
  %4317 = vmatprep.subr.mxu0 0.0
  %4318 = vmatpush1.msra.mxu0 0.0
  %4319 = vmatprep.subr.mxu0 0.0
  %4320 = vmatpush1.msra.mxu0 0.0
  %4321 = vmatprep.subr.mxu0 0.0
  %4322 = vmatpush1.msra.mxu0 0.0
  %4323 = vmatprep.subr.mxu0 0.0
  %4324 = vmatpush1.msra.mxu0 %v4299
  %4325 = vmatprep.subr.mxu0 0.0
  %4326 = vmatpush1.msra.mxu0 %v4289
  %4327 = vmatprep.subr.mxu0 0.0
  %4328 = vmatpush1.msra.mxu0 %v4288
  %4329 = vmatprep.subr.mxu0 0.0
  %4330 = vmatpush1.msra.mxu0 %v4287
  %4331 = vmatprep.subr.mxu0 0.0
  %4332 = vmatpush1.msra.mxu0 %v4286
  %4333 = vmatprep.subr.mxu0 0.0
  %4334 = vmatpush2.msra.mxu0 0.0
  %4335 = vmatprep.subr.mxu0 0.0
  %4336 = vmatpush2.msra.mxu0 0.0
  %4337 = vmatprep.subr.mxu0 0.0
  %4338 = vmatpush2.msra.mxu0 0.0
  %4339 = vmatprep.subr.mxu0 0.0
  %4340 = vmatpush2.msra.mxu0 0.0
  %4341 = vmatprep.subr.mxu0 0.0
  %4342 = vmatpush2.msra.mxu0 0.0
  %4343 = vmatprep.subr.mxu0 0.0
  %4344 = vmatpush2.msra.mxu0 0.0
  %4345 = vmatprep.subr.mxu0 0.0
  %4346 = vmatpush2.msra.mxu0 0.0
  %4347 = vmatprep.subr.mxu0 0.0
  %4348 = vmatpush2.msra.mxu0 0.0
  %4349 = vmatprep.subr.mxu0 0.0
  %4350 = vmatpush2.msra.mxu0 0.0
  %4351 = vmatprep.subr.mxu0 0.0
  %4352 = vmatpush2.msra.mxu0 0.0
  %4353 = vmatprep.subr.mxu0 0.0
  %4354 = vmatpush2.msra.mxu0 0.0
  %4355 = vmatprep.subr.mxu0 0.0
  %4356 = vmatpush2.msra.mxu0 0.0
  %4357 = vmatprep.subr.mxu0 0.0
  %4358 = vmatpush2.msra.mxu0 0.0
  %4359 = vmatprep.subr.mxu0 0.0
  %4360 = vmatpush2.msra.mxu0 0.0
  %4361 = vmatprep.subr.mxu0 0.0
  %4362 = vmatpush2.msra.mxu0 0.0
  %4363 = vmatprep.subr.mxu0 0.0
  %4364 = vmatpush2.msra.mxu0 0.0
  %4365 = vmatprep.mubr.f32.mxu0 0.0
  %4366 = vmatmul.mubr.f32.gmra.mxu0 %v1301
  %v4367 = vpop.f32.mrf.mxu0
  %v4368 = vadd.f32 %v4293, %v4367
  %v4369 = vpop.f32.mrf.mxu0
  %4370 = vmatprep.mubr.f32.mxu0 0.0
  %4371 = vmatmul.mubr.f32.gmra.mxu0 %v1304
  %v4372 = vpop.f32.mrf.mxu0
  %v4373 = vadd.f32 %v4295, %v4372
  %v4374 = vpop.f32.mrf.mxu0
  %4375 = vdwg.mxu0
  %s4376 = scalar_lea.vmem %s79, 32
  %v4377 = vld [vmem:[%s4376] sm:$0xf]
  %v4378 = vld [vmem:[%s4376 + $0x4] sm:$0xf]
  %v4379 = vld [vmem:[%s4376 + $0x8] sm:$0xf]
  %v4380 = vld [vmem:[%s4376 + $0xc] sm:$0xf]
  %v4381 = vld [vmem:[%s4376 + $0x10] sm:$0xf]
  %v4382 = vld [vmem:[%s4376 + $0x14] sm:$0xf]
  %v4383 = vld [vmem:[%s4376 + $0x18] sm:$0xf]
  %v4384 = vld [vmem:[%s4376 + $0x1c] sm:$0xf]
  %v4385 = vpack.c.bf16 %v4373, %v4368
  %s4386 = scalar_lea.vmem %s81, 1
  %v4387 = vld [vmem:[%s4386] sm:$0x1]
  %v4389 = vlaneseq
  %v4390 = vshrl.u32 %v4389, 7
  %v4391 = vsub.s32 0, %v4390
  %v4392 = vrot.slane %v4387, %v4391
  %v4402 = vunpack.c.l.b16 %v4377
  %v4403 = vunpack.c.l.b16 %v4378
  %v4404 = vunpack.c.l.b16 %v4379
  %v4405 = vunpack.c.l.b16 %v4380
  %v4406 = vunpack.c.l.b16 %v4381
  %v4407 = vunpack.c.l.b16 %v4382
  %v4408 = vunpack.c.l.b16 %v4383
  %v4409 = vunpack.c.l.b16 %v4384
  %v4410 = vpack.c.b16 %v4403, %v4402
  %v4411 = vpack.c.b16 %v4405, %v4404
  %v4412 = vpack.c.b16 %v4407, %v4406
  %v4413 = vpack.c.b16 %v4409, %v4408
  %v4419 = vsel %vm1941, %v4385, 0
  %4421 = vmatprep.subr.bf16.mxu0 0
  %4422 = vmatpush1.bf16.msra.mxu0 0
  %4423 = vmatprep.subr.bf16.mxu0 0
  %4424 = vmatpush1.bf16.msra.mxu0 0
  %4425 = vmatprep.subr.bf16.mxu0 0
  %4426 = vmatpush1.bf16.msra.mxu0 0
  %4427 = vmatprep.subr.bf16.mxu0 0
  %4428 = vmatpush1.bf16.msra.mxu0 0
  %4429 = vmatprep.subr.bf16.mxu0 0
  %4430 = vmatpush1.bf16.msra.mxu0 %v4413
  %4431 = vmatprep.subr.bf16.mxu0 0
  %4432 = vmatpush1.bf16.msra.mxu0 %v4412
  %4433 = vmatprep.subr.bf16.mxu0 0
  %4434 = vmatpush1.bf16.msra.mxu0 %v4411
  %4435 = vmatprep.subr.bf16.mxu0 0
  %4436 = vmatpush1.bf16.msra.mxu0 %v4410
  %4437 = vmatprep.subr.bf16.mxu0 0
  %4438 = vmatpush2.bf16.msra.mxu0 0
  %4439 = vmatprep.subr.bf16.mxu0 0
  %4440 = vmatpush2.bf16.msra.mxu0 0
  %4441 = vmatprep.subr.bf16.mxu0 0
  %4442 = vmatpush2.bf16.msra.mxu0 0
  %4443 = vmatprep.subr.bf16.mxu0 0
  %4444 = vmatpush2.bf16.msra.mxu0 0
  %4445 = vmatprep.subr.bf16.mxu0 0
  %4446 = vmatpush2.bf16.msra.mxu0 0
  %4447 = vmatprep.subr.bf16.mxu0 0
  %4448 = vmatpush2.bf16.msra.mxu0 0
  %4449 = vmatprep.subr.bf16.mxu0 0
  %4450 = vmatpush2.bf16.msra.mxu0 0
  %4451 = vmatprep.subr.bf16.mxu0 0
  %4452 = vmatpush2.bf16.msra.mxu0 0
  %4453 = vmatprep.mubr.bf16.mxu0 0
  %4454 = vmatmul.mubr.bf16.gmra.mxu0 %v4419
  %v4455 = vpop.f32.mrf.mxu0
  %v4456 = vadd.f32 %v4392, %v4455
  %v4457 = vpop.f32.mrf.mxu0
  %v4458 = vpop.f32.mrf.mxu0
  %v4459 = vadd.f32 %v4392, %v4458
  %v4460 = vpop.f32.mrf.mxu0
  %4461 = vdwg.mxu0
  %v4462 = vadd.f32 %v3301, %v4456
  %v4463 = vadd.f32 %v3302, %v4459
  %v4465 = vsel %vm1163, %v4463, 0
  %4467 = vmatprep.subr.mxu0 0.0
  %4468 = vmatpush1.msra.mxu0 0.0
  %4469 = vmatprep.subr.mxu0 0.0
  %4470 = vmatpush1.msra.mxu0 0.0
  %4471 = vmatprep.subr.mxu0 0.0
  %4472 = vmatpush1.msra.mxu0 0.0
  %4473 = vmatprep.subr.mxu0 0.0
  %4474 = vmatpush1.msra.mxu0 0.0
  %4475 = vmatprep.subr.mxu0 0.0
  %4476 = vmatpush1.msra.mxu0 0.0
  %4477 = vmatprep.subr.mxu0 0.0
  %4478 = vmatpush1.msra.mxu0 0.0
  %4479 = vmatprep.subr.mxu0 0.0
  %4480 = vmatpush1.msra.mxu0 0.0
  %4481 = vmatprep.subr.mxu0 0.0
  %4482 = vmatpush1.msra.mxu0 0.0
  %4483 = vmatprep.subr.mxu0 0.0
  %4484 = vmatpush1.msra.mxu0 0.0
  %4485 = vmatprep.subr.mxu0 0.0
  %4486 = vmatpush1.msra.mxu0 0.0
  %4487 = vmatprep.subr.mxu0 0.0
  %4488 = vmatpush1.msra.mxu0 0.0
  %4489 = vmatprep.subr.mxu0 0.0
  %4490 = vmatpush1.msra.mxu0 0.0
  %4491 = vmatprep.subr.mxu0 0.0
  %4492 = vmatpush1.msra.mxu0 0.0
  %4493 = vmatprep.subr.mxu0 0.0
  %4494 = vmatpush1.msra.mxu0 0.0
  %4495 = vmatprep.subr.mxu0 0.0
  %4496 = vmatpush1.msra.mxu0 %v4465
  %4497 = vmatprep.subr.mxu0 0.0
  %4498 = vmatpush1.msra.mxu0 %v4462
  %4499 = vmatprep.subr.mxu0 0.0
  %4500 = vmatpush2.msra.mxu0 0.0
  %4501 = vmatprep.subr.mxu0 0.0
  %4502 = vmatpush2.msra.mxu0 0.0
  %4503 = vmatprep.subr.mxu0 0.0
  %4504 = vmatpush2.msra.mxu0 0.0
  %4505 = vmatprep.subr.mxu0 0.0
  %4506 = vmatpush2.msra.mxu0 0.0
  %4507 = vmatprep.subr.mxu0 0.0
  %4508 = vmatpush2.msra.mxu0 0.0
  %4509 = vmatprep.subr.mxu0 0.0
  %4510 = vmatpush2.msra.mxu0 0.0
  %4511 = vmatprep.subr.mxu0 0.0
  %4512 = vmatpush2.msra.mxu0 0.0
  %4513 = vmatprep.subr.mxu0 0.0
  %4514 = vmatpush2.msra.mxu0 0.0
  %4515 = vmatprep.subr.mxu0 0.0
  %4516 = vmatpush2.msra.mxu0 0.0
  %4517 = vmatprep.subr.mxu0 0.0
  %4518 = vmatpush2.msra.mxu0 0.0
  %4519 = vmatprep.subr.mxu0 0.0
  %4520 = vmatpush2.msra.mxu0 0.0
  %4521 = vmatprep.subr.mxu0 0.0
  %4522 = vmatpush2.msra.mxu0 0.0
  %4523 = vmatprep.subr.mxu0 0.0
  %4524 = vmatpush2.msra.mxu0 0.0
  %4525 = vmatprep.subr.mxu0 0.0
  %4526 = vmatpush2.msra.mxu0 0.0
  %4527 = vmatprep.subr.mxu0 0.0
  %4528 = vmatpush2.msra.mxu0 0.0
  %4529 = vmatprep.subr.mxu0 0.0
  %4530 = vmatpush2.msra.mxu0 0.0
  %4531 = vmatprep.mubr.f32.mxu0 0.0
  %4532 = vmatmul.mubr.f32.gmra.mxu0 %v2429
  %v4533 = vpop.f32.mrf.mxu0
  %v4534 = vadd.f32 0.0, %v4533
  %v4535 = vpop.f32.mrf.mxu0
  %4536 = vdwg.mxu0
  %v4537 = vsel %vm2504, %v4534, 0.0
  %4538 = vadd.xlane.f32.xlu0 %v4537
  %v4539 = vpop.xlane.xlu0 %4538
  %v4540 = vmul.f32 %v4539, %v243
  %v4542 = vsel %vm469, %v4540, 0
  %4544 = vmatprep.subr.mxu0 0.0
  %4545 = vmatpush1.msra.mxu0 0.0
  %4546 = vmatprep.subr.mxu0 0.0
  %4547 = vmatpush1.msra.mxu0 0.0
  %4548 = vmatprep.subr.mxu0 0.0
  %4549 = vmatpush1.msra.mxu0 0.0
  %4550 = vmatprep.subr.mxu0 0.0
  %4551 = vmatpush1.msra.mxu0 0.0
  %4552 = vmatprep.subr.mxu0 0.0
  %4553 = vmatpush1.msra.mxu0 0.0
  %4554 = vmatprep.subr.mxu0 0.0
  %4555 = vmatpush1.msra.mxu0 0.0
  %4556 = vmatprep.subr.mxu0 0.0
  %4557 = vmatpush1.msra.mxu0 0.0
  %4558 = vmatprep.subr.mxu0 0.0
  %4559 = vmatpush1.msra.mxu0 0.0
  %4560 = vmatprep.subr.mxu0 0.0
  %4561 = vmatpush1.msra.mxu0 0.0
  %4562 = vmatprep.subr.mxu0 0.0
  %4563 = vmatpush1.msra.mxu0 0.0
  %4564 = vmatprep.subr.mxu0 0.0
  %4565 = vmatpush1.msra.mxu0 0.0
  %4566 = vmatprep.subr.mxu0 0.0
  %4567 = vmatpush1.msra.mxu0 0.0
  %4568 = vmatprep.subr.mxu0 0.0
  %4569 = vmatpush1.msra.mxu0 0.0
  %4570 = vmatprep.subr.mxu0 0.0
  %4571 = vmatpush1.msra.mxu0 0.0
  %4572 = vmatprep.subr.mxu0 0.0
  %4573 = vmatpush1.msra.mxu0 0.0
  %4574 = vmatprep.subr.mxu0 0.0
  %4575 = vmatpush1.msra.mxu0 %v4542
  %4576 = vmatprep.subr.mxu0 0.0
  %4577 = vmatpush2.msra.mxu0 0.0
  %4578 = vmatprep.subr.mxu0 0.0
  %4579 = vmatpush2.msra.mxu0 0.0
  %4580 = vmatprep.subr.mxu0 0.0
  %4581 = vmatpush2.msra.mxu0 0.0
  %4582 = vmatprep.subr.mxu0 0.0
  %4583 = vmatpush2.msra.mxu0 0.0
  %4584 = vmatprep.subr.mxu0 0.0
  %4585 = vmatpush2.msra.mxu0 0.0
  %4586 = vmatprep.subr.mxu0 0.0
  %4587 = vmatpush2.msra.mxu0 0.0
  %4588 = vmatprep.subr.mxu0 0.0
  %4589 = vmatpush2.msra.mxu0 0.0
  %4590 = vmatprep.subr.mxu0 0.0
  %4591 = vmatpush2.msra.mxu0 0.0
  %4592 = vmatprep.subr.mxu0 0.0
  %4593 = vmatpush2.msra.mxu0 0.0
  %4594 = vmatprep.subr.mxu0 0.0
  %4595 = vmatpush2.msra.mxu0 0.0
  %4596 = vmatprep.subr.mxu0 0.0
  %4597 = vmatpush2.msra.mxu0 0.0
  %4598 = vmatprep.subr.mxu0 0.0
  %4599 = vmatpush2.msra.mxu0 0.0
  %4600 = vmatprep.subr.mxu0 0.0
  %4601 = vmatpush2.msra.mxu0 0.0
  %4602 = vmatprep.subr.mxu0 0.0
  %4603 = vmatpush2.msra.mxu0 0.0
  %4604 = vmatprep.subr.mxu0 0.0
  %4605 = vmatpush2.msra.mxu0 0.0
  %4606 = vmatprep.subr.mxu0 0.0
  %4607 = vmatpush2.msra.mxu0 0.0
  %4608 = vmatprep.mubr.f32.mxu0 0.0
  %4609 = vmatmul.mubr.f32.gmra.mxu0 %v2510
  %v4610 = vpop.f32.mrf.mxu0
  %v4611 = vadd.f32 0.0, %v4610
  %v4612 = vpop.f32.mrf.mxu0
  %4613 = vmatprep.mubr.f32.mxu0 0.0
  %4614 = vmatmul.mubr.f32.gmra.mxu0 %v2513
  %v4615 = vpop.f32.mrf.mxu0
  %v4616 = vadd.f32 0.0, %v4615
  %v4617 = vpop.f32.mrf.mxu0
  %4618 = vdwg.mxu0
  %4620 = vset.pattern.permute.xlu0 0
  %4621 = vperm.xlu0 %4620, %v4611
  %v4622 = vpop.permute.xlu0 %4621
  %4625 = vset.pattern.permute.xlu0 0
  %4626 = vperm.xlu0 %4625, %v4616
  %v4627 = vpop.permute.xlu0 %4626
  %v4629 = vsub.f32 %v4462, %v4622
  %v4630 = vsub.f32 %v4463, %v4627
  %v4631 = vmul.f32 %v4629, %v4629
  %v4632 = vmul.f32 %v4630, %v4630
  %v4634 = vsel %vm1163, %v4632, 0
  %4636 = vmatprep.subr.mxu0 0.0
  %4637 = vmatpush1.msra.mxu0 0.0
  %4638 = vmatprep.subr.mxu0 0.0
  %4639 = vmatpush1.msra.mxu0 0.0
  %4640 = vmatprep.subr.mxu0 0.0
  %4641 = vmatpush1.msra.mxu0 0.0
  %4642 = vmatprep.subr.mxu0 0.0
  %4643 = vmatpush1.msra.mxu0 0.0
  %4644 = vmatprep.subr.mxu0 0.0
  %4645 = vmatpush1.msra.mxu0 0.0
  %4646 = vmatprep.subr.mxu0 0.0
  %4647 = vmatpush1.msra.mxu0 0.0
  %4648 = vmatprep.subr.mxu0 0.0
  %4649 = vmatpush1.msra.mxu0 0.0
  %4650 = vmatprep.subr.mxu0 0.0
  %4651 = vmatpush1.msra.mxu0 0.0
  %4652 = vmatprep.subr.mxu0 0.0
  %4653 = vmatpush1.msra.mxu0 0.0
  %4654 = vmatprep.subr.mxu0 0.0
  %4655 = vmatpush1.msra.mxu0 0.0
  %4656 = vmatprep.subr.mxu0 0.0
  %4657 = vmatpush1.msra.mxu0 0.0
  %4658 = vmatprep.subr.mxu0 0.0
  %4659 = vmatpush1.msra.mxu0 0.0
  %4660 = vmatprep.subr.mxu0 0.0
  %4661 = vmatpush1.msra.mxu0 0.0
  %4662 = vmatprep.subr.mxu0 0.0
  %4663 = vmatpush1.msra.mxu0 0.0
  %4664 = vmatprep.subr.mxu0 0.0
  %4665 = vmatpush1.msra.mxu0 %v4634
  %4666 = vmatprep.subr.mxu0 0.0
  %4667 = vmatpush1.msra.mxu0 %v4631
  %4668 = vmatprep.subr.mxu0 0.0
  %4669 = vmatpush2.msra.mxu0 0.0
  %4670 = vmatprep.subr.mxu0 0.0
  %4671 = vmatpush2.msra.mxu0 0.0
  %4672 = vmatprep.subr.mxu0 0.0
  %4673 = vmatpush2.msra.mxu0 0.0
  %4674 = vmatprep.subr.mxu0 0.0
  %4675 = vmatpush2.msra.mxu0 0.0
  %4676 = vmatprep.subr.mxu0 0.0
  %4677 = vmatpush2.msra.mxu0 0.0
  %4678 = vmatprep.subr.mxu0 0.0
  %4679 = vmatpush2.msra.mxu0 0.0
  %4680 = vmatprep.subr.mxu0 0.0
  %4681 = vmatpush2.msra.mxu0 0.0
  %4682 = vmatprep.subr.mxu0 0.0
  %4683 = vmatpush2.msra.mxu0 0.0
  %4684 = vmatprep.subr.mxu0 0.0
  %4685 = vmatpush2.msra.mxu0 0.0
  %4686 = vmatprep.subr.mxu0 0.0
  %4687 = vmatpush2.msra.mxu0 0.0
  %4688 = vmatprep.subr.mxu0 0.0
  %4689 = vmatpush2.msra.mxu0 0.0
  %4690 = vmatprep.subr.mxu0 0.0
  %4691 = vmatpush2.msra.mxu0 0.0
  %4692 = vmatprep.subr.mxu0 0.0
  %4693 = vmatpush2.msra.mxu0 0.0
  %4694 = vmatprep.subr.mxu0 0.0
  %4695 = vmatpush2.msra.mxu0 0.0
  %4696 = vmatprep.subr.mxu0 0.0
  %4697 = vmatpush2.msra.mxu0 0.0
  %4698 = vmatprep.subr.mxu0 0.0
  %4699 = vmatpush2.msra.mxu0 0.0
  %4700 = vmatprep.mubr.f32.mxu0 0.0
  %4701 = vmatmul.mubr.f32.gmra.mxu0 %v2429
  %v4702 = vpop.f32.mrf.mxu0
  %v4703 = vadd.f32 0.0, %v4702
  %v4704 = vpop.f32.mrf.mxu0
  %4705 = vdwg.mxu0
  %v4706 = vsel %vm2504, %v4703, 0.0
  %4707 = vadd.xlane.f32.xlu0 %v4706
  %v4708 = vpop.xlane.xlu0 %4707
  %v4709 = vmul.f32 %v4708, %v243
  %v4710 = vadd.f32 %v4709, 1e-05
  %v4711 = vrsqrt.pop %v4710
  %v4713 = vsel %vm469, %v4711, 0
  %4715 = vmatprep.subr.mxu0 0.0
  %4716 = vmatpush1.msra.mxu0 0.0
  %4717 = vmatprep.subr.mxu0 0.0
  %4718 = vmatpush1.msra.mxu0 0.0
  %4719 = vmatprep.subr.mxu0 0.0
  %4720 = vmatpush1.msra.mxu0 0.0
  %4721 = vmatprep.subr.mxu0 0.0
  %4722 = vmatpush1.msra.mxu0 0.0
  %4723 = vmatprep.subr.mxu0 0.0
  %4724 = vmatpush1.msra.mxu0 0.0
  %4725 = vmatprep.subr.mxu0 0.0
  %4726 = vmatpush1.msra.mxu0 0.0
  %4727 = vmatprep.subr.mxu0 0.0
  %4728 = vmatpush1.msra.mxu0 0.0
  %4729 = vmatprep.subr.mxu0 0.0
  %4730 = vmatpush1.msra.mxu0 0.0
  %4731 = vmatprep.subr.mxu0 0.0
  %4732 = vmatpush1.msra.mxu0 0.0
  %4733 = vmatprep.subr.mxu0 0.0
  %4734 = vmatpush1.msra.mxu0 0.0
  %4735 = vmatprep.subr.mxu0 0.0
  %4736 = vmatpush1.msra.mxu0 0.0
  %4737 = vmatprep.subr.mxu0 0.0
  %4738 = vmatpush1.msra.mxu0 0.0
  %4739 = vmatprep.subr.mxu0 0.0
  %4740 = vmatpush1.msra.mxu0 0.0
  %4741 = vmatprep.subr.mxu0 0.0
  %4742 = vmatpush1.msra.mxu0 0.0
  %4743 = vmatprep.subr.mxu0 0.0
  %4744 = vmatpush1.msra.mxu0 0.0
  %4745 = vmatprep.subr.mxu0 0.0
  %4746 = vmatpush1.msra.mxu0 %v4713
  %4747 = vmatprep.subr.mxu0 0.0
  %4748 = vmatpush2.msra.mxu0 0.0
  %4749 = vmatprep.subr.mxu0 0.0
  %4750 = vmatpush2.msra.mxu0 0.0
  %4751 = vmatprep.subr.mxu0 0.0
  %4752 = vmatpush2.msra.mxu0 0.0
  %4753 = vmatprep.subr.mxu0 0.0
  %4754 = vmatpush2.msra.mxu0 0.0
  %4755 = vmatprep.subr.mxu0 0.0
  %4756 = vmatpush2.msra.mxu0 0.0
  %4757 = vmatprep.subr.mxu0 0.0
  %4758 = vmatpush2.msra.mxu0 0.0
  %4759 = vmatprep.subr.mxu0 0.0
  %4760 = vmatpush2.msra.mxu0 0.0
  %4761 = vmatprep.subr.mxu0 0.0
  %4762 = vmatpush2.msra.mxu0 0.0
  %4763 = vmatprep.subr.mxu0 0.0
  %4764 = vmatpush2.msra.mxu0 0.0
  %4765 = vmatprep.subr.mxu0 0.0
  %4766 = vmatpush2.msra.mxu0 0.0
  %4767 = vmatprep.subr.mxu0 0.0
  %4768 = vmatpush2.msra.mxu0 0.0
  %4769 = vmatprep.subr.mxu0 0.0
  %4770 = vmatpush2.msra.mxu0 0.0
  %4771 = vmatprep.subr.mxu0 0.0
  %4772 = vmatpush2.msra.mxu0 0.0
  %4773 = vmatprep.subr.mxu0 0.0
  %4774 = vmatpush2.msra.mxu0 0.0
  %4775 = vmatprep.subr.mxu0 0.0
  %4776 = vmatpush2.msra.mxu0 0.0
  %4777 = vmatprep.subr.mxu0 0.0
  %4778 = vmatpush2.msra.mxu0 0.0
  %4779 = vmatprep.mubr.f32.mxu0 0.0
  %4780 = vmatmul.mubr.f32.gmra.mxu0 %v2510
  %v4781 = vpop.f32.mrf.mxu0
  %v4782 = vadd.f32 0.0, %v4781
  %v4783 = vpop.f32.mrf.mxu0
  %4784 = vmatprep.mubr.f32.mxu0 0.0
  %4785 = vmatmul.mubr.f32.gmra.mxu0 %v2513
  %v4786 = vpop.f32.mrf.mxu0
  %v4787 = vadd.f32 0.0, %v4786
  %v4788 = vpop.f32.mrf.mxu0
  %4789 = vdwg.mxu0
  %4791 = vset.pattern.permute.xlu0 0
  %4792 = vperm.xlu0 %4791, %v4782
  %v4793 = vpop.permute.xlu0 %4792
  %4796 = vset.pattern.permute.xlu0 0
  %4797 = vperm.xlu0 %4796, %v4787
  %v4798 = vpop.permute.xlu0 %4797
  %v4800 = vmul.f32 %v4629, %v4793
  %v4801 = vmul.f32 %v4630, %v4798
  %s4802 = scalar_lea.vmem %s83, 16
  %v4803 = vld [vmem:[%s4802] sm:$0xf]
  %v4804 = vld [vmem:[%s4802 + $0x4] sm:$0xf]
  %v4805 = vld [vmem:[%s4802 + $0x8] sm:$0xf]
  %v4806 = vld [vmem:[%s4802 + $0xc] sm:$0xf]
  %v4807 = vpack.c.bf16 %v4801, %v4800
  %s4808 = scalar_lea.vmem %s85, 1
  %v4809 = vld [vmem:[%s4808] sm:$0x1]
  %v4811 = vlaneseq
  %v4812 = vshrl.u32 %v4811, 7
  %v4813 = vsub.s32 0, %v4812
  %v4814 = vrot.slane %v4809, %v4813
  %v4820 = vunpack.c.l.b16 %v4803
  %v4821 = vunpack.c.l.b16 %v4804
  %v4822 = vunpack.c.l.b16 %v4805
  %v4823 = vunpack.c.l.b16 %v4806
  %v4824 = vpack.c.b16 %v4821, %v4820
  %v4825 = vpack.c.b16 %v4823, %v4822
  %v4829 = vsel %vm335, %v4807, 0
  %4831 = vmatprep.subr.bf16.mxu0 0
  %4832 = vmatpush1.bf16.msra.mxu0 0
  %4833 = vmatprep.subr.bf16.mxu0 0
  %4834 = vmatpush1.bf16.msra.mxu0 0
  %4835 = vmatprep.subr.bf16.mxu0 0
  %4836 = vmatpush1.bf16.msra.mxu0 0
  %4837 = vmatprep.subr.bf16.mxu0 0
  %4838 = vmatpush1.bf16.msra.mxu0 0
  %4839 = vmatprep.subr.bf16.mxu0 0
  %4840 = vmatpush1.bf16.msra.mxu0 0
  %4841 = vmatprep.subr.bf16.mxu0 0
  %4842 = vmatpush1.bf16.msra.mxu0 0
  %4843 = vmatprep.subr.bf16.mxu0 0
  %4844 = vmatpush1.bf16.msra.mxu0 %v4825
  %4845 = vmatprep.subr.bf16.mxu0 0
  %4846 = vmatpush1.bf16.msra.mxu0 %v4824
  %4847 = vmatprep.subr.bf16.mxu0 0
  %4848 = vmatpush2.bf16.msra.mxu0 0
  %4849 = vmatprep.subr.bf16.mxu0 0
  %4850 = vmatpush2.bf16.msra.mxu0 0
  %4851 = vmatprep.subr.bf16.mxu0 0
  %4852 = vmatpush2.bf16.msra.mxu0 0
  %4853 = vmatprep.subr.bf16.mxu0 0
  %4854 = vmatpush2.bf16.msra.mxu0 0
  %4855 = vmatprep.subr.bf16.mxu0 0
  %4856 = vmatpush2.bf16.msra.mxu0 0
  %4857 = vmatprep.subr.bf16.mxu0 0
  %4858 = vmatpush2.bf16.msra.mxu0 0
  %4859 = vmatprep.subr.bf16.mxu0 0
  %4860 = vmatpush2.bf16.msra.mxu0 0
  %4861 = vmatprep.subr.bf16.mxu0 0
  %4862 = vmatpush2.bf16.msra.mxu0 0
  %4863 = vmatprep.mubr.bf16.mxu0 0
  %4864 = vmatmul.mubr.bf16.gmra.mxu0 %v4829
  %v4865 = vpop.f32.mrf.mxu0
  %v4866 = vadd.f32 %v4814, %v4865
  %v4867 = vpop.f32.mrf.mxu0
  %v4868 = vpop.f32.mrf.mxu0
  %v4869 = vadd.f32 %v4814, %v4868
  %v4870 = vpop.f32.mrf.mxu0
  %4871 = vdwg.mxu0
  %vm4872 = vcmp.gt.f32.partialorder %v4866, 0.0
  %vm4873 = vcmp.gt.f32.partialorder %v4869, 0.0
  %v4874 = vmul.f32 %v4866, 0.01
  %v4875 = vmul.f32 %v4869, 0.01
  %v4876 = vsel %vm4872, %v4866, %v4874
  %v4877 = vsel %vm4873, %v4869, %v4875
  %s4878 = scalar_lea.vmem %s87, 64
  %v4879 = vld [vmem:[%s4878] sm:$0xf]
  %v4880 = vld [vmem:[%s4878 + $0x4] sm:$0xf]
  %v4881 = vld [vmem:[%s4878 + $0x8] sm:$0xf]
  %v4882 = vld [vmem:[%s4878 + $0xc] sm:$0xf]
  %v4883 = vld [vmem:[%s4878 + $0x10] sm:$0xf]
  %v4884 = vld [vmem:[%s4878 + $0x14] sm:$0xf]
  %v4885 = vld [vmem:[%s4878 + $0x18] sm:$0xf]
  %v4886 = vld [vmem:[%s4878 + $0x1c] sm:$0xf]
  %v4887 = vld [vmem:[%s4878 + $0x20] sm:$0xf]
  %v4888 = vld [vmem:[%s4878 + $0x24] sm:$0xf]
  %v4889 = vld [vmem:[%s4878 + $0x28] sm:$0xf]
  %v4890 = vld [vmem:[%s4878 + $0x2c] sm:$0xf]
  %v4891 = vld [vmem:[%s4878 + $0x30] sm:$0xf]
  %v4892 = vld [vmem:[%s4878 + $0x34] sm:$0xf]
  %v4893 = vld [vmem:[%s4878 + $0x38] sm:$0xf]
  %v4894 = vld [vmem:[%s4878 + $0x3c] sm:$0xf]
  %v4895 = vpack.c.bf16 %v4877, %v4876
  %s4896 = scalar_lea.vmem %s89, 1
  %v4897 = vld [vmem:[%s4896] sm:$0x1]
  %v4899 = vlaneseq
  %v4900 = vshrl.u32 %v4899, 7
  %v4901 = vsub.s32 0, %v4900
  %v4902 = vrot.slane %v4897, %v4901
  %v4920 = vunpack.c.l.b16 %v4879
  %v4921 = vunpack.c.l.b16 %v4880
  %v4922 = vunpack.c.l.b16 %v4881
  %v4923 = vunpack.c.l.b16 %v4882
  %v4924 = vunpack.c.l.b16 %v4883
  %v4925 = vunpack.c.l.b16 %v4884
  %v4926 = vunpack.c.l.b16 %v4885
  %v4927 = vunpack.c.l.b16 %v4886
  %v4928 = vunpack.c.l.b16 %v4887
  %v4929 = vunpack.c.l.b16 %v4888
  %v4930 = vunpack.c.l.b16 %v4889
  %v4931 = vunpack.c.l.b16 %v4890
  %v4932 = vunpack.c.l.b16 %v4891
  %v4933 = vunpack.c.l.b16 %v4892
  %v4934 = vunpack.c.l.b16 %v4893
  %v4935 = vunpack.c.l.b16 %v4894
  %v4936 = vpack.c.b16 %v4921, %v4920
  %v4937 = vpack.c.b16 %v4923, %v4922
  %v4938 = vpack.c.b16 %v4925, %v4924
  %v4939 = vpack.c.b16 %v4927, %v4926
  %v4940 = vpack.c.b16 %v4929, %v4928
  %v4941 = vpack.c.b16 %v4931, %v4930
  %v4942 = vpack.c.b16 %v4933, %v4932
  %v4943 = vpack.c.b16 %v4935, %v4934
  %4952 = vmatprep.subr.bf16.mxu0 0
  %4953 = vmatpush1.bf16.msra.mxu0 %v4943
  %4954 = vmatprep.subr.bf16.mxu0 0
  %4955 = vmatpush1.bf16.msra.mxu0 %v4942
  %4956 = vmatprep.subr.bf16.mxu0 0
  %4957 = vmatpush1.bf16.msra.mxu0 %v4941
  %4958 = vmatprep.subr.bf16.mxu0 0
  %4959 = vmatpush1.bf16.msra.mxu0 %v4940
  %4960 = vmatprep.subr.bf16.mxu0 0
  %4961 = vmatpush1.bf16.msra.mxu0 %v4939
  %4962 = vmatprep.subr.bf16.mxu0 0
  %4963 = vmatpush1.bf16.msra.mxu0 %v4938
  %4964 = vmatprep.subr.bf16.mxu0 0
  %4965 = vmatpush1.bf16.msra.mxu0 %v4937
  %4966 = vmatprep.subr.bf16.mxu0 0
  %4967 = vmatpush1.bf16.msra.mxu0 %v4936
  %4968 = vmatprep.subr.bf16.mxu0 0
  %4969 = vmatpush2.bf16.msra.mxu0 0
  %4970 = vmatprep.subr.bf16.mxu0 0
  %4971 = vmatpush2.bf16.msra.mxu0 0
  %4972 = vmatprep.subr.bf16.mxu0 0
  %4973 = vmatpush2.bf16.msra.mxu0 0
  %4974 = vmatprep.subr.bf16.mxu0 0
  %4975 = vmatpush2.bf16.msra.mxu0 0
  %4976 = vmatprep.subr.bf16.mxu0 0
  %4977 = vmatpush2.bf16.msra.mxu0 0
  %4978 = vmatprep.subr.bf16.mxu0 0
  %4979 = vmatpush2.bf16.msra.mxu0 0
  %4980 = vmatprep.subr.bf16.mxu0 0
  %4981 = vmatpush2.bf16.msra.mxu0 0
  %4982 = vmatprep.subr.bf16.mxu0 0
  %4983 = vmatpush2.bf16.msra.mxu0 0
  %4984 = vmatprep.mubr.bf16.mxu0 0
  %4985 = vmatmul.mubr.bf16.gmra.mxu0 %v4895
  %v4986 = vpop.f32.mrf.mxu0
  %v4987 = vadd.f32 %v4902, %v4986
  %v4988 = vpop.f32.mrf.mxu0
  %v4989 = vpop.f32.mrf.mxu0
  %v4990 = vadd.f32 %v4902, %v4989
  %v4991 = vpop.f32.mrf.mxu0
  %4992 = vdwg.mxu0
  %v4993 = vadd.f32 %v4800, %v4987
  %v4994 = vadd.f32 %v4801, %v4990
  %v4996 = vsel %vm1163, %v4994, 0
  %4998 = vmatprep.subr.mxu0 0.0
  %4999 = vmatpush1.msra.mxu0 0.0
  %5000 = vmatprep.subr.mxu0 0.0
  %5001 = vmatpush1.msra.mxu0 0.0
  %5002 = vmatprep.subr.mxu0 0.0
  %5003 = vmatpush1.msra.mxu0 0.0
  %5004 = vmatprep.subr.mxu0 0.0
  %5005 = vmatpush1.msra.mxu0 0.0
  %5006 = vmatprep.subr.mxu0 0.0
  %5007 = vmatpush1.msra.mxu0 0.0
  %5008 = vmatprep.subr.mxu0 0.0
  %5009 = vmatpush1.msra.mxu0 0.0
  %5010 = vmatprep.subr.mxu0 0.0
  %5011 = vmatpush1.msra.mxu0 0.0
  %5012 = vmatprep.subr.mxu0 0.0
  %5013 = vmatpush1.msra.mxu0 0.0
  %5014 = vmatprep.subr.mxu0 0.0
  %5015 = vmatpush1.msra.mxu0 0.0
  %5016 = vmatprep.subr.mxu0 0.0
  %5017 = vmatpush1.msra.mxu0 0.0
  %5018 = vmatprep.subr.mxu0 0.0
  %5019 = vmatpush1.msra.mxu0 0.0
  %5020 = vmatprep.subr.mxu0 0.0
  %5021 = vmatpush1.msra.mxu0 0.0
  %5022 = vmatprep.subr.mxu0 0.0
  %5023 = vmatpush1.msra.mxu0 0.0
  %5024 = vmatprep.subr.mxu0 0.0
  %5025 = vmatpush1.msra.mxu0 0.0
  %5026 = vmatprep.subr.mxu0 0.0
  %5027 = vmatpush1.msra.mxu0 %v4996
  %5028 = vmatprep.subr.mxu0 0.0
  %5029 = vmatpush1.msra.mxu0 %v4993
  %5030 = vmatprep.subr.mxu0 0.0
  %5031 = vmatpush2.msra.mxu0 0.0
  %5032 = vmatprep.subr.mxu0 0.0
  %5033 = vmatpush2.msra.mxu0 0.0
  %5034 = vmatprep.subr.mxu0 0.0
  %5035 = vmatpush2.msra.mxu0 0.0
  %5036 = vmatprep.subr.mxu0 0.0
  %5037 = vmatpush2.msra.mxu0 0.0
  %5038 = vmatprep.subr.mxu0 0.0
  %5039 = vmatpush2.msra.mxu0 0.0
  %5040 = vmatprep.subr.mxu0 0.0
  %5041 = vmatpush2.msra.mxu0 0.0
  %5042 = vmatprep.subr.mxu0 0.0
  %5043 = vmatpush2.msra.mxu0 0.0
  %5044 = vmatprep.subr.mxu0 0.0
  %5045 = vmatpush2.msra.mxu0 0.0
  %5046 = vmatprep.subr.mxu0 0.0
  %5047 = vmatpush2.msra.mxu0 0.0
  %5048 = vmatprep.subr.mxu0 0.0
  %5049 = vmatpush2.msra.mxu0 0.0
  %5050 = vmatprep.subr.mxu0 0.0
  %5051 = vmatpush2.msra.mxu0 0.0
  %5052 = vmatprep.subr.mxu0 0.0
  %5053 = vmatpush2.msra.mxu0 0.0
  %5054 = vmatprep.subr.mxu0 0.0
  %5055 = vmatpush2.msra.mxu0 0.0
  %5056 = vmatprep.subr.mxu0 0.0
  %5057 = vmatpush2.msra.mxu0 0.0
  %5058 = vmatprep.subr.mxu0 0.0
  %5059 = vmatpush2.msra.mxu0 0.0
  %5060 = vmatprep.subr.mxu0 0.0
  %5061 = vmatpush2.msra.mxu0 0.0
  %5062 = vmatprep.mubr.f32.mxu0 0.0
  %5063 = vmatmul.mubr.f32.gmra.mxu0 %v2429
  %v5064 = vpop.f32.mrf.mxu0
  %v5065 = vadd.f32 0.0, %v5064
  %v5066 = vpop.f32.mrf.mxu0
  %5067 = vdwg.mxu0
  %v5068 = vsel %vm2504, %v5065, 0.0
  %5069 = vadd.xlane.f32.xlu0 %v5068
  %v5070 = vpop.xlane.xlu0 %5069
  %v5071 = vmul.f32 %v5070, %v243
  %v5073 = vsel %vm469, %v5071, 0
  %5075 = vmatprep.subr.mxu0 0.0
  %5076 = vmatpush1.msra.mxu0 0.0
  %5077 = vmatprep.subr.mxu0 0.0
  %5078 = vmatpush1.msra.mxu0 0.0
  %5079 = vmatprep.subr.mxu0 0.0
  %5080 = vmatpush1.msra.mxu0 0.0
  %5081 = vmatprep.subr.mxu0 0.0
  %5082 = vmatpush1.msra.mxu0 0.0
  %5083 = vmatprep.subr.mxu0 0.0
  %5084 = vmatpush1.msra.mxu0 0.0
  %5085 = vmatprep.subr.mxu0 0.0
  %5086 = vmatpush1.msra.mxu0 0.0
  %5087 = vmatprep.subr.mxu0 0.0
  %5088 = vmatpush1.msra.mxu0 0.0
  %5089 = vmatprep.subr.mxu0 0.0
  %5090 = vmatpush1.msra.mxu0 0.0
  %5091 = vmatprep.subr.mxu0 0.0
  %5092 = vmatpush1.msra.mxu0 0.0
  %5093 = vmatprep.subr.mxu0 0.0
  %5094 = vmatpush1.msra.mxu0 0.0
  %5095 = vmatprep.subr.mxu0 0.0
  %5096 = vmatpush1.msra.mxu0 0.0
  %5097 = vmatprep.subr.mxu0 0.0
  %5098 = vmatpush1.msra.mxu0 0.0
  %5099 = vmatprep.subr.mxu0 0.0
  %5100 = vmatpush1.msra.mxu0 0.0
  %5101 = vmatprep.subr.mxu0 0.0
  %5102 = vmatpush1.msra.mxu0 0.0
  %5103 = vmatprep.subr.mxu0 0.0
  %5104 = vmatpush1.msra.mxu0 0.0
  %5105 = vmatprep.subr.mxu0 0.0
  %5106 = vmatpush1.msra.mxu0 %v5073
  %5107 = vmatprep.subr.mxu0 0.0
  %5108 = vmatpush2.msra.mxu0 0.0
  %5109 = vmatprep.subr.mxu0 0.0
  %5110 = vmatpush2.msra.mxu0 0.0
  %5111 = vmatprep.subr.mxu0 0.0
  %5112 = vmatpush2.msra.mxu0 0.0
  %5113 = vmatprep.subr.mxu0 0.0
  %5114 = vmatpush2.msra.mxu0 0.0
  %5115 = vmatprep.subr.mxu0 0.0
  %5116 = vmatpush2.msra.mxu0 0.0
  %5117 = vmatprep.subr.mxu0 0.0
  %5118 = vmatpush2.msra.mxu0 0.0
  %5119 = vmatprep.subr.mxu0 0.0
  %5120 = vmatpush2.msra.mxu0 0.0
  %5121 = vmatprep.subr.mxu0 0.0
  %5122 = vmatpush2.msra.mxu0 0.0
  %5123 = vmatprep.subr.mxu0 0.0
  %5124 = vmatpush2.msra.mxu0 0.0
  %5125 = vmatprep.subr.mxu0 0.0
  %5126 = vmatpush2.msra.mxu0 0.0
  %5127 = vmatprep.subr.mxu0 0.0
  %5128 = vmatpush2.msra.mxu0 0.0
  %5129 = vmatprep.subr.mxu0 0.0
  %5130 = vmatpush2.msra.mxu0 0.0
  %5131 = vmatprep.subr.mxu0 0.0
  %5132 = vmatpush2.msra.mxu0 0.0
  %5133 = vmatprep.subr.mxu0 0.0
  %5134 = vmatpush2.msra.mxu0 0.0
  %5135 = vmatprep.subr.mxu0 0.0
  %5136 = vmatpush2.msra.mxu0 0.0
  %5137 = vmatprep.subr.mxu0 0.0
  %5138 = vmatpush2.msra.mxu0 0.0
  %5139 = vmatprep.mubr.f32.mxu0 0.0
  %5140 = vmatmul.mubr.f32.gmra.mxu0 %v2510
  %v5141 = vpop.f32.mrf.mxu0
  %v5142 = vadd.f32 0.0, %v5141
  %v5143 = vpop.f32.mrf.mxu0
  %5144 = vmatprep.mubr.f32.mxu0 0.0
  %5145 = vmatmul.mubr.f32.gmra.mxu0 %v2513
  %v5146 = vpop.f32.mrf.mxu0
  %v5147 = vadd.f32 0.0, %v5146
  %v5148 = vpop.f32.mrf.mxu0
  %5149 = vdwg.mxu0
  %5151 = vset.pattern.permute.xlu0 0
  %5152 = vperm.xlu0 %5151, %v5142
  %v5153 = vpop.permute.xlu0 %5152
  %5156 = vset.pattern.permute.xlu0 0
  %5157 = vperm.xlu0 %5156, %v5147
  %v5158 = vpop.permute.xlu0 %5157
  %v5160 = vsub.f32 %v4993, %v5153
  %v5161 = vsub.f32 %v4994, %v5158
  %v5162 = vmul.f32 %v5160, %v5160
  %v5163 = vmul.f32 %v5161, %v5161
  %v5165 = vsel %vm1163, %v5163, 0
  %5167 = vmatprep.subr.mxu0 0.0
  %5168 = vmatpush1.msra.mxu0 0.0
  %5169 = vmatprep.subr.mxu0 0.0
  %5170 = vmatpush1.msra.mxu0 0.0
  %5171 = vmatprep.subr.mxu0 0.0
  %5172 = vmatpush1.msra.mxu0 0.0
  %5173 = vmatprep.subr.mxu0 0.0
  %5174 = vmatpush1.msra.mxu0 0.0
  %5175 = vmatprep.subr.mxu0 0.0
  %5176 = vmatpush1.msra.mxu0 0.0
  %5177 = vmatprep.subr.mxu0 0.0
  %5178 = vmatpush1.msra.mxu0 0.0
  %5179 = vmatprep.subr.mxu0 0.0
  %5180 = vmatpush1.msra.mxu0 0.0
  %5181 = vmatprep.subr.mxu0 0.0
  %5182 = vmatpush1.msra.mxu0 0.0
  %5183 = vmatprep.subr.mxu0 0.0
  %5184 = vmatpush1.msra.mxu0 0.0
  %5185 = vmatprep.subr.mxu0 0.0
  %5186 = vmatpush1.msra.mxu0 0.0
  %5187 = vmatprep.subr.mxu0 0.0
  %5188 = vmatpush1.msra.mxu0 0.0
  %5189 = vmatprep.subr.mxu0 0.0
  %5190 = vmatpush1.msra.mxu0 0.0
  %5191 = vmatprep.subr.mxu0 0.0
  %5192 = vmatpush1.msra.mxu0 0.0
  %5193 = vmatprep.subr.mxu0 0.0
  %5194 = vmatpush1.msra.mxu0 0.0
  %5195 = vmatprep.subr.mxu0 0.0
  %5196 = vmatpush1.msra.mxu0 %v5165
  %5197 = vmatprep.subr.mxu0 0.0
  %5198 = vmatpush1.msra.mxu0 %v5162
  %5199 = vmatprep.subr.mxu0 0.0
  %5200 = vmatpush2.msra.mxu0 0.0
  %5201 = vmatprep.subr.mxu0 0.0
  %5202 = vmatpush2.msra.mxu0 0.0
  %5203 = vmatprep.subr.mxu0 0.0
  %5204 = vmatpush2.msra.mxu0 0.0
  %5205 = vmatprep.subr.mxu0 0.0
  %5206 = vmatpush2.msra.mxu0 0.0
  %5207 = vmatprep.subr.mxu0 0.0
  %5208 = vmatpush2.msra.mxu0 0.0
  %5209 = vmatprep.subr.mxu0 0.0
  %5210 = vmatpush2.msra.mxu0 0.0
  %5211 = vmatprep.subr.mxu0 0.0
  %5212 = vmatpush2.msra.mxu0 0.0
  %5213 = vmatprep.subr.mxu0 0.0
  %5214 = vmatpush2.msra.mxu0 0.0
  %5215 = vmatprep.subr.mxu0 0.0
  %5216 = vmatpush2.msra.mxu0 0.0
  %5217 = vmatprep.subr.mxu0 0.0
  %5218 = vmatpush2.msra.mxu0 0.0
  %5219 = vmatprep.subr.mxu0 0.0
  %5220 = vmatpush2.msra.mxu0 0.0
  %5221 = vmatprep.subr.mxu0 0.0
  %5222 = vmatpush2.msra.mxu0 0.0
  %5223 = vmatprep.subr.mxu0 0.0
  %5224 = vmatpush2.msra.mxu0 0.0
  %5225 = vmatprep.subr.mxu0 0.0
  %5226 = vmatpush2.msra.mxu0 0.0
  %5227 = vmatprep.subr.mxu0 0.0
  %5228 = vmatpush2.msra.mxu0 0.0
  %5229 = vmatprep.subr.mxu0 0.0
  %5230 = vmatpush2.msra.mxu0 0.0
  %5231 = vmatprep.mubr.f32.mxu0 0.0
  %5232 = vmatmul.mubr.f32.gmra.mxu0 %v2429
  %v5233 = vpop.f32.mrf.mxu0
  %v5234 = vadd.f32 0.0, %v5233
  %v5235 = vpop.f32.mrf.mxu0
  %5236 = vdwg.mxu0
  %v5237 = vsel %vm2504, %v5234, 0.0
  %5238 = vadd.xlane.f32.xlu0 %v5237
  %v5239 = vpop.xlane.xlu0 %5238
  %v5240 = vmul.f32 %v5239, %v243
  %v5241 = vadd.f32 %v5240, 1e-05
  %v5242 = vrsqrt.pop %v5241
  %v5244 = vsel %vm469, %v5242, 0
  %5246 = vmatprep.subr.mxu0 0.0
  %5247 = vmatpush1.msra.mxu0 0.0
  %5248 = vmatprep.subr.mxu0 0.0
  %5249 = vmatpush1.msra.mxu0 0.0
  %5250 = vmatprep.subr.mxu0 0.0
  %5251 = vmatpush1.msra.mxu0 0.0
  %5252 = vmatprep.subr.mxu0 0.0
  %5253 = vmatpush1.msra.mxu0 0.0
  %5254 = vmatprep.subr.mxu0 0.0
  %5255 = vmatpush1.msra.mxu0 0.0
  %5256 = vmatprep.subr.mxu0 0.0
  %5257 = vmatpush1.msra.mxu0 0.0
  %5258 = vmatprep.subr.mxu0 0.0
  %5259 = vmatpush1.msra.mxu0 0.0
  %5260 = vmatprep.subr.mxu0 0.0
  %5261 = vmatpush1.msra.mxu0 0.0
  %5262 = vmatprep.subr.mxu0 0.0
  %5263 = vmatpush1.msra.mxu0 0.0
  %5264 = vmatprep.subr.mxu0 0.0
  %5265 = vmatpush1.msra.mxu0 0.0
  %5266 = vmatprep.subr.mxu0 0.0
  %5267 = vmatpush1.msra.mxu0 0.0
  %5268 = vmatprep.subr.mxu0 0.0
  %5269 = vmatpush1.msra.mxu0 0.0
  %5270 = vmatprep.subr.mxu0 0.0
  %5271 = vmatpush1.msra.mxu0 0.0
  %5272 = vmatprep.subr.mxu0 0.0
  %5273 = vmatpush1.msra.mxu0 0.0
  %5274 = vmatprep.subr.mxu0 0.0
  %5275 = vmatpush1.msra.mxu0 0.0
  %5276 = vmatprep.subr.mxu0 0.0
  %5277 = vmatpush1.msra.mxu0 %v5244
  %5278 = vmatprep.subr.mxu0 0.0
  %5279 = vmatpush2.msra.mxu0 0.0
  %5280 = vmatprep.subr.mxu0 0.0
  %5281 = vmatpush2.msra.mxu0 0.0
  %5282 = vmatprep.subr.mxu0 0.0
  %5283 = vmatpush2.msra.mxu0 0.0
  %5284 = vmatprep.subr.mxu0 0.0
  %5285 = vmatpush2.msra.mxu0 0.0
  %5286 = vmatprep.subr.mxu0 0.0
  %5287 = vmatpush2.msra.mxu0 0.0
  %5288 = vmatprep.subr.mxu0 0.0
  %5289 = vmatpush2.msra.mxu0 0.0
  %5290 = vmatprep.subr.mxu0 0.0
  %5291 = vmatpush2.msra.mxu0 0.0
  %5292 = vmatprep.subr.mxu0 0.0
  %5293 = vmatpush2.msra.mxu0 0.0
  %5294 = vmatprep.subr.mxu0 0.0
  %5295 = vmatpush2.msra.mxu0 0.0
  %5296 = vmatprep.subr.mxu0 0.0
  %5297 = vmatpush2.msra.mxu0 0.0
  %5298 = vmatprep.subr.mxu0 0.0
  %5299 = vmatpush2.msra.mxu0 0.0
  %5300 = vmatprep.subr.mxu0 0.0
  %5301 = vmatpush2.msra.mxu0 0.0
  %5302 = vmatprep.subr.mxu0 0.0
  %5303 = vmatpush2.msra.mxu0 0.0
  %5304 = vmatprep.subr.mxu0 0.0
  %5305 = vmatpush2.msra.mxu0 0.0
  %5306 = vmatprep.subr.mxu0 0.0
  %5307 = vmatpush2.msra.mxu0 0.0
  %5308 = vmatprep.subr.mxu0 0.0
  %5309 = vmatpush2.msra.mxu0 0.0
  %5310 = vmatprep.mubr.f32.mxu0 0.0
  %5311 = vmatmul.mubr.f32.gmra.mxu0 %v2510
  %v5312 = vpop.f32.mrf.mxu0
  %v5313 = vadd.f32 0.0, %v5312
  %v5314 = vpop.f32.mrf.mxu0
  %5315 = vmatprep.mubr.f32.mxu0 0.0
  %5316 = vmatmul.mubr.f32.gmra.mxu0 %v2513
  %v5317 = vpop.f32.mrf.mxu0
  %v5318 = vadd.f32 0.0, %v5317
  %v5319 = vpop.f32.mrf.mxu0
  %5320 = vdwg.mxu0
  %5322 = vset.pattern.permute.xlu0 0
  %5323 = vperm.xlu0 %5322, %v5313
  %v5324 = vpop.permute.xlu0 %5323
  %5327 = vset.pattern.permute.xlu0 0
  %5328 = vperm.xlu0 %5327, %v5318
  %v5329 = vpop.permute.xlu0 %5328
  %v5331 = vmul.f32 %v5160, %v5324
  %v5332 = vmul.f32 %v5161, %v5329
  %v5334 = vsel %vm1163, %v5332, 0
  %5336 = vmatprep.subr.mxu0 0.0
  %5337 = vmatpush1.msra.mxu0 0.0
  %5338 = vmatprep.subr.mxu0 0.0
  %5339 = vmatpush1.msra.mxu0 0.0
  %5340 = vmatprep.subr.mxu0 0.0
  %5341 = vmatpush1.msra.mxu0 0.0
  %5342 = vmatprep.subr.mxu0 0.0
  %5343 = vmatpush1.msra.mxu0 0.0
  %5344 = vmatprep.subr.mxu0 0.0
  %5345 = vmatpush1.msra.mxu0 0.0
  %5346 = vmatprep.subr.mxu0 0.0
  %5347 = vmatpush1.msra.mxu0 0.0
  %5348 = vmatprep.subr.mxu0 0.0
  %5349 = vmatpush1.msra.mxu0 0.0
  %5350 = vmatprep.subr.mxu0 0.0
  %5351 = vmatpush1.msra.mxu0 0.0
  %5352 = vmatprep.subr.mxu0 0.0
  %5353 = vmatpush1.msra.mxu0 0.0
  %5354 = vmatprep.subr.mxu0 0.0
  %5355 = vmatpush1.msra.mxu0 0.0
  %5356 = vmatprep.subr.mxu0 0.0
  %5357 = vmatpush1.msra.mxu0 0.0
  %5358 = vmatprep.subr.mxu0 0.0
  %5359 = vmatpush1.msra.mxu0 0.0
  %5360 = vmatprep.subr.mxu0 0.0
  %5361 = vmatpush1.msra.mxu0 0.0
  %5362 = vmatprep.subr.mxu0 0.0
  %5363 = vmatpush1.msra.mxu0 0.0
  %5364 = vmatprep.subr.mxu0 0.0
  %5365 = vmatpush1.msra.mxu0 %v5334
  %5366 = vmatprep.subr.mxu0 0.0
  %5367 = vmatpush1.msra.mxu0 %v5331
  %5368 = vmatprep.subr.mxu0 0.0
  %5369 = vmatpush2.msra.mxu0 0.0
  %5370 = vmatprep.subr.mxu0 0.0
  %5371 = vmatpush2.msra.mxu0 0.0
  %5372 = vmatprep.subr.mxu0 0.0
  %5373 = vmatpush2.msra.mxu0 0.0
  %5374 = vmatprep.subr.mxu0 0.0
  %5375 = vmatpush2.msra.mxu0 0.0
  %5376 = vmatprep.subr.mxu0 0.0
  %5377 = vmatpush2.msra.mxu0 0.0
  %5378 = vmatprep.subr.mxu0 0.0
  %5379 = vmatpush2.msra.mxu0 0.0
  %5380 = vmatprep.subr.mxu0 0.0
  %5381 = vmatpush2.msra.mxu0 0.0
  %5382 = vmatprep.subr.mxu0 0.0
  %5383 = vmatpush2.msra.mxu0 0.0
  %5384 = vmatprep.subr.mxu0 0.0
  %5385 = vmatpush2.msra.mxu0 0.0
  %5386 = vmatprep.subr.mxu0 0.0
  %5387 = vmatpush2.msra.mxu0 0.0
  %5388 = vmatprep.subr.mxu0 0.0
  %5389 = vmatpush2.msra.mxu0 0.0
  %5390 = vmatprep.subr.mxu0 0.0
  %5391 = vmatpush2.msra.mxu0 0.0
  %5392 = vmatprep.subr.mxu0 0.0
  %5393 = vmatpush2.msra.mxu0 0.0
  %5394 = vmatprep.subr.mxu0 0.0
  %5395 = vmatpush2.msra.mxu0 0.0
  %5396 = vmatprep.subr.mxu0 0.0
  %5397 = vmatpush2.msra.mxu0 0.0
  %5398 = vmatprep.subr.mxu0 0.0
  %5399 = vmatpush2.msra.mxu0 0.0
  %5400 = vmatprep.mubr.f32.mxu0 0.0
  %5401 = vmatmul.mubr.f32.gmra.mxu0 %v1149
  %v5402 = vpop.f32.mrf.mxu0
  %v5403 = vadd.f32 %v1124, %v5402
  %v5404 = vpop.f32.mrf.mxu0
  %5405 = vmatprep.mubr.f32.mxu0 0.0
  %5406 = vmatmul.mubr.f32.gmra.mxu0 %v1152
  %v5407 = vpop.f32.mrf.mxu0
  %v5408 = vadd.f32 %v1129, %v5407
  %v5409 = vpop.f32.mrf.mxu0
  %5410 = vmatprep.mubr.f32.mxu0 0.0
  %5411 = vmatmul.mubr.f32.gmra.mxu0 %v1155
  %v5412 = vpop.f32.mrf.mxu0
  %v5413 = vadd.f32 %v1134, %v5412
  %v5414 = vpop.f32.mrf.mxu0
  %5415 = vmatprep.mubr.f32.mxu0 0.0
  %5416 = vmatmul.mubr.f32.gmra.mxu0 %v1158
  %v5417 = vpop.f32.mrf.mxu0
  %v5418 = vadd.f32 %v1139, %v5417
  %v5419 = vpop.f32.mrf.mxu0
  %5420 = vmatprep.mubr.f32.mxu0 0.0
  %5421 = vmatmul.mubr.f32.gmra.mxu0 %v1161
  %v5422 = vpop.f32.mrf.mxu0
  %v5423 = vadd.f32 %v1144, %v5422
  %v5424 = vpop.f32.mrf.mxu0
  %5425 = vdwg.mxu0
  %v5426 = vmax.f32 %v5403, 0.0
  %v5427 = vmax.f32 %v5408, 0.0
  %v5428 = vmax.f32 %v5413, 0.0
  %v5429 = vmax.f32 %v5418, 0.0
  %v5430 = vmax.f32 %v5423, 0.0
  %v5431 = vadd.f32 %v5426, 1e-07
  %v5432 = vadd.f32 %v5427, 1e-07
  %v5433 = vadd.f32 %v5428, 1e-07
  %v5434 = vadd.f32 %v5429, 1e-07
  %v5435 = vadd.f32 %v5430, 1e-07
  %v5437 = vsel %vm1163, %v5435, 0
  %5439 = vmatprep.subr.mxu0 0.0
  %5440 = vmatpush1.msra.mxu0 0.0
  %5441 = vmatprep.subr.mxu0 0.0
  %5442 = vmatpush1.msra.mxu0 0.0
  %5443 = vmatprep.subr.mxu0 0.0
  %5444 = vmatpush1.msra.mxu0 0.0
  %5445 = vmatprep.subr.mxu0 0.0
  %5446 = vmatpush1.msra.mxu0 0.0
  %5447 = vmatprep.subr.mxu0 0.0
  %5448 = vmatpush1.msra.mxu0 0.0
  %5449 = vmatprep.subr.mxu0 0.0
  %5450 = vmatpush1.msra.mxu0 0.0
  %5451 = vmatprep.subr.mxu0 0.0
  %5452 = vmatpush1.msra.mxu0 0.0
  %5453 = vmatprep.subr.mxu0 0.0
  %5454 = vmatpush1.msra.mxu0 0.0
  %5455 = vmatprep.subr.mxu0 0.0
  %5456 = vmatpush1.msra.mxu0 0.0
  %5457 = vmatprep.subr.mxu0 0.0
  %5458 = vmatpush1.msra.mxu0 0.0
  %5459 = vmatprep.subr.mxu0 0.0
  %5460 = vmatpush1.msra.mxu0 0.0
  %5461 = vmatprep.subr.mxu0 0.0
  %5462 = vmatpush1.msra.mxu0 %v5437
  %5463 = vmatprep.subr.mxu0 0.0
  %5464 = vmatpush1.msra.mxu0 %v5434
  %5465 = vmatprep.subr.mxu0 0.0
  %5466 = vmatpush1.msra.mxu0 %v5433
  %5467 = vmatprep.subr.mxu0 0.0
  %5468 = vmatpush1.msra.mxu0 %v5432
  %5469 = vmatprep.subr.mxu0 0.0
  %5470 = vmatpush1.msra.mxu0 %v5431
  %5471 = vmatprep.subr.mxu0 0.0
  %5472 = vmatpush2.msra.mxu0 0.0
  %5473 = vmatprep.subr.mxu0 0.0
  %5474 = vmatpush2.msra.mxu0 0.0
  %5475 = vmatprep.subr.mxu0 0.0
  %5476 = vmatpush2.msra.mxu0 0.0
  %5477 = vmatprep.subr.mxu0 0.0
  %5478 = vmatpush2.msra.mxu0 0.0
  %5479 = vmatprep.subr.mxu0 0.0
  %5480 = vmatpush2.msra.mxu0 0.0
  %5481 = vmatprep.subr.mxu0 0.0
  %5482 = vmatpush2.msra.mxu0 0.0
  %5483 = vmatprep.subr.mxu0 0.0
  %5484 = vmatpush2.msra.mxu0 0.0
  %5485 = vmatprep.subr.mxu0 0.0
  %5486 = vmatpush2.msra.mxu0 0.0
  %5487 = vmatprep.subr.mxu0 0.0
  %5488 = vmatpush2.msra.mxu0 0.0
  %5489 = vmatprep.subr.mxu0 0.0
  %5490 = vmatpush2.msra.mxu0 0.0
  %5491 = vmatprep.subr.mxu0 0.0
  %5492 = vmatpush2.msra.mxu0 0.0
  %5493 = vmatprep.subr.mxu0 0.0
  %5494 = vmatpush2.msra.mxu0 0.0
  %5495 = vmatprep.subr.mxu0 0.0
  %5496 = vmatpush2.msra.mxu0 0.0
  %5497 = vmatprep.subr.mxu0 0.0
  %5498 = vmatpush2.msra.mxu0 0.0
  %5499 = vmatprep.subr.mxu0 0.0
  %5500 = vmatpush2.msra.mxu0 0.0
  %5501 = vmatprep.subr.mxu0 0.0
  %5502 = vmatpush2.msra.mxu0 0.0
  %5503 = vmatprep.mubr.f32.mxu0 0.0
  %5504 = vmatmul.mubr.f32.gmra.mxu0 %v1301
  %v5505 = vpop.f32.mrf.mxu0
  %v5506 = vadd.f32 0.0, %v5505
  %v5507 = vpop.f32.mrf.mxu0
  %5508 = vmatprep.mubr.f32.mxu0 0.0
  %5509 = vmatmul.mubr.f32.gmra.mxu0 %v1304
  %v5510 = vpop.f32.mrf.mxu0
  %v5511 = vadd.f32 0.0, %v5510
  %v5512 = vpop.f32.mrf.mxu0
  %5513 = vdwg.mxu0
  %s5514 = scalar_lea.vmem %s71, 64
  %v5515 = vld [vmem:[%s5514] sm:$0xff]
  %v5516 = vld [vmem:[%s5514 + $0x8] sm:$0xff]
  %v5517 = vld [vmem:[%s5514 + $0x10] sm:$0xff]
  %v5518 = vld [vmem:[%s5514 + $0x18] sm:$0xff]
  %v5519 = vpack.c.bf16 %v5332, %v5331
  %v5520 = vadd.f32 %v5331, %v5506
  %v5521 = vadd.f32 %v5332, %v5511
  %s5522 = scalar_lea.vmem %s73, 64
  %v5523 = vld [vmem:[%s5522] sm:$0xff]
  %v5524 = vld [vmem:[%s5522 + $0x8] sm:$0xff]
  %v5525 = vld [vmem:[%s5522 + $0x10] sm:$0xff]
  %v5526 = vld [vmem:[%s5522 + $0x18] sm:$0xff]
  %v5527 = vpack.c.bf16 %v5521, %v5520
  %v5532 = vunpack.c.l.b16 %v5523
  %v5533 = vunpack.c.h.b16 %v5523
  %v5534 = vunpack.c.l.b16 %v5524
  %v5535 = vunpack.c.h.b16 %v5524
  %v5536 = vunpack.c.l.b16 %v5525
  %v5537 = vunpack.c.h.b16 %v5525
  %v5538 = vunpack.c.l.b16 %v5526
  %v5539 = vunpack.c.h.b16 %v5526
  %v5540 = vpack.c.b16 %v5534, %v5532
  %v5541 = vpack.c.b16 %v5535, %v5533
  %v5542 = vpack.c.b16 %v5538, %v5536
  %v5543 = vpack.c.b16 %v5539, %v5537
  %v5549 = vsel %vm335, %v5527, 0
  %5551 = vmatprep.subr.bf16.mxu0 0
  %5552 = vmatpush1.bf16.msra.mxu0 0
  %5553 = vmatprep.subr.bf16.mxu0 0
  %5554 = vmatpush1.bf16.msra.mxu0 0
  %5555 = vmatprep.subr.bf16.mxu0 0
  %5556 = vmatpush1.bf16.msra.mxu0 0
  %5557 = vmatprep.subr.bf16.mxu0 0
  %5558 = vmatpush1.bf16.msra.mxu0 0
  %5559 = vmatprep.subr.bf16.mxu0 0
  %5560 = vmatpush1.bf16.msra.mxu0 0
  %5561 = vmatprep.subr.bf16.mxu0 0
  %5562 = vmatpush1.bf16.msra.mxu0 0
  %5563 = vmatprep.subr.bf16.mxu0 %v5543
  %5564 = vmatpush1.bf16.msra.mxu0 %v5542
  %5565 = vmatprep.subr.bf16.mxu0 %v5541
  %5566 = vmatpush1.bf16.msra.mxu0 %v5540
  %5567 = vmatprep.subr.bf16.mxu0 0
  %5568 = vmatpush2.bf16.msra.mxu0 0
  %5569 = vmatprep.subr.bf16.mxu0 0
  %5570 = vmatpush2.bf16.msra.mxu0 0
  %5571 = vmatprep.subr.bf16.mxu0 0
  %5572 = vmatpush2.bf16.msra.mxu0 0
  %5573 = vmatprep.subr.bf16.mxu0 0
  %5574 = vmatpush2.bf16.msra.mxu0 0
  %5575 = vmatprep.subr.bf16.mxu0 0
  %5576 = vmatpush2.bf16.msra.mxu0 0
  %5577 = vmatprep.subr.bf16.mxu0 0
  %5578 = vmatpush2.bf16.msra.mxu0 0
  %5579 = vmatprep.subr.bf16.mxu0 0
  %5580 = vmatpush2.bf16.msra.mxu0 0
  %5581 = vmatprep.subr.bf16.mxu0 0
  %5582 = vmatpush2.bf16.msra.mxu0 0
  %5583 = vmatprep.mubr.bf16.mxu0 0
  %5584 = vmatmul.mubr.bf16.gmra.mxu0 %v5549
  %v5585 = vpop.f32.mrf.mxu0
  %v5586 = vadd.f32 0.0, %v5585
  %v5587 = vpop.f32.mrf.mxu0
  %v5588 = vadd.f32 0.0, %v5587
  %v5589 = vpop.f32.mrf.mxu0
  %v5590 = vadd.f32 0.0, %v5589
  %v5591 = vpop.f32.mrf.mxu0
  %v5592 = vadd.f32 0.0, %v5591
  %5593 = vdwg.mxu0
  %v5598 = vunpack.c.l.b16 %v5515
  %v5599 = vunpack.c.h.b16 %v5515
  %v5600 = vunpack.c.l.b16 %v5516
  %v5601 = vunpack.c.h.b16 %v5516
  %v5602 = vunpack.c.l.b16 %v5517
  %v5603 = vunpack.c.h.b16 %v5517
  %v5604 = vunpack.c.l.b16 %v5518
  %v5605 = vunpack.c.h.b16 %v5518
  %v5606 = vpack.c.b16 %v5600, %v5598
  %v5607 = vpack.c.b16 %v5601, %v5599
  %v5608 = vpack.c.b16 %v5604, %v5602
  %v5609 = vpack.c.b16 %v5605, %v5603
  %v5615 = vsel %vm335, %v5519, 0
  %5617 = vmatprep.subr.bf16.mxu0 0
  %5618 = vmatpush1.bf16.msra.mxu0 0
  %5619 = vmatprep.subr.bf16.mxu0 0
  %5620 = vmatpush1.bf16.msra.mxu0 0
  %5621 = vmatprep.subr.bf16.mxu0 0
  %5622 = vmatpush1.bf16.msra.mxu0 0
  %5623 = vmatprep.subr.bf16.mxu0 0
  %5624 = vmatpush1.bf16.msra.mxu0 0
  %5625 = vmatprep.subr.bf16.mxu0 0
  %5626 = vmatpush1.bf16.msra.mxu0 0
  %5627 = vmatprep.subr.bf16.mxu0 0
  %5628 = vmatpush1.bf16.msra.mxu0 0
  %5629 = vmatprep.subr.bf16.mxu0 %v5609
  %5630 = vmatpush1.bf16.msra.mxu0 %v5608
  %5631 = vmatprep.subr.bf16.mxu0 %v5607
  %5632 = vmatpush1.bf16.msra.mxu0 %v5606
  %5633 = vmatprep.subr.bf16.mxu0 0
  %5634 = vmatpush2.bf16.msra.mxu0 0
  %5635 = vmatprep.subr.bf16.mxu0 0
  %5636 = vmatpush2.bf16.msra.mxu0 0
  %5637 = vmatprep.subr.bf16.mxu0 0
  %5638 = vmatpush2.bf16.msra.mxu0 0
  %5639 = vmatprep.subr.bf16.mxu0 0
  %5640 = vmatpush2.bf16.msra.mxu0 0
  %5641 = vmatprep.subr.bf16.mxu0 0
  %5642 = vmatpush2.bf16.msra.mxu0 0
  %5643 = vmatprep.subr.bf16.mxu0 0
  %5644 = vmatpush2.bf16.msra.mxu0 0
  %5645 = vmatprep.subr.bf16.mxu0 0
  %5646 = vmatpush2.bf16.msra.mxu0 0
  %5647 = vmatprep.subr.bf16.mxu0 0
  %5648 = vmatpush2.bf16.msra.mxu0 0
  %5649 = vmatprep.mubr.bf16.mxu0 0
  %5650 = vmatmul.mubr.bf16.gmra.mxu0 %v5615
  %v5651 = vpop.f32.mrf.mxu0
  %v5652 = vadd.f32 %v5586, %v5651
  %v5653 = vpop.f32.mrf.mxu0
  %v5654 = vadd.f32 %v5588, %v5653
  %v5655 = vpop.f32.mrf.mxu0
  %v5656 = vadd.f32 %v5590, %v5655
  %v5657 = vpop.f32.mrf.mxu0
  %v5658 = vadd.f32 %v5592, %v5657
  %5659 = vdwg.mxu0
  %s5660 = scalar_lea.vmem %s75, 4
  %v5661 = vld [vmem:[%s5660] sm:$0x3]
  %v5663 = vlaneseq
  %v5664 = vshrl.u32 %v5663, 7
  %v5665 = vsub.s32 0, %v5664
  %v5666 = vrot.slane %v5661, %v5665
  %v5667 = vlaneseq
  %v5668 = vshrl.u32 %v5667, 7
  %v5669 = vsub.s32 1, %v5668
  %v5670 = vrot.slane %v5661, %v5669
  %v5673 = vadd.f32 %v5652, %v5666
  %v5674 = vadd.f32 %v5654, %v5670
  %v5675 = vadd.f32 %v5656, %v5666
  %v5676 = vadd.f32 %v5658, %v5670
  %s5677 = scalar_lea.vmem %s77, 32
  %v5678 = vld [vmem:[%s5677] sm:$0xf]
  %v5679 = vld [vmem:[%s5677 + $0x4] sm:$0xf]
  %v5680 = vld [vmem:[%s5677 + $0x8] sm:$0xf]
  %v5681 = vld [vmem:[%s5677 + $0xc] sm:$0xf]
  %v5686 = vunpack.c.l.b16 %v5678
  %v5687 = vunpack.c.l.b16 %v5679
  %v5688 = vunpack.c.l.b16 %v5680
  %v5689 = vunpack.c.l.b16 %v5681
  %v5690 = vpack.c.b16 %v5687, %v5686
  %v5691 = vpack.c.b16 %v5689, %v5688
  %5694 = vmatprep.subr.bf16.mxu0 0
  %5695 = vmatpush1.bf16.msra.mxu0 0
  %5696 = vmatprep.subr.bf16.mxu0 0
  %5697 = vmatpush1.bf16.msra.mxu0 0
  %5698 = vmatprep.subr.bf16.mxu0 0
  %5699 = vmatpush1.bf16.msra.mxu0 0
  %5700 = vmatprep.subr.bf16.mxu0 0
  %5701 = vmatpush1.bf16.msra.mxu0 0
  %5702 = vmatprep.subr.bf16.mxu0 0
  %5703 = vmatpush1.bf16.msra.mxu0 0
  %5704 = vmatprep.subr.bf16.mxu0 0
  %5705 = vmatpush1.bf16.msra.mxu0 0
  %5706 = vmatprep.subr.bf16.mxu0 0
  %5707 = vmatpush1.bf16.msra.mxu0 %v5691
  %5708 = vmatprep.subr.bf16.mxu0 0
  %5709 = vmatpush1.bf16.msra.mxu0 %v5690
  %5710 = vmatprep.subr.bf16.mxu0 0
  %5711 = vmatpush2.bf16.msra.mxu0 0
  %5712 = vmatprep.subr.bf16.mxu0 0
  %5713 = vmatpush2.bf16.msra.mxu0 0
  %5714 = vmatprep.subr.bf16.mxu0 0
  %5715 = vmatpush2.bf16.msra.mxu0 0
  %5716 = vmatprep.subr.bf16.mxu0 0
  %5717 = vmatpush2.bf16.msra.mxu0 0
  %5718 = vmatprep.subr.bf16.mxu0 0
  %5719 = vmatpush2.bf16.msra.mxu0 0
  %5720 = vmatprep.subr.bf16.mxu0 0
  %5721 = vmatpush2.bf16.msra.mxu0 0
  %5722 = vmatprep.subr.bf16.mxu0 0
  %5723 = vmatpush2.bf16.msra.mxu0 0
  %5724 = vmatprep.subr.bf16.mxu0 0
  %5725 = vmatpush2.bf16.msra.mxu0 0
  %5726 = vmatprep.mubr.bf16.mxu0 0
  %5727 = vmatmul.mubr.bf16.gmra.mxu0 %v1564
  %v5728 = vpop.f32.mrf.mxu0
  %v5729 = vadd.f32 0.0, %v5728
  %v5730 = vpop.f32.mrf.mxu0
  %v5731 = vpop.f32.mrf.mxu0
  %v5732 = vadd.f32 0.0, %v5731
  %v5733 = vpop.f32.mrf.mxu0
  %5734 = vmatprep.mubr.bf16.mxu0 0
  %5735 = vmatmul.mubr.bf16.gmra.mxu0 %v1567
  %v5736 = vpop.f32.mrf.mxu0
  %v5737 = vadd.f32 0.0, %v5736
  %v5738 = vpop.f32.mrf.mxu0
  %v5739 = vpop.f32.mrf.mxu0
  %v5740 = vadd.f32 0.0, %v5739
  %v5741 = vpop.f32.mrf.mxu0
  %5742 = vmatprep.mubr.bf16.mxu0 0
  %5743 = vmatmul.mubr.bf16.gmra.mxu0 %v1570
  %v5744 = vpop.f32.mrf.mxu0
  %v5745 = vadd.f32 0.0, %v5744
  %v5746 = vpop.f32.mrf.mxu0
  %v5747 = vpop.f32.mrf.mxu0
  %v5748 = vpop.f32.mrf.mxu0
  %5749 = vdwg.mxu0
  %v5751 = vsel %vm1163, %v5675, 0
  %5753 = vmatprep.subr.mxu0 0.0
  %5754 = vmatpush1.msra.mxu0 0.0
  %5755 = vmatprep.subr.mxu0 0.0
  %5756 = vmatpush1.msra.mxu0 0.0
  %5757 = vmatprep.subr.mxu0 0.0
  %5758 = vmatpush1.msra.mxu0 0.0
  %5759 = vmatprep.subr.mxu0 0.0
  %5760 = vmatpush1.msra.mxu0 0.0
  %5761 = vmatprep.subr.mxu0 0.0
  %5762 = vmatpush1.msra.mxu0 0.0
  %5763 = vmatprep.subr.mxu0 0.0
  %5764 = vmatpush1.msra.mxu0 0.0
  %5765 = vmatprep.subr.mxu0 0.0
  %5766 = vmatpush1.msra.mxu0 0.0
  %5767 = vmatprep.subr.mxu0 0.0
  %5768 = vmatpush1.msra.mxu0 0.0
  %5769 = vmatprep.subr.mxu0 0.0
  %5770 = vmatpush1.msra.mxu0 0.0
  %5771 = vmatprep.subr.mxu0 0.0
  %5772 = vmatpush1.msra.mxu0 0.0
  %5773 = vmatprep.subr.mxu0 0.0
  %5774 = vmatpush1.msra.mxu0 0.0
  %5775 = vmatprep.subr.mxu0 0.0
  %5776 = vmatpush1.msra.mxu0 0.0
  %5777 = vmatprep.subr.mxu0 0.0
  %5778 = vmatpush1.msra.mxu0 0.0
  %5779 = vmatprep.subr.mxu0 0.0
  %5780 = vmatpush1.msra.mxu0 0.0
  %5781 = vmatprep.subr.mxu0 0.0
  %5782 = vmatpush1.msra.mxu0 %v5751
  %5783 = vmatprep.subr.mxu0 0.0
  %5784 = vmatpush1.msra.mxu0 %v5673
  %5785 = vmatprep.subr.mxu0 0.0
  %5786 = vmatpush2.msra.mxu0 0.0
  %5787 = vmatprep.subr.mxu0 0.0
  %5788 = vmatpush2.msra.mxu0 0.0
  %5789 = vmatprep.subr.mxu0 0.0
  %5790 = vmatpush2.msra.mxu0 0.0
  %5791 = vmatprep.subr.mxu0 0.0
  %5792 = vmatpush2.msra.mxu0 0.0
  %5793 = vmatprep.subr.mxu0 0.0
  %5794 = vmatpush2.msra.mxu0 0.0
  %5795 = vmatprep.subr.mxu0 0.0
  %5796 = vmatpush2.msra.mxu0 0.0
  %5797 = vmatprep.subr.mxu0 0.0
  %5798 = vmatpush2.msra.mxu0 0.0
  %5799 = vmatprep.subr.mxu0 0.0
  %5800 = vmatpush2.msra.mxu0 0.0
  %5801 = vmatprep.subr.mxu0 0.0
  %5802 = vmatpush2.msra.mxu0 0.0
  %5803 = vmatprep.subr.mxu0 0.0
  %5804 = vmatpush2.msra.mxu0 0.0
  %5805 = vmatprep.subr.mxu0 0.0
  %5806 = vmatpush2.msra.mxu0 0.0
  %5807 = vmatprep.subr.mxu0 0.0
  %5808 = vmatpush2.msra.mxu0 0.0
  %5809 = vmatprep.subr.mxu0 0.0
  %5810 = vmatpush2.msra.mxu0 0.0
  %5811 = vmatprep.subr.mxu0 0.0
  %5812 = vmatpush2.msra.mxu0 0.0
  %5813 = vmatprep.subr.mxu0 0.0
  %5814 = vmatpush2.msra.mxu0 0.0
  %5815 = vmatprep.subr.mxu0 0.0
  %5816 = vmatpush2.msra.mxu0 0.0
  %5817 = vmatprep.mubr.f32.mxu0 0.0
  %5818 = vmatmul.mubr.f32.gmra.mxu0 %v1629
  %v5819 = vpop.f32.mrf.mxu0
  %v5820 = vadd.f32 0.0, %v5819
  %v5821 = vpop.f32.mrf.mxu0
  %5822 = vmatprep.mubr.f32.mxu0 0.0
  %5823 = vmatmul.mubr.f32.gmra.mxu0 %v1632
  %v5824 = vpop.f32.mrf.mxu0
  %v5825 = vadd.f32 0.0, %v5824
  %v5826 = vpop.f32.mrf.mxu0
  %5827 = vmatprep.mubr.f32.mxu0 0.0
  %5828 = vmatmul.mubr.f32.gmra.mxu0 %v1635
  %v5829 = vpop.f32.mrf.mxu0
  %v5830 = vadd.f32 0.0, %v5829
  %v5831 = vpop.f32.mrf.mxu0
  %5832 = vmatprep.mubr.f32.mxu0 0.0
  %5833 = vmatmul.mubr.f32.gmra.mxu0 %v1638
  %v5834 = vpop.f32.mrf.mxu0
  %v5835 = vadd.f32 0.0, %v5834
  %v5836 = vpop.f32.mrf.mxu0
  %5837 = vmatprep.mubr.f32.mxu0 0.0
  %5838 = vmatmul.mubr.f32.gmra.mxu0 %v1641
  %v5839 = vpop.f32.mrf.mxu0
  %v5840 = vadd.f32 0.0, %v5839
  %v5841 = vpop.f32.mrf.mxu0
  %5842 = vdwg.mxu0
  %5844 = vrot.lane.b32.xlu0 %v5673, 64
  %v5845 = vpop.permute.xlu0 %5844
  %5846 = vrot.lane.b32.xlu0 %v5675, 64
  %v5847 = vpop.permute.xlu0 %5846
  %v5849 = vsel %vm1163, %v5847, 0
  %5851 = vmatprep.subr.mxu0 0.0
  %5852 = vmatpush1.msra.mxu0 0.0
  %5853 = vmatprep.subr.mxu0 0.0
  %5854 = vmatpush1.msra.mxu0 0.0
  %5855 = vmatprep.subr.mxu0 0.0
  %5856 = vmatpush1.msra.mxu0 0.0
  %5857 = vmatprep.subr.mxu0 0.0
  %5858 = vmatpush1.msra.mxu0 0.0
  %5859 = vmatprep.subr.mxu0 0.0
  %5860 = vmatpush1.msra.mxu0 0.0
  %5861 = vmatprep.subr.mxu0 0.0
  %5862 = vmatpush1.msra.mxu0 0.0
  %5863 = vmatprep.subr.mxu0 0.0
  %5864 = vmatpush1.msra.mxu0 0.0
  %5865 = vmatprep.subr.mxu0 0.0
  %5866 = vmatpush1.msra.mxu0 0.0
  %5867 = vmatprep.subr.mxu0 0.0
  %5868 = vmatpush1.msra.mxu0 0.0
  %5869 = vmatprep.subr.mxu0 0.0
  %5870 = vmatpush1.msra.mxu0 0.0
  %5871 = vmatprep.subr.mxu0 0.0
  %5872 = vmatpush1.msra.mxu0 0.0
  %5873 = vmatprep.subr.mxu0 0.0
  %5874 = vmatpush1.msra.mxu0 0.0
  %5875 = vmatprep.subr.mxu0 0.0
  %5876 = vmatpush1.msra.mxu0 0.0
  %5877 = vmatprep.subr.mxu0 0.0
  %5878 = vmatpush1.msra.mxu0 0.0
  %5879 = vmatprep.subr.mxu0 0.0
  %5880 = vmatpush1.msra.mxu0 %v5849
  %5881 = vmatprep.subr.mxu0 0.0
  %5882 = vmatpush1.msra.mxu0 %v5845
  %5883 = vmatprep.subr.mxu0 0.0
  %5884 = vmatpush2.msra.mxu0 0.0
  %5885 = vmatprep.subr.mxu0 0.0
  %5886 = vmatpush2.msra.mxu0 0.0
  %5887 = vmatprep.subr.mxu0 0.0
  %5888 = vmatpush2.msra.mxu0 0.0
  %5889 = vmatprep.subr.mxu0 0.0
  %5890 = vmatpush2.msra.mxu0 0.0
  %5891 = vmatprep.subr.mxu0 0.0
  %5892 = vmatpush2.msra.mxu0 0.0
  %5893 = vmatprep.subr.mxu0 0.0
  %5894 = vmatpush2.msra.mxu0 0.0
  %5895 = vmatprep.subr.mxu0 0.0
  %5896 = vmatpush2.msra.mxu0 0.0
  %5897 = vmatprep.subr.mxu0 0.0
  %5898 = vmatpush2.msra.mxu0 0.0
  %5899 = vmatprep.subr.mxu0 0.0
  %5900 = vmatpush2.msra.mxu0 0.0
  %5901 = vmatprep.subr.mxu0 0.0
  %5902 = vmatpush2.msra.mxu0 0.0
  %5903 = vmatprep.subr.mxu0 0.0
  %5904 = vmatpush2.msra.mxu0 0.0
  %5905 = vmatprep.subr.mxu0 0.0
  %5906 = vmatpush2.msra.mxu0 0.0
  %5907 = vmatprep.subr.mxu0 0.0
  %5908 = vmatpush2.msra.mxu0 0.0
  %5909 = vmatprep.subr.mxu0 0.0
  %5910 = vmatpush2.msra.mxu0 0.0
  %5911 = vmatprep.subr.mxu0 0.0
  %5912 = vmatpush2.msra.mxu0 0.0
  %5913 = vmatprep.subr.mxu0 0.0
  %5914 = vmatpush2.msra.mxu0 0.0
  %5915 = vmatprep.mubr.f32.mxu0 0.0
  %5916 = vmatmul.mubr.f32.gmra.mxu0 %v1149
  %v5917 = vpop.f32.mrf.mxu0
  %v5918 = vadd.f32 %v5729, %v5917
  %v5919 = vpop.f32.mrf.mxu0
  %5920 = vmatprep.mubr.f32.mxu0 0.0
  %5921 = vmatmul.mubr.f32.gmra.mxu0 %v1152
  %v5922 = vpop.f32.mrf.mxu0
  %v5923 = vadd.f32 %v5732, %v5922
  %v5924 = vpop.f32.mrf.mxu0
  %5925 = vmatprep.mubr.f32.mxu0 0.0
  %5926 = vmatmul.mubr.f32.gmra.mxu0 %v1155
  %v5927 = vpop.f32.mrf.mxu0
  %v5928 = vadd.f32 %v5737, %v5927
  %v5929 = vpop.f32.mrf.mxu0
  %5930 = vmatprep.mubr.f32.mxu0 0.0
  %5931 = vmatmul.mubr.f32.gmra.mxu0 %v1158
  %v5932 = vpop.f32.mrf.mxu0
  %v5933 = vadd.f32 %v5740, %v5932
  %v5934 = vpop.f32.mrf.mxu0
  %5935 = vmatprep.mubr.f32.mxu0 0.0
  %5936 = vmatmul.mubr.f32.gmra.mxu0 %v1161
  %v5937 = vpop.f32.mrf.mxu0
  %v5938 = vadd.f32 %v5745, %v5937
  %v5939 = vpop.f32.mrf.mxu0
  %5940 = vdwg.mxu0
  %v5942 = vsel %vm1163, %v5676, 0
  %5944 = vmatprep.subr.mxu0 0.0
  %5945 = vmatpush1.msra.mxu0 0.0
  %5946 = vmatprep.subr.mxu0 0.0
  %5947 = vmatpush1.msra.mxu0 0.0
  %5948 = vmatprep.subr.mxu0 0.0
  %5949 = vmatpush1.msra.mxu0 0.0
  %5950 = vmatprep.subr.mxu0 0.0
  %5951 = vmatpush1.msra.mxu0 0.0
  %5952 = vmatprep.subr.mxu0 0.0
  %5953 = vmatpush1.msra.mxu0 0.0
  %5954 = vmatprep.subr.mxu0 0.0
  %5955 = vmatpush1.msra.mxu0 0.0
  %5956 = vmatprep.subr.mxu0 0.0
  %5957 = vmatpush1.msra.mxu0 0.0
  %5958 = vmatprep.subr.mxu0 0.0
  %5959 = vmatpush1.msra.mxu0 0.0
  %5960 = vmatprep.subr.mxu0 0.0
  %5961 = vmatpush1.msra.mxu0 0.0
  %5962 = vmatprep.subr.mxu0 0.0
  %5963 = vmatpush1.msra.mxu0 0.0
  %5964 = vmatprep.subr.mxu0 0.0
  %5965 = vmatpush1.msra.mxu0 0.0
  %5966 = vmatprep.subr.mxu0 0.0
  %5967 = vmatpush1.msra.mxu0 0.0
  %5968 = vmatprep.subr.mxu0 0.0
  %5969 = vmatpush1.msra.mxu0 0.0
  %5970 = vmatprep.subr.mxu0 0.0
  %5971 = vmatpush1.msra.mxu0 0.0
  %5972 = vmatprep.subr.mxu0 0.0
  %5973 = vmatpush1.msra.mxu0 %v5942
  %5974 = vmatprep.subr.mxu0 0.0
  %5975 = vmatpush1.msra.mxu0 %v5674
  %5976 = vmatprep.subr.mxu0 0.0
  %5977 = vmatpush2.msra.mxu0 0.0
  %5978 = vmatprep.subr.mxu0 0.0
  %5979 = vmatpush2.msra.mxu0 0.0
  %5980 = vmatprep.subr.mxu0 0.0
  %5981 = vmatpush2.msra.mxu0 0.0
  %5982 = vmatprep.subr.mxu0 0.0
  %5983 = vmatpush2.msra.mxu0 0.0
  %5984 = vmatprep.subr.mxu0 0.0
  %5985 = vmatpush2.msra.mxu0 0.0
  %5986 = vmatprep.subr.mxu0 0.0
  %5987 = vmatpush2.msra.mxu0 0.0
  %5988 = vmatprep.subr.mxu0 0.0
  %5989 = vmatpush2.msra.mxu0 0.0
  %5990 = vmatprep.subr.mxu0 0.0
  %5991 = vmatpush2.msra.mxu0 0.0
  %5992 = vmatprep.subr.mxu0 0.0
  %5993 = vmatpush2.msra.mxu0 0.0
  %5994 = vmatprep.subr.mxu0 0.0
  %5995 = vmatpush2.msra.mxu0 0.0
  %5996 = vmatprep.subr.mxu0 0.0
  %5997 = vmatpush2.msra.mxu0 0.0
  %5998 = vmatprep.subr.mxu0 0.0
  %5999 = vmatpush2.msra.mxu0 0.0
  %6000 = vmatprep.subr.mxu0 0.0
  %6001 = vmatpush2.msra.mxu0 0.0
  %6002 = vmatprep.subr.mxu0 0.0
  %6003 = vmatpush2.msra.mxu0 0.0
  %6004 = vmatprep.subr.mxu0 0.0
  %6005 = vmatpush2.msra.mxu0 0.0
  %6006 = vmatprep.subr.mxu0 0.0
  %6007 = vmatpush2.msra.mxu0 0.0
  %6008 = vmatprep.mubr.f32.mxu0 0.0
  %6009 = vmatmul.mubr.f32.gmra.mxu0 %v1149
  %v6010 = vpop.f32.mrf.mxu0
  %v6011 = vadd.f32 %v5729, %v6010
  %v6012 = vpop.f32.mrf.mxu0
  %6013 = vmatprep.mubr.f32.mxu0 0.0
  %6014 = vmatmul.mubr.f32.gmra.mxu0 %v1152
  %v6015 = vpop.f32.mrf.mxu0
  %v6016 = vadd.f32 %v5732, %v6015
  %v6017 = vpop.f32.mrf.mxu0
  %6018 = vmatprep.mubr.f32.mxu0 0.0
  %6019 = vmatmul.mubr.f32.gmra.mxu0 %v1155
  %v6020 = vpop.f32.mrf.mxu0
  %v6021 = vadd.f32 %v5737, %v6020
  %v6022 = vpop.f32.mrf.mxu0
  %6023 = vmatprep.mubr.f32.mxu0 0.0
  %6024 = vmatmul.mubr.f32.gmra.mxu0 %v1158
  %v6025 = vpop.f32.mrf.mxu0
  %v6026 = vadd.f32 %v5740, %v6025
  %v6027 = vpop.f32.mrf.mxu0
  %6028 = vmatprep.mubr.f32.mxu0 0.0
  %6029 = vmatmul.mubr.f32.gmra.mxu0 %v1161
  %v6030 = vpop.f32.mrf.mxu0
  %v6031 = vadd.f32 %v5745, %v6030
  %v6032 = vpop.f32.mrf.mxu0
  %6033 = vdwg.mxu0
  %v6034 = vmul.f32 %v5820, %v5918
  %v6035 = vmul.f32 %v5825, %v5923
  %v6036 = vmul.f32 %v5830, %v5928
  %v6037 = vmul.f32 %v5835, %v5933
  %v6038 = vmul.f32 %v5840, %v5938
  %v6039 = vmul.f32 %v6034, %v1935
  %v6040 = vmul.f32 %v6035, %v1935
  %v6041 = vmul.f32 %v6036, %v1935
  %v6042 = vmul.f32 %v6037, %v1935
  %v6043 = vmul.f32 %v6038, %v1935
  %v6044 = vsel %vm1941, %v6039, 0.0
  %6045 = vadd.xlane.f32.xlu0 %v6044
  %v6046 = vpop.xlane.xlu0 %6045
  %v6047 = vsel %vm1941, %v6040, 0.0
  %6048 = vadd.xlane.f32.xlu0 %v6047
  %v6049 = vpop.xlane.xlu0 %6048
  %v6050 = vsel %vm1941, %v6041, 0.0
  %6051 = vadd.xlane.f32.xlu0 %v6050
  %v6052 = vpop.xlane.xlu0 %6051
  %v6053 = vsel %vm1941, %v6042, 0.0
  %6054 = vadd.xlane.f32.xlu0 %v6053
  %v6055 = vpop.xlane.xlu0 %6054
  %v6056 = vsel %vm1954, %v6043, 0.0
  %6057 = vadd.xlane.f32.xlu0 %v6056
  %v6058 = vpop.xlane.xlu0 %6057
  %v6059 = vmul.f32 %v6046, 0.17677669
  %v6060 = vmul.f32 %v6049, 0.17677669
  %v6061 = vmul.f32 %v6052, 0.17677669
  %v6062 = vmul.f32 %v6055, 0.17677669
  %v6063 = vmul.f32 %v6058, 0.17677669
  %v6064 = vadd.f32 %v6059, %v236
  %v6065 = vadd.f32 %v6060, %v237
  %v6066 = vadd.f32 %v6061, %v238
  %v6067 = vadd.f32 %v6062, %v239
  %v6068 = vadd.f32 %v6063, %v240
  %v6069 = vsel %vm1147, %v6064, -inf
  %v6070 = vsel %vm1147, %v6065, -inf
  %v6071 = vsel %vm1147, %v6066, -inf
  %v6072 = vsel %vm1147, %v6067, -inf
  %v6073 = vsel %vm1972, %v6068, -inf
  %v6074 = vmax.f32 %v6069, %v6073
  %v6075 = vmax.f32 %v6074, %v6070
  %v6076 = vmax.f32 %v6071, %v6072
  %v6077 = vmax.f32 %v6075, %v6076
  %v6078 = vrot.slane %v6077, 4
  %v6079 = vmax.f32 %v6077, %v6078
  %v6080 = vrot.slane %v6079, 2
  %v6081 = vmax.f32 %v6079, %v6080
  %v6082 = vrot.slane %v6081, 1
  %v6083 = vmax.f32 %v6081, %v6082
  %v6084 = vmul.f32 %v231, %v6083
  %v6085 = vmul.f32 %v232, %v6083
  %v6086 = vmul.f32 %v233, %v6083
  %v6087 = vmul.f32 %v234, %v6083
  %v6088 = vmul.f32 %v235, %v6083
  %v6089 = vsel %vm1147, %v6084, 0.0
  %6090 = vadd.xlane.f32.xlu0 %v6089
  %v6091 = vpop.xlane.xlu0 %6090
  %v6092 = vsel %vm1147, %v6085, 0.0
  %6093 = vadd.xlane.f32.xlu0 %v6092
  %v6094 = vpop.xlane.xlu0 %6093
  %v6095 = vsel %vm1147, %v6086, 0.0
  %6096 = vadd.xlane.f32.xlu0 %v6095
  %v6097 = vpop.xlane.xlu0 %6096
  %v6098 = vsel %vm1147, %v6087, 0.0
  %6099 = vadd.xlane.f32.xlu0 %v6098
  %v6100 = vpop.xlane.xlu0 %6099
  %v6101 = vsel %vm1972, %v6088, 0.0
  %6102 = vadd.xlane.f32.xlu0 %v6101
  %v6103 = vpop.xlane.xlu0 %6102
  %v6104 = vsub.f32 %v6059, %v6091
  %v6105 = vsub.f32 %v6060, %v6094
  %v6106 = vsub.f32 %v6061, %v6097
  %v6107 = vsub.f32 %v6062, %v6100
  %v6108 = vsub.f32 %v6063, %v6103
  %v6109 = vmul.f32 %v6104, 1.442695
  %v6110 = vpow.pop %v6109
  %v6111 = vmul.f32 %v6105, 1.442695
  %v6112 = vpow.pop %v6111
  %v6113 = vmul.f32 %v6106, 1.442695
  %v6114 = vpow.pop %v6113
  %v6115 = vmul.f32 %v6107, 1.442695
  %v6116 = vpow.pop %v6115
  %v6117 = vmul.f32 %v6108, 1.442695
  %v6118 = vpow.pop %v6117
  %v6119 = vmul.f32 %v231, %v6110
  %v6120 = vmul.f32 %v232, %v6112
  %v6121 = vmul.f32 %v233, %v6114
  %v6122 = vmul.f32 %v234, %v6116
  %v6123 = vmul.f32 %v235, %v6118
  %v6124 = vsel %vm1147, %v6119, 0.0
  %v6125 = vsel %vm1147, %v6120, 0.0
  %v6126 = vadd.f32 %v6124, %v6125
  %v6127 = vsel %vm1147, %v6121, 0.0
  %v6128 = vadd.f32 %v6126, %v6127
  %v6129 = vsel %vm1147, %v6122, 0.0
  %v6130 = vadd.f32 %v6128, %v6129
  %v6131 = vsel %vm1972, %v6123, 0.0
  %v6132 = vadd.f32 %v6130, %v6131
  %v6133 = vrot.slane %v6132, 4
  %v6134 = vadd.f32 %v6132, %v6133
  %v6135 = vrot.slane %v6134, 2
  %v6136 = vadd.f32 %v6134, %v6135
  %v6137 = vrot.slane %v6136, 1
  %v6138 = vadd.f32 %v6136, %v6137
  %v6139 = vadd.f32 %v6138, 1e-16
  %v6140 = vmul.f32 %v231, %v6139
  %v6141 = vmul.f32 %v232, %v6139
  %v6142 = vmul.f32 %v233, %v6139
  %v6143 = vmul.f32 %v234, %v6139
  %v6144 = vmul.f32 %v235, %v6139
  %v6145 = vsel %vm1147, %v6140, 0.0
  %6146 = vadd.xlane.f32.xlu0 %v6145
  %v6147 = vpop.xlane.xlu0 %6146
  %v6148 = vsel %vm1147, %v6141, 0.0
  %6149 = vadd.xlane.f32.xlu0 %v6148
  %v6150 = vpop.xlane.xlu0 %6149
  %v6151 = vsel %vm1147, %v6142, 0.0
  %6152 = vadd.xlane.f32.xlu0 %v6151
  %v6153 = vpop.xlane.xlu0 %6152
  %v6154 = vsel %vm1147, %v6143, 0.0
  %6155 = vadd.xlane.f32.xlu0 %v6154
  %v6156 = vpop.xlane.xlu0 %6155
  %v6157 = vsel %vm1972, %v6144, 0.0
  %6158 = vadd.xlane.f32.xlu0 %v6157
  %v6159 = vpop.xlane.xlu0 %6158
  %v6160 = vrcp.pop %v6147
  %v6161 = vmul.f32 %v6110, %v6160
  %v6162 = vrcp.pop %v6150
  %v6163 = vmul.f32 %v6112, %v6162
  %v6164 = vrcp.pop %v6153
  %v6165 = vmul.f32 %v6114, %v6164
  %v6166 = vrcp.pop %v6156
  %v6167 = vmul.f32 %v6116, %v6166
  %v6168 = vrcp.pop %v6159
  %v6169 = vmul.f32 %v6118, %v6168
  %v6170 = vmul.f32 %v6161, %v1935
  %v6171 = vmul.f32 %v6163, %v1935
  %v6172 = vmul.f32 %v6165, %v1935
  %v6173 = vmul.f32 %v6167, %v1935
  %v6174 = vmul.f32 %v6169, %v1935
  %v6175 = vmul.f32 %v6034, %v2078
  %v6176 = vmul.f32 %v6035, %v2078
  %v6177 = vmul.f32 %v6036, %v2078
  %v6178 = vmul.f32 %v6037, %v2078
  %v6179 = vmul.f32 %v6038, %v2078
  %v6180 = vsel %vm1941, %v6175, 0.0
  %6181 = vadd.xlane.f32.xlu0 %v6180
  %v6182 = vpop.xlane.xlu0 %6181
  %v6183 = vsel %vm1941, %v6176, 0.0
  %6184 = vadd.xlane.f32.xlu0 %v6183
  %v6185 = vpop.xlane.xlu0 %6184
  %v6186 = vsel %vm1941, %v6177, 0.0
  %6187 = vadd.xlane.f32.xlu0 %v6186
  %v6188 = vpop.xlane.xlu0 %6187
  %v6189 = vsel %vm1941, %v6178, 0.0
  %6190 = vadd.xlane.f32.xlu0 %v6189
  %v6191 = vpop.xlane.xlu0 %6190
  %v6192 = vsel %vm1954, %v6179, 0.0
  %6193 = vadd.xlane.f32.xlu0 %v6192
  %v6194 = vpop.xlane.xlu0 %6193
  %v6195 = vmul.f32 %v6182, 0.17677669
  %v6196 = vmul.f32 %v6185, 0.17677669
  %v6197 = vmul.f32 %v6188, 0.17677669
  %v6198 = vmul.f32 %v6191, 0.17677669
  %v6199 = vmul.f32 %v6194, 0.17677669
  %v6200 = vadd.f32 %v6195, %v236
  %v6201 = vadd.f32 %v6196, %v237
  %v6202 = vadd.f32 %v6197, %v238
  %v6203 = vadd.f32 %v6198, %v239
  %v6204 = vadd.f32 %v6199, %v240
  %v6205 = vsel %vm1147, %v6200, -inf
  %v6206 = vsel %vm1147, %v6201, -inf
  %v6207 = vsel %vm1147, %v6202, -inf
  %v6208 = vsel %vm1147, %v6203, -inf
  %v6209 = vsel %vm1972, %v6204, -inf
  %v6210 = vmax.f32 %v6205, %v6209
  %v6211 = vmax.f32 %v6210, %v6206
  %v6212 = vmax.f32 %v6207, %v6208
  %v6213 = vmax.f32 %v6211, %v6212
  %v6214 = vrot.slane %v6213, 4
  %v6215 = vmax.f32 %v6213, %v6214
  %v6216 = vrot.slane %v6215, 2
  %v6217 = vmax.f32 %v6215, %v6216
  %v6218 = vrot.slane %v6217, 1
  %v6219 = vmax.f32 %v6217, %v6218
  %v6220 = vmul.f32 %v231, %v6219
  %v6221 = vmul.f32 %v232, %v6219
  %v6222 = vmul.f32 %v233, %v6219
  %v6223 = vmul.f32 %v234, %v6219
  %v6224 = vmul.f32 %v235, %v6219
  %v6225 = vsel %vm1147, %v6220, 0.0
  %6226 = vadd.xlane.f32.xlu0 %v6225
  %v6227 = vpop.xlane.xlu0 %6226
  %v6228 = vsel %vm1147, %v6221, 0.0
  %6229 = vadd.xlane.f32.xlu0 %v6228
  %v6230 = vpop.xlane.xlu0 %6229
  %v6231 = vsel %vm1147, %v6222, 0.0
  %6232 = vadd.xlane.f32.xlu0 %v6231
  %v6233 = vpop.xlane.xlu0 %6232
  %v6234 = vsel %vm1147, %v6223, 0.0
  %6235 = vadd.xlane.f32.xlu0 %v6234
  %v6236 = vpop.xlane.xlu0 %6235
  %v6237 = vsel %vm1972, %v6224, 0.0
  %6238 = vadd.xlane.f32.xlu0 %v6237
  %v6239 = vpop.xlane.xlu0 %6238
  %v6240 = vsub.f32 %v6195, %v6227
  %v6241 = vsub.f32 %v6196, %v6230
  %v6242 = vsub.f32 %v6197, %v6233
  %v6243 = vsub.f32 %v6198, %v6236
  %v6244 = vsub.f32 %v6199, %v6239
  %v6245 = vmul.f32 %v6240, 1.442695
  %v6246 = vpow.pop %v6245
  %v6247 = vmul.f32 %v6241, 1.442695
  %v6248 = vpow.pop %v6247
  %v6249 = vmul.f32 %v6242, 1.442695
  %v6250 = vpow.pop %v6249
  %v6251 = vmul.f32 %v6243, 1.442695
  %v6252 = vpow.pop %v6251
  %v6253 = vmul.f32 %v6244, 1.442695
  %v6254 = vpow.pop %v6253
  %v6255 = vmul.f32 %v231, %v6246
  %v6256 = vmul.f32 %v232, %v6248
  %v6257 = vmul.f32 %v233, %v6250
  %v6258 = vmul.f32 %v234, %v6252
  %v6259 = vmul.f32 %v235, %v6254
  %v6260 = vsel %vm1147, %v6255, 0.0
  %v6261 = vsel %vm1147, %v6256, 0.0
  %v6262 = vadd.f32 %v6260, %v6261
  %v6263 = vsel %vm1147, %v6257, 0.0
  %v6264 = vadd.f32 %v6262, %v6263
  %v6265 = vsel %vm1147, %v6258, 0.0
  %v6266 = vadd.f32 %v6264, %v6265
  %v6267 = vsel %vm1972, %v6259, 0.0
  %v6268 = vadd.f32 %v6266, %v6267
  %v6269 = vrot.slane %v6268, 4
  %v6270 = vadd.f32 %v6268, %v6269
  %v6271 = vrot.slane %v6270, 2
  %v6272 = vadd.f32 %v6270, %v6271
  %v6273 = vrot.slane %v6272, 1
  %v6274 = vadd.f32 %v6272, %v6273
  %v6275 = vadd.f32 %v6274, 1e-16
  %v6276 = vmul.f32 %v231, %v6275
  %v6277 = vmul.f32 %v232, %v6275
  %v6278 = vmul.f32 %v233, %v6275
  %v6279 = vmul.f32 %v234, %v6275
  %v6280 = vmul.f32 %v235, %v6275
  %v6281 = vsel %vm1147, %v6276, 0.0
  %6282 = vadd.xlane.f32.xlu0 %v6281
  %v6283 = vpop.xlane.xlu0 %6282
  %v6284 = vsel %vm1147, %v6277, 0.0
  %6285 = vadd.xlane.f32.xlu0 %v6284
  %v6286 = vpop.xlane.xlu0 %6285
  %v6287 = vsel %vm1147, %v6278, 0.0
  %6288 = vadd.xlane.f32.xlu0 %v6287
  %v6289 = vpop.xlane.xlu0 %6288
  %v6290 = vsel %vm1147, %v6279, 0.0
  %6291 = vadd.xlane.f32.xlu0 %v6290
  %v6292 = vpop.xlane.xlu0 %6291
  %v6293 = vsel %vm1972, %v6280, 0.0
  %6294 = vadd.xlane.f32.xlu0 %v6293
  %v6295 = vpop.xlane.xlu0 %6294
  %v6296 = vrcp.pop %v6283
  %v6297 = vmul.f32 %v6246, %v6296
  %v6298 = vrcp.pop %v6286
  %v6299 = vmul.f32 %v6248, %v6298
  %v6300 = vrcp.pop %v6289
  %v6301 = vmul.f32 %v6250, %v6300
  %v6302 = vrcp.pop %v6292
  %v6303 = vmul.f32 %v6252, %v6302
  %v6304 = vrcp.pop %v6295
  %v6305 = vmul.f32 %v6254, %v6304
  %v6306 = vmul.f32 %v6297, %v2078
  %v6307 = vmul.f32 %v6299, %v2078
  %v6308 = vmul.f32 %v6301, %v2078
  %v6309 = vmul.f32 %v6303, %v2078
  %v6310 = vmul.f32 %v6305, %v2078
  %v6311 = vadd.f32 %v6170, %v6306
  %v6312 = vadd.f32 %v6171, %v6307
  %v6313 = vadd.f32 %v6172, %v6308
  %v6314 = vadd.f32 %v6173, %v6309
  %v6315 = vadd.f32 %v6174, %v6310
  %v6316 = vmul.f32 %v6011, %v6311
  %v6317 = vmul.f32 %v6016, %v6312
  %v6318 = vmul.f32 %v6021, %v6313
  %v6319 = vmul.f32 %v6026, %v6314
  %v6320 = vmul.f32 %v6031, %v6315
  %6322 = vrot.lane.b32.xlu0 %v5674, 64
  %v6323 = vpop.permute.xlu0 %6322
  %6324 = vrot.lane.b32.xlu0 %v5676, 64
  %v6325 = vpop.permute.xlu0 %6324
  %v6329 = vsel %vm1163, %v6320, 0
  %6331 = vmatprep.subr.mxu0 0.0
  %6332 = vmatpush1.msra.mxu0 0.0
  %6333 = vmatprep.subr.mxu0 0.0
  %6334 = vmatpush1.msra.mxu0 0.0
  %6335 = vmatprep.subr.mxu0 0.0
  %6336 = vmatpush1.msra.mxu0 0.0
  %6337 = vmatprep.subr.mxu0 0.0
  %6338 = vmatpush1.msra.mxu0 0.0
  %6339 = vmatprep.subr.mxu0 0.0
  %6340 = vmatpush1.msra.mxu0 0.0
  %6341 = vmatprep.subr.mxu0 0.0
  %6342 = vmatpush1.msra.mxu0 0.0
  %6343 = vmatprep.subr.mxu0 0.0
  %6344 = vmatpush1.msra.mxu0 0.0
  %6345 = vmatprep.subr.mxu0 0.0
  %6346 = vmatpush1.msra.mxu0 0.0
  %6347 = vmatprep.subr.mxu0 0.0
  %6348 = vmatpush1.msra.mxu0 0.0
  %6349 = vmatprep.subr.mxu0 0.0
  %6350 = vmatpush1.msra.mxu0 0.0
  %6351 = vmatprep.subr.mxu0 0.0
  %6352 = vmatpush1.msra.mxu0 0.0
  %6353 = vmatprep.subr.mxu0 0.0
  %6354 = vmatpush1.msra.mxu0 %v6329
  %6355 = vmatprep.subr.mxu0 0.0
  %6356 = vmatpush1.msra.mxu0 %v6319
  %6357 = vmatprep.subr.mxu0 0.0
  %6358 = vmatpush1.msra.mxu0 %v6318
  %6359 = vmatprep.subr.mxu0 0.0
  %6360 = vmatpush1.msra.mxu0 %v6317
  %6361 = vmatprep.subr.mxu0 0.0
  %6362 = vmatpush1.msra.mxu0 %v6316
  %6363 = vmatprep.subr.mxu0 0.0
  %6364 = vmatpush2.msra.mxu0 0.0
  %6365 = vmatprep.subr.mxu0 0.0
  %6366 = vmatpush2.msra.mxu0 0.0
  %6367 = vmatprep.subr.mxu0 0.0
  %6368 = vmatpush2.msra.mxu0 0.0
  %6369 = vmatprep.subr.mxu0 0.0
  %6370 = vmatpush2.msra.mxu0 0.0
  %6371 = vmatprep.subr.mxu0 0.0
  %6372 = vmatpush2.msra.mxu0 0.0
  %6373 = vmatprep.subr.mxu0 0.0
  %6374 = vmatpush2.msra.mxu0 0.0
  %6375 = vmatprep.subr.mxu0 0.0
  %6376 = vmatpush2.msra.mxu0 0.0
  %6377 = vmatprep.subr.mxu0 0.0
  %6378 = vmatpush2.msra.mxu0 0.0
  %6379 = vmatprep.subr.mxu0 0.0
  %6380 = vmatpush2.msra.mxu0 0.0
  %6381 = vmatprep.subr.mxu0 0.0
  %6382 = vmatpush2.msra.mxu0 0.0
  %6383 = vmatprep.subr.mxu0 0.0
  %6384 = vmatpush2.msra.mxu0 0.0
  %6385 = vmatprep.subr.mxu0 0.0
  %6386 = vmatpush2.msra.mxu0 0.0
  %6387 = vmatprep.subr.mxu0 0.0
  %6388 = vmatpush2.msra.mxu0 0.0
  %6389 = vmatprep.subr.mxu0 0.0
  %6390 = vmatpush2.msra.mxu0 0.0
  %6391 = vmatprep.subr.mxu0 0.0
  %6392 = vmatpush2.msra.mxu0 0.0
  %6393 = vmatprep.subr.mxu0 0.0
  %6394 = vmatpush2.msra.mxu0 0.0
  %6395 = vmatprep.mubr.f32.mxu0 0.0
  %6396 = vmatmul.mubr.f32.gmra.mxu0 %v1301
  %v6397 = vpop.f32.mrf.mxu0
  %v6398 = vadd.f32 %v6323, %v6397
  %v6399 = vpop.f32.mrf.mxu0
  %6400 = vmatprep.mubr.f32.mxu0 0.0
  %6401 = vmatmul.mubr.f32.gmra.mxu0 %v1304
  %v6402 = vpop.f32.mrf.mxu0
  %v6403 = vadd.f32 %v6325, %v6402
  %v6404 = vpop.f32.mrf.mxu0
  %6405 = vdwg.mxu0
  %s6406 = scalar_lea.vmem %s79, 64
  %v6407 = vld [vmem:[%s6406] sm:$0xf]
  %v6408 = vld [vmem:[%s6406 + $0x4] sm:$0xf]
  %v6409 = vld [vmem:[%s6406 + $0x8] sm:$0xf]
  %v6410 = vld [vmem:[%s6406 + $0xc] sm:$0xf]
  %v6411 = vld [vmem:[%s6406 + $0x10] sm:$0xf]
  %v6412 = vld [vmem:[%s6406 + $0x14] sm:$0xf]
  %v6413 = vld [vmem:[%s6406 + $0x18] sm:$0xf]
  %v6414 = vld [vmem:[%s6406 + $0x1c] sm:$0xf]
  %v6415 = vpack.c.bf16 %v6403, %v6398
  %s6416 = scalar_lea.vmem %s81, 2
  %v6417 = vld [vmem:[%s6416] sm:$0x1]
  %v6419 = vlaneseq
  %v6420 = vshrl.u32 %v6419, 7
  %v6421 = vsub.s32 0, %v6420
  %v6422 = vrot.slane %v6417, %v6421
  %v6432 = vunpack.c.l.b16 %v6407
  %v6433 = vunpack.c.l.b16 %v6408
  %v6434 = vunpack.c.l.b16 %v6409
  %v6435 = vunpack.c.l.b16 %v6410
  %v6436 = vunpack.c.l.b16 %v6411
  %v6437 = vunpack.c.l.b16 %v6412
  %v6438 = vunpack.c.l.b16 %v6413
  %v6439 = vunpack.c.l.b16 %v6414
  %v6440 = vpack.c.b16 %v6433, %v6432
  %v6441 = vpack.c.b16 %v6435, %v6434
  %v6442 = vpack.c.b16 %v6437, %v6436
  %v6443 = vpack.c.b16 %v6439, %v6438
  %v6449 = vsel %vm1941, %v6415, 0
  %6451 = vmatprep.subr.bf16.mxu0 0
  %6452 = vmatpush1.bf16.msra.mxu0 0
  %6453 = vmatprep.subr.bf16.mxu0 0
  %6454 = vmatpush1.bf16.msra.mxu0 0
  %6455 = vmatprep.subr.bf16.mxu0 0
  %6456 = vmatpush1.bf16.msra.mxu0 0
  %6457 = vmatprep.subr.bf16.mxu0 0
  %6458 = vmatpush1.bf16.msra.mxu0 0
  %6459 = vmatprep.subr.bf16.mxu0 0
  %6460 = vmatpush1.bf16.msra.mxu0 %v6443
  %6461 = vmatprep.subr.bf16.mxu0 0
  %6462 = vmatpush1.bf16.msra.mxu0 %v6442
  %6463 = vmatprep.subr.bf16.mxu0 0
  %6464 = vmatpush1.bf16.msra.mxu0 %v6441
  %6465 = vmatprep.subr.bf16.mxu0 0
  %6466 = vmatpush1.bf16.msra.mxu0 %v6440
  %6467 = vmatprep.subr.bf16.mxu0 0
  %6468 = vmatpush2.bf16.msra.mxu0 0
  %6469 = vmatprep.subr.bf16.mxu0 0
  %6470 = vmatpush2.bf16.msra.mxu0 0
  %6471 = vmatprep.subr.bf16.mxu0 0
  %6472 = vmatpush2.bf16.msra.mxu0 0
  %6473 = vmatprep.subr.bf16.mxu0 0
  %6474 = vmatpush2.bf16.msra.mxu0 0
  %6475 = vmatprep.subr.bf16.mxu0 0
  %6476 = vmatpush2.bf16.msra.mxu0 0
  %6477 = vmatprep.subr.bf16.mxu0 0
  %6478 = vmatpush2.bf16.msra.mxu0 0
  %6479 = vmatprep.subr.bf16.mxu0 0
  %6480 = vmatpush2.bf16.msra.mxu0 0
  %6481 = vmatprep.subr.bf16.mxu0 0
  %6482 = vmatpush2.bf16.msra.mxu0 0
  %6483 = vmatprep.mubr.bf16.mxu0 0
  %6484 = vmatmul.mubr.bf16.gmra.mxu0 %v6449
  %v6485 = vpop.f32.mrf.mxu0
  %v6486 = vadd.f32 %v6422, %v6485
  %v6487 = vpop.f32.mrf.mxu0
  %v6488 = vpop.f32.mrf.mxu0
  %v6489 = vadd.f32 %v6422, %v6488
  %v6490 = vpop.f32.mrf.mxu0
  %6491 = vdwg.mxu0
  %v6492 = vadd.f32 %v5331, %v6486
  %v6493 = vadd.f32 %v5332, %v6489
  %v6495 = vsel %vm1163, %v6493, 0
  %6497 = vmatprep.subr.mxu0 0.0
  %6498 = vmatpush1.msra.mxu0 0.0
  %6499 = vmatprep.subr.mxu0 0.0
  %6500 = vmatpush1.msra.mxu0 0.0
  %6501 = vmatprep.subr.mxu0 0.0
  %6502 = vmatpush1.msra.mxu0 0.0
  %6503 = vmatprep.subr.mxu0 0.0
  %6504 = vmatpush1.msra.mxu0 0.0
  %6505 = vmatprep.subr.mxu0 0.0
  %6506 = vmatpush1.msra.mxu0 0.0
  %6507 = vmatprep.subr.mxu0 0.0
  %6508 = vmatpush1.msra.mxu0 0.0
  %6509 = vmatprep.subr.mxu0 0.0
  %6510 = vmatpush1.msra.mxu0 0.0
  %6511 = vmatprep.subr.mxu0 0.0
  %6512 = vmatpush1.msra.mxu0 0.0
  %6513 = vmatprep.subr.mxu0 0.0
  %6514 = vmatpush1.msra.mxu0 0.0
  %6515 = vmatprep.subr.mxu0 0.0
  %6516 = vmatpush1.msra.mxu0 0.0
  %6517 = vmatprep.subr.mxu0 0.0
  %6518 = vmatpush1.msra.mxu0 0.0
  %6519 = vmatprep.subr.mxu0 0.0
  %6520 = vmatpush1.msra.mxu0 0.0
  %6521 = vmatprep.subr.mxu0 0.0
  %6522 = vmatpush1.msra.mxu0 0.0
  %6523 = vmatprep.subr.mxu0 0.0
  %6524 = vmatpush1.msra.mxu0 0.0
  %6525 = vmatprep.subr.mxu0 0.0
  %6526 = vmatpush1.msra.mxu0 %v6495
  %6527 = vmatprep.subr.mxu0 0.0
  %6528 = vmatpush1.msra.mxu0 %v6492
  %6529 = vmatprep.subr.mxu0 0.0
  %6530 = vmatpush2.msra.mxu0 0.0
  %6531 = vmatprep.subr.mxu0 0.0
  %6532 = vmatpush2.msra.mxu0 0.0
  %6533 = vmatprep.subr.mxu0 0.0
  %6534 = vmatpush2.msra.mxu0 0.0
  %6535 = vmatprep.subr.mxu0 0.0
  %6536 = vmatpush2.msra.mxu0 0.0
  %6537 = vmatprep.subr.mxu0 0.0
  %6538 = vmatpush2.msra.mxu0 0.0
  %6539 = vmatprep.subr.mxu0 0.0
  %6540 = vmatpush2.msra.mxu0 0.0
  %6541 = vmatprep.subr.mxu0 0.0
  %6542 = vmatpush2.msra.mxu0 0.0
  %6543 = vmatprep.subr.mxu0 0.0
  %6544 = vmatpush2.msra.mxu0 0.0
  %6545 = vmatprep.subr.mxu0 0.0
  %6546 = vmatpush2.msra.mxu0 0.0
  %6547 = vmatprep.subr.mxu0 0.0
  %6548 = vmatpush2.msra.mxu0 0.0
  %6549 = vmatprep.subr.mxu0 0.0
  %6550 = vmatpush2.msra.mxu0 0.0
  %6551 = vmatprep.subr.mxu0 0.0
  %6552 = vmatpush2.msra.mxu0 0.0
  %6553 = vmatprep.subr.mxu0 0.0
  %6554 = vmatpush2.msra.mxu0 0.0
  %6555 = vmatprep.subr.mxu0 0.0
  %6556 = vmatpush2.msra.mxu0 0.0
  %6557 = vmatprep.subr.mxu0 0.0
  %6558 = vmatpush2.msra.mxu0 0.0
  %6559 = vmatprep.subr.mxu0 0.0
  %6560 = vmatpush2.msra.mxu0 0.0
  %6561 = vmatprep.mubr.f32.mxu0 0.0
  %6562 = vmatmul.mubr.f32.gmra.mxu0 %v2429
  %v6563 = vpop.f32.mrf.mxu0
  %v6564 = vadd.f32 0.0, %v6563
  %v6565 = vpop.f32.mrf.mxu0
  %6566 = vdwg.mxu0
  %v6567 = vsel %vm2504, %v6564, 0.0
  %6568 = vadd.xlane.f32.xlu0 %v6567
  %v6569 = vpop.xlane.xlu0 %6568
  %v6570 = vmul.f32 %v6569, %v243
  %v6572 = vsel %vm469, %v6570, 0
  %6574 = vmatprep.subr.mxu0 0.0
  %6575 = vmatpush1.msra.mxu0 0.0
  %6576 = vmatprep.subr.mxu0 0.0
  %6577 = vmatpush1.msra.mxu0 0.0
  %6578 = vmatprep.subr.mxu0 0.0
  %6579 = vmatpush1.msra.mxu0 0.0
  %6580 = vmatprep.subr.mxu0 0.0
  %6581 = vmatpush1.msra.mxu0 0.0
  %6582 = vmatprep.subr.mxu0 0.0
  %6583 = vmatpush1.msra.mxu0 0.0
  %6584 = vmatprep.subr.mxu0 0.0
  %6585 = vmatpush1.msra.mxu0 0.0
  %6586 = vmatprep.subr.mxu0 0.0
  %6587 = vmatpush1.msra.mxu0 0.0
  %6588 = vmatprep.subr.mxu0 0.0
  %6589 = vmatpush1.msra.mxu0 0.0
  %6590 = vmatprep.subr.mxu0 0.0
  %6591 = vmatpush1.msra.mxu0 0.0
  %6592 = vmatprep.subr.mxu0 0.0
  %6593 = vmatpush1.msra.mxu0 0.0
  %6594 = vmatprep.subr.mxu0 0.0
  %6595 = vmatpush1.msra.mxu0 0.0
  %6596 = vmatprep.subr.mxu0 0.0
  %6597 = vmatpush1.msra.mxu0 0.0
  %6598 = vmatprep.subr.mxu0 0.0
  %6599 = vmatpush1.msra.mxu0 0.0
  %6600 = vmatprep.subr.mxu0 0.0
  %6601 = vmatpush1.msra.mxu0 0.0
  %6602 = vmatprep.subr.mxu0 0.0
  %6603 = vmatpush1.msra.mxu0 0.0
  %6604 = vmatprep.subr.mxu0 0.0
  %6605 = vmatpush1.msra.mxu0 %v6572
  %6606 = vmatprep.subr.mxu0 0.0
  %6607 = vmatpush2.msra.mxu0 0.0
  %6608 = vmatprep.subr.mxu0 0.0
  %6609 = vmatpush2.msra.mxu0 0.0
  %6610 = vmatprep.subr.mxu0 0.0
  %6611 = vmatpush2.msra.mxu0 0.0
  %6612 = vmatprep.subr.mxu0 0.0
  %6613 = vmatpush2.msra.mxu0 0.0
  %6614 = vmatprep.subr.mxu0 0.0
  %6615 = vmatpush2.msra.mxu0 0.0
  %6616 = vmatprep.subr.mxu0 0.0
  %6617 = vmatpush2.msra.mxu0 0.0
  %6618 = vmatprep.subr.mxu0 0.0
  %6619 = vmatpush2.msra.mxu0 0.0
  %6620 = vmatprep.subr.mxu0 0.0
  %6621 = vmatpush2.msra.mxu0 0.0
  %6622 = vmatprep.subr.mxu0 0.0
  %6623 = vmatpush2.msra.mxu0 0.0
  %6624 = vmatprep.subr.mxu0 0.0
  %6625 = vmatpush2.msra.mxu0 0.0
  %6626 = vmatprep.subr.mxu0 0.0
  %6627 = vmatpush2.msra.mxu0 0.0
  %6628 = vmatprep.subr.mxu0 0.0
  %6629 = vmatpush2.msra.mxu0 0.0
  %6630 = vmatprep.subr.mxu0 0.0
  %6631 = vmatpush2.msra.mxu0 0.0
  %6632 = vmatprep.subr.mxu0 0.0
  %6633 = vmatpush2.msra.mxu0 0.0
  %6634 = vmatprep.subr.mxu0 0.0
  %6635 = vmatpush2.msra.mxu0 0.0
  %6636 = vmatprep.subr.mxu0 0.0
  %6637 = vmatpush2.msra.mxu0 0.0
  %6638 = vmatprep.mubr.f32.mxu0 0.0
  %6639 = vmatmul.mubr.f32.gmra.mxu0 %v2510
  %v6640 = vpop.f32.mrf.mxu0
  %v6641 = vadd.f32 0.0, %v6640
  %v6642 = vpop.f32.mrf.mxu0
  %6643 = vmatprep.mubr.f32.mxu0 0.0
  %6644 = vmatmul.mubr.f32.gmra.mxu0 %v2513
  %v6645 = vpop.f32.mrf.mxu0
  %v6646 = vadd.f32 0.0, %v6645
  %v6647 = vpop.f32.mrf.mxu0
  %6648 = vdwg.mxu0
  %6650 = vset.pattern.permute.xlu0 0
  %6651 = vperm.xlu0 %6650, %v6641
  %v6652 = vpop.permute.xlu0 %6651
  %6655 = vset.pattern.permute.xlu0 0
  %6656 = vperm.xlu0 %6655, %v6646
  %v6657 = vpop.permute.xlu0 %6656
  %v6659 = vsub.f32 %v6492, %v6652
  %v6660 = vsub.f32 %v6493, %v6657
  %v6661 = vmul.f32 %v6659, %v6659
  %v6662 = vmul.f32 %v6660, %v6660
  %v6664 = vsel %vm1163, %v6662, 0
  %6666 = vmatprep.subr.mxu0 0.0
  %6667 = vmatpush1.msra.mxu0 0.0
  %6668 = vmatprep.subr.mxu0 0.0
  %6669 = vmatpush1.msra.mxu0 0.0
  %6670 = vmatprep.subr.mxu0 0.0
  %6671 = vmatpush1.msra.mxu0 0.0
  %6672 = vmatprep.subr.mxu0 0.0
  %6673 = vmatpush1.msra.mxu0 0.0
  %6674 = vmatprep.subr.mxu0 0.0
  %6675 = vmatpush1.msra.mxu0 0.0
  %6676 = vmatprep.subr.mxu0 0.0
  %6677 = vmatpush1.msra.mxu0 0.0
  %6678 = vmatprep.subr.mxu0 0.0
  %6679 = vmatpush1.msra.mxu0 0.0
  %6680 = vmatprep.subr.mxu0 0.0
  %6681 = vmatpush1.msra.mxu0 0.0
  %6682 = vmatprep.subr.mxu0 0.0
  %6683 = vmatpush1.msra.mxu0 0.0
  %6684 = vmatprep.subr.mxu0 0.0
  %6685 = vmatpush1.msra.mxu0 0.0
  %6686 = vmatprep.subr.mxu0 0.0
  %6687 = vmatpush1.msra.mxu0 0.0
  %6688 = vmatprep.subr.mxu0 0.0
  %6689 = vmatpush1.msra.mxu0 0.0
  %6690 = vmatprep.subr.mxu0 0.0
  %6691 = vmatpush1.msra.mxu0 0.0
  %6692 = vmatprep.subr.mxu0 0.0
  %6693 = vmatpush1.msra.mxu0 0.0
  %6694 = vmatprep.subr.mxu0 0.0
  %6695 = vmatpush1.msra.mxu0 %v6664
  %6696 = vmatprep.subr.mxu0 0.0
  %6697 = vmatpush1.msra.mxu0 %v6661
  %6698 = vmatprep.subr.mxu0 0.0
  %6699 = vmatpush2.msra.mxu0 0.0
  %6700 = vmatprep.subr.mxu0 0.0
  %6701 = vmatpush2.msra.mxu0 0.0
  %6702 = vmatprep.subr.mxu0 0.0
  %6703 = vmatpush2.msra.mxu0 0.0
  %6704 = vmatprep.subr.mxu0 0.0
  %6705 = vmatpush2.msra.mxu0 0.0
  %6706 = vmatprep.subr.mxu0 0.0
  %6707 = vmatpush2.msra.mxu0 0.0
  %6708 = vmatprep.subr.mxu0 0.0
  %6709 = vmatpush2.msra.mxu0 0.0
  %6710 = vmatprep.subr.mxu0 0.0
  %6711 = vmatpush2.msra.mxu0 0.0
  %6712 = vmatprep.subr.mxu0 0.0
  %6713 = vmatpush2.msra.mxu0 0.0
  %6714 = vmatprep.subr.mxu0 0.0
  %6715 = vmatpush2.msra.mxu0 0.0
  %6716 = vmatprep.subr.mxu0 0.0
  %6717 = vmatpush2.msra.mxu0 0.0
  %6718 = vmatprep.subr.mxu0 0.0
  %6719 = vmatpush2.msra.mxu0 0.0
  %6720 = vmatprep.subr.mxu0 0.0
  %6721 = vmatpush2.msra.mxu0 0.0
  %6722 = vmatprep.subr.mxu0 0.0
  %6723 = vmatpush2.msra.mxu0 0.0
  %6724 = vmatprep.subr.mxu0 0.0
  %6725 = vmatpush2.msra.mxu0 0.0
  %6726 = vmatprep.subr.mxu0 0.0
  %6727 = vmatpush2.msra.mxu0 0.0
  %6728 = vmatprep.subr.mxu0 0.0
  %6729 = vmatpush2.msra.mxu0 0.0
  %6730 = vmatprep.mubr.f32.mxu0 0.0
  %6731 = vmatmul.mubr.f32.gmra.mxu0 %v2429
  %v6732 = vpop.f32.mrf.mxu0
  %v6733 = vadd.f32 0.0, %v6732
  %v6734 = vpop.f32.mrf.mxu0
  %6735 = vdwg.mxu0
  %v6736 = vsel %vm2504, %v6733, 0.0
  %6737 = vadd.xlane.f32.xlu0 %v6736
  %v6738 = vpop.xlane.xlu0 %6737
  %v6739 = vmul.f32 %v6738, %v243
  %v6740 = vadd.f32 %v6739, 1e-05
  %v6741 = vrsqrt.pop %v6740
  %v6743 = vsel %vm469, %v6741, 0
  %6745 = vmatprep.subr.mxu0 0.0
  %6746 = vmatpush1.msra.mxu0 0.0
  %6747 = vmatprep.subr.mxu0 0.0
  %6748 = vmatpush1.msra.mxu0 0.0
  %6749 = vmatprep.subr.mxu0 0.0
  %6750 = vmatpush1.msra.mxu0 0.0
  %6751 = vmatprep.subr.mxu0 0.0
  %6752 = vmatpush1.msra.mxu0 0.0
  %6753 = vmatprep.subr.mxu0 0.0
  %6754 = vmatpush1.msra.mxu0 0.0
  %6755 = vmatprep.subr.mxu0 0.0
  %6756 = vmatpush1.msra.mxu0 0.0
  %6757 = vmatprep.subr.mxu0 0.0
  %6758 = vmatpush1.msra.mxu0 0.0
  %6759 = vmatprep.subr.mxu0 0.0
  %6760 = vmatpush1.msra.mxu0 0.0
  %6761 = vmatprep.subr.mxu0 0.0
  %6762 = vmatpush1.msra.mxu0 0.0
  %6763 = vmatprep.subr.mxu0 0.0
  %6764 = vmatpush1.msra.mxu0 0.0
  %6765 = vmatprep.subr.mxu0 0.0
  %6766 = vmatpush1.msra.mxu0 0.0
  %6767 = vmatprep.subr.mxu0 0.0
  %6768 = vmatpush1.msra.mxu0 0.0
  %6769 = vmatprep.subr.mxu0 0.0
  %6770 = vmatpush1.msra.mxu0 0.0
  %6771 = vmatprep.subr.mxu0 0.0
  %6772 = vmatpush1.msra.mxu0 0.0
  %6773 = vmatprep.subr.mxu0 0.0
  %6774 = vmatpush1.msra.mxu0 0.0
  %6775 = vmatprep.subr.mxu0 0.0
  %6776 = vmatpush1.msra.mxu0 %v6743
  %6777 = vmatprep.subr.mxu0 0.0
  %6778 = vmatpush2.msra.mxu0 0.0
  %6779 = vmatprep.subr.mxu0 0.0
  %6780 = vmatpush2.msra.mxu0 0.0
  %6781 = vmatprep.subr.mxu0 0.0
  %6782 = vmatpush2.msra.mxu0 0.0
  %6783 = vmatprep.subr.mxu0 0.0
  %6784 = vmatpush2.msra.mxu0 0.0
  %6785 = vmatprep.subr.mxu0 0.0
  %6786 = vmatpush2.msra.mxu0 0.0
  %6787 = vmatprep.subr.mxu0 0.0
  %6788 = vmatpush2.msra.mxu0 0.0
  %6789 = vmatprep.subr.mxu0 0.0
  %6790 = vmatpush2.msra.mxu0 0.0
  %6791 = vmatprep.subr.mxu0 0.0
  %6792 = vmatpush2.msra.mxu0 0.0
  %6793 = vmatprep.subr.mxu0 0.0
  %6794 = vmatpush2.msra.mxu0 0.0
  %6795 = vmatprep.subr.mxu0 0.0
  %6796 = vmatpush2.msra.mxu0 0.0
  %6797 = vmatprep.subr.mxu0 0.0
  %6798 = vmatpush2.msra.mxu0 0.0
  %6799 = vmatprep.subr.mxu0 0.0
  %6800 = vmatpush2.msra.mxu0 0.0
  %6801 = vmatprep.subr.mxu0 0.0
  %6802 = vmatpush2.msra.mxu0 0.0
  %6803 = vmatprep.subr.mxu0 0.0
  %6804 = vmatpush2.msra.mxu0 0.0
  %6805 = vmatprep.subr.mxu0 0.0
  %6806 = vmatpush2.msra.mxu0 0.0
  %6807 = vmatprep.subr.mxu0 0.0
  %6808 = vmatpush2.msra.mxu0 0.0
  %6809 = vmatprep.mubr.f32.mxu0 0.0
  %6810 = vmatmul.mubr.f32.gmra.mxu0 %v2510
  %v6811 = vpop.f32.mrf.mxu0
  %v6812 = vadd.f32 0.0, %v6811
  %v6813 = vpop.f32.mrf.mxu0
  %6814 = vmatprep.mubr.f32.mxu0 0.0
  %6815 = vmatmul.mubr.f32.gmra.mxu0 %v2513
  %v6816 = vpop.f32.mrf.mxu0
  %v6817 = vadd.f32 0.0, %v6816
  %v6818 = vpop.f32.mrf.mxu0
  %6819 = vdwg.mxu0
  %6821 = vset.pattern.permute.xlu0 0
  %6822 = vperm.xlu0 %6821, %v6812
  %v6823 = vpop.permute.xlu0 %6822
  %6826 = vset.pattern.permute.xlu0 0
  %6827 = vperm.xlu0 %6826, %v6817
  %v6828 = vpop.permute.xlu0 %6827
  %v6830 = vmul.f32 %v6659, %v6823
  %v6831 = vmul.f32 %v6660, %v6828
  %s6832 = scalar_lea.vmem %s83, 32
  %v6833 = vld [vmem:[%s6832] sm:$0xf]
  %v6834 = vld [vmem:[%s6832 + $0x4] sm:$0xf]
  %v6835 = vld [vmem:[%s6832 + $0x8] sm:$0xf]
  %v6836 = vld [vmem:[%s6832 + $0xc] sm:$0xf]
  %v6837 = vpack.c.bf16 %v6831, %v6830
  %s6838 = scalar_lea.vmem %s85, 2
  %v6839 = vld [vmem:[%s6838] sm:$0x1]
  %v6841 = vlaneseq
  %v6842 = vshrl.u32 %v6841, 7
  %v6843 = vsub.s32 0, %v6842
  %v6844 = vrot.slane %v6839, %v6843
  %v6850 = vunpack.c.l.b16 %v6833
  %v6851 = vunpack.c.l.b16 %v6834
  %v6852 = vunpack.c.l.b16 %v6835
  %v6853 = vunpack.c.l.b16 %v6836
  %v6854 = vpack.c.b16 %v6851, %v6850
  %v6855 = vpack.c.b16 %v6853, %v6852
  %v6859 = vsel %vm335, %v6837, 0
  %6861 = vmatprep.subr.bf16.mxu0 0
  %6862 = vmatpush1.bf16.msra.mxu0 0
  %6863 = vmatprep.subr.bf16.mxu0 0
  %6864 = vmatpush1.bf16.msra.mxu0 0
  %6865 = vmatprep.subr.bf16.mxu0 0
  %6866 = vmatpush1.bf16.msra.mxu0 0
  %6867 = vmatprep.subr.bf16.mxu0 0
  %6868 = vmatpush1.bf16.msra.mxu0 0
  %6869 = vmatprep.subr.bf16.mxu0 0
  %6870 = vmatpush1.bf16.msra.mxu0 0
  %6871 = vmatprep.subr.bf16.mxu0 0
  %6872 = vmatpush1.bf16.msra.mxu0 0
  %6873 = vmatprep.subr.bf16.mxu0 0
  %6874 = vmatpush1.bf16.msra.mxu0 %v6855
  %6875 = vmatprep.subr.bf16.mxu0 0
  %6876 = vmatpush1.bf16.msra.mxu0 %v6854
  %6877 = vmatprep.subr.bf16.mxu0 0
  %6878 = vmatpush2.bf16.msra.mxu0 0
  %6879 = vmatprep.subr.bf16.mxu0 0
  %6880 = vmatpush2.bf16.msra.mxu0 0
  %6881 = vmatprep.subr.bf16.mxu0 0
  %6882 = vmatpush2.bf16.msra.mxu0 0
  %6883 = vmatprep.subr.bf16.mxu0 0
  %6884 = vmatpush2.bf16.msra.mxu0 0
  %6885 = vmatprep.subr.bf16.mxu0 0
  %6886 = vmatpush2.bf16.msra.mxu0 0
  %6887 = vmatprep.subr.bf16.mxu0 0
  %6888 = vmatpush2.bf16.msra.mxu0 0
  %6889 = vmatprep.subr.bf16.mxu0 0
  %6890 = vmatpush2.bf16.msra.mxu0 0
  %6891 = vmatprep.subr.bf16.mxu0 0
  %6892 = vmatpush2.bf16.msra.mxu0 0
  %6893 = vmatprep.mubr.bf16.mxu0 0
  %6894 = vmatmul.mubr.bf16.gmra.mxu0 %v6859
  %v6895 = vpop.f32.mrf.mxu0
  %v6896 = vadd.f32 %v6844, %v6895
  %v6897 = vpop.f32.mrf.mxu0
  %v6898 = vpop.f32.mrf.mxu0
  %v6899 = vadd.f32 %v6844, %v6898
  %v6900 = vpop.f32.mrf.mxu0
  %6901 = vdwg.mxu0
  %vm6902 = vcmp.gt.f32.partialorder %v6896, 0.0
  %vm6903 = vcmp.gt.f32.partialorder %v6899, 0.0
  %v6904 = vmul.f32 %v6896, 0.01
  %v6905 = vmul.f32 %v6899, 0.01
  %v6906 = vsel %vm6902, %v6896, %v6904
  %v6907 = vsel %vm6903, %v6899, %v6905
  %s6908 = scalar_lea.vmem %s87, 128
  %v6909 = vld [vmem:[%s6908] sm:$0xf]
  %v6910 = vld [vmem:[%s6908 + $0x4] sm:$0xf]
  %v6911 = vld [vmem:[%s6908 + $0x8] sm:$0xf]
  %v6912 = vld [vmem:[%s6908 + $0xc] sm:$0xf]
  %v6913 = vld [vmem:[%s6908 + $0x10] sm:$0xf]
  %v6914 = vld [vmem:[%s6908 + $0x14] sm:$0xf]
  %v6915 = vld [vmem:[%s6908 + $0x18] sm:$0xf]
  %v6916 = vld [vmem:[%s6908 + $0x1c] sm:$0xf]
  %v6917 = vld [vmem:[%s6908 + $0x20] sm:$0xf]
  %v6918 = vld [vmem:[%s6908 + $0x24] sm:$0xf]
  %v6919 = vld [vmem:[%s6908 + $0x28] sm:$0xf]
  %v6920 = vld [vmem:[%s6908 + $0x2c] sm:$0xf]
  %v6921 = vld [vmem:[%s6908 + $0x30] sm:$0xf]
  %v6922 = vld [vmem:[%s6908 + $0x34] sm:$0xf]
  %v6923 = vld [vmem:[%s6908 + $0x38] sm:$0xf]
  %v6924 = vld [vmem:[%s6908 + $0x3c] sm:$0xf]
  %v6925 = vpack.c.bf16 %v6907, %v6906
  %s6926 = scalar_lea.vmem %s89, 2
  %v6927 = vld [vmem:[%s6926] sm:$0x1]
  %v6929 = vlaneseq
  %v6930 = vshrl.u32 %v6929, 7
  %v6931 = vsub.s32 0, %v6930
  %v6932 = vrot.slane %v6927, %v6931
  %v6950 = vunpack.c.l.b16 %v6909
  %v6951 = vunpack.c.l.b16 %v6910
  %v6952 = vunpack.c.l.b16 %v6911
  %v6953 = vunpack.c.l.b16 %v6912
  %v6954 = vunpack.c.l.b16 %v6913
  %v6955 = vunpack.c.l.b16 %v6914
  %v6956 = vunpack.c.l.b16 %v6915
  %v6957 = vunpack.c.l.b16 %v6916
  %v6958 = vunpack.c.l.b16 %v6917
  %v6959 = vunpack.c.l.b16 %v6918
  %v6960 = vunpack.c.l.b16 %v6919
  %v6961 = vunpack.c.l.b16 %v6920
  %v6962 = vunpack.c.l.b16 %v6921
  %v6963 = vunpack.c.l.b16 %v6922
  %v6964 = vunpack.c.l.b16 %v6923
  %v6965 = vunpack.c.l.b16 %v6924
  %v6966 = vpack.c.b16 %v6951, %v6950
  %v6967 = vpack.c.b16 %v6953, %v6952
  %v6968 = vpack.c.b16 %v6955, %v6954
  %v6969 = vpack.c.b16 %v6957, %v6956
  %v6970 = vpack.c.b16 %v6959, %v6958
  %v6971 = vpack.c.b16 %v6961, %v6960
  %v6972 = vpack.c.b16 %v6963, %v6962
  %v6973 = vpack.c.b16 %v6965, %v6964
  %6982 = vmatprep.subr.bf16.mxu0 0
  %6983 = vmatpush1.bf16.msra.mxu0 %v6973
  %6984 = vmatprep.subr.bf16.mxu0 0
  %6985 = vmatpush1.bf16.msra.mxu0 %v6972
  %6986 = vmatprep.subr.bf16.mxu0 0
  %6987 = vmatpush1.bf16.msra.mxu0 %v6971
  %6988 = vmatprep.subr.bf16.mxu0 0
  %6989 = vmatpush1.bf16.msra.mxu0 %v6970
  %6990 = vmatprep.subr.bf16.mxu0 0
  %6991 = vmatpush1.bf16.msra.mxu0 %v6969
  %6992 = vmatprep.subr.bf16.mxu0 0
  %6993 = vmatpush1.bf16.msra.mxu0 %v6968
  %6994 = vmatprep.subr.bf16.mxu0 0
  %6995 = vmatpush1.bf16.msra.mxu0 %v6967
  %6996 = vmatprep.subr.bf16.mxu0 0
  %6997 = vmatpush1.bf16.msra.mxu0 %v6966
  %6998 = vmatprep.subr.bf16.mxu0 0
  %6999 = vmatpush2.bf16.msra.mxu0 0
  %7000 = vmatprep.subr.bf16.mxu0 0
  %7001 = vmatpush2.bf16.msra.mxu0 0
  %7002 = vmatprep.subr.bf16.mxu0 0
  %7003 = vmatpush2.bf16.msra.mxu0 0
  %7004 = vmatprep.subr.bf16.mxu0 0
  %7005 = vmatpush2.bf16.msra.mxu0 0
  %7006 = vmatprep.subr.bf16.mxu0 0
  %7007 = vmatpush2.bf16.msra.mxu0 0
  %7008 = vmatprep.subr.bf16.mxu0 0
  %7009 = vmatpush2.bf16.msra.mxu0 0
  %7010 = vmatprep.subr.bf16.mxu0 0
  %7011 = vmatpush2.bf16.msra.mxu0 0
  %7012 = vmatprep.subr.bf16.mxu0 0
  %7013 = vmatpush2.bf16.msra.mxu0 0
  %7014 = vmatprep.mubr.bf16.mxu0 0
  %7015 = vmatmul.mubr.bf16.gmra.mxu0 %v6925
  %v7016 = vpop.f32.mrf.mxu0
  %v7017 = vadd.f32 %v6932, %v7016
  %v7018 = vpop.f32.mrf.mxu0
  %v7019 = vpop.f32.mrf.mxu0
  %v7020 = vadd.f32 %v6932, %v7019
  %v7021 = vpop.f32.mrf.mxu0
  %7022 = vdwg.mxu0
  %v7023 = vadd.f32 %v6830, %v7017
  %v7024 = vadd.f32 %v6831, %v7020
  %v7026 = vsel %vm1163, %v7024, 0
  %7028 = vmatprep.subr.mxu0 0.0
  %7029 = vmatpush1.msra.mxu0 0.0
  %7030 = vmatprep.subr.mxu0 0.0
  %7031 = vmatpush1.msra.mxu0 0.0
  %7032 = vmatprep.subr.mxu0 0.0
  %7033 = vmatpush1.msra.mxu0 0.0
  %7034 = vmatprep.subr.mxu0 0.0
  %7035 = vmatpush1.msra.mxu0 0.0
  %7036 = vmatprep.subr.mxu0 0.0
  %7037 = vmatpush1.msra.mxu0 0.0
  %7038 = vmatprep.subr.mxu0 0.0
  %7039 = vmatpush1.msra.mxu0 0.0
  %7040 = vmatprep.subr.mxu0 0.0
  %7041 = vmatpush1.msra.mxu0 0.0
  %7042 = vmatprep.subr.mxu0 0.0
  %7043 = vmatpush1.msra.mxu0 0.0
  %7044 = vmatprep.subr.mxu0 0.0
  %7045 = vmatpush1.msra.mxu0 0.0
  %7046 = vmatprep.subr.mxu0 0.0
  %7047 = vmatpush1.msra.mxu0 0.0
  %7048 = vmatprep.subr.mxu0 0.0
  %7049 = vmatpush1.msra.mxu0 0.0
  %7050 = vmatprep.subr.mxu0 0.0
  %7051 = vmatpush1.msra.mxu0 0.0
  %7052 = vmatprep.subr.mxu0 0.0
  %7053 = vmatpush1.msra.mxu0 0.0
  %7054 = vmatprep.subr.mxu0 0.0
  %7055 = vmatpush1.msra.mxu0 0.0
  %7056 = vmatprep.subr.mxu0 0.0
  %7057 = vmatpush1.msra.mxu0 %v7026
  %7058 = vmatprep.subr.mxu0 0.0
  %7059 = vmatpush1.msra.mxu0 %v7023
  %7060 = vmatprep.subr.mxu0 0.0
  %7061 = vmatpush2.msra.mxu0 0.0
  %7062 = vmatprep.subr.mxu0 0.0
  %7063 = vmatpush2.msra.mxu0 0.0
  %7064 = vmatprep.subr.mxu0 0.0
  %7065 = vmatpush2.msra.mxu0 0.0
  %7066 = vmatprep.subr.mxu0 0.0
  %7067 = vmatpush2.msra.mxu0 0.0
  %7068 = vmatprep.subr.mxu0 0.0
  %7069 = vmatpush2.msra.mxu0 0.0
  %7070 = vmatprep.subr.mxu0 0.0
  %7071 = vmatpush2.msra.mxu0 0.0
  %7072 = vmatprep.subr.mxu0 0.0
  %7073 = vmatpush2.msra.mxu0 0.0
  %7074 = vmatprep.subr.mxu0 0.0
  %7075 = vmatpush2.msra.mxu0 0.0
  %7076 = vmatprep.subr.mxu0 0.0
  %7077 = vmatpush2.msra.mxu0 0.0
  %7078 = vmatprep.subr.mxu0 0.0
  %7079 = vmatpush2.msra.mxu0 0.0
  %7080 = vmatprep.subr.mxu0 0.0
  %7081 = vmatpush2.msra.mxu0 0.0
  %7082 = vmatprep.subr.mxu0 0.0
  %7083 = vmatpush2.msra.mxu0 0.0
  %7084 = vmatprep.subr.mxu0 0.0
  %7085 = vmatpush2.msra.mxu0 0.0
  %7086 = vmatprep.subr.mxu0 0.0
  %7087 = vmatpush2.msra.mxu0 0.0
  %7088 = vmatprep.subr.mxu0 0.0
  %7089 = vmatpush2.msra.mxu0 0.0
  %7090 = vmatprep.subr.mxu0 0.0
  %7091 = vmatpush2.msra.mxu0 0.0
  %7092 = vmatprep.mubr.f32.mxu0 0.0
  %7093 = vmatmul.mubr.f32.gmra.mxu0 %v2429
  %v7094 = vpop.f32.mrf.mxu0
  %v7095 = vadd.f32 0.0, %v7094
  %v7096 = vpop.f32.mrf.mxu0
  %7097 = vdwg.mxu0
  %v7098 = vsel %vm2504, %v7095, 0.0
  %7099 = vadd.xlane.f32.xlu0 %v7098
  %v7100 = vpop.xlane.xlu0 %7099
  %v7101 = vmul.f32 %v7100, %v243
  %v7103 = vsel %vm469, %v7101, 0
  %7105 = vmatprep.subr.mxu0 0.0
  %7106 = vmatpush1.msra.mxu0 0.0
  %7107 = vmatprep.subr.mxu0 0.0
  %7108 = vmatpush1.msra.mxu0 0.0
  %7109 = vmatprep.subr.mxu0 0.0
  %7110 = vmatpush1.msra.mxu0 0.0
  %7111 = vmatprep.subr.mxu0 0.0
  %7112 = vmatpush1.msra.mxu0 0.0
  %7113 = vmatprep.subr.mxu0 0.0
  %7114 = vmatpush1.msra.mxu0 0.0
  %7115 = vmatprep.subr.mxu0 0.0
  %7116 = vmatpush1.msra.mxu0 0.0
  %7117 = vmatprep.subr.mxu0 0.0
  %7118 = vmatpush1.msra.mxu0 0.0
  %7119 = vmatprep.subr.mxu0 0.0
  %7120 = vmatpush1.msra.mxu0 0.0
  %7121 = vmatprep.subr.mxu0 0.0
  %7122 = vmatpush1.msra.mxu0 0.0
  %7123 = vmatprep.subr.mxu0 0.0
  %7124 = vmatpush1.msra.mxu0 0.0
  %7125 = vmatprep.subr.mxu0 0.0
  %7126 = vmatpush1.msra.mxu0 0.0
  %7127 = vmatprep.subr.mxu0 0.0
  %7128 = vmatpush1.msra.mxu0 0.0
  %7129 = vmatprep.subr.mxu0 0.0
  %7130 = vmatpush1.msra.mxu0 0.0
  %7131 = vmatprep.subr.mxu0 0.0
  %7132 = vmatpush1.msra.mxu0 0.0
  %7133 = vmatprep.subr.mxu0 0.0
  %7134 = vmatpush1.msra.mxu0 0.0
  %7135 = vmatprep.subr.mxu0 0.0
  %7136 = vmatpush1.msra.mxu0 %v7103
  %7137 = vmatprep.subr.mxu0 0.0
  %7138 = vmatpush2.msra.mxu0 0.0
  %7139 = vmatprep.subr.mxu0 0.0
  %7140 = vmatpush2.msra.mxu0 0.0
  %7141 = vmatprep.subr.mxu0 0.0
  %7142 = vmatpush2.msra.mxu0 0.0
  %7143 = vmatprep.subr.mxu0 0.0
  %7144 = vmatpush2.msra.mxu0 0.0
  %7145 = vmatprep.subr.mxu0 0.0
  %7146 = vmatpush2.msra.mxu0 0.0
  %7147 = vmatprep.subr.mxu0 0.0
  %7148 = vmatpush2.msra.mxu0 0.0
  %7149 = vmatprep.subr.mxu0 0.0
  %7150 = vmatpush2.msra.mxu0 0.0
  %7151 = vmatprep.subr.mxu0 0.0
  %7152 = vmatpush2.msra.mxu0 0.0
  %7153 = vmatprep.subr.mxu0 0.0
  %7154 = vmatpush2.msra.mxu0 0.0
  %7155 = vmatprep.subr.mxu0 0.0
  %7156 = vmatpush2.msra.mxu0 0.0
  %7157 = vmatprep.subr.mxu0 0.0
  %7158 = vmatpush2.msra.mxu0 0.0
  %7159 = vmatprep.subr.mxu0 0.0
  %7160 = vmatpush2.msra.mxu0 0.0
  %7161 = vmatprep.subr.mxu0 0.0
  %7162 = vmatpush2.msra.mxu0 0.0
  %7163 = vmatprep.subr.mxu0 0.0
  %7164 = vmatpush2.msra.mxu0 0.0
  %7165 = vmatprep.subr.mxu0 0.0
  %7166 = vmatpush2.msra.mxu0 0.0
  %7167 = vmatprep.subr.mxu0 0.0
  %7168 = vmatpush2.msra.mxu0 0.0
  %7169 = vmatprep.mubr.f32.mxu0 0.0
  %7170 = vmatmul.mubr.f32.gmra.mxu0 %v2510
  %v7171 = vpop.f32.mrf.mxu0
  %v7172 = vadd.f32 0.0, %v7171
  %v7173 = vpop.f32.mrf.mxu0
  %7174 = vmatprep.mubr.f32.mxu0 0.0
  %7175 = vmatmul.mubr.f32.gmra.mxu0 %v2513
  %v7176 = vpop.f32.mrf.mxu0
  %v7177 = vadd.f32 0.0, %v7176
  %v7178 = vpop.f32.mrf.mxu0
  %7179 = vdwg.mxu0
  %7181 = vset.pattern.permute.xlu0 0
  %7182 = vperm.xlu0 %7181, %v7172
  %v7183 = vpop.permute.xlu0 %7182
  %7186 = vset.pattern.permute.xlu0 0
  %7187 = vperm.xlu0 %7186, %v7177
  %v7188 = vpop.permute.xlu0 %7187
  %v7190 = vsub.f32 %v7023, %v7183
  %v7191 = vsub.f32 %v7024, %v7188
  %v7192 = vmul.f32 %v7190, %v7190
  %v7193 = vmul.f32 %v7191, %v7191
  %v7195 = vsel %vm1163, %v7193, 0
  %7197 = vmatprep.subr.mxu0 0.0
  %7198 = vmatpush1.msra.mxu0 0.0
  %7199 = vmatprep.subr.mxu0 0.0
  %7200 = vmatpush1.msra.mxu0 0.0
  %7201 = vmatprep.subr.mxu0 0.0
  %7202 = vmatpush1.msra.mxu0 0.0
  %7203 = vmatprep.subr.mxu0 0.0
  %7204 = vmatpush1.msra.mxu0 0.0
  %7205 = vmatprep.subr.mxu0 0.0
  %7206 = vmatpush1.msra.mxu0 0.0
  %7207 = vmatprep.subr.mxu0 0.0
  %7208 = vmatpush1.msra.mxu0 0.0
  %7209 = vmatprep.subr.mxu0 0.0
  %7210 = vmatpush1.msra.mxu0 0.0
  %7211 = vmatprep.subr.mxu0 0.0
  %7212 = vmatpush1.msra.mxu0 0.0
  %7213 = vmatprep.subr.mxu0 0.0
  %7214 = vmatpush1.msra.mxu0 0.0
  %7215 = vmatprep.subr.mxu0 0.0
  %7216 = vmatpush1.msra.mxu0 0.0
  %7217 = vmatprep.subr.mxu0 0.0
  %7218 = vmatpush1.msra.mxu0 0.0
  %7219 = vmatprep.subr.mxu0 0.0
  %7220 = vmatpush1.msra.mxu0 0.0
  %7221 = vmatprep.subr.mxu0 0.0
  %7222 = vmatpush1.msra.mxu0 0.0
  %7223 = vmatprep.subr.mxu0 0.0
  %7224 = vmatpush1.msra.mxu0 0.0
  %7225 = vmatprep.subr.mxu0 0.0
  %7226 = vmatpush1.msra.mxu0 %v7195
  %7227 = vmatprep.subr.mxu0 0.0
  %7228 = vmatpush1.msra.mxu0 %v7192
  %7229 = vmatprep.subr.mxu0 0.0
  %7230 = vmatpush2.msra.mxu0 0.0
  %7231 = vmatprep.subr.mxu0 0.0
  %7232 = vmatpush2.msra.mxu0 0.0
  %7233 = vmatprep.subr.mxu0 0.0
  %7234 = vmatpush2.msra.mxu0 0.0
  %7235 = vmatprep.subr.mxu0 0.0
  %7236 = vmatpush2.msra.mxu0 0.0
  %7237 = vmatprep.subr.mxu0 0.0
  %7238 = vmatpush2.msra.mxu0 0.0
  %7239 = vmatprep.subr.mxu0 0.0
  %7240 = vmatpush2.msra.mxu0 0.0
  %7241 = vmatprep.subr.mxu0 0.0
  %7242 = vmatpush2.msra.mxu0 0.0
  %7243 = vmatprep.subr.mxu0 0.0
  %7244 = vmatpush2.msra.mxu0 0.0
  %7245 = vmatprep.subr.mxu0 0.0
  %7246 = vmatpush2.msra.mxu0 0.0
  %7247 = vmatprep.subr.mxu0 0.0
  %7248 = vmatpush2.msra.mxu0 0.0
  %7249 = vmatprep.subr.mxu0 0.0
  %7250 = vmatpush2.msra.mxu0 0.0
  %7251 = vmatprep.subr.mxu0 0.0
  %7252 = vmatpush2.msra.mxu0 0.0
  %7253 = vmatprep.subr.mxu0 0.0
  %7254 = vmatpush2.msra.mxu0 0.0
  %7255 = vmatprep.subr.mxu0 0.0
  %7256 = vmatpush2.msra.mxu0 0.0
  %7257 = vmatprep.subr.mxu0 0.0
  %7258 = vmatpush2.msra.mxu0 0.0
  %7259 = vmatprep.subr.mxu0 0.0
  %7260 = vmatpush2.msra.mxu0 0.0
  %7261 = vmatprep.mubr.f32.mxu0 0.0
  %7262 = vmatmul.mubr.f32.gmra.mxu0 %v2429
  %v7263 = vpop.f32.mrf.mxu0
  %v7264 = vadd.f32 0.0, %v7263
  %v7265 = vpop.f32.mrf.mxu0
  %7266 = vdwg.mxu0
  %v7267 = vsel %vm2504, %v7264, 0.0
  %7268 = vadd.xlane.f32.xlu0 %v7267
  %v7269 = vpop.xlane.xlu0 %7268
  %v7270 = vmul.f32 %v7269, %v243
  %v7271 = vadd.f32 %v7270, 1e-05
  %v7272 = vrsqrt.pop %v7271
  %v7274 = vsel %vm469, %v7272, 0
  %7276 = vmatprep.subr.mxu0 0.0
  %7277 = vmatpush1.msra.mxu0 0.0
  %7278 = vmatprep.subr.mxu0 0.0
  %7279 = vmatpush1.msra.mxu0 0.0
  %7280 = vmatprep.subr.mxu0 0.0
  %7281 = vmatpush1.msra.mxu0 0.0
  %7282 = vmatprep.subr.mxu0 0.0
  %7283 = vmatpush1.msra.mxu0 0.0
  %7284 = vmatprep.subr.mxu0 0.0
  %7285 = vmatpush1.msra.mxu0 0.0
  %7286 = vmatprep.subr.mxu0 0.0
  %7287 = vmatpush1.msra.mxu0 0.0
  %7288 = vmatprep.subr.mxu0 0.0
  %7289 = vmatpush1.msra.mxu0 0.0
  %7290 = vmatprep.subr.mxu0 0.0
  %7291 = vmatpush1.msra.mxu0 0.0
  %7292 = vmatprep.subr.mxu0 0.0
  %7293 = vmatpush1.msra.mxu0 0.0
  %7294 = vmatprep.subr.mxu0 0.0
  %7295 = vmatpush1.msra.mxu0 0.0
  %7296 = vmatprep.subr.mxu0 0.0
  %7297 = vmatpush1.msra.mxu0 0.0
  %7298 = vmatprep.subr.mxu0 0.0
  %7299 = vmatpush1.msra.mxu0 0.0
  %7300 = vmatprep.subr.mxu0 0.0
  %7301 = vmatpush1.msra.mxu0 0.0
  %7302 = vmatprep.subr.mxu0 0.0
  %7303 = vmatpush1.msra.mxu0 0.0
  %7304 = vmatprep.subr.mxu0 0.0
  %7305 = vmatpush1.msra.mxu0 0.0
  %7306 = vmatprep.subr.mxu0 0.0
  %7307 = vmatpush1.msra.mxu0 %v7274
  %7308 = vmatprep.subr.mxu0 0.0
  %7309 = vmatpush2.msra.mxu0 0.0
  %7310 = vmatprep.subr.mxu0 0.0
  %7311 = vmatpush2.msra.mxu0 0.0
  %7312 = vmatprep.subr.mxu0 0.0
  %7313 = vmatpush2.msra.mxu0 0.0
  %7314 = vmatprep.subr.mxu0 0.0
  %7315 = vmatpush2.msra.mxu0 0.0
  %7316 = vmatprep.subr.mxu0 0.0
  %7317 = vmatpush2.msra.mxu0 0.0
  %7318 = vmatprep.subr.mxu0 0.0
  %7319 = vmatpush2.msra.mxu0 0.0
  %7320 = vmatprep.subr.mxu0 0.0
  %7321 = vmatpush2.msra.mxu0 0.0
  %7322 = vmatprep.subr.mxu0 0.0
  %7323 = vmatpush2.msra.mxu0 0.0
  %7324 = vmatprep.subr.mxu0 0.0
  %7325 = vmatpush2.msra.mxu0 0.0
  %7326 = vmatprep.subr.mxu0 0.0
  %7327 = vmatpush2.msra.mxu0 0.0
  %7328 = vmatprep.subr.mxu0 0.0
  %7329 = vmatpush2.msra.mxu0 0.0
  %7330 = vmatprep.subr.mxu0 0.0
  %7331 = vmatpush2.msra.mxu0 0.0
  %7332 = vmatprep.subr.mxu0 0.0
  %7333 = vmatpush2.msra.mxu0 0.0
  %7334 = vmatprep.subr.mxu0 0.0
  %7335 = vmatpush2.msra.mxu0 0.0
  %7336 = vmatprep.subr.mxu0 0.0
  %7337 = vmatpush2.msra.mxu0 0.0
  %7338 = vmatprep.subr.mxu0 0.0
  %7339 = vmatpush2.msra.mxu0 0.0
  %7340 = vmatprep.mubr.f32.mxu0 0.0
  %7341 = vmatmul.mubr.f32.gmra.mxu0 %v2510
  %v7342 = vpop.f32.mrf.mxu0
  %v7343 = vadd.f32 0.0, %v7342
  %v7344 = vpop.f32.mrf.mxu0
  %7345 = vmatprep.mubr.f32.mxu0 0.0
  %7346 = vmatmul.mubr.f32.gmra.mxu0 %v2513
  %v7347 = vpop.f32.mrf.mxu0
  %v7348 = vadd.f32 0.0, %v7347
  %v7349 = vpop.f32.mrf.mxu0
  %7350 = vdwg.mxu0
  %7352 = vset.pattern.permute.xlu0 0
  %7353 = vperm.xlu0 %7352, %v7343
  %v7354 = vpop.permute.xlu0 %7353
  %7357 = vset.pattern.permute.xlu0 0
  %7358 = vperm.xlu0 %7357, %v7348
  %v7359 = vpop.permute.xlu0 %7358
  %v7361 = vmul.f32 %v7190, %v7354
  %v7362 = vmul.f32 %v7191, %v7359
  %7363 = vxpose.xlu0.b32.start [1/16] %v853, 128
  %7364 = vxpose.xlu0.b32.cont [2/16] %v854, 128
  %7365 = vxpose.xlu0.b32.cont [3/16] 0.0, 128
  %7366 = vxpose.xlu0.b32.cont [4/16] 0.0, 128
  %7367 = vxpose.xlu0.b32.cont [5/16] 0.0, 128
  %7368 = vxpose.xlu0.b32.cont [6/16] 0.0, 128
  %7369 = vxpose.xlu0.b32.cont [7/16] 0.0, 128
  %7370 = vxpose.xlu0.b32.cont [8/16] 0.0, 128
  %7371 = vxpose.xlu0.b32.cont [9/16] 0.0, 128
  %7372 = vxpose.xlu0.b32.cont [10/16] 0.0, 128
  %7373 = vxpose.xlu0.b32.cont [11/16] 0.0, 128
  %7374 = vxpose.xlu0.b32.cont [12/16] 0.0, 128
  %7375 = vxpose.xlu0.b32.cont [13/16] 0.0, 128
  %7376 = vxpose.xlu0.b32.cont [14/16] 0.0, 128
  %7377 = vxpose.xlu0.b32.cont [15/16] 0.0, 128
  %7378 = vxpose.xlu0.b32.end [16/16] 0.0, 128
  %v7379 = vpop.trf.xlu0
  %v7380 = vpop.trf.xlu0
  %v7381 = vpop.trf.xlu0
  %v7382 = vpop.trf.xlu0
  %v7383 = vpop.trf.xlu0
  %v7384 = vpop.trf.xlu0
  %v7385 = vpop.trf.xlu0
  %v7386 = vpop.trf.xlu0
  %v7387 = vpop.trf.xlu0
  %v7388 = vpop.trf.xlu0
  %v7389 = vpop.trf.xlu0
  %v7390 = vpop.trf.xlu0
  %v7391 = vpop.trf.xlu0
  %v7392 = vpop.trf.xlu0
  %v7393 = vpop.trf.xlu0
  %v7394 = vpop.trf.xlu0
  %v7396 = vsel %vm1147, %v7379, 0
  %v7399 = vsel %vm1163, %v7362, 0
  %7401 = vmatprep.subr.mxu0 0.0
  %7402 = vmatpush1.msra.mxu0 0.0
  %7403 = vmatprep.subr.mxu0 0.0
  %7404 = vmatpush1.msra.mxu0 0.0
  %7405 = vmatprep.subr.mxu0 0.0
  %7406 = vmatpush1.msra.mxu0 0.0
  %7407 = vmatprep.subr.mxu0 0.0
  %7408 = vmatpush1.msra.mxu0 0.0
  %7409 = vmatprep.subr.mxu0 0.0
  %7410 = vmatpush1.msra.mxu0 0.0
  %7411 = vmatprep.subr.mxu0 0.0
  %7412 = vmatpush1.msra.mxu0 0.0
  %7413 = vmatprep.subr.mxu0 0.0
  %7414 = vmatpush1.msra.mxu0 0.0
  %7415 = vmatprep.subr.mxu0 0.0
  %7416 = vmatpush1.msra.mxu0 0.0
  %7417 = vmatprep.subr.mxu0 0.0
  %7418 = vmatpush1.msra.mxu0 0.0
  %7419 = vmatprep.subr.mxu0 0.0
  %7420 = vmatpush1.msra.mxu0 0.0
  %7421 = vmatprep.subr.mxu0 0.0
  %7422 = vmatpush1.msra.mxu0 0.0
  %7423 = vmatprep.subr.mxu0 0.0
  %7424 = vmatpush1.msra.mxu0 0.0
  %7425 = vmatprep.subr.mxu0 0.0
  %7426 = vmatpush1.msra.mxu0 0.0
  %7427 = vmatprep.subr.mxu0 0.0
  %7428 = vmatpush1.msra.mxu0 0.0
  %7429 = vmatprep.subr.mxu0 0.0
  %7430 = vmatpush1.msra.mxu0 %v7399
  %7431 = vmatprep.subr.mxu0 0.0
  %7432 = vmatpush1.msra.mxu0 %v7361
  %7433 = vmatprep.subr.mxu0 0.0
  %7434 = vmatpush2.msra.mxu0 0.0
  %7435 = vmatprep.subr.mxu0 0.0
  %7436 = vmatpush2.msra.mxu0 0.0
  %7437 = vmatprep.subr.mxu0 0.0
  %7438 = vmatpush2.msra.mxu0 0.0
  %7439 = vmatprep.subr.mxu0 0.0
  %7440 = vmatpush2.msra.mxu0 0.0
  %7441 = vmatprep.subr.mxu0 0.0
  %7442 = vmatpush2.msra.mxu0 0.0
  %7443 = vmatprep.subr.mxu0 0.0
  %7444 = vmatpush2.msra.mxu0 0.0
  %7445 = vmatprep.subr.mxu0 0.0
  %7446 = vmatpush2.msra.mxu0 0.0
  %7447 = vmatprep.subr.mxu0 0.0
  %7448 = vmatpush2.msra.mxu0 0.0
  %7449 = vmatprep.subr.mxu0 0.0
  %7450 = vmatpush2.msra.mxu0 0.0
  %7451 = vmatprep.subr.mxu0 0.0
  %7452 = vmatpush2.msra.mxu0 0.0
  %7453 = vmatprep.subr.mxu0 0.0
  %7454 = vmatpush2.msra.mxu0 0.0
  %7455 = vmatprep.subr.mxu0 0.0
  %7456 = vmatpush2.msra.mxu0 0.0
  %7457 = vmatprep.subr.mxu0 0.0
  %7458 = vmatpush2.msra.mxu0 0.0
  %7459 = vmatprep.subr.mxu0 0.0
  %7460 = vmatpush2.msra.mxu0 0.0
  %7461 = vmatprep.subr.mxu0 0.0
  %7462 = vmatpush2.msra.mxu0 0.0
  %7463 = vmatprep.subr.mxu0 0.0
  %7464 = vmatpush2.msra.mxu0 0.0
  %7465 = vmatprep.mubr.f32.mxu0 0.0
  %7466 = vmatmul.mubr.f32.gmra.mxu0 %v7396
  %v7467 = vpop.f32.mrf.mxu0
  %v7468 = vadd.f32 0.0, %v7467
  %v7469 = vpop.f32.mrf.mxu0
  %7470 = vdwg.mxu0
  %7471 = vxpose.xlu0.b32.start [1/16] %v855, 128
  %7472 = vxpose.xlu0.b32.cont [2/16] %v856, 128
  %7473 = vxpose.xlu0.b32.cont [3/16] 0.0, 128
  %7474 = vxpose.xlu0.b32.cont [4/16] 0.0, 128
  %7475 = vxpose.xlu0.b32.cont [5/16] 0.0, 128
  %7476 = vxpose.xlu0.b32.cont [6/16] 0.0, 128
  %7477 = vxpose.xlu0.b32.cont [7/16] 0.0, 128
  %7478 = vxpose.xlu0.b32.cont [8/16] 0.0, 128
  %7479 = vxpose.xlu0.b32.cont [9/16] 0.0, 128
  %7480 = vxpose.xlu0.b32.cont [10/16] 0.0, 128
  %7481 = vxpose.xlu0.b32.cont [11/16] 0.0, 128
  %7482 = vxpose.xlu0.b32.cont [12/16] 0.0, 128
  %7483 = vxpose.xlu0.b32.cont [13/16] 0.0, 128
  %7484 = vxpose.xlu0.b32.cont [14/16] 0.0, 128
  %7485 = vxpose.xlu0.b32.cont [15/16] 0.0, 128
  %7486 = vxpose.xlu0.b32.end [16/16] 0.0, 128
  %v7487 = vpop.trf.xlu0
  %v7488 = vpop.trf.xlu0
  %v7489 = vpop.trf.xlu0
  %v7490 = vpop.trf.xlu0
  %v7491 = vpop.trf.xlu0
  %v7492 = vpop.trf.xlu0
  %v7493 = vpop.trf.xlu0
  %v7494 = vpop.trf.xlu0
  %v7495 = vpop.trf.xlu0
  %v7496 = vpop.trf.xlu0
  %v7497 = vpop.trf.xlu0
  %v7498 = vpop.trf.xlu0
  %v7499 = vpop.trf.xlu0
  %v7500 = vpop.trf.xlu0
  %v7501 = vpop.trf.xlu0
  %v7502 = vpop.trf.xlu0
  %v7504 = vsel %vm1147, %v7487, 0
  %7506 = vmatprep.subr.mxu0 0.0
  %7507 = vmatpush1.msra.mxu0 0.0
  %7508 = vmatprep.subr.mxu0 0.0
  %7509 = vmatpush1.msra.mxu0 0.0
  %7510 = vmatprep.subr.mxu0 0.0
  %7511 = vmatpush1.msra.mxu0 0.0
  %7512 = vmatprep.subr.mxu0 0.0
  %7513 = vmatpush1.msra.mxu0 0.0
  %7514 = vmatprep.subr.mxu0 0.0
  %7515 = vmatpush1.msra.mxu0 0.0
  %7516 = vmatprep.subr.mxu0 0.0
  %7517 = vmatpush1.msra.mxu0 0.0
  %7518 = vmatprep.subr.mxu0 0.0
  %7519 = vmatpush1.msra.mxu0 0.0
  %7520 = vmatprep.subr.mxu0 0.0
  %7521 = vmatpush1.msra.mxu0 0.0
  %7522 = vmatprep.subr.mxu0 0.0
  %7523 = vmatpush1.msra.mxu0 0.0
  %7524 = vmatprep.subr.mxu0 0.0
  %7525 = vmatpush1.msra.mxu0 0.0
  %7526 = vmatprep.subr.mxu0 0.0
  %7527 = vmatpush1.msra.mxu0 0.0
  %7528 = vmatprep.subr.mxu0 0.0
  %7529 = vmatpush1.msra.mxu0 0.0
  %7530 = vmatprep.subr.mxu0 0.0
  %7531 = vmatpush1.msra.mxu0 0.0
  %7532 = vmatprep.subr.mxu0 0.0
  %7533 = vmatpush1.msra.mxu0 0.0
  %7534 = vmatprep.subr.mxu0 0.0
  %7535 = vmatpush1.msra.mxu0 %v7399
  %7536 = vmatprep.subr.mxu0 0.0
  %7537 = vmatpush1.msra.mxu0 %v7361
  %7538 = vmatprep.subr.mxu0 0.0
  %7539 = vmatpush2.msra.mxu0 0.0
  %7540 = vmatprep.subr.mxu0 0.0
  %7541 = vmatpush2.msra.mxu0 0.0
  %7542 = vmatprep.subr.mxu0 0.0
  %7543 = vmatpush2.msra.mxu0 0.0
  %7544 = vmatprep.subr.mxu0 0.0
  %7545 = vmatpush2.msra.mxu0 0.0
  %7546 = vmatprep.subr.mxu0 0.0
  %7547 = vmatpush2.msra.mxu0 0.0
  %7548 = vmatprep.subr.mxu0 0.0
  %7549 = vmatpush2.msra.mxu0 0.0
  %7550 = vmatprep.subr.mxu0 0.0
  %7551 = vmatpush2.msra.mxu0 0.0
  %7552 = vmatprep.subr.mxu0 0.0
  %7553 = vmatpush2.msra.mxu0 0.0
  %7554 = vmatprep.subr.mxu0 0.0
  %7555 = vmatpush2.msra.mxu0 0.0
  %7556 = vmatprep.subr.mxu0 0.0
  %7557 = vmatpush2.msra.mxu0 0.0
  %7558 = vmatprep.subr.mxu0 0.0
  %7559 = vmatpush2.msra.mxu0 0.0
  %7560 = vmatprep.subr.mxu0 0.0
  %7561 = vmatpush2.msra.mxu0 0.0
  %7562 = vmatprep.subr.mxu0 0.0
  %7563 = vmatpush2.msra.mxu0 0.0
  %7564 = vmatprep.subr.mxu0 0.0
  %7565 = vmatpush2.msra.mxu0 0.0
  %7566 = vmatprep.subr.mxu0 0.0
  %7567 = vmatpush2.msra.mxu0 0.0
  %7568 = vmatprep.subr.mxu0 0.0
  %7569 = vmatpush2.msra.mxu0 0.0
  %7570 = vmatprep.mubr.f32.mxu0 0.0
  %7571 = vmatmul.mubr.f32.gmra.mxu0 %v7504
  %v7572 = vpop.f32.mrf.mxu0
  %v7573 = vadd.f32 0.0, %v7572
  %v7574 = vpop.f32.mrf.mxu0
  %7575 = vdwg.mxu0
  %v7576 = vld [vmem:[%s25] sm:$0x7f]
  %v7578 = vsel %vm857, %v7576, 0
  %7580 = vmatprep.subr.mxu0 0.0
  %7581 = vmatpush1.msra.mxu0 0.0
  %7582 = vmatprep.subr.mxu0 0.0
  %7583 = vmatpush1.msra.mxu0 0.0
  %7584 = vmatprep.subr.mxu0 0.0
  %7585 = vmatpush1.msra.mxu0 0.0
  %7586 = vmatprep.subr.mxu0 0.0
  %7587 = vmatpush1.msra.mxu0 0.0
  %7588 = vmatprep.subr.mxu0 0.0
  %7589 = vmatpush1.msra.mxu0 0.0
  %7590 = vmatprep.subr.mxu0 0.0
  %7591 = vmatpush1.msra.mxu0 0.0
  %7592 = vmatprep.subr.mxu0 0.0
  %7593 = vmatpush1.msra.mxu0 0.0
  %7594 = vmatprep.subr.mxu0 0.0
  %7595 = vmatpush1.msra.mxu0 0.0
  %7596 = vmatprep.subr.mxu0 0.0
  %7597 = vmatpush1.msra.mxu0 0.0
  %7598 = vmatprep.subr.mxu0 0.0
  %7599 = vmatpush1.msra.mxu0 0.0
  %7600 = vmatprep.subr.mxu0 0.0
  %7601 = vmatpush1.msra.mxu0 0.0
  %7602 = vmatprep.subr.mxu0 0.0
  %7603 = vmatpush1.msra.mxu0 0.0
  %7604 = vmatprep.subr.mxu0 0.0
  %7605 = vmatpush1.msra.mxu0 0.0
  %7606 = vmatprep.subr.mxu0 0.0
  %7607 = vmatpush1.msra.mxu0 0.0
  %7608 = vmatprep.subr.mxu0 0.0
  %7609 = vmatpush1.msra.mxu0 0.0
  %7610 = vmatprep.subr.mxu0 0.0
  %7611 = vmatpush1.msra.mxu0 %v865
  %7612 = vmatprep.subr.mxu0 0.0
  %7613 = vmatpush2.msra.mxu0 0.0
  %7614 = vmatprep.subr.mxu0 0.0
  %7615 = vmatpush2.msra.mxu0 0.0
  %7616 = vmatprep.subr.mxu0 0.0
  %7617 = vmatpush2.msra.mxu0 0.0
  %7618 = vmatprep.subr.mxu0 0.0
  %7619 = vmatpush2.msra.mxu0 0.0
  %7620 = vmatprep.subr.mxu0 0.0
  %7621 = vmatpush2.msra.mxu0 0.0
  %7622 = vmatprep.subr.mxu0 0.0
  %7623 = vmatpush2.msra.mxu0 0.0
  %7624 = vmatprep.subr.mxu0 0.0
  %7625 = vmatpush2.msra.mxu0 0.0
  %7626 = vmatprep.subr.mxu0 0.0
  %7627 = vmatpush2.msra.mxu0 0.0
  %7628 = vmatprep.subr.mxu0 0.0
  %7629 = vmatpush2.msra.mxu0 0.0
  %7630 = vmatprep.subr.mxu0 0.0
  %7631 = vmatpush2.msra.mxu0 0.0
  %7632 = vmatprep.subr.mxu0 0.0
  %7633 = vmatpush2.msra.mxu0 0.0
  %7634 = vmatprep.subr.mxu0 0.0
  %7635 = vmatpush2.msra.mxu0 0.0
  %7636 = vmatprep.subr.mxu0 0.0
  %7637 = vmatpush2.msra.mxu0 0.0
  %7638 = vmatprep.subr.mxu0 0.0
  %7639 = vmatpush2.msra.mxu0 0.0
  %7640 = vmatprep.subr.mxu0 0.0
  %7641 = vmatpush2.msra.mxu0 0.0
  %7642 = vmatprep.subr.mxu0 0.0
  %7643 = vmatpush2.msra.mxu0 0.0
  %7644 = vmatprep.mubr.f32.mxu0 0.0
  %7645 = vmatmul.mubr.f32.gmra.mxu0 %v7578
  %v7646 = vpop.f32.mrf.mxu0
  %v7647 = vadd.f32 0.0, %v7646
  %v7648 = vpop.f32.mrf.mxu0
  %7649 = vdwg.mxu0
  %v7650 = vld [vmem:[%s91] sm:$0xf]
  %v7651 = vld [vmem:[%s91 + $0x4] sm:$0xf]
  %v7652 = vld [vmem:[%s91 + $0x8] sm:$0xf]
  %v7653 = vld [vmem:[%s91 + $0xc] sm:$0xf]
  %v7654 = vpack.c.bf16 %v7468, %v7468
  %v7655 = vld [vmem:[%s93] sm:$0xf]
  %v7656 = vld [vmem:[%s93 + $0x4] sm:$0xf]
  %v7657 = vld [vmem:[%s93 + $0x8] sm:$0xf]
  %v7658 = vld [vmem:[%s93 + $0xc] sm:$0xf]
  %v7659 = vpack.c.bf16 %v7647, %v7647
  %v7664 = vunpack.c.l.b16 %v7655
  %v7665 = vunpack.c.l.b16 %v7656
  %v7666 = vunpack.c.l.b16 %v7657
  %v7667 = vunpack.c.l.b16 %v7658
  %v7668 = vpack.c.b16 %v7665, %v7664
  %v7669 = vpack.c.b16 %v7667, %v7666
  %v7673 = vsel %vm335, %v7659, 0
  %7675 = vmatprep.subr.bf16.mxu0 0
  %7676 = vmatpush1.bf16.msra.mxu0 0
  %7677 = vmatprep.subr.bf16.mxu0 0
  %7678 = vmatpush1.bf16.msra.mxu0 0
  %7679 = vmatprep.subr.bf16.mxu0 0
  %7680 = vmatpush1.bf16.msra.mxu0 0
  %7681 = vmatprep.subr.bf16.mxu0 0
  %7682 = vmatpush1.bf16.msra.mxu0 0
  %7683 = vmatprep.subr.bf16.mxu0 0
  %7684 = vmatpush1.bf16.msra.mxu0 0
  %7685 = vmatprep.subr.bf16.mxu0 0
  %7686 = vmatpush1.bf16.msra.mxu0 0
  %7687 = vmatprep.subr.bf16.mxu0 0
  %7688 = vmatpush1.bf16.msra.mxu0 %v7669
  %7689 = vmatprep.subr.bf16.mxu0 0
  %7690 = vmatpush1.bf16.msra.mxu0 %v7668
  %7691 = vmatprep.subr.bf16.mxu0 0
  %7692 = vmatpush2.bf16.msra.mxu0 0
  %7693 = vmatprep.subr.bf16.mxu0 0
  %7694 = vmatpush2.bf16.msra.mxu0 0
  %7695 = vmatprep.subr.bf16.mxu0 0
  %7696 = vmatpush2.bf16.msra.mxu0 0
  %7697 = vmatprep.subr.bf16.mxu0 0
  %7698 = vmatpush2.bf16.msra.mxu0 0
  %7699 = vmatprep.subr.bf16.mxu0 0
  %7700 = vmatpush2.bf16.msra.mxu0 0
  %7701 = vmatprep.subr.bf16.mxu0 0
  %7702 = vmatpush2.bf16.msra.mxu0 0
  %7703 = vmatprep.subr.bf16.mxu0 0
  %7704 = vmatpush2.bf16.msra.mxu0 0
  %7705 = vmatprep.subr.bf16.mxu0 0
  %7706 = vmatpush2.bf16.msra.mxu0 0
  %7707 = vmatprep.mubr.bf16.mxu0 0
  %7708 = vmatmul.mubr.bf16.gmra.mxu0 %v7673
  %v7709 = vpop.f32.mrf.mxu0
  %v7710 = vadd.f32 0.0, %v7709
  %v7711 = vpop.f32.mrf.mxu0
  %v7712 = vpop.f32.mrf.mxu0
  %v7713 = vpop.f32.mrf.mxu0
  %7714 = vdwg.mxu0
  %v7719 = vunpack.c.l.b16 %v7650
  %v7720 = vunpack.c.l.b16 %v7651
  %v7721 = vunpack.c.l.b16 %v7652
  %v7722 = vunpack.c.l.b16 %v7653
  %v7723 = vpack.c.b16 %v7720, %v7719
  %v7724 = vpack.c.b16 %v7722, %v7721
  %v7728 = vsel %vm335, %v7654, 0
  %7730 = vmatprep.subr.bf16.mxu0 0
  %7731 = vmatpush1.bf16.msra.mxu0 0
  %7732 = vmatprep.subr.bf16.mxu0 0
  %7733 = vmatpush1.bf16.msra.mxu0 0
  %7734 = vmatprep.subr.bf16.mxu0 0
  %7735 = vmatpush1.bf16.msra.mxu0 0
  %7736 = vmatprep.subr.bf16.mxu0 0
  %7737 = vmatpush1.bf16.msra.mxu0 0
  %7738 = vmatprep.subr.bf16.mxu0 0
  %7739 = vmatpush1.bf16.msra.mxu0 0
  %7740 = vmatprep.subr.bf16.mxu0 0
  %7741 = vmatpush1.bf16.msra.mxu0 0
  %7742 = vmatprep.subr.bf16.mxu0 0
  %7743 = vmatpush1.bf16.msra.mxu0 %v7724
  %7744 = vmatprep.subr.bf16.mxu0 0
  %7745 = vmatpush1.bf16.msra.mxu0 %v7723
  %7746 = vmatprep.subr.bf16.mxu0 0
  %7747 = vmatpush2.bf16.msra.mxu0 0
  %7748 = vmatprep.subr.bf16.mxu0 0
  %7749 = vmatpush2.bf16.msra.mxu0 0
  %7750 = vmatprep.subr.bf16.mxu0 0
  %7751 = vmatpush2.bf16.msra.mxu0 0
  %7752 = vmatprep.subr.bf16.mxu0 0
  %7753 = vmatpush2.bf16.msra.mxu0 0
  %7754 = vmatprep.subr.bf16.mxu0 0
  %7755 = vmatpush2.bf16.msra.mxu0 0
  %7756 = vmatprep.subr.bf16.mxu0 0
  %7757 = vmatpush2.bf16.msra.mxu0 0
  %7758 = vmatprep.subr.bf16.mxu0 0
  %7759 = vmatpush2.bf16.msra.mxu0 0
  %7760 = vmatprep.subr.bf16.mxu0 0
  %7761 = vmatpush2.bf16.msra.mxu0 0
  %7762 = vmatprep.mubr.bf16.mxu0 0
  %7763 = vmatmul.mubr.bf16.gmra.mxu0 %v7728
  %v7764 = vpop.f32.mrf.mxu0
  %v7765 = vadd.f32 %v7710, %v7764
  %v7766 = vpop.f32.mrf.mxu0
  %v7767 = vpop.f32.mrf.mxu0
  %v7768 = vpop.f32.mrf.mxu0
  %7769 = vdwg.mxu0
  %v7770 = vld [vmem:[%s95] sm:$0x1]
  %v7772 = vlaneseq
  %v7773 = vshrl.u32 %v7772, 7
  %v7774 = vsub.s32 0, %v7773
  %v7775 = vrot.slane %v7770, %v7774
  %v7777 = vadd.f32 %v7765, %v7775
  %7778 = vst [vmem:[%s107] sm:$0x7f] %v7777
  %v7779 = vld [vmem:[%s31] sm:$0x7]
  %v7780 = vld [vmem:[%s97] sm:$0x1]
  %v7782 = vlaneseq
  %v7783 = vshrl.u32 %v7782, 7
  %v7784 = vsub.s32 0, %v7783
  %v7785 = vrot.slane %v7780, %v7784
  %v7788 = vsel %vm942, %v7779, 0
  %v7791 = vsel %vm949, %v7777, 0
  %7793 = vmatprep.subr.mxu0 0.0
  %7794 = vmatpush1.msra.mxu0 0.0
  %7795 = vmatprep.subr.mxu0 0.0
  %7796 = vmatpush1.msra.mxu0 0.0
  %7797 = vmatprep.subr.mxu0 0.0
  %7798 = vmatpush1.msra.mxu0 0.0
  %7799 = vmatprep.subr.mxu0 0.0
  %7800 = vmatpush1.msra.mxu0 0.0
  %7801 = vmatprep.subr.mxu0 0.0
  %7802 = vmatpush1.msra.mxu0 0.0
  %7803 = vmatprep.subr.mxu0 0.0
  %7804 = vmatpush1.msra.mxu0 0.0
  %7805 = vmatprep.subr.mxu0 0.0
  %7806 = vmatpush1.msra.mxu0 0.0
  %7807 = vmatprep.subr.mxu0 0.0
  %7808 = vmatpush1.msra.mxu0 0.0
  %7809 = vmatprep.subr.mxu0 0.0
  %7810 = vmatpush1.msra.mxu0 0.0
  %7811 = vmatprep.subr.mxu0 0.0
  %7812 = vmatpush1.msra.mxu0 0.0
  %7813 = vmatprep.subr.mxu0 0.0
  %7814 = vmatpush1.msra.mxu0 0.0
  %7815 = vmatprep.subr.mxu0 0.0
  %7816 = vmatpush1.msra.mxu0 0.0
  %7817 = vmatprep.subr.mxu0 0.0
  %7818 = vmatpush1.msra.mxu0 0.0
  %7819 = vmatprep.subr.mxu0 0.0
  %7820 = vmatpush1.msra.mxu0 0.0
  %7821 = vmatprep.subr.mxu0 0.0
  %7822 = vmatpush1.msra.mxu0 0.0
  %7823 = vmatprep.subr.mxu0 0.0
  %7824 = vmatpush1.msra.mxu0 %v7791
  %7825 = vmatprep.subr.mxu0 0.0
  %7826 = vmatpush2.msra.mxu0 0.0
  %7827 = vmatprep.subr.mxu0 0.0
  %7828 = vmatpush2.msra.mxu0 0.0
  %7829 = vmatprep.subr.mxu0 0.0
  %7830 = vmatpush2.msra.mxu0 0.0
  %7831 = vmatprep.subr.mxu0 0.0
  %7832 = vmatpush2.msra.mxu0 0.0
  %7833 = vmatprep.subr.mxu0 0.0
  %7834 = vmatpush2.msra.mxu0 0.0
  %7835 = vmatprep.subr.mxu0 0.0
  %7836 = vmatpush2.msra.mxu0 0.0
  %7837 = vmatprep.subr.mxu0 0.0
  %7838 = vmatpush2.msra.mxu0 0.0
  %7839 = vmatprep.subr.mxu0 0.0
  %7840 = vmatpush2.msra.mxu0 0.0
  %7841 = vmatprep.subr.mxu0 0.0
  %7842 = vmatpush2.msra.mxu0 0.0
  %7843 = vmatprep.subr.mxu0 0.0
  %7844 = vmatpush2.msra.mxu0 0.0
  %7845 = vmatprep.subr.mxu0 0.0
  %7846 = vmatpush2.msra.mxu0 0.0
  %7847 = vmatprep.subr.mxu0 0.0
  %7848 = vmatpush2.msra.mxu0 0.0
  %7849 = vmatprep.subr.mxu0 0.0
  %7850 = vmatpush2.msra.mxu0 0.0
  %7851 = vmatprep.subr.mxu0 0.0
  %7852 = vmatpush2.msra.mxu0 0.0
  %7853 = vmatprep.subr.mxu0 0.0
  %7854 = vmatpush2.msra.mxu0 0.0
  %7855 = vmatprep.subr.mxu0 0.0
  %7856 = vmatpush2.msra.mxu0 0.0
  %7857 = vmatprep.mubr.f32.mxu0 0.0
  %7858 = vmatmul.mubr.f32.gmra.mxu0 %v7788
  %v7859 = vpop.f32.mrf.mxu0
  %v7860 = vadd.f32 %v7785, %v7859
  %v7861 = vpop.f32.mrf.mxu0
  %7862 = vdwg.mxu0
  %7863 = vst [vmem:[%s109] sm:$0x7] %v7860
  %v7864 = vld [vmem:[%s33] sm:$0x1f]
  %v7865 = vld [vmem:[%s97] sm:$0x1]
  %v7867 = vlaneseq
  %v7868 = vshrl.u32 %v7867, 7
  %v7869 = vsub.s32 0, %v7868
  %v7870 = vrot.slane %v7865, %v7869
  %v7873 = vsel %vm942, %v7864, 0
  %7875 = vmatprep.subr.mxu0 0.0
  %7876 = vmatpush1.msra.mxu0 0.0
  %7877 = vmatprep.subr.mxu0 0.0
  %7878 = vmatpush1.msra.mxu0 0.0
  %7879 = vmatprep.subr.mxu0 0.0
  %7880 = vmatpush1.msra.mxu0 0.0
  %7881 = vmatprep.subr.mxu0 0.0
  %7882 = vmatpush1.msra.mxu0 0.0
  %7883 = vmatprep.subr.mxu0 0.0
  %7884 = vmatpush1.msra.mxu0 0.0
  %7885 = vmatprep.subr.mxu0 0.0
  %7886 = vmatpush1.msra.mxu0 0.0
  %7887 = vmatprep.subr.mxu0 0.0
  %7888 = vmatpush1.msra.mxu0 0.0
  %7889 = vmatprep.subr.mxu0 0.0
  %7890 = vmatpush1.msra.mxu0 0.0
  %7891 = vmatprep.subr.mxu0 0.0
  %7892 = vmatpush1.msra.mxu0 0.0
  %7893 = vmatprep.subr.mxu0 0.0
  %7894 = vmatpush1.msra.mxu0 0.0
  %7895 = vmatprep.subr.mxu0 0.0
  %7896 = vmatpush1.msra.mxu0 0.0
  %7897 = vmatprep.subr.mxu0 0.0
  %7898 = vmatpush1.msra.mxu0 0.0
  %7899 = vmatprep.subr.mxu0 0.0
  %7900 = vmatpush1.msra.mxu0 0.0
  %7901 = vmatprep.subr.mxu0 0.0
  %7902 = vmatpush1.msra.mxu0 0.0
  %7903 = vmatprep.subr.mxu0 0.0
  %7904 = vmatpush1.msra.mxu0 0.0
  %7905 = vmatprep.subr.mxu0 0.0
  %7906 = vmatpush1.msra.mxu0 %v7791
  %7907 = vmatprep.subr.mxu0 0.0
  %7908 = vmatpush2.msra.mxu0 0.0
  %7909 = vmatprep.subr.mxu0 0.0
  %7910 = vmatpush2.msra.mxu0 0.0
  %7911 = vmatprep.subr.mxu0 0.0
  %7912 = vmatpush2.msra.mxu0 0.0
  %7913 = vmatprep.subr.mxu0 0.0
  %7914 = vmatpush2.msra.mxu0 0.0
  %7915 = vmatprep.subr.mxu0 0.0
  %7916 = vmatpush2.msra.mxu0 0.0
  %7917 = vmatprep.subr.mxu0 0.0
  %7918 = vmatpush2.msra.mxu0 0.0
  %7919 = vmatprep.subr.mxu0 0.0
  %7920 = vmatpush2.msra.mxu0 0.0
  %7921 = vmatprep.subr.mxu0 0.0
  %7922 = vmatpush2.msra.mxu0 0.0
  %7923 = vmatprep.subr.mxu0 0.0
  %7924 = vmatpush2.msra.mxu0 0.0
  %7925 = vmatprep.subr.mxu0 0.0
  %7926 = vmatpush2.msra.mxu0 0.0
  %7927 = vmatprep.subr.mxu0 0.0
  %7928 = vmatpush2.msra.mxu0 0.0
  %7929 = vmatprep.subr.mxu0 0.0
  %7930 = vmatpush2.msra.mxu0 0.0
  %7931 = vmatprep.subr.mxu0 0.0
  %7932 = vmatpush2.msra.mxu0 0.0
  %7933 = vmatprep.subr.mxu0 0.0
  %7934 = vmatpush2.msra.mxu0 0.0
  %7935 = vmatprep.subr.mxu0 0.0
  %7936 = vmatpush2.msra.mxu0 0.0
  %7937 = vmatprep.subr.mxu0 0.0
  %7938 = vmatpush2.msra.mxu0 0.0
  %7939 = vmatprep.mubr.f32.mxu0 0.0
  %7940 = vmatmul.mubr.f32.gmra.mxu0 %v7873
  %v7941 = vpop.f32.mrf.mxu0
  %v7942 = vadd.f32 %v7870, %v7941
  %v7943 = vpop.f32.mrf.mxu0
  %7944 = vdwg.mxu0
  %7945 = vst [vmem:[%s111] sm:$0x1f] %v7942
  %v7946 = vld [vmem:[%s25] sm:$0x7f]
  %7947 = vxpose.xlu0.b32.start [1/16] %v7946, 128
  %7948 = vxpose.xlu0.b32.cont [2/16] 0.0, 128
  %7949 = vxpose.xlu0.b32.cont [3/16] 0.0, 128
  %7950 = vxpose.xlu0.b32.cont [4/16] 0.0, 128
  %7951 = vxpose.xlu0.b32.cont [5/16] 0.0, 128
  %7952 = vxpose.xlu0.b32.cont [6/16] 0.0, 128
  %7953 = vxpose.xlu0.b32.cont [7/16] 0.0, 128
  %7954 = vxpose.xlu0.b32.cont [8/16] 0.0, 128
  %7955 = vxpose.xlu0.b32.cont [9/16] 0.0, 128
  %7956 = vxpose.xlu0.b32.cont [10/16] 0.0, 128
  %7957 = vxpose.xlu0.b32.cont [11/16] 0.0, 128
  %7958 = vxpose.xlu0.b32.cont [12/16] 0.0, 128
  %7959 = vxpose.xlu0.b32.cont [13/16] 0.0, 128
  %7960 = vxpose.xlu0.b32.cont [14/16] 0.0, 128
  %7961 = vxpose.xlu0.b32.cont [15/16] 0.0, 128
  %7962 = vxpose.xlu0.b32.end [16/16] 0.0, 128
  %v7963 = vpop.trf.xlu0
  %v7964 = vpop.trf.xlu0
  %v7965 = vpop.trf.xlu0
  %v7966 = vpop.trf.xlu0
  %v7967 = vpop.trf.xlu0
  %v7968 = vpop.trf.xlu0
  %v7969 = vpop.trf.xlu0
  %v7970 = vpop.trf.xlu0
  %v7971 = vpop.trf.xlu0
  %v7972 = vpop.trf.xlu0
  %v7973 = vpop.trf.xlu0
  %v7974 = vpop.trf.xlu0
  %v7975 = vpop.trf.xlu0
  %v7976 = vpop.trf.xlu0
  %v7977 = vpop.trf.xlu0
  %v7978 = vpop.trf.xlu0
  %v7980 = vsel %vm942, %v7963, 0
  %v7983 = vsel %vm949, %v7468, 0
  %7985 = vmatprep.subr.mxu0 0.0
  %7986 = vmatpush1.msra.mxu0 0.0
  %7987 = vmatprep.subr.mxu0 0.0
  %7988 = vmatpush1.msra.mxu0 0.0
  %7989 = vmatprep.subr.mxu0 0.0
  %7990 = vmatpush1.msra.mxu0 0.0
  %7991 = vmatprep.subr.mxu0 0.0
  %7992 = vmatpush1.msra.mxu0 0.0
  %7993 = vmatprep.subr.mxu0 0.0
  %7994 = vmatpush1.msra.mxu0 0.0
  %7995 = vmatprep.subr.mxu0 0.0
  %7996 = vmatpush1.msra.mxu0 0.0
  %7997 = vmatprep.subr.mxu0 0.0
  %7998 = vmatpush1.msra.mxu0 0.0
  %7999 = vmatprep.subr.mxu0 0.0
  %8000 = vmatpush1.msra.mxu0 0.0
  %8001 = vmatprep.subr.mxu0 0.0
  %8002 = vmatpush1.msra.mxu0 0.0
  %8003 = vmatprep.subr.mxu0 0.0
  %8004 = vmatpush1.msra.mxu0 0.0
  %8005 = vmatprep.subr.mxu0 0.0
  %8006 = vmatpush1.msra.mxu0 0.0
  %8007 = vmatprep.subr.mxu0 0.0
  %8008 = vmatpush1.msra.mxu0 0.0
  %8009 = vmatprep.subr.mxu0 0.0
  %8010 = vmatpush1.msra.mxu0 0.0
  %8011 = vmatprep.subr.mxu0 0.0
  %8012 = vmatpush1.msra.mxu0 0.0
  %8013 = vmatprep.subr.mxu0 0.0
  %8014 = vmatpush1.msra.mxu0 0.0
  %8015 = vmatprep.subr.mxu0 0.0
  %8016 = vmatpush1.msra.mxu0 %v7983
  %8017 = vmatprep.subr.mxu0 0.0
  %8018 = vmatpush2.msra.mxu0 0.0
  %8019 = vmatprep.subr.mxu0 0.0
  %8020 = vmatpush2.msra.mxu0 0.0
  %8021 = vmatprep.subr.mxu0 0.0
  %8022 = vmatpush2.msra.mxu0 0.0
  %8023 = vmatprep.subr.mxu0 0.0
  %8024 = vmatpush2.msra.mxu0 0.0
  %8025 = vmatprep.subr.mxu0 0.0
  %8026 = vmatpush2.msra.mxu0 0.0
  %8027 = vmatprep.subr.mxu0 0.0
  %8028 = vmatpush2.msra.mxu0 0.0
  %8029 = vmatprep.subr.mxu0 0.0
  %8030 = vmatpush2.msra.mxu0 0.0
  %8031 = vmatprep.subr.mxu0 0.0
  %8032 = vmatpush2.msra.mxu0 0.0
  %8033 = vmatprep.subr.mxu0 0.0
  %8034 = vmatpush2.msra.mxu0 0.0
  %8035 = vmatprep.subr.mxu0 0.0
  %8036 = vmatpush2.msra.mxu0 0.0
  %8037 = vmatprep.subr.mxu0 0.0
  %8038 = vmatpush2.msra.mxu0 0.0
  %8039 = vmatprep.subr.mxu0 0.0
  %8040 = vmatpush2.msra.mxu0 0.0
  %8041 = vmatprep.subr.mxu0 0.0
  %8042 = vmatpush2.msra.mxu0 0.0
  %8043 = vmatprep.subr.mxu0 0.0
  %8044 = vmatpush2.msra.mxu0 0.0
  %8045 = vmatprep.subr.mxu0 0.0
  %8046 = vmatpush2.msra.mxu0 0.0
  %8047 = vmatprep.subr.mxu0 0.0
  %8048 = vmatpush2.msra.mxu0 0.0
  %8049 = vmatprep.mubr.f32.mxu0 0.0
  %8050 = vmatmul.mubr.f32.gmra.mxu0 %v7980
  %v8051 = vpop.f32.mrf.mxu0
  %v8052 = vadd.f32 0.0, %v8051
  %v8053 = vpop.f32.mrf.mxu0
  %8054 = vdwg.mxu0
  %v8055 = vld [vmem:[%s27] sm:$0x3]
  %8057 = vset.pattern.permute.xlu0 0
  %8058 = vperm.xlu0 %8057, %v8055
  %v8059 = vpop.permute.xlu0 %8058
  %v8061 = vmul.f32 %v8052, %v8059
  %v8062 = vld [vmem:[%s99] sm:$0xf]
  %v8063 = vld [vmem:[%s99 + $0x4] sm:$0xf]
  %v8064 = vld [vmem:[%s99 + $0x8] sm:$0xf]
  %v8065 = vld [vmem:[%s99 + $0xc] sm:$0xf]
  %v8066 = vpack.c.bf16 %v8061, %v8061
  %v8067 = vld [vmem:[%s101] sm:$0xf]
  %v8068 = vld [vmem:[%s101 + $0x4] sm:$0xf]
  %v8069 = vld [vmem:[%s101 + $0x8] sm:$0xf]
  %v8070 = vld [vmem:[%s101 + $0xc] sm:$0xf]
  %v8071 = vpack.c.bf16 %v7573, %v7573
  %v8076 = vunpack.c.l.b16 %v8067
  %v8077 = vunpack.c.l.b16 %v8068
  %v8078 = vunpack.c.l.b16 %v8069
  %v8079 = vunpack.c.l.b16 %v8070
  %v8080 = vpack.c.b16 %v8077, %v8076
  %v8081 = vpack.c.b16 %v8079, %v8078
  %v8085 = vsel %vm335, %v8071, 0
  %8087 = vmatprep.subr.bf16.mxu0 0
  %8088 = vmatpush1.bf16.msra.mxu0 0
  %8089 = vmatprep.subr.bf16.mxu0 0
  %8090 = vmatpush1.bf16.msra.mxu0 0
  %8091 = vmatprep.subr.bf16.mxu0 0
  %8092 = vmatpush1.bf16.msra.mxu0 0
  %8093 = vmatprep.subr.bf16.mxu0 0
  %8094 = vmatpush1.bf16.msra.mxu0 0
  %8095 = vmatprep.subr.bf16.mxu0 0
  %8096 = vmatpush1.bf16.msra.mxu0 0
  %8097 = vmatprep.subr.bf16.mxu0 0
  %8098 = vmatpush1.bf16.msra.mxu0 0
  %8099 = vmatprep.subr.bf16.mxu0 0
  %8100 = vmatpush1.bf16.msra.mxu0 %v8081
  %8101 = vmatprep.subr.bf16.mxu0 0
  %8102 = vmatpush1.bf16.msra.mxu0 %v8080
  %8103 = vmatprep.subr.bf16.mxu0 0
  %8104 = vmatpush2.bf16.msra.mxu0 0
  %8105 = vmatprep.subr.bf16.mxu0 0
  %8106 = vmatpush2.bf16.msra.mxu0 0
  %8107 = vmatprep.subr.bf16.mxu0 0
  %8108 = vmatpush2.bf16.msra.mxu0 0
  %8109 = vmatprep.subr.bf16.mxu0 0
  %8110 = vmatpush2.bf16.msra.mxu0 0
  %8111 = vmatprep.subr.bf16.mxu0 0
  %8112 = vmatpush2.bf16.msra.mxu0 0
  %8113 = vmatprep.subr.bf16.mxu0 0
  %8114 = vmatpush2.bf16.msra.mxu0 0
  %8115 = vmatprep.subr.bf16.mxu0 0
  %8116 = vmatpush2.bf16.msra.mxu0 0
  %8117 = vmatprep.subr.bf16.mxu0 0
  %8118 = vmatpush2.bf16.msra.mxu0 0
  %8119 = vmatprep.mubr.bf16.mxu0 0
  %8120 = vmatmul.mubr.bf16.gmra.mxu0 %v8085
  %v8121 = vpop.f32.mrf.mxu0
  %v8122 = vadd.f32 0.0, %v8121
  %v8123 = vpop.f32.mrf.mxu0
  %v8124 = vpop.f32.mrf.mxu0
  %v8125 = vpop.f32.mrf.mxu0
  %8126 = vdwg.mxu0
  %v8131 = vunpack.c.l.b16 %v8062
  %v8132 = vunpack.c.l.b16 %v8063
  %v8133 = vunpack.c.l.b16 %v8064
  %v8134 = vunpack.c.l.b16 %v8065
  %v8135 = vpack.c.b16 %v8132, %v8131
  %v8136 = vpack.c.b16 %v8134, %v8133
  %v8140 = vsel %vm335, %v8066, 0
  %8142 = vmatprep.subr.bf16.mxu0 0
  %8143 = vmatpush1.bf16.msra.mxu0 0
  %8144 = vmatprep.subr.bf16.mxu0 0
  %8145 = vmatpush1.bf16.msra.mxu0 0
  %8146 = vmatprep.subr.bf16.mxu0 0
  %8147 = vmatpush1.bf16.msra.mxu0 0
  %8148 = vmatprep.subr.bf16.mxu0 0
  %8149 = vmatpush1.bf16.msra.mxu0 0
  %8150 = vmatprep.subr.bf16.mxu0 0
  %8151 = vmatpush1.bf16.msra.mxu0 0
  %8152 = vmatprep.subr.bf16.mxu0 0
  %8153 = vmatpush1.bf16.msra.mxu0 0
  %8154 = vmatprep.subr.bf16.mxu0 0
  %8155 = vmatpush1.bf16.msra.mxu0 %v8136
  %8156 = vmatprep.subr.bf16.mxu0 0
  %8157 = vmatpush1.bf16.msra.mxu0 %v8135
  %8158 = vmatprep.subr.bf16.mxu0 0
  %8159 = vmatpush2.bf16.msra.mxu0 0
  %8160 = vmatprep.subr.bf16.mxu0 0
  %8161 = vmatpush2.bf16.msra.mxu0 0
  %8162 = vmatprep.subr.bf16.mxu0 0
  %8163 = vmatpush2.bf16.msra.mxu0 0
  %8164 = vmatprep.subr.bf16.mxu0 0
  %8165 = vmatpush2.bf16.msra.mxu0 0
  %8166 = vmatprep.subr.bf16.mxu0 0
  %8167 = vmatpush2.bf16.msra.mxu0 0
  %8168 = vmatprep.subr.bf16.mxu0 0
  %8169 = vmatpush2.bf16.msra.mxu0 0
  %8170 = vmatprep.subr.bf16.mxu0 0
  %8171 = vmatpush2.bf16.msra.mxu0 0
  %8172 = vmatprep.subr.bf16.mxu0 0
  %8173 = vmatpush2.bf16.msra.mxu0 0
  %8174 = vmatprep.mubr.bf16.mxu0 0
  %8175 = vmatmul.mubr.bf16.gmra.mxu0 %v8140
  %v8176 = vpop.f32.mrf.mxu0
  %v8177 = vadd.f32 %v8122, %v8176
  %v8178 = vpop.f32.mrf.mxu0
  %v8179 = vpop.f32.mrf.mxu0
  %v8180 = vpop.f32.mrf.mxu0
  %8181 = vdwg.mxu0
  %v8182 = vld [vmem:[%s103] sm:$0xf]
  %v8183 = vld [vmem:[%s103 + $0x4] sm:$0xf]
  %v8184 = vld [vmem:[%s103 + $0x8] sm:$0xf]
  %v8185 = vld [vmem:[%s103 + $0xc] sm:$0xf]
  %v8186 = vpack.c.bf16 %v848, %v848
  %v8191 = vunpack.c.l.b16 %v8182
  %v8192 = vunpack.c.l.b16 %v8183
  %v8193 = vunpack.c.l.b16 %v8184
  %v8194 = vunpack.c.l.b16 %v8185
  %v8195 = vpack.c.b16 %v8192, %v8191
  %v8196 = vpack.c.b16 %v8194, %v8193
  %v8200 = vsel %vm335, %v8186, 0
  %8202 = vmatprep.subr.bf16.mxu0 0
  %8203 = vmatpush1.bf16.msra.mxu0 0
  %8204 = vmatprep.subr.bf16.mxu0 0
  %8205 = vmatpush1.bf16.msra.mxu0 0
  %8206 = vmatprep.subr.bf16.mxu0 0
  %8207 = vmatpush1.bf16.msra.mxu0 0
  %8208 = vmatprep.subr.bf16.mxu0 0
  %8209 = vmatpush1.bf16.msra.mxu0 0
  %8210 = vmatprep.subr.bf16.mxu0 0
  %8211 = vmatpush1.bf16.msra.mxu0 0
  %8212 = vmatprep.subr.bf16.mxu0 0
  %8213 = vmatpush1.bf16.msra.mxu0 0
  %8214 = vmatprep.subr.bf16.mxu0 0
  %8215 = vmatpush1.bf16.msra.mxu0 %v8196
  %8216 = vmatprep.subr.bf16.mxu0 0
  %8217 = vmatpush1.bf16.msra.mxu0 %v8195
  %8218 = vmatprep.subr.bf16.mxu0 0
  %8219 = vmatpush2.bf16.msra.mxu0 0
  %8220 = vmatprep.subr.bf16.mxu0 0
  %8221 = vmatpush2.bf16.msra.mxu0 0
  %8222 = vmatprep.subr.bf16.mxu0 0
  %8223 = vmatpush2.bf16.msra.mxu0 0
  %8224 = vmatprep.subr.bf16.mxu0 0
  %8225 = vmatpush2.bf16.msra.mxu0 0
  %8226 = vmatprep.subr.bf16.mxu0 0
  %8227 = vmatpush2.bf16.msra.mxu0 0
  %8228 = vmatprep.subr.bf16.mxu0 0
  %8229 = vmatpush2.bf16.msra.mxu0 0
  %8230 = vmatprep.subr.bf16.mxu0 0
  %8231 = vmatpush2.bf16.msra.mxu0 0
  %8232 = vmatprep.subr.bf16.mxu0 0
  %8233 = vmatpush2.bf16.msra.mxu0 0
  %8234 = vmatprep.mubr.bf16.mxu0 0
  %8235 = vmatmul.mubr.bf16.gmra.mxu0 %v8200
  %v8236 = vpop.f32.mrf.mxu0
  %v8237 = vadd.f32 0.0, %v8236
  %v8238 = vpop.f32.mrf.mxu0
  %v8239 = vpop.f32.mrf.mxu0
  %v8240 = vpop.f32.mrf.mxu0
  %8241 = vdwg.mxu0
  %v8242 = vadd.f32 %v8177, %v8237
  %v8243 = vld [vmem:[%s105] sm:$0x1]
  %v8245 = vlaneseq
  %v8246 = vshrl.u32 %v8245, 7
  %v8247 = vsub.s32 0, %v8246
  %v8248 = vrot.slane %v8243, %v8247
  %v8250 = vadd.f32 %v8242, %v8248
  %8251 = vst [vmem:[%s113] sm:$0x3] %v8250
  // Predicated region
  $region214: #{graph_transformer_gfn_forward.1} parent=0 // pred_check
    _
  $region215: #{graph_transformer_gfn_forward.1} parent=0 // pred_check_branch
    %8253 = sbr.rel (0) target = $region217
  $region216: #{graph_transformer_gfn_forward.1} parent=0 // pred_region
    _
  $region217: #{graph_transformer_gfn_forward.1} parent=0 // pred_fallthru
    _
  // Predicated region
  $region218: #{graph_transformer_gfn_forward.1} parent=0 // pred_check
    _
  $region219: #{graph_transformer_gfn_forward.1} parent=0 // pred_check_branch
    %8255 = sbr.rel (0) target = $region221
  $region220: #{graph_transformer_gfn_forward.1} parent=0 // pred_region
    _
  $region221: #{graph_transformer_gfn_forward.1} parent=0 // pred_fallthru
    _
  // Predicated region
  $region222: #{graph_transformer_gfn_forward.1} parent=0 // pred_check
    _
  $region223: #{graph_transformer_gfn_forward.1} parent=0 // pred_check_branch
    %8257 = sbr.rel (0) target = $region225
  $region224: #{graph_transformer_gfn_forward.1} parent=0 // pred_region
    _
  $region225: #{graph_transformer_gfn_forward.1} parent=0 // pred_fallthru
    _
  // Predicated region
  $region226: #{graph_transformer_gfn_forward.1} parent=0 // pred_check
    _
  $region227: #{graph_transformer_gfn_forward.1} parent=0 // pred_check_branch
    %8259 = sbr.rel (0) target = $region229
  $region228: #{graph_transformer_gfn_forward.1} parent=0 // pred_region
    _
  $region229: #{graph_transformer_gfn_forward.1} parent=0 // pred_fallthru
    _
  // Predicated region
  $region230: #{graph_transformer_gfn_forward.1} parent=0 // pred_check
    _
  $region231: #{graph_transformer_gfn_forward.1} parent=0 // pred_check_branch
    %8261 = sbr.rel (0) target = $region233
  $region232: #{graph_transformer_gfn_forward.1} parent=0 // pred_region
    _
  $region233: #{graph_transformer_gfn_forward.1} parent=0 // pred_fallthru
    _
  // Predicated region
  $region234: #{graph_transformer_gfn_forward.1} parent=0 // pred_check
    _
  $region235: #{graph_transformer_gfn_forward.1} parent=0 // pred_check_branch
    %8263 = sbr.rel (0) target = $region237
  $region236: #{graph_transformer_gfn_forward.1} parent=0 // pred_region
    _
  $region237: #{graph_transformer_gfn_forward.1} parent=0 // pred_fallthru
    _
  // Predicated region
  $region238: #{graph_transformer_gfn_forward.1} parent=0 // pred_check
    _
  $region239: #{graph_transformer_gfn_forward.1} parent=0 // pred_check_branch
    %8265 = sbr.rel (0) target = $region241
  $region240: #{graph_transformer_gfn_forward.1} parent=0 // pred_region
    _
  $region241: #{graph_transformer_gfn_forward.1} parent=0 // pred_fallthru
    _
  // Predicated region
  $region242: #{graph_transformer_gfn_forward.1} parent=0 // pred_check
    _
  $region243: #{graph_transformer_gfn_forward.1} parent=0 // pred_check_branch
    %8267 = sbr.rel (0) target = $region245
  $region244: #{graph_transformer_gfn_forward.1} parent=0 // pred_region
    _
  $region245: #{graph_transformer_gfn_forward.1} parent=0 // pred_fallthru
    _

</llo_original>
